<compile_context>
chip_gen: v6e
topology: v6e:2x2x1
jax: 0.10.0
libtpu: 0.0.40
codegen_flags: <defaults>
</compile_context>

<pallas_src>
import jax
import jax.numpy as jnp
from jax.experimental import pallas as pl
from jax.experimental.pallas import tpu as pltpu

# ----------------------------- config ---------------------------------------
N_CLASSES   = 16      # opt.n_classes
LATENT_DIM  = 48      # opt.latentdim
CHANNELS    = 1       # opt.channels
IMG_SIZE    = 16      # opt.imageSize
DEPTH       = 128     # self.depth

IMG_FLAT    = CHANNELS * IMG_SIZE * IMG_SIZE       # prod(img_shape) = 256
IN_DIM      = LATENT_DIM + N_CLASSES               # 64
BN_EPS      = 0.8                                  # nn.BatchNorm1d(output, 0.8)
LRELU_SLOPE = 0.2

TILE_M      = 128     # rows per grid step = batch size of one forward pass
NUM_BATCHES = 4       # independent forward passes per pallas_call

LAYER_DIMS = [(IN_DIM, DEPTH), (DEPTH, 2 * DEPTH), (2 * DEPTH, 4 * DEPTH),
              (4 * DEPTH, 8 * DEPTH), (8 * DEPTH, IMG_FLAT)]


# ----------------------------- Pallas kernel --------------------------------
def _generator_kernel(lbl_ref, noise_ref, embed_ref,
                      w1, g1, be1, w2, g2, be2, w3, g3, be3, w4, g4, be4,
                      w5, b5, out_ref):
    """One independent forward pass (TILE_M rows) per grid step.

    lbl:   (TILE_M, 1) int32; noise: (TILE_M, LATENT_DIM) f32
    embed: (N_CLASSES, N_CLASSES) bf16; wK: (fan_in, fan_out) bf16
    gK/beK/b5: (1, fan_out) f32; out: (TILE_M, IMG_FLAT) f32
    """
    m = lbl_ref.shape[0]

    # ---- in-kernel label embedding: exact gather via one-hot matmul --------
    lbl = lbl_ref[...]                                                  # (m, 1) i32
    classes = jax.lax.broadcasted_iota(jnp.int32, (m, N_CLASSES), 1)    # (m, 16)
    onehot = (lbl == classes).astype(jnp.bfloat16)                      # exact 0/1
    emb = jnp.dot(onehot, embed_ref[...],
                  preferred_element_type=jnp.float32)                   # (m, 16) f32

    def bn_lrelu(y, g_ref, be_ref):
        # BatchNorm1d, training-mode batch stats (biased variance), eps=0.8,
        # folded into a single scale/shift; rsqrt goes to the EUP slot.
        mean = jnp.mean(y, axis=0, keepdims=True)
        yc = y - mean
        var = jnp.mean(yc * yc, axis=0, keepdims=True)
        y = yc * (g_ref[...] * jax.lax.rsqrt(var + BN_EPS)) + be_ref[...]
        # LeakyReLU(0.2) as a single VPU max (valid for slope in (0,1)).
        return jnp.maximum(y, LRELU_SLOPE * y)

    def lin(h, w_ref):
        # bf16 x bf16 -> f32 accumulation on the MXU.
        return jnp.dot(h.astype(jnp.bfloat16), w_ref[...],
                       preferred_element_type=jnp.float32)

    # Layer 1: concat([emb, noise]) @ w1 computed as a split dot (no concat).
    # Linear biases b1..b4 omitted: exactly cancelled by BN mean subtraction.
    y = (jnp.dot(emb.astype(jnp.bfloat16), w1[pl.ds(0, N_CLASSES), :],
                 preferred_element_type=jnp.float32)
         + jnp.dot(noise_ref[...].astype(jnp.bfloat16),
                   w1[pl.ds(N_CLASSES, LATENT_DIM), :],
                   preferred_element_type=jnp.float32))
    h = bn_lrelu(y, g1, be1)                 # IN_DIM -> 128
    h = bn_lrelu(lin(h, w2), g2, be2)        # 128    -> 256
    h = bn_lrelu(lin(h, w3), g3, be3)        # 256    -> 512
    h = bn_lrelu(lin(h, w4), g4, be4)        # 512    -> 1024
    y = lin(h, w5) + b5[...]                 # 1024   -> IMG_FLAT
    out_ref[...] = jnp.tanh(y)


# ----------------------------- parameter init -------------------------------
def init_generator_params(key):
    keys = jax.random.split(key, 6)
    # nn.Embedding(n_classes, n_classes) ~ N(0, 1); stored bf16 like the weights.
    params = {"embed": jax.random.normal(keys[0], (N_CLASSES, N_CLASSES),
                                         jnp.float32).astype(jnp.bfloat16)}
    for i, (fi, fo) in enumerate(LAYER_DIMS):
        kw, kb = jax.random.split(keys[i + 1])
        bound = 1.0 / jnp.sqrt(jnp.float32(fi))
        w = jax.random.uniform(kw, (fi, fo), jnp.float32, -bound, bound)
        params[f"w{i + 1}"] = w.astype(jnp.bfloat16)        # bf16 weights
        if i < 4:
            # BN affine params (gamma=1, beta=0). Linear biases b1..b4 omitted:
            # they are exactly cancelled by BN mean subtraction.
            params[f"g{i + 1}"] = jnp.ones((1, fo), jnp.float32)
            params[f"be{i + 1}"] = jnp.zeros((1, fo), jnp.float32)
        else:
            params[f"b{i + 1}"] = jax.random.uniform(
                kb, (1, fo), jnp.float32, -bound, bound)
    return params


# ----------------------------- wrapper ---------------------------------------
def _cost_estimate(num_batches):
    total = num_batches * TILE_M
    matmul_flops = 2 * total * (N_CLASSES * N_CLASSES
                                + sum(fi * fo for fi, fo in LAYER_DIMS))
    bn_features = sum(fo for _, fo in LAYER_DIMS[:4])
    transcendentals = total * IMG_FLAT + num_batches * bn_features   # tanh + rsqrt
    weight_bytes = (N_CLASSES * N_CLASSES
                    + sum(fi * fo for fi, fo in LAYER_DIMS)) * 2     # bf16, once
    bias_bn_bytes = (2 * bn_features + IMG_FLAT) * 4                 # f32, once
    act_bytes = total * (4 + LATENT_DIM * 4 + IMG_FLAT * 4)          # labels+noise+img
    return pl.CostEstimate(flops=matmul_flops,
                           transcendentals=transcendentals,
                           bytes_accessed=weight_bytes + bias_bn_bytes + act_bytes)


def _const_spec(shape):
    # Full-array block with a constant index_map: DMA'd once, stays VMEM-resident
    # across all grid steps (weights / BN params / embedding table).
    return pl.BlockSpec(shape, lambda i: (0, 0))


@jax.jit
def generator_forward(params, noise, labels):
    """noise: (NUM_BATCHES, TILE_M, LATENT_DIM) f32; labels: (NUM_BATCHES, TILE_M) i32.
    Each of the NUM_BATCHES slices is one independent Generator.forward call with
    batch size TILE_M (BatchNorm batch statistics are computed per slice)."""
    nb, bsz, _ = noise.shape
    assert bsz == TILE_M, "per-forward batch must equal TILE_M"

    noise_flat = noise.reshape(nb * bsz, LATENT_DIM)
    labels_flat = labels.reshape(nb * bsz, 1).astype(jnp.int32)

    in_specs = [
        pl.BlockSpec((TILE_M, 1), lambda i: (i, 0)),            # labels (tiled)
        pl.BlockSpec((TILE_M, LATENT_DIM), lambda i: (i, 0)),   # noise  (tiled)
        _const_spec((N_CLASSES, N_CLASSES)),                    # embedding table
    ]
    args = [labels_flat, noise_flat, params["embed"]]
    for l, (fi, fo) in enumerate(LAYER_DIMS[:4], start=1):
        in_specs += [_const_spec((fi, fo)), _const_spec((1, fo)), _const_spec((1, fo))]
        args += [params[f"w{l}"], params[f"g{l}"], params[f"be{l}"]]
    fi5, fo5 = LAYER_DIMS[4]
    in_specs += [_const_spec((fi5, fo5)), _const_spec((1, fo5))]
    args += [params["w5"], params["b5"]]

    flat_img = pl.pallas_call(
        _generator_kernel,
        out_shape=jax.ShapeDtypeStruct((nb * bsz, IMG_FLAT), jnp.float32),
        grid=(nb,),
        in_specs=in_specs,
        out_specs=pl.BlockSpec((TILE_M, IMG_FLAT), lambda i: (i, 0)),
        compiler_params=pltpu.CompilerParams(
            dimension_semantics=("parallel",),       # v7x: shard grid across 2 TCs
            vmem_limit_bytes=32 * 1024 * 1024),      # headroom only, not tuning
        cost_estimate=_cost_estimate(nb),
    )(*args)

    # PyTorch: img.view(B, channels, imageSize, imageSize) per forward pass.
    return flat_img.reshape(nb, bsz, CHANNELS, IMG_SIZE, IMG_SIZE)


# ----------------------------- reference (pure JAX) --------------------------
def _bn_lrelu_ref(y, g, be):
    mean = jnp.mean(y, axis=0, keepdims=True)
    yc = y - mean
    var = jnp.mean(yc * yc, axis=0, keepdims=True)
    y = yc * (g * jax.lax.rsqrt(var + BN_EPS)) + be
    return jnp.maximum(y, LRELU_SLOPE * y)


def _reference_forward(params, noise, labels):
    def one_forward(noise_b, labels_b):
        emb = jnp.take(params["embed"], labels_b, axis=0)            # (B, 16) bf16
        y = (jnp.dot(emb, params["w1"][:N_CLASSES],
                     preferred_element_type=jnp.float32)
             + jnp.dot(noise_b.astype(jnp.bfloat16), params["w1"][N_CLASSES:],
                       preferred_element_type=jnp.float32))
        h = _bn_lrelu_ref(y, params["g1"], params["be1"])
        for i in range(2, 5):
            y = jnp.dot(h.astype(jnp.bfloat16), params[f"w{i}"],
                        preferred_element_type=jnp.float32)
            h = _bn_lrelu_ref(y, params[f"g{i}"], params[f"be{i}"])
        y = jnp.dot(h.astype(jnp.bfloat16), params["w5"],
                    preferred_element_type=jnp.float32) + params["b5"]
        return jnp.tanh(y).reshape(-1, CHANNELS, IMG_SIZE, IMG_SIZE)
    return jax.vmap(one_forward)(noise, labels)


# ----------------------------- main ------------------------------------------
if __name__ == "__main__":
    key = jax.random.PRNGKey(0)
    k_params, k_noise, k_labels = jax.random.split(key, 3)

    params = init_generator_params(k_params)
    noise = jax.random.normal(k_noise, (NUM_BATCHES, TILE_M, LATENT_DIM), jnp.float32)
    labels = jax.random.randint(k_labels, (NUM_BATCHES, TILE_M), 0, N_CLASSES,
                                dtype=jnp.int32)

    img = jax.block_until_ready(generator_forward(params, noise, labels))
    ref = _reference_forward(params, noise, labels)

    assert img.shape == (NUM_BATCHES, TILE_M, CHANNELS, IMG_SIZE, IMG_SIZE)
    # bf16 weights -> compare against a bf16-weight reference at a loose tol.
    assert jnp.allclose(img, ref, atol=3e-3, rtol=3e-3), "mismatch vs reference"

    print("KERNEL_OK")
</pallas_src>

<mosaic_0001>
module attributes {stable_mosaic.version = 11 : i64} {
  func.func @_generator_kernel(%arg0: i32, %arg1: memref<128x1xi32, #tpu.memory_space<vmem>>, %arg2: memref<128x48xf32, #tpu.memory_space<vmem>>, %arg3: memref<16x16xbf16, #tpu.memory_space<vmem>>, %arg4: memref<64x128xbf16, #tpu.memory_space<vmem>>, %arg5: memref<1x128xf32, #tpu.memory_space<vmem>>, %arg6: memref<1x128xf32, #tpu.memory_space<vmem>>, %arg7: memref<128x256xbf16, #tpu.memory_space<vmem>>, %arg8: memref<1x256xf32, #tpu.memory_space<vmem>>, %arg9: memref<1x256xf32, #tpu.memory_space<vmem>>, %arg10: memref<256x512xbf16, #tpu.memory_space<vmem>>, %arg11: memref<1x512xf32, #tpu.memory_space<vmem>>, %arg12: memref<1x512xf32, #tpu.memory_space<vmem>>, %arg13: memref<512x1024xbf16, #tpu.memory_space<vmem>>, %arg14: memref<1x1024xf32, #tpu.memory_space<vmem>>, %arg15: memref<1x1024xf32, #tpu.memory_space<vmem>>, %arg16: memref<1024x256xbf16, #tpu.memory_space<vmem>>, %arg17: memref<1x256xf32, #tpu.memory_space<vmem>>, %arg18: memref<128x256xf32, #tpu.memory_space<vmem>>) attributes {dimension_semantics = [#tpu.dimension_semantics<parallel>], iteration_bounds = array<i64: 4>, scalar_prefetch = 0 : i64, scratch_operands = 0 : i64, tpu.core_type = #tpu.core_type<tc>, window_params = [{transform_indices = @transform_0, window_bounds = array<i64: 128, 1>}, {transform_indices = @transform_1, window_bounds = array<i64: 128, 48>}, {pipeline_mode = #tpu.pipeline_mode<synchronous>, transform_indices = @transform_2, window_bounds = array<i64: 16, 16>}, {pipeline_mode = #tpu.pipeline_mode<synchronous>, transform_indices = @transform_3, window_bounds = array<i64: 64, 128>}, {pipeline_mode = #tpu.pipeline_mode<synchronous>, transform_indices = @transform_4, window_bounds = array<i64: 1, 128>}, {pipeline_mode = #tpu.pipeline_mode<synchronous>, transform_indices = @transform_5, window_bounds = array<i64: 1, 128>}, {pipeline_mode = #tpu.pipeline_mode<synchronous>, transform_indices = @transform_6, window_bounds = array<i64: 128, 256>}, {pipeline_mode = #tpu.pipeline_mode<synchronous>, transform_indices = @transform_7, window_bounds = array<i64: 1, 256>}, {pipeline_mode = #tpu.pipeline_mode<synchronous>, transform_indices = @transform_8, window_bounds = array<i64: 1, 256>}, {pipeline_mode = #tpu.pipeline_mode<synchronous>, transform_indices = @transform_9, window_bounds = array<i64: 256, 512>}, {pipeline_mode = #tpu.pipeline_mode<synchronous>, transform_indices = @transform_10, window_bounds = array<i64: 1, 512>}, {pipeline_mode = #tpu.pipeline_mode<synchronous>, transform_indices = @transform_11, window_bounds = array<i64: 1, 512>}, {pipeline_mode = #tpu.pipeline_mode<synchronous>, transform_indices = @transform_12, window_bounds = array<i64: 512, 1024>}, {pipeline_mode = #tpu.pipeline_mode<synchronous>, transform_indices = @transform_13, window_bounds = array<i64: 1, 1024>}, {pipeline_mode = #tpu.pipeline_mode<synchronous>, transform_indices = @transform_14, window_bounds = array<i64: 1, 1024>}, {pipeline_mode = #tpu.pipeline_mode<synchronous>, transform_indices = @transform_15, window_bounds = array<i64: 1024, 256>}, {pipeline_mode = #tpu.pipeline_mode<synchronous>, transform_indices = @transform_16, window_bounds = array<i64: 1, 256>}, {transform_indices = @transform_17, window_bounds = array<i64: 128, 256>}]} {
    %c0 = arith.constant 0 : index
    %c0_0 = arith.constant 0 : index
    %0 = vector.load %arg1[%c0, %c0_0] : memref<128x1xi32, #tpu.memory_space<vmem>>, vector<128x1xi32>
    %1 = tpu.iota {dimensions = array<i32: 1>} : vector<128x16xi32>
    %2 = vector.broadcast %0 : vector<128x1xi32> to vector<128x16xi32>
    %3 = arith.cmpi eq, %2, %1 : vector<128x16xi32>
    %4 = arith.extui %3 : vector<128x16xi1> to vector<128x16xi32>
    %5 = arith.sitofp %4 : vector<128x16xi32> to vector<128x16xf32>
    %6 = arith.truncf %5 : vector<128x16xf32> to vector<128x16xbf16>
    %c0_1 = arith.constant 0 : index
    %c0_2 = arith.constant 0 : index
    %7 = vector.load %arg3[%c0_1, %c0_2] : memref<16x16xbf16, #tpu.memory_space<vmem>>, vector<16x16xbf16>
    %cst = arith.constant dense<0.000000e+00> : vector<128x16xf32>
    %8 = tpu.matmul %6, %7, %cst {dimension_numbers = #tpu.dot_dimension_numbers<[1], [0], [0], [1], [0, 0, 1, 1], [], []>} : vector<128x16xbf16>, vector<16x16xbf16>, vector<128x16xf32> -> vector<128x16xf32>
    %9 = arith.truncf %8 : vector<128x16xf32> to vector<128x16xbf16>
    %c0_3 = arith.constant 0 : index
    %c0_4 = arith.constant 0 : index
    %10 = vector.load %arg4[%c0_3, %c0_4] : memref<64x128xbf16, #tpu.memory_space<vmem>>, vector<16x128xbf16>
    %cst_5 = arith.constant dense<0.000000e+00> : vector<128x128xf32>
    %11 = tpu.matmul %9, %10, %cst_5 {dimension_numbers = #tpu.dot_dimension_numbers<[1], [0], [0], [1], [0, 0, 1, 1], [], []>} : vector<128x16xbf16>, vector<16x128xbf16>, vector<128x128xf32> -> vector<128x128xf32>
    %c0_6 = arith.constant 0 : index
    %c0_7 = arith.constant 0 : index
    %12 = vector.load %arg2[%c0_6, %c0_7] : memref<128x48xf32, #tpu.memory_space<vmem>>, vector<128x48xf32>
    %13 = arith.truncf %12 : vector<128x48xf32> to vector<128x48xbf16>
    %c16 = arith.constant 16 : index
    %c0_8 = arith.constant 0 : index
    %14 = vector.load %arg4[%c16, %c0_8] : memref<64x128xbf16, #tpu.memory_space<vmem>>, vector<48x128xbf16>
    %cst_9 = arith.constant dense<0.000000e+00> : vector<128x128xf32>
    %15 = tpu.matmul %13, %14, %cst_9 {dimension_numbers = #tpu.dot_dimension_numbers<[1], [0], [0], [1], [0, 0, 1, 1], [], []>} : vector<128x48xbf16>, vector<48x128xbf16>, vector<128x128xf32> -> vector<128x128xf32>
    %16 = arith.addf %11, %15 : vector<128x128xf32>
    %cst_10 = arith.constant dense<0.000000e+00> : vector<128xf32>
    %17 = vector.multi_reduction <add>, %16, %cst_10 [0] : vector<128x128xf32> to vector<128xf32>
    %18 = vector.shape_cast %17 : vector<128xf32> to vector<1x128xf32>
    %cst_11 = arith.constant 1.280000e+02 : f32
    %19 = vector.broadcast %cst_11 : f32 to vector<1x128xf32>
    %20 = arith.divf %18, %19 : vector<1x128xf32>
    %21 = vector.broadcast %20 : vector<1x128xf32> to vector<128x128xf32>
    %22 = arith.subf %16, %21 : vector<128x128xf32>
    %23 = arith.mulf %22, %22 : vector<128x128xf32>
    %cst_12 = arith.constant dense<0.000000e+00> : vector<128xf32>
    %24 = vector.multi_reduction <add>, %23, %cst_12 [0] : vector<128x128xf32> to vector<128xf32>
    %25 = vector.shape_cast %24 : vector<128xf32> to vector<1x128xf32>
    %cst_13 = arith.constant 1.280000e+02 : f32
    %26 = vector.broadcast %cst_13 : f32 to vector<1x128xf32>
    %27 = arith.divf %25, %26 : vector<1x128xf32>
    %c0_14 = arith.constant 0 : index
    %c0_15 = arith.constant 0 : index
    %28 = vector.load %arg5[%c0_14, %c0_15] : memref<1x128xf32, #tpu.memory_space<vmem>>, vector<1x128xf32>
    %cst_16 = arith.constant 8.000000e-01 : f32
    %29 = vector.broadcast %cst_16 : f32 to vector<1x128xf32>
    %30 = arith.addf %27, %29 : vector<1x128xf32>
    %31 = math.rsqrt %30 : vector<1x128xf32>
    %32 = arith.mulf %28, %31 : vector<1x128xf32>
    %33 = vector.broadcast %32 : vector<1x128xf32> to vector<128x128xf32>
    %34 = arith.mulf %22, %33 : vector<128x128xf32>
    %c0_17 = arith.constant 0 : index
    %c0_18 = arith.constant 0 : index
    %35 = vector.load %arg6[%c0_17, %c0_18] : memref<1x128xf32, #tpu.memory_space<vmem>>, vector<1x128xf32>
    %36 = vector.broadcast %35 : vector<1x128xf32> to vector<128x128xf32>
    %37 = arith.addf %34, %36 : vector<128x128xf32>
    %cst_19 = arith.constant 2.000000e-01 : f32
    %38 = vector.broadcast %cst_19 : f32 to vector<128x128xf32>
    %39 = arith.mulf %38, %37 : vector<128x128xf32>
    %40 = arith.maximumf %37, %39 : vector<128x128xf32>
    %41 = arith.truncf %40 : vector<128x128xf32> to vector<128x128xbf16>
    %c0_20 = arith.constant 0 : index
    %c0_21 = arith.constant 0 : index
    %42 = vector.load %arg7[%c0_20, %c0_21] : memref<128x256xbf16, #tpu.memory_space<vmem>>, vector<128x256xbf16>
    %cst_22 = arith.constant dense<0.000000e+00> : vector<128x256xf32>
    %43 = tpu.matmul %41, %42, %cst_22 {dimension_numbers = #tpu.dot_dimension_numbers<[1], [0], [0], [1], [0, 0, 1, 1], [], []>} : vector<128x128xbf16>, vector<128x256xbf16>, vector<128x256xf32> -> vector<128x256xf32>
    %cst_23 = arith.constant dense<0.000000e+00> : vector<256xf32>
    %44 = vector.multi_reduction <add>, %43, %cst_23 [0] : vector<128x256xf32> to vector<256xf32>
    %45 = vector.shape_cast %44 : vector<256xf32> to vector<1x256xf32>
    %cst_24 = arith.constant 1.280000e+02 : f32
    %46 = vector.broadcast %cst_24 : f32 to vector<1x256xf32>
    %47 = arith.divf %45, %46 : vector<1x256xf32>
    %48 = vector.broadcast %47 : vector<1x256xf32> to vector<128x256xf32>
    %49 = arith.subf %43, %48 : vector<128x256xf32>
    %50 = arith.mulf %49, %49 : vector<128x256xf32>
    %cst_25 = arith.constant dense<0.000000e+00> : vector<256xf32>
    %51 = vector.multi_reduction <add>, %50, %cst_25 [0] : vector<128x256xf32> to vector<256xf32>
    %52 = vector.shape_cast %51 : vector<256xf32> to vector<1x256xf32>
    %cst_26 = arith.constant 1.280000e+02 : f32
    %53 = vector.broadcast %cst_26 : f32 to vector<1x256xf32>
    %54 = arith.divf %52, %53 : vector<1x256xf32>
    %c0_27 = arith.constant 0 : index
    %c0_28 = arith.constant 0 : index
    %55 = vector.load %arg8[%c0_27, %c0_28] : memref<1x256xf32, #tpu.memory_space<vmem>>, vector<1x256xf32>
    %cst_29 = arith.constant 8.000000e-01 : f32
    %56 = vector.broadcast %cst_29 : f32 to vector<1x256xf32>
    %57 = arith.addf %54, %56 : vector<1x256xf32>
    %58 = math.rsqrt %57 : vector<1x256xf32>
    %59 = arith.mulf %55, %58 : vector<1x256xf32>
    %60 = vector.broadcast %59 : vector<1x256xf32> to vector<128x256xf32>
    %61 = arith.mulf %49, %60 : vector<128x256xf32>
    %c0_30 = arith.constant 0 : index
    %c0_31 = arith.constant 0 : index
    %62 = vector.load %arg9[%c0_30, %c0_31] : memref<1x256xf32, #tpu.memory_space<vmem>>, vector<1x256xf32>
    %63 = vector.broadcast %62 : vector<1x256xf32> to vector<128x256xf32>
    %64 = arith.addf %61, %63 : vector<128x256xf32>
    %cst_32 = arith.constant 2.000000e-01 : f32
    %65 = vector.broadcast %cst_32 : f32 to vector<128x256xf32>
    %66 = arith.mulf %65, %64 : vector<128x256xf32>
    %67 = arith.maximumf %64, %66 : vector<128x256xf32>
    %68 = arith.truncf %67 : vector<128x256xf32> to vector<128x256xbf16>
    %c0_33 = arith.constant 0 : index
    %c0_34 = arith.constant 0 : index
    %69 = vector.load %arg10[%c0_33, %c0_34] : memref<256x512xbf16, #tpu.memory_space<vmem>>, vector<256x512xbf16>
    %cst_35 = arith.constant dense<0.000000e+00> : vector<128x512xf32>
    %70 = tpu.matmul %68, %69, %cst_35 {dimension_numbers = #tpu.dot_dimension_numbers<[1], [0], [0], [1], [0, 0, 1, 1], [], []>} : vector<128x256xbf16>, vector<256x512xbf16>, vector<128x512xf32> -> vector<128x512xf32>
    %cst_36 = arith.constant dense<0.000000e+00> : vector<512xf32>
    %71 = vector.multi_reduction <add>, %70, %cst_36 [0] : vector<128x512xf32> to vector<512xf32>
    %72 = vector.shape_cast %71 : vector<512xf32> to vector<1x512xf32>
    %cst_37 = arith.constant 1.280000e+02 : f32
    %73 = vector.broadcast %cst_37 : f32 to vector<1x512xf32>
    %74 = arith.divf %72, %73 : vector<1x512xf32>
    %75 = vector.broadcast %74 : vector<1x512xf32> to vector<128x512xf32>
    %76 = arith.subf %70, %75 : vector<128x512xf32>
    %77 = arith.mulf %76, %76 : vector<128x512xf32>
    %cst_38 = arith.constant dense<0.000000e+00> : vector<512xf32>
    %78 = vector.multi_reduction <add>, %77, %cst_38 [0] : vector<128x512xf32> to vector<512xf32>
    %79 = vector.shape_cast %78 : vector<512xf32> to vector<1x512xf32>
    %cst_39 = arith.constant 1.280000e+02 : f32
    %80 = vector.broadcast %cst_39 : f32 to vector<1x512xf32>
    %81 = arith.divf %79, %80 : vector<1x512xf32>
    %c0_40 = arith.constant 0 : index
    %c0_41 = arith.constant 0 : index
    %82 = vector.load %arg11[%c0_40, %c0_41] : memref<1x512xf32, #tpu.memory_space<vmem>>, vector<1x512xf32>
    %cst_42 = arith.constant 8.000000e-01 : f32
    %83 = vector.broadcast %cst_42 : f32 to vector<1x512xf32>
    %84 = arith.addf %81, %83 : vector<1x512xf32>
    %85 = math.rsqrt %84 : vector<1x512xf32>
    %86 = arith.mulf %82, %85 : vector<1x512xf32>
    %87 = vector.broadcast %86 : vector<1x512xf32> to vector<128x512xf32>
    %88 = arith.mulf %76, %87 : vector<128x512xf32>
    %c0_43 = arith.constant 0 : index
    %c0_44 = arith.constant 0 : index
    %89 = vector.load %arg12[%c0_43, %c0_44] : memref<1x512xf32, #tpu.memory_space<vmem>>, vector<1x512xf32>
    %90 = vector.broadcast %89 : vector<1x512xf32> to vector<128x512xf32>
    %91 = arith.addf %88, %90 : vector<128x512xf32>
    %cst_45 = arith.constant 2.000000e-01 : f32
    %92 = vector.broadcast %cst_45 : f32 to vector<128x512xf32>
    %93 = arith.mulf %92, %91 : vector<128x512xf32>
    %94 = arith.maximumf %91, %93 : vector<128x512xf32>
    %95 = arith.truncf %94 : vector<128x512xf32> to vector<128x512xbf16>
    %c0_46 = arith.constant 0 : index
    %c0_47 = arith.constant 0 : index
    %96 = vector.load %arg13[%c0_46, %c0_47] : memref<512x1024xbf16, #tpu.memory_space<vmem>>, vector<512x1024xbf16>
    %cst_48 = arith.constant dense<0.000000e+00> : vector<128x1024xf32>
    %97 = tpu.matmul %95, %96, %cst_48 {dimension_numbers = #tpu.dot_dimension_numbers<[1], [0], [0], [1], [0, 0, 1, 1], [], []>} : vector<128x512xbf16>, vector<512x1024xbf16>, vector<128x1024xf32> -> vector<128x1024xf32>
    %cst_49 = arith.constant dense<0.000000e+00> : vector<1024xf32>
    %98 = vector.multi_reduction <add>, %97, %cst_49 [0] : vector<128x1024xf32> to vector<1024xf32>
    %99 = vector.shape_cast %98 : vector<1024xf32> to vector<1x1024xf32>
    %cst_50 = arith.constant 1.280000e+02 : f32
    %100 = vector.broadcast %cst_50 : f32 to vector<1x1024xf32>
    %101 = arith.divf %99, %100 : vector<1x1024xf32>
    %102 = vector.broadcast %101 : vector<1x1024xf32> to vector<128x1024xf32>
    %103 = arith.subf %97, %102 : vector<128x1024xf32>
    %104 = arith.mulf %103, %103 : vector<128x1024xf32>
    %cst_51 = arith.constant dense<0.000000e+00> : vector<1024xf32>
    %105 = vector.multi_reduction <add>, %104, %cst_51 [0] : vector<128x1024xf32> to vector<1024xf32>
    %106 = vector.shape_cast %105 : vector<1024xf32> to vector<1x1024xf32>
    %cst_52 = arith.constant 1.280000e+02 : f32
    %107 = vector.broadcast %cst_52 : f32 to vector<1x1024xf32>
    %108 = arith.divf %106, %107 : vector<1x1024xf32>
    %c0_53 = arith.constant 0 : index
    %c0_54 = arith.constant 0 : index
    %109 = vector.load %arg14[%c0_53, %c0_54] : memref<1x1024xf32, #tpu.memory_space<vmem>>, vector<1x1024xf32>
    %cst_55 = arith.constant 8.000000e-01 : f32
    %110 = vector.broadcast %cst_55 : f32 to vector<1x1024xf32>
    %111 = arith.addf %108, %110 : vector<1x1024xf32>
    %112 = math.rsqrt %111 : vector<1x1024xf32>
    %113 = arith.mulf %109, %112 : vector<1x1024xf32>
    %114 = vector.broadcast %113 : vector<1x1024xf32> to vector<128x1024xf32>
    %115 = arith.mulf %103, %114 : vector<128x1024xf32>
    %c0_56 = arith.constant 0 : index
    %c0_57 = arith.constant 0 : index
    %116 = vector.load %arg15[%c0_56, %c0_57] : memref<1x1024xf32, #tpu.memory_space<vmem>>, vector<1x1024xf32>
    %117 = vector.broadcast %116 : vector<1x1024xf32> to vector<128x1024xf32>
    %118 = arith.addf %115, %117 : vector<128x1024xf32>
    %cst_58 = arith.constant 2.000000e-01 : f32
    %119 = vector.broadcast %cst_58 : f32 to vector<128x1024xf32>
    %120 = arith.mulf %119, %118 : vector<128x1024xf32>
    %121 = arith.maximumf %118, %120 : vector<128x1024xf32>
    %122 = arith.truncf %121 : vector<128x1024xf32> to vector<128x1024xbf16>
    %c0_59 = arith.constant 0 : index
    %c0_60 = arith.constant 0 : index
    %123 = vector.load %arg16[%c0_59, %c0_60] : memref<1024x256xbf16, #tpu.memory_space<vmem>>, vector<1024x256xbf16>
    %cst_61 = arith.constant dense<0.000000e+00> : vector<128x256xf32>
    %124 = tpu.matmul %122, %123, %cst_61 {dimension_numbers = #tpu.dot_dimension_numbers<[1], [0], [0], [1], [0, 0, 1, 1], [], []>} : vector<128x1024xbf16>, vector<1024x256xbf16>, vector<128x256xf32> -> vector<128x256xf32>
    %c0_62 = arith.constant 0 : index
    %c0_63 = arith.constant 0 : index
    %125 = vector.load %arg17[%c0_62, %c0_63] : memref<1x256xf32, #tpu.memory_space<vmem>>, vector<1x256xf32>
    %126 = vector.broadcast %125 : vector<1x256xf32> to vector<128x256xf32>
    %127 = arith.addf %124, %126 : vector<128x256xf32>
    %128 = math.tanh %127 : vector<128x256xf32>
    %c0_64 = arith.constant 0 : index
    %c0_65 = arith.constant 0 : index
    %129 = vector.load %arg18[%c0_64, %c0_65] : memref<128x256xf32, #tpu.memory_space<vmem>>, vector<128x256xf32>
    tpu.vector_store %arg18[%c0_64, %c0_65], %128 {strides = array<i32>} : memref<128x256xf32, #tpu.memory_space<vmem>>, vector<128x256xf32>,
    return
  }
  func.func @transform_0(%arg0: i32) -> (i32, i32) {
    %c0_i32 = arith.constant 0 : i32
    %c0_i32_0 = arith.constant 0 : i32
    return %arg0, %c0_i32 : i32, i32
  }
  func.func @transform_1(%arg0: i32) -> (i32, i32) {
    %c0_i32 = arith.constant 0 : i32
    %c0_i32_0 = arith.constant 0 : i32
    return %arg0, %c0_i32 : i32, i32
  }
  func.func @transform_2(%arg0: i32) -> (i32, i32) {
    %c0_i32 = arith.constant 0 : i32
    %c0_i32_0 = arith.constant 0 : i32
    %c0_i32_1 = arith.constant 0 : i32
    return %c0_i32, %c0_i32_0 : i32, i32
  }
  func.func @transform_3(%arg0: i32) -> (i32, i32) {
    %c0_i32 = arith.constant 0 : i32
    %c0_i32_0 = arith.constant 0 : i32
    %c0_i32_1 = arith.constant 0 : i32
    return %c0_i32, %c0_i32_0 : i32, i32
  }
  func.func @transform_4(%arg0: i32) -> (i32, i32) {
    %c0_i32 = arith.constant 0 : i32
    %c0_i32_0 = arith.constant 0 : i32
    %c0_i32_1 = arith.constant 0 : i32
    return %c0_i32, %c0_i32_0 : i32, i32
  }
  func.func @transform_5(%arg0: i32) -> (i32, i32) {
    %c0_i32 = arith.constant 0 : i32
    %c0_i32_0 = arith.constant 0 : i32
    %c0_i32_1 = arith.constant 0 : i32
    return %c0_i32, %c0_i32_0 : i32, i32
  }
  func.func @transform_6(%arg0: i32) -> (i32, i32) {
    %c0_i32 = arith.constant 0 : i32
    %c0_i32_0 = arith.constant 0 : i32
    %c0_i32_1 = arith.constant 0 : i32
    return %c0_i32, %c0_i32_0 : i32, i32
  }
  func.func @transform_7(%arg0: i32) -> (i32, i32) {
    %c0_i32 = arith.constant 0 : i32
    %c0_i32_0 = arith.constant 0 : i32
    %c0_i32_1 = arith.constant 0 : i32
    return %c0_i32, %c0_i32_0 : i32, i32
  }
  func.func @transform_8(%arg0: i32) -> (i32, i32) {
    %c0_i32 = arith.constant 0 : i32
    %c0_i32_0 = arith.constant 0 : i32
    %c0_i32_1 = arith.constant 0 : i32
    return %c0_i32, %c0_i32_0 : i32, i32
  }
  func.func @transform_9(%arg0: i32) -> (i32, i32) {
    %c0_i32 = arith.constant 0 : i32
    %c0_i32_0 = arith.constant 0 : i32
    %c0_i32_1 = arith.constant 0 : i32
    return %c0_i32, %c0_i32_0 : i32, i32
  }
  func.func @transform_10(%arg0: i32) -> (i32, i32) {
    %c0_i32 = arith.constant 0 : i32
    %c0_i32_0 = arith.constant 0 : i32
    %c0_i32_1 = arith.constant 0 : i32
    return %c0_i32, %c0_i32_0 : i32, i32
  }
  func.func @transform_11(%arg0: i32) -> (i32, i32) {
    %c0_i32 = arith.constant 0 : i32
    %c0_i32_0 = arith.constant 0 : i32
    %c0_i32_1 = arith.constant 0 : i32
    return %c0_i32, %c0_i32_0 : i32, i32
  }
  func.func @transform_12(%arg0: i32) -> (i32, i32) {
    %c0_i32 = arith.constant 0 : i32
    %c0_i32_0 = arith.constant 0 : i32
    %c0_i32_1 = arith.constant 0 : i32
    return %c0_i32, %c0_i32_0 : i32, i32
  }
  func.func @transform_13(%arg0: i32) -> (i32, i32) {
    %c0_i32 = arith.constant 0 : i32
    %c0_i32_0 = arith.constant 0 : i32
    %c0_i32_1 = arith.constant 0 : i32
    return %c0_i32, %c0_i32_0 : i32, i32
  }
  func.func @transform_14(%arg0: i32) -> (i32, i32) {
    %c0_i32 = arith.constant 0 : i32
    %c0_i32_0 = arith.constant 0 : i32
    %c0_i32_1 = arith.constant 0 : i32
    return %c0_i32, %c0_i32_0 : i32, i32
  }
  func.func @transform_15(%arg0: i32) -> (i32, i32) {
    %c0_i32 = arith.constant 0 : i32
    %c0_i32_0 = arith.constant 0 : i32
    %c0_i32_1 = arith.constant 0 : i32
    return %c0_i32, %c0_i32_0 : i32, i32
  }
  func.func @transform_16(%arg0: i32) -> (i32, i32) {
    %c0_i32 = arith.constant 0 : i32
    %c0_i32_0 = arith.constant 0 : i32
    %c0_i32_1 = arith.constant 0 : i32
    return %c0_i32, %c0_i32_0 : i32, i32
  }
  func.func @transform_17(%arg0: i32) -> (i32, i32) {
    %c0_i32 = arith.constant 0 : i32
    %c0_i32_0 = arith.constant 0 : i32
    return %arg0, %c0_i32 : i32, i32
  }
}

</mosaic_0001>

<llo_original>
// kernel: generator_forward.1
$region0: #{generator_forward.1}
  #allocation0 [shape = 'u32[]', space=smem, size = 0x4, offset = 0x4, fixed_abs, tag = 'smem constant byte address 0x4 - core index']
  #allocation1 [shape = 'u32[144,128]{1,0:T(1,128)}', space=vmem, size = 0x12000, scoped, tag = 'internal scratch']
  %s0 = inlined_call_operand.vmem [shape: s32[512,1], index: 0, kind: input, shape index: {}]
  %s1 = inlined_call_operand.vmem [shape: f32[512,48], index: 1, kind: input, shape index: {}]
  %s2 = inlined_call_operand.vmem [shape: bf16[16,16], index: 2, kind: input, shape index: {}]
  %s3 = inlined_call_operand.vmem [shape: bf16[64,128], index: 3, kind: input, shape index: {}]
  %s4 = inlined_call_operand.vmem [shape: f32[1,128], index: 4, kind: input, shape index: {}]
  %s5 = inlined_call_operand.vmem [shape: f32[1,128], index: 5, kind: input, shape index: {}]
  %s6 = inlined_call_operand.vmem [shape: bf16[128,256], index: 6, kind: input, shape index: {}]
  %s7 = inlined_call_operand.vmem [shape: f32[1,256], index: 7, kind: input, shape index: {}]
  %s8 = inlined_call_operand.vmem [shape: f32[1,256], index: 8, kind: input, shape index: {}]
  %s9 = inlined_call_operand.hbm [shape: bf16[256,512], index: 9, kind: input, shape index: {}]
  %s10 = inlined_call_operand.vmem [shape: f32[1,512], index: 10, kind: input, shape index: {}]
  %s11 = inlined_call_operand.vmem [shape: f32[1,512], index: 11, kind: input, shape index: {}]
  %s12 = inlined_call_operand.hbm [shape: bf16[512,1024], index: 12, kind: input, shape index: {}]
  %s13 = inlined_call_operand.vmem [shape: f32[1,1024], index: 13, kind: input, shape index: {}]
  %s14 = inlined_call_operand.vmem [shape: f32[1,1024], index: 14, kind: input, shape index: {}]
  %s15 = inlined_call_operand.vmem [shape: bf16[1024,256], index: 15, kind: input, shape index: {}]
  %s16 = inlined_call_operand.vmem [shape: f32[1,256], index: 16, kind: input, shape index: {}]
  %s17 = inlined_call_operand.vmem [shape: f32[512,256], index: 17, kind: output, shape index: {}]
  %s18 = sld [smem:[#allocation0]]
  $region109: #{generator_forward.1} parent=0
    _
  %s20 = ssub.s32 1, %s18
  %s21 = scalar_select 0, %s20, %s18
  $region1: #{generator_forward.1} parent=0
    #allocation2 [shape = 'u8[262144]{0}', space=vmem, size = 0x40000, scoped, tag = 'input window, operand 9, single buffered']
    #allocation3 [shape = 's32[2]{0}', space=sflag, size = 0x8, scoped, tag = 'scoped memory for generator_forward.1']
    #allocation4 [shape = 'u8[1048576]{0}', space=vmem, size = 0x100000, scoped, tag = 'input window, operand 12, single buffered']
    #allocation5 [shape = 's32[1]{0}', space=sflag, size = 0x4, scoped, tag = 'scoped memory for generator_forward.1']
    %22 = vsyncpa [#allocation3], 0
    %23 = vsyncpa [#allocation5], 0
    loop: start=0, step=1, limit=6
    $region2: #{generator_forward.1} parent=1 // loop_pre_header
      _
    $region3: #{generator_forward.1} parent=1 // loop_header
      %s25 = sphi 0, %s29
      %p26 = scmp.ge.s32.totalorder %s25, 6
      %s35 = sphi 0, %s37
      %s38 = sphi 0, %s35
      %s39 = sphi 0, %s38
      %s55 = sphi 0, %s39
      %s61 = sphi 0, %s63
      %s64 = sphi 0, %s61
      %s65 = sphi 0, %s64
      %s81 = sphi 0, %s65
      %s85 = sphi 0, %s85
      %s87 = sphi 0, %s85
      %s88 = sphi 0, %s87
      %s102 = sphi 0, %s88
      %s106 = sphi 0, %s106
      %s108 = sphi 0, %s106
      %s109 = sphi 0, %s108
      %s123 = sphi 0, %s109
      %s127 = sphi 0, %s127
      %s129 = sphi 0, %s127
      %s130 = sphi 0, %s129
      %s144 = sphi 0, %s130
      %s148 = sphi 0, %s148
      %s150 = sphi 0, %s148
      %s151 = sphi 0, %s150
      %s165 = sphi 0, %s151
      %s169 = sphi 0, %s169
      %s171 = sphi 0, %s169
      %s172 = sphi 0, %s171
      %s186 = sphi 0, %s172
      %s190 = sphi 0, %s190
      %s192 = sphi 0, %s190
      %s193 = sphi 0, %s192
      %s207 = sphi 0, %s193
      %s211 = sphi 0, %s211
      %s213 = sphi 0, %s211
      %s214 = sphi 0, %s213
      %s228 = sphi 0, %s214
      %s232 = sphi 0, %s232
      %s234 = sphi 0, %s232
      %s235 = sphi 0, %s234
      %s249 = sphi 0, %s235
      %s253 = sphi 0, %s253
      %s255 = sphi 0, %s253
      %s256 = sphi 0, %s255
      %s270 = sphi 0, %s256
      %s274 = sphi 0, %s274
      %s276 = sphi 0, %s274
      %s277 = sphi 0, %s276
      %s291 = sphi 0, %s277
      %s295 = sphi 0, %s295
      %s297 = sphi 0, %s295
      %s298 = sphi 0, %s297
      %s312 = sphi 0, %s298
      %s316 = sphi 0, %s316
      %s318 = sphi 0, %s316
      %s319 = sphi 0, %s318
      %s333 = sphi 0, %s319
      %s337 = sphi 0, %s337
      %s339 = sphi 0, %s337
      %s340 = sphi 0, %s339
      %s354 = sphi 0, %s340
      %s358 = sphi 0, %s358
      %s360 = sphi 0, %s358
      %s361 = sphi 0, %s360
      %s375 = sphi 0, %s361
      %s379 = sphi 0, %s379
      %s381 = sphi 0, %s379
      %s382 = sphi 0, %s381
      %s396 = sphi 0, %s382
      %s402 = sphi 0, %s404
      %s405 = sphi 0, %s402
      %s406 = sphi 0, %s405
      %s422 = sphi 0, %s406
    $region4: #{generator_forward.1} parent=1 // loop_header_branch
      %28 = sbr.rel (%p26) target = $region8
    $region5: #{generator_forward.1} parent=1 // loop_body
      %s30 = ssub.s32 %s25, 1
      %s31 = ssub.s32 %s25, 2
      %s32 = sadd.s32 %s25, 1
      %s33 = ssub.s32 %s25, %s32
      %p34 = scmp.eq.s32.totalorder %s33, 0
      %s36 = sadd.s32 %s35, 1
      %s37 = scalar_select %p34, %s35, %s36
      %p40 = pneg %p34
      %p41 = scmp.eq.s32.totalorder %s25, 3
      %p42 = por %p40, %p41
      %p43 = scmp.ne.s32.totalorder %s35, %s38
      %p44 = scmp.eq.s32.totalorder %s25, 0
      %p45 = por %p43, %p44
      %p46 = scmp.ne.s32.totalorder %s35, %s38
      %p47 = scmp.eq.s32.totalorder %s30, 3
      %p48 = por %p46, %p47
      %p49 = scmp.ne.s32.totalorder %s38, %s39
      %p50 = scmp.eq.s32.totalorder %s30, 0
      %p51 = por %p49, %p50
      %p52 = scmp.ne.s32.totalorder %s38, %s39
      %p53 = scmp.eq.s32.totalorder %s31, 3
      %p54 = por %p52, %p53
      %p56 = scmp.ne.s32.totalorder %s39, %s55
      %p57 = scmp.eq.s32.totalorder %s31, 0
      %p58 = por %p56, %p57
      %s59 = ssub.s32 %s25, %s32
      %p60 = scmp.eq.s32.totalorder %s59, 0
      %s62 = sadd.s32 %s61, 1
      %s63 = scalar_select %p60, %s61, %s62
      %p66 = pneg %p60
      %p67 = scmp.eq.s32.totalorder %s25, 3
      %p68 = por %p66, %p67
      %p69 = scmp.ne.s32.totalorder %s61, %s64
      %p70 = scmp.eq.s32.totalorder %s25, 0
      %p71 = por %p69, %p70
      %p72 = scmp.ne.s32.totalorder %s61, %s64
      %p73 = scmp.eq.s32.totalorder %s30, 3
      %p74 = por %p72, %p73
      %p75 = scmp.ne.s32.totalorder %s64, %s65
      %p76 = scmp.eq.s32.totalorder %s30, 0
      %p77 = por %p75, %p76
      %p78 = scmp.ne.s32.totalorder %s64, %s65
      %p79 = scmp.eq.s32.totalorder %s31, 3
      %p80 = por %p78, %p79
      %p82 = scmp.ne.s32.totalorder %s65, %s81
      %p83 = scmp.eq.s32.totalorder %s31, 0
      %p84 = por %p82, %p83
      %s86 = sadd.s32 %s85, 1
      %p89 = scmp.eq.s32.totalorder %s25, 3
      %p90 = scmp.ne.s32.totalorder %s85, %s87
      %p91 = scmp.eq.s32.totalorder %s25, 0
      %p92 = por %p90, %p91
      %p93 = scmp.ne.s32.totalorder %s85, %s87
      %p94 = scmp.eq.s32.totalorder %s30, 3
      %p95 = por %p93, %p94
      %p96 = scmp.ne.s32.totalorder %s87, %s88
      %p97 = scmp.eq.s32.totalorder %s30, 0
      %p98 = por %p96, %p97
      %p99 = scmp.ne.s32.totalorder %s87, %s88
      %p100 = scmp.eq.s32.totalorder %s31, 3
      %p101 = por %p99, %p100
      %p103 = scmp.ne.s32.totalorder %s88, %s102
      %p104 = scmp.eq.s32.totalorder %s31, 0
      %p105 = por %p103, %p104
      %s107 = sadd.s32 %s106, 1
      %p110 = scmp.eq.s32.totalorder %s25, 3
      %p111 = scmp.ne.s32.totalorder %s106, %s108
      %p112 = scmp.eq.s32.totalorder %s25, 0
      %p113 = por %p111, %p112
      %p114 = scmp.ne.s32.totalorder %s106, %s108
      %p115 = scmp.eq.s32.totalorder %s30, 3
      %p116 = por %p114, %p115
      %p117 = scmp.ne.s32.totalorder %s108, %s109
      %p118 = scmp.eq.s32.totalorder %s30, 0
      %p119 = por %p117, %p118
      %p120 = scmp.ne.s32.totalorder %s108, %s109
      %p121 = scmp.eq.s32.totalorder %s31, 3
      %p122 = por %p120, %p121
      %p124 = scmp.ne.s32.totalorder %s109, %s123
      %p125 = scmp.eq.s32.totalorder %s31, 0
      %p126 = por %p124, %p125
      %s128 = sadd.s32 %s127, 1
      %p131 = scmp.eq.s32.totalorder %s25, 3
      %p132 = scmp.ne.s32.totalorder %s127, %s129
      %p133 = scmp.eq.s32.totalorder %s25, 0
      %p134 = por %p132, %p133
      %p135 = scmp.ne.s32.totalorder %s127, %s129
      %p136 = scmp.eq.s32.totalorder %s30, 3
      %p137 = por %p135, %p136
      %p138 = scmp.ne.s32.totalorder %s129, %s130
      %p139 = scmp.eq.s32.totalorder %s30, 0
      %p140 = por %p138, %p139
      %p141 = scmp.ne.s32.totalorder %s129, %s130
      %p142 = scmp.eq.s32.totalorder %s31, 3
      %p143 = por %p141, %p142
      %p145 = scmp.ne.s32.totalorder %s130, %s144
      %p146 = scmp.eq.s32.totalorder %s31, 0
      %p147 = por %p145, %p146
      %s149 = sadd.s32 %s148, 1
      %p152 = scmp.eq.s32.totalorder %s25, 3
      %p153 = scmp.ne.s32.totalorder %s148, %s150
      %p154 = scmp.eq.s32.totalorder %s25, 0
      %p155 = por %p153, %p154
      %p156 = scmp.ne.s32.totalorder %s148, %s150
      %p157 = scmp.eq.s32.totalorder %s30, 3
      %p158 = por %p156, %p157
      %p159 = scmp.ne.s32.totalorder %s150, %s151
      %p160 = scmp.eq.s32.totalorder %s30, 0
      %p161 = por %p159, %p160
      %p162 = scmp.ne.s32.totalorder %s150, %s151
      %p163 = scmp.eq.s32.totalorder %s31, 3
      %p164 = por %p162, %p163
      %p166 = scmp.ne.s32.totalorder %s151, %s165
      %p167 = scmp.eq.s32.totalorder %s31, 0
      %p168 = por %p166, %p167
      %s170 = sadd.s32 %s169, 1
      %p173 = scmp.eq.s32.totalorder %s25, 3
      %p174 = scmp.ne.s32.totalorder %s169, %s171
      %p175 = scmp.eq.s32.totalorder %s25, 0
      %p176 = por %p174, %p175
      %p177 = scmp.ne.s32.totalorder %s169, %s171
      %p178 = scmp.eq.s32.totalorder %s30, 3
      %p179 = por %p177, %p178
      %p180 = scmp.ne.s32.totalorder %s171, %s172
      %p181 = scmp.eq.s32.totalorder %s30, 0
      %p182 = por %p180, %p181
      %p183 = scmp.ne.s32.totalorder %s171, %s172
      %p184 = scmp.eq.s32.totalorder %s31, 3
      %p185 = por %p183, %p184
      %p187 = scmp.ne.s32.totalorder %s172, %s186
      %p188 = scmp.eq.s32.totalorder %s31, 0
      %p189 = por %p187, %p188
      %s191 = sadd.s32 %s190, 1
      %p194 = scmp.eq.s32.totalorder %s25, 3
      %p195 = scmp.ne.s32.totalorder %s190, %s192
      %p196 = scmp.eq.s32.totalorder %s25, 0
      %p197 = por %p195, %p196
      %p198 = scmp.ne.s32.totalorder %s190, %s192
      %p199 = scmp.eq.s32.totalorder %s30, 3
      %p200 = por %p198, %p199
      %p201 = scmp.ne.s32.totalorder %s192, %s193
      %p202 = scmp.eq.s32.totalorder %s30, 0
      %p203 = por %p201, %p202
      %p204 = scmp.ne.s32.totalorder %s192, %s193
      %p205 = scmp.eq.s32.totalorder %s31, 3
      %p206 = por %p204, %p205
      %p208 = scmp.ne.s32.totalorder %s193, %s207
      %p209 = scmp.eq.s32.totalorder %s31, 0
      %p210 = por %p208, %p209
      %s212 = sadd.s32 %s211, 1
      %p215 = scmp.eq.s32.totalorder %s25, 3
      %p216 = scmp.ne.s32.totalorder %s211, %s213
      %p217 = scmp.eq.s32.totalorder %s25, 0
      %p218 = por %p216, %p217
      %p219 = scmp.ne.s32.totalorder %s211, %s213
      %p220 = scmp.eq.s32.totalorder %s30, 3
      %p221 = por %p219, %p220
      %p222 = scmp.ne.s32.totalorder %s213, %s214
      %p223 = scmp.eq.s32.totalorder %s30, 0
      %p224 = por %p222, %p223
      %p225 = scmp.ne.s32.totalorder %s213, %s214
      %p226 = scmp.eq.s32.totalorder %s31, 3
      %p227 = por %p225, %p226
      %p229 = scmp.ne.s32.totalorder %s214, %s228
      %p230 = scmp.eq.s32.totalorder %s31, 0
      %p231 = por %p229, %p230
      %s233 = sadd.s32 %s232, 1
      %p236 = scmp.eq.s32.totalorder %s25, 3
      %p237 = scmp.ne.s32.totalorder %s232, %s234
      %p238 = scmp.eq.s32.totalorder %s25, 0
      %p239 = por %p237, %p238
      %p240 = scmp.ne.s32.totalorder %s232, %s234
      %p241 = scmp.eq.s32.totalorder %s30, 3
      %p242 = por %p240, %p241
      %p243 = scmp.ne.s32.totalorder %s234, %s235
      %p244 = scmp.eq.s32.totalorder %s30, 0
      %p245 = por %p243, %p244
      %p246 = scmp.ne.s32.totalorder %s234, %s235
      %p247 = scmp.eq.s32.totalorder %s31, 3
      %p248 = por %p246, %p247
      %p250 = scmp.ne.s32.totalorder %s235, %s249
      %p251 = scmp.eq.s32.totalorder %s31, 0
      %p252 = por %p250, %p251
      %s254 = sadd.s32 %s253, 1
      %p257 = scmp.eq.s32.totalorder %s25, 3
      %p258 = scmp.ne.s32.totalorder %s253, %s255
      %p259 = scmp.eq.s32.totalorder %s25, 0
      %p260 = por %p258, %p259
      %p261 = scmp.ne.s32.totalorder %s253, %s255
      %p262 = scmp.eq.s32.totalorder %s30, 3
      %p263 = por %p261, %p262
      %p264 = scmp.ne.s32.totalorder %s255, %s256
      %p265 = scmp.eq.s32.totalorder %s30, 0
      %p266 = por %p264, %p265
      %p267 = scmp.ne.s32.totalorder %s255, %s256
      %p268 = scmp.eq.s32.totalorder %s31, 3
      %p269 = por %p267, %p268
      %p271 = scmp.ne.s32.totalorder %s256, %s270
      %p272 = scmp.eq.s32.totalorder %s31, 0
      %p273 = por %p271, %p272
      %s275 = sadd.s32 %s274, 1
      %p278 = scmp.eq.s32.totalorder %s25, 3
      %p279 = scmp.ne.s32.totalorder %s274, %s276
      %p280 = scmp.eq.s32.totalorder %s25, 0
      %p281 = por %p279, %p280
      %p282 = scmp.ne.s32.totalorder %s274, %s276
      %p283 = scmp.eq.s32.totalorder %s30, 3
      %p284 = por %p282, %p283
      %p285 = scmp.ne.s32.totalorder %s276, %s277
      %p286 = scmp.eq.s32.totalorder %s30, 0
      %p287 = por %p285, %p286
      %p288 = scmp.ne.s32.totalorder %s276, %s277
      %p289 = scmp.eq.s32.totalorder %s31, 3
      %p290 = por %p288, %p289
      %p292 = scmp.ne.s32.totalorder %s277, %s291
      %p293 = scmp.eq.s32.totalorder %s31, 0
      %p294 = por %p292, %p293
      %s296 = sadd.s32 %s295, 1
      %p299 = scmp.eq.s32.totalorder %s25, 3
      %p300 = scmp.ne.s32.totalorder %s295, %s297
      %p301 = scmp.eq.s32.totalorder %s25, 0
      %p302 = por %p300, %p301
      %p303 = scmp.ne.s32.totalorder %s295, %s297
      %p304 = scmp.eq.s32.totalorder %s30, 3
      %p305 = por %p303, %p304
      %p306 = scmp.ne.s32.totalorder %s297, %s298
      %p307 = scmp.eq.s32.totalorder %s30, 0
      %p308 = por %p306, %p307
      %p309 = scmp.ne.s32.totalorder %s297, %s298
      %p310 = scmp.eq.s32.totalorder %s31, 3
      %p311 = por %p309, %p310
      %p313 = scmp.ne.s32.totalorder %s298, %s312
      %p314 = scmp.eq.s32.totalorder %s31, 0
      %p315 = por %p313, %p314
      %s317 = sadd.s32 %s316, 1
      %p320 = scmp.eq.s32.totalorder %s25, 3
      %p321 = scmp.ne.s32.totalorder %s316, %s318
      %p322 = scmp.eq.s32.totalorder %s25, 0
      %p323 = por %p321, %p322
      %p324 = scmp.ne.s32.totalorder %s316, %s318
      %p325 = scmp.eq.s32.totalorder %s30, 3
      %p326 = por %p324, %p325
      %p327 = scmp.ne.s32.totalorder %s318, %s319
      %p328 = scmp.eq.s32.totalorder %s30, 0
      %p329 = por %p327, %p328
      %p330 = scmp.ne.s32.totalorder %s318, %s319
      %p331 = scmp.eq.s32.totalorder %s31, 3
      %p332 = por %p330, %p331
      %p334 = scmp.ne.s32.totalorder %s319, %s333
      %p335 = scmp.eq.s32.totalorder %s31, 0
      %p336 = por %p334, %p335
      %s338 = sadd.s32 %s337, 1
      %p341 = scmp.eq.s32.totalorder %s25, 3
      %p342 = scmp.ne.s32.totalorder %s337, %s339
      %p343 = scmp.eq.s32.totalorder %s25, 0
      %p344 = por %p342, %p343
      %p345 = scmp.ne.s32.totalorder %s337, %s339
      %p346 = scmp.eq.s32.totalorder %s30, 3
      %p347 = por %p345, %p346
      %p348 = scmp.ne.s32.totalorder %s339, %s340
      %p349 = scmp.eq.s32.totalorder %s30, 0
      %p350 = por %p348, %p349
      %p351 = scmp.ne.s32.totalorder %s339, %s340
      %p352 = scmp.eq.s32.totalorder %s31, 3
      %p353 = por %p351, %p352
      %p355 = scmp.ne.s32.totalorder %s340, %s354
      %p356 = scmp.eq.s32.totalorder %s31, 0
      %p357 = por %p355, %p356
      %s359 = sadd.s32 %s358, 1
      %p362 = scmp.eq.s32.totalorder %s25, 3
      %p363 = scmp.ne.s32.totalorder %s358, %s360
      %p364 = scmp.eq.s32.totalorder %s25, 0
      %p365 = por %p363, %p364
      %p366 = scmp.ne.s32.totalorder %s358, %s360
      %p367 = scmp.eq.s32.totalorder %s30, 3
      %p368 = por %p366, %p367
      %p369 = scmp.ne.s32.totalorder %s360, %s361
      %p370 = scmp.eq.s32.totalorder %s30, 0
      %p371 = por %p369, %p370
      %p372 = scmp.ne.s32.totalorder %s360, %s361
      %p373 = scmp.eq.s32.totalorder %s31, 3
      %p374 = por %p372, %p373
      %p376 = scmp.ne.s32.totalorder %s361, %s375
      %p377 = scmp.eq.s32.totalorder %s31, 0
      %p378 = por %p376, %p377
      %s380 = sadd.s32 %s379, 1
      %p383 = scmp.eq.s32.totalorder %s25, 3
      %p384 = scmp.ne.s32.totalorder %s379, %s381
      %p385 = scmp.eq.s32.totalorder %s25, 0
      %p386 = por %p384, %p385
      %p387 = scmp.ne.s32.totalorder %s379, %s381
      %p388 = scmp.eq.s32.totalorder %s30, 3
      %p389 = por %p387, %p388
      %p390 = scmp.ne.s32.totalorder %s381, %s382
      %p391 = scmp.eq.s32.totalorder %s30, 0
      %p392 = por %p390, %p391
      %p393 = scmp.ne.s32.totalorder %s381, %s382
      %p394 = scmp.eq.s32.totalorder %s31, 3
      %p395 = por %p393, %p394
      %p397 = scmp.ne.s32.totalorder %s382, %s396
      %p398 = scmp.eq.s32.totalorder %s31, 0
      %p399 = por %p397, %p398
      %s400 = ssub.s32 %s25, %s32
      %p401 = scmp.eq.s32.totalorder %s400, 0
      %s403 = sadd.s32 %s402, 1
      %s404 = scalar_select %p401, %s402, %s403
      %p407 = pneg %p401
      %p408 = scmp.eq.s32.totalorder %s25, 3
      %p409 = por %p407, %p408
      %p410 = scmp.ne.s32.totalorder %s402, %s405
      %p411 = scmp.eq.s32.totalorder %s25, 0
      %p412 = por %p410, %p411
      %p413 = scmp.ne.s32.totalorder %s402, %s405
      %p414 = scmp.eq.s32.totalorder %s30, 3
      %p415 = por %p413, %p414
      %p416 = scmp.ne.s32.totalorder %s405, %s406
      %p417 = scmp.eq.s32.totalorder %s30, 0
      %p418 = por %p416, %p417
      %p419 = scmp.ne.s32.totalorder %s405, %s406
      %p420 = scmp.eq.s32.totalorder %s31, 3
      %p421 = por %p419, %p420
      %p423 = scmp.ne.s32.totalorder %s406, %s422
      %p424 = scmp.eq.s32.totalorder %s31, 0
      %p425 = por %p423, %p424
      %p426 = scmp.le.s32.totalorder 1, %s25
      %p427 = scmp.lt.s32.totalorder %s25, 5
      %p428 = pnand %p426, %p427
      %p429 = pneg %p428
      // Predicated region
      $region9: #{generator_forward.1} parent=5 // pred_check
        _
      $region10: #{generator_forward.1} parent=5 // pred_check_branch
        %431 = sbr.rel (%p428) target = $region12
      $region11: #{generator_forward.1} parent=5 // pred_region
        %s432 = ssub.s32 %s25, 1
        // Predicated region
        $region13: #{generator_forward.1} parent=11 // pred_check
          %p433 = pneg %p98
        $region14: #{generator_forward.1} parent=11 // pred_check_branch
          %435 = sbr.rel (%p433) target = $region16
        $region15: #{generator_forward.1} parent=11 // pred_region
          _
        $region16: #{generator_forward.1} parent=11 // pred_fallthru
          _
        // Predicated region
        $region17: #{generator_forward.1} parent=11 // pred_check
          %p436 = pneg %p119
        $region18: #{generator_forward.1} parent=11 // pred_check_branch
          %438 = sbr.rel (%p436) target = $region20
        $region19: #{generator_forward.1} parent=11 // pred_region
          _
        $region20: #{generator_forward.1} parent=11 // pred_fallthru
          _
        // Predicated region
        $region21: #{generator_forward.1} parent=11 // pred_check
          %p439 = pneg %p140
        $region22: #{generator_forward.1} parent=11 // pred_check_branch
          %441 = sbr.rel (%p439) target = $region24
        $region23: #{generator_forward.1} parent=11 // pred_region
          _
        $region24: #{generator_forward.1} parent=11 // pred_fallthru
          _
        // Predicated region
        $region25: #{generator_forward.1} parent=11 // pred_check
          %p442 = pneg %p161
        $region26: #{generator_forward.1} parent=11 // pred_check_branch
          %444 = sbr.rel (%p442) target = $region28
        $region27: #{generator_forward.1} parent=11 // pred_region
          _
        $region28: #{generator_forward.1} parent=11 // pred_fallthru
          _
        // Predicated region
        $region29: #{generator_forward.1} parent=11 // pred_check
          %p445 = pneg %p182
        $region30: #{generator_forward.1} parent=11 // pred_check_branch
          %447 = sbr.rel (%p445) target = $region32
        $region31: #{generator_forward.1} parent=11 // pred_region
          _
        $region32: #{generator_forward.1} parent=11 // pred_fallthru
          _
        // Predicated region
        $region33: #{generator_forward.1} parent=11 // pred_check
          %p448 = pneg %p203
        $region34: #{generator_forward.1} parent=11 // pred_check_branch
          %450 = sbr.rel (%p448) target = $region36
        $region35: #{generator_forward.1} parent=11 // pred_region
          _
        $region36: #{generator_forward.1} parent=11 // pred_fallthru
          _
        // Predicated region
        $region37: #{generator_forward.1} parent=11 // pred_check
          %p451 = pneg %p224
        $region38: #{generator_forward.1} parent=11 // pred_check_branch
          %453 = sbr.rel (%p451) target = $region40
        $region39: #{generator_forward.1} parent=11 // pred_region
          _
        $region40: #{generator_forward.1} parent=11 // pred_fallthru
          _
        // Predicated region
        $region41: #{generator_forward.1} parent=11 // pred_check
          %p454 = pneg %p245
        $region42: #{generator_forward.1} parent=11 // pred_check_branch
          %456 = sbr.rel (%p454) target = $region44
        $region43: #{generator_forward.1} parent=11 // pred_region
          %s458 = ssub.s32 8192, 8192
          %459 = vsyncadd [#allocation3], %s458
          %s460 = sshll.u32 [#allocation2], 4
          %s461 = int_to_ptr.vmem [resolvable:$true] %s460
          %466 = dma.hbm_to_vmem [thread:$0]  %s9, 8192, %s461, [#allocation3], 256, 256, 16
        $region44: #{generator_forward.1} parent=11 // pred_fallthru
          _
        // Predicated region
        $region45: #{generator_forward.1} parent=11 // pred_check
          %p467 = pneg %p266
        $region46: #{generator_forward.1} parent=11 // pred_check_branch
          %469 = sbr.rel (%p467) target = $region48
        $region47: #{generator_forward.1} parent=11 // pred_region
          _
        $region48: #{generator_forward.1} parent=11 // pred_fallthru
          _
        // Predicated region
        $region49: #{generator_forward.1} parent=11 // pred_check
          %p470 = pneg %p287
        $region50: #{generator_forward.1} parent=11 // pred_check_branch
          %472 = sbr.rel (%p470) target = $region52
        $region51: #{generator_forward.1} parent=11 // pred_region
          _
        $region52: #{generator_forward.1} parent=11 // pred_fallthru
          _
        // Predicated region
        $region53: #{generator_forward.1} parent=11 // pred_check
          %p473 = pneg %p308
        $region54: #{generator_forward.1} parent=11 // pred_check_branch
          %475 = sbr.rel (%p473) target = $region56
        $region55: #{generator_forward.1} parent=11 // pred_region
          %s477 = ssub.s32 32768, 32768
          %478 = vsyncadd [#allocation5], %s477
          %s479 = sshll.u32 [#allocation4], 4
          %s480 = int_to_ptr.vmem [resolvable:$true] %s479
          %485 = dma.hbm_to_vmem [thread:$0]  %s12, 32768, %s480, [#allocation5], 512, 512, 32
        $region56: #{generator_forward.1} parent=11 // pred_fallthru
          _
        // Predicated region
        $region57: #{generator_forward.1} parent=11 // pred_check
          %p486 = pneg %p329
        $region58: #{generator_forward.1} parent=11 // pred_check_branch
          %488 = sbr.rel (%p486) target = $region60
        $region59: #{generator_forward.1} parent=11 // pred_region
          _
        $region60: #{generator_forward.1} parent=11 // pred_fallthru
          _
        // Predicated region
        $region61: #{generator_forward.1} parent=11 // pred_check
          %p489 = pneg %p350
        $region62: #{generator_forward.1} parent=11 // pred_check_branch
          %491 = sbr.rel (%p489) target = $region64
        $region63: #{generator_forward.1} parent=11 // pred_region
          _
        $region64: #{generator_forward.1} parent=11 // pred_fallthru
          _
        // Predicated region
        $region65: #{generator_forward.1} parent=11 // pred_check
          %p492 = pneg %p371
        $region66: #{generator_forward.1} parent=11 // pred_check_branch
          %494 = sbr.rel (%p492) target = $region68
        $region67: #{generator_forward.1} parent=11 // pred_region
          _
        $region68: #{generator_forward.1} parent=11 // pred_fallthru
          _
        // Predicated region
        $region69: #{generator_forward.1} parent=11 // pred_check
          %p495 = pneg %p392
        $region70: #{generator_forward.1} parent=11 // pred_check_branch
          %497 = sbr.rel (%p495) target = $region72
        $region71: #{generator_forward.1} parent=11 // pred_region
          _
        $region72: #{generator_forward.1} parent=11 // pred_fallthru
          _
      $region12: #{generator_forward.1} parent=5 // pred_fallthru
        _
      %p498 = scmp.lt.s32.totalorder %s25, 4
      // Predicated region
      $region73: #{generator_forward.1} parent=5 // pred_check
        %p499 = pneg %p498
      $region74: #{generator_forward.1} parent=5 // pred_check_branch
        %501 = sbr.rel (%p499) target = $region76
      $region75: #{generator_forward.1} parent=5 // pred_region
        // Predicated region
        $region77: #{generator_forward.1} parent=75 // pred_check
          %p502 = pneg %p45
        $region78: #{generator_forward.1} parent=75 // pred_check_branch
          %504 = sbr.rel (%p502) target = $region80
        $region79: #{generator_forward.1} parent=75 // pred_region
          %s505 = smul.u32 16, %s25
          %p506 = scmp.lt.s32.totalorder %s505, 63
          %s507 = scalar_select %p506, %s505, 63
          %s508 = smul.addr %s507, 8
          %s509 = scalar_lea.vmem %s0, %s508
          %s510 = smul.u32 16, %s25
        $region80: #{generator_forward.1} parent=75 // pred_fallthru
          _
        // Predicated region
        $region81: #{generator_forward.1} parent=75 // pred_check
          %p511 = pneg %p71
        $region82: #{generator_forward.1} parent=75 // pred_check_branch
          %513 = sbr.rel (%p511) target = $region84
        $region83: #{generator_forward.1} parent=75 // pred_region
          %s514 = smul.u32 16, %s25
          %p515 = scmp.lt.s32.totalorder %s514, 63
          %s516 = scalar_select %p515, %s514, 63
          %s517 = smul.addr %s516, 8
          %s518 = scalar_lea.vmem %s1, %s517
          %s519 = smul.u32 16, %s25
        $region84: #{generator_forward.1} parent=75 // pred_fallthru
          _
      $region76: #{generator_forward.1} parent=5 // pred_fallthru
        _
      %p520 = scmp.le.s32.totalorder 1, %s25
      %p521 = scmp.lt.s32.totalorder %s25, 5
      %p522 = pnand %p520, %p521
      %p523 = pneg %p522
      // Predicated region
      $region85: #{generator_forward.1} parent=5 // pred_check
        _
      $region86: #{generator_forward.1} parent=5 // pred_check_branch
        %525 = sbr.rel (%p522) target = $region88
      $region87: #{generator_forward.1} parent=5 // pred_region
        %s526 = ssub.s32 %s25, 1
        // Predicated region
        $region89: #{generator_forward.1} parent=87 // pred_check
          %p527 = pneg %p245
        $region90: #{generator_forward.1} parent=87 // pred_check_branch
          %529 = sbr.rel (%p527) target = $region92
        $region91: #{generator_forward.1} parent=87 // pred_region
          %530 = dma.done [#allocation3], 8192
        $region92: #{generator_forward.1} parent=87 // pred_fallthru
          _
        // Predicated region
        $region93: #{generator_forward.1} parent=87 // pred_check
          %p531 = pneg %p308
        $region94: #{generator_forward.1} parent=87 // pred_check_branch
          %533 = sbr.rel (%p531) target = $region96
        $region95: #{generator_forward.1} parent=87 // pred_region
          %534 = dma.done [#allocation5], 32768
        $region96: #{generator_forward.1} parent=87 // pred_fallthru
          _
        %s535 = smul.u32 16, %s30
        %p536 = scmp.lt.s32.totalorder %s535, 63
        %s537 = scalar_select %p536, %s535, 63
        %s538 = smul.addr %s537, 8
        %s539 = scalar_lea.vmem %s0, %s538
        %p540 = pneg %p51
        %p541 = pneg %p48
        %s542 = smul.u32 16, %s30
        %p543 = scmp.lt.s32.totalorder %s542, 63
        %s544 = scalar_select %p543, %s542, 63
        %s545 = smul.addr %s544, 8
        %s546 = scalar_lea.vmem %s1, %s545
        %p547 = pneg %p77
        %p548 = pneg %p74
        %p549 = pneg %p98
        %p550 = pneg %p95
        %p551 = pneg %p119
        %p552 = pneg %p116
        %p553 = pneg %p140
        %p554 = pneg %p137
        %p555 = pneg %p161
        %p556 = pneg %p158
        %p557 = pneg %p182
        %p558 = pneg %p179
        %p559 = pneg %p203
        %p560 = pneg %p200
        %p561 = pneg %p224
        %p562 = pneg %p221
        %p563 = pneg %p245
        %p564 = pneg %p242
        %p565 = pneg %p266
        %p566 = pneg %p263
        %p567 = pneg %p287
        %p568 = pneg %p284
        %p569 = pneg %p308
        %p570 = pneg %p305
        %p571 = pneg %p329
        %p572 = pneg %p326
        %p573 = pneg %p350
        %p574 = pneg %p347
        %p575 = pneg %p371
        %p576 = pneg %p368
        %p577 = pneg %p392
        %p578 = pneg %p389
        %p579 = pneg %p418
        %p580 = pneg %p415
        %s581 = smul.u32 16, %s30
        %p582 = scmp.lt.s32.totalorder %s581, 63
        %s583 = scalar_select %p582, %s581, 63
        %s584 = smul.addr %s583, 2
        %s585 = smul.addr %s584, 8
        %s586 = scalar_lea.vmem %s17, %s585
        %s587 = smul.u32 16, %s30
        %p588 = scmp.lt.s32.totalorder %s587, 63
        %s589 = scalar_select %p588, %s587, 63
        %s590 = smul.addr %s589, 8
        %s591 = scalar_lea.vmem %s0, %s590
        %s592 = smul.u32 16, %s30
        %s593 = smul.u32 16, %s30
        %p594 = scmp.lt.s32.totalorder %s593, 63
        %s595 = scalar_select %p594, %s593, 63
        %s596 = smul.addr %s595, 8
        %s597 = scalar_lea.vmem %s1, %s596
        %s598 = smul.u32 16, %s30
        %s599 = smul.u32 16, %s30
        %p600 = scmp.lt.s32.totalorder %s599, 63
        %s601 = scalar_select %p600, %s599, 63
        %s602 = smul.addr %s601, 2
        %s603 = smul.addr %s602, 8
        %s604 = scalar_lea.vmem %s17, %s603
        %s605 = smul.u32 16, %s30
        %v607 = vld [vmem:[%s591] sm:$0xff]
        %v608 = vld [vmem:[%s591 + $0x8] sm:$0xff]
        %v609 = vld [vmem:[%s591 + $0x10] sm:$0xff]
        %v610 = vld [vmem:[%s591 + $0x18] sm:$0xff]
        %v611 = vld [vmem:[%s591 + $0x20] sm:$0xff]
        %v612 = vld [vmem:[%s591 + $0x28] sm:$0xff]
        %v613 = vld [vmem:[%s591 + $0x30] sm:$0xff]
        %v614 = vld [vmem:[%s591 + $0x38] sm:$0xff]
        %v615 = vld [vmem:[%s591 + $0x40] sm:$0xff]
        %v616 = vld [vmem:[%s591 + $0x48] sm:$0xff]
        %v617 = vld [vmem:[%s591 + $0x50] sm:$0xff]
        %v618 = vld [vmem:[%s591 + $0x58] sm:$0xff]
        %v619 = vld [vmem:[%s591 + $0x60] sm:$0xff]
        %v620 = vld [vmem:[%s591 + $0x68] sm:$0xff]
        %v621 = vld [vmem:[%s591 + $0x70] sm:$0xff]
        %v622 = vld [vmem:[%s591 + $0x78] sm:$0xff]
        %v623 = vlaneseq
        %v624 = vand.u32 %v623, 127
        %625 = vset.pattern.permute.xlu0 0
        %626 = vperm.xlu0 %625, %v607
        %v627 = vpop.permute.xlu0 %626
        %628 = vset.pattern.permute.xlu0 0
        %629 = vperm.xlu0 %628, %v608
        %v630 = vpop.permute.xlu0 %629
        %631 = vset.pattern.permute.xlu0 0
        %632 = vperm.xlu0 %631, %v609
        %v633 = vpop.permute.xlu0 %632
        %634 = vset.pattern.permute.xlu0 0
        %635 = vperm.xlu0 %634, %v610
        %v636 = vpop.permute.xlu0 %635
        %637 = vset.pattern.permute.xlu0 0
        %638 = vperm.xlu0 %637, %v611
        %v639 = vpop.permute.xlu0 %638
        %640 = vset.pattern.permute.xlu0 0
        %641 = vperm.xlu0 %640, %v612
        %v642 = vpop.permute.xlu0 %641
        %643 = vset.pattern.permute.xlu0 0
        %644 = vperm.xlu0 %643, %v613
        %v645 = vpop.permute.xlu0 %644
        %646 = vset.pattern.permute.xlu0 0
        %647 = vperm.xlu0 %646, %v614
        %v648 = vpop.permute.xlu0 %647
        %649 = vset.pattern.permute.xlu0 0
        %650 = vperm.xlu0 %649, %v615
        %v651 = vpop.permute.xlu0 %650
        %652 = vset.pattern.permute.xlu0 0
        %653 = vperm.xlu0 %652, %v616
        %v654 = vpop.permute.xlu0 %653
        %655 = vset.pattern.permute.xlu0 0
        %656 = vperm.xlu0 %655, %v617
        %v657 = vpop.permute.xlu0 %656
        %658 = vset.pattern.permute.xlu0 0
        %659 = vperm.xlu0 %658, %v618
        %v660 = vpop.permute.xlu0 %659
        %661 = vset.pattern.permute.xlu0 0
        %662 = vperm.xlu0 %661, %v619
        %v663 = vpop.permute.xlu0 %662
        %664 = vset.pattern.permute.xlu0 0
        %665 = vperm.xlu0 %664, %v620
        %v666 = vpop.permute.xlu0 %665
        %667 = vset.pattern.permute.xlu0 0
        %668 = vperm.xlu0 %667, %v621
        %v669 = vpop.permute.xlu0 %668
        %670 = vset.pattern.permute.xlu0 0
        %671 = vperm.xlu0 %670, %v622
        %v672 = vpop.permute.xlu0 %671
        %vm673 = vcmp.eq.s32.totalorder %v627, %v624
        %vm674 = vcmp.eq.s32.totalorder %v630, %v624
        %vm675 = vcmp.eq.s32.totalorder %v633, %v624
        %vm676 = vcmp.eq.s32.totalorder %v636, %v624
        %vm677 = vcmp.eq.s32.totalorder %v639, %v624
        %vm678 = vcmp.eq.s32.totalorder %v642, %v624
        %vm679 = vcmp.eq.s32.totalorder %v645, %v624
        %vm680 = vcmp.eq.s32.totalorder %v648, %v624
        %vm681 = vcmp.eq.s32.totalorder %v651, %v624
        %vm682 = vcmp.eq.s32.totalorder %v654, %v624
        %vm683 = vcmp.eq.s32.totalorder %v657, %v624
        %vm684 = vcmp.eq.s32.totalorder %v660, %v624
        %vm685 = vcmp.eq.s32.totalorder %v663, %v624
        %vm686 = vcmp.eq.s32.totalorder %v666, %v624
        %vm687 = vcmp.eq.s32.totalorder %v669, %v624
        %vm688 = vcmp.eq.s32.totalorder %v672, %v624
        %v689 = vsel %vm673, 1, 0
        %v690 = vsel %vm674, 1, 0
        %v691 = vsel %vm675, 1, 0
        %v692 = vsel %vm676, 1, 0
        %v693 = vsel %vm677, 1, 0
        %v694 = vsel %vm678, 1, 0
        %v695 = vsel %vm679, 1, 0
        %v696 = vsel %vm680, 1, 0
        %v697 = vsel %vm681, 1, 0
        %v698 = vsel %vm682, 1, 0
        %v699 = vsel %vm683, 1, 0
        %v700 = vsel %vm684, 1, 0
        %v701 = vsel %vm685, 1, 0
        %v702 = vsel %vm686, 1, 0
        %v703 = vsel %vm687, 1, 0
        %v704 = vsel %vm688, 1, 0
        %v705 = vcvt.s32.f32 %v689
        %v706 = vcvt.s32.f32 %v690
        %v707 = vcvt.s32.f32 %v691
        %v708 = vcvt.s32.f32 %v692
        %v709 = vcvt.s32.f32 %v693
        %v710 = vcvt.s32.f32 %v694
        %v711 = vcvt.s32.f32 %v695
        %v712 = vcvt.s32.f32 %v696
        %v713 = vcvt.s32.f32 %v697
        %v714 = vcvt.s32.f32 %v698
        %v715 = vcvt.s32.f32 %v699
        %v716 = vcvt.s32.f32 %v700
        %v717 = vcvt.s32.f32 %v701
        %v718 = vcvt.s32.f32 %v702
        %v719 = vcvt.s32.f32 %v703
        %v720 = vcvt.s32.f32 %v704
        %v721 = vpack.c.bf16 %v706, %v705
        %v722 = vpack.c.bf16 %v708, %v707
        %v723 = vpack.c.bf16 %v710, %v709
        %v724 = vpack.c.bf16 %v712, %v711
        %v725 = vpack.c.bf16 %v714, %v713
        %v726 = vpack.c.bf16 %v716, %v715
        %v727 = vpack.c.bf16 %v718, %v717
        %v728 = vpack.c.bf16 %v720, %v719
        %v729 = vld [vmem:[%s2] sm:$0xf]
        %v730 = vld [vmem:[%s2 + $0x4] sm:$0xf]
        %v733 = vunpack.c.l.b16 %v729
        %v734 = vunpack.c.l.b16 %v730
        %v735 = vpack.c.b16 %v734, %v733
        %vm737 = vcmask 130048
        %v739 = vsel %vm737, %v721, 0
        %v742 = vsel %vm737, %v722, 0
        %v745 = vsel %vm737, %v723, 0
        %v748 = vsel %vm737, %v724, 0
        %v751 = vsel %vm737, %v725, 0
        %v754 = vsel %vm737, %v726, 0
        %v757 = vsel %vm737, %v727, 0
        %v760 = vsel %vm737, %v728, 0
        %762 = vmatprep.subr.bf16.mxu0 0
        %763 = vmatpush1.bf16.msra.mxu0 0
        %764 = vmatprep.subr.bf16.mxu0 0
        %765 = vmatpush1.bf16.msra.mxu0 0
        %766 = vmatprep.subr.bf16.mxu0 0
        %767 = vmatpush1.bf16.msra.mxu0 0
        %768 = vmatprep.subr.bf16.mxu0 0
        %769 = vmatpush1.bf16.msra.mxu0 0
        %770 = vmatprep.subr.bf16.mxu0 0
        %771 = vmatpush1.bf16.msra.mxu0 0
        %772 = vmatprep.subr.bf16.mxu0 0
        %773 = vmatpush1.bf16.msra.mxu0 0
        %774 = vmatprep.subr.bf16.mxu0 0
        %775 = vmatpush1.bf16.msra.mxu0 0
        %776 = vmatprep.subr.bf16.mxu0 0
        %777 = vmatpush1.bf16.msra.mxu0 %v735
        %778 = vmatprep.subr.bf16.mxu0 0
        %779 = vmatpush2.bf16.msra.mxu0 0
        %780 = vmatprep.subr.bf16.mxu0 0
        %781 = vmatpush2.bf16.msra.mxu0 0
        %782 = vmatprep.subr.bf16.mxu0 0
        %783 = vmatpush2.bf16.msra.mxu0 0
        %784 = vmatprep.subr.bf16.mxu0 0
        %785 = vmatpush2.bf16.msra.mxu0 0
        %786 = vmatprep.subr.bf16.mxu0 0
        %787 = vmatpush2.bf16.msra.mxu0 0
        %788 = vmatprep.subr.bf16.mxu0 0
        %789 = vmatpush2.bf16.msra.mxu0 0
        %790 = vmatprep.subr.bf16.mxu0 0
        %791 = vmatpush2.bf16.msra.mxu0 0
        %792 = vmatprep.subr.bf16.mxu0 0
        %793 = vmatpush2.bf16.msra.mxu0 0
        %794 = vmatprep.mubr.bf16.mxu0 0
        %795 = vmatmul.mubr.bf16.gmra.mxu0 %v739
        %v796 = vpop.f32.mrf.mxu0
        %v797 = vadd.f32 0.0, %v796
        %v798 = vpop.f32.mrf.mxu0
        %v799 = vpop.f32.mrf.mxu0
        %v800 = vadd.f32 0.0, %v799
        %v801 = vpop.f32.mrf.mxu0
        %802 = vmatprep.mubr.bf16.mxu0 0
        %803 = vmatmul.mubr.bf16.gmra.mxu0 %v742
        %v804 = vpop.f32.mrf.mxu0
        %v805 = vadd.f32 0.0, %v804
        %v806 = vpop.f32.mrf.mxu0
        %v807 = vpop.f32.mrf.mxu0
        %v808 = vadd.f32 0.0, %v807
        %v809 = vpop.f32.mrf.mxu0
        %810 = vmatprep.mubr.bf16.mxu0 0
        %811 = vmatmul.mubr.bf16.gmra.mxu0 %v745
        %v812 = vpop.f32.mrf.mxu0
        %v813 = vadd.f32 0.0, %v812
        %v814 = vpop.f32.mrf.mxu0
        %v815 = vpop.f32.mrf.mxu0
        %v816 = vadd.f32 0.0, %v815
        %v817 = vpop.f32.mrf.mxu0
        %818 = vmatprep.mubr.bf16.mxu0 0
        %819 = vmatmul.mubr.bf16.gmra.mxu0 %v748
        %v820 = vpop.f32.mrf.mxu0
        %v821 = vadd.f32 0.0, %v820
        %v822 = vpop.f32.mrf.mxu0
        %v823 = vpop.f32.mrf.mxu0
        %v824 = vadd.f32 0.0, %v823
        %v825 = vpop.f32.mrf.mxu0
        %826 = vmatprep.mubr.bf16.mxu0 0
        %827 = vmatmul.mubr.bf16.gmra.mxu0 %v751
        %v828 = vpop.f32.mrf.mxu0
        %v829 = vadd.f32 0.0, %v828
        %v830 = vpop.f32.mrf.mxu0
        %v831 = vpop.f32.mrf.mxu0
        %v832 = vadd.f32 0.0, %v831
        %v833 = vpop.f32.mrf.mxu0
        %834 = vmatprep.mubr.bf16.mxu0 0
        %835 = vmatmul.mubr.bf16.gmra.mxu0 %v754
        %v836 = vpop.f32.mrf.mxu0
        %v837 = vadd.f32 0.0, %v836
        %v838 = vpop.f32.mrf.mxu0
        %v839 = vpop.f32.mrf.mxu0
        %v840 = vadd.f32 0.0, %v839
        %v841 = vpop.f32.mrf.mxu0
        %842 = vmatprep.mubr.bf16.mxu0 0
        %843 = vmatmul.mubr.bf16.gmra.mxu0 %v757
        %v844 = vpop.f32.mrf.mxu0
        %v845 = vadd.f32 0.0, %v844
        %v846 = vpop.f32.mrf.mxu0
        %v847 = vpop.f32.mrf.mxu0
        %v848 = vadd.f32 0.0, %v847
        %v849 = vpop.f32.mrf.mxu0
        %850 = vmatprep.mubr.bf16.mxu0 0
        %851 = vmatmul.mubr.bf16.gmra.mxu0 %v760
        %v852 = vpop.f32.mrf.mxu0
        %v853 = vadd.f32 0.0, %v852
        %v854 = vpop.f32.mrf.mxu0
        %v855 = vpop.f32.mrf.mxu0
        %v856 = vadd.f32 0.0, %v855
        %v857 = vpop.f32.mrf.mxu0
        %858 = vdwg.mxu0
        %v859 = vpack.c.bf16 %v800, %v797
        %v860 = vpack.c.bf16 %v808, %v805
        %v861 = vpack.c.bf16 %v816, %v813
        %v862 = vpack.c.bf16 %v824, %v821
        %v863 = vpack.c.bf16 %v832, %v829
        %v864 = vpack.c.bf16 %v840, %v837
        %v865 = vpack.c.bf16 %v848, %v845
        %v866 = vpack.c.bf16 %v856, %v853
        %v867 = vld [vmem:[%s3] sm:$0xf]
        %v868 = vld [vmem:[%s3 + $0x4] sm:$0xf]
        %v869 = vld [vmem:[%s597] sm:$0xff]
        %v870 = vld [vmem:[%s597 + $0x8] sm:$0xff]
        %v871 = vld [vmem:[%s597 + $0x10] sm:$0xff]
        %v872 = vld [vmem:[%s597 + $0x18] sm:$0xff]
        %v873 = vld [vmem:[%s597 + $0x20] sm:$0xff]
        %v874 = vld [vmem:[%s597 + $0x28] sm:$0xff]
        %v875 = vld [vmem:[%s597 + $0x30] sm:$0xff]
        %v876 = vld [vmem:[%s597 + $0x38] sm:$0xff]
        %v877 = vld [vmem:[%s597 + $0x40] sm:$0xff]
        %v878 = vld [vmem:[%s597 + $0x48] sm:$0xff]
        %v879 = vld [vmem:[%s597 + $0x50] sm:$0xff]
        %v880 = vld [vmem:[%s597 + $0x58] sm:$0xff]
        %v881 = vld [vmem:[%s597 + $0x60] sm:$0xff]
        %v882 = vld [vmem:[%s597 + $0x68] sm:$0xff]
        %v883 = vld [vmem:[%s597 + $0x70] sm:$0xff]
        %v884 = vld [vmem:[%s597 + $0x78] sm:$0xff]
        %v885 = vpack.c.bf16 %v870, %v869
        %v886 = vpack.c.bf16 %v872, %v871
        %v887 = vpack.c.bf16 %v874, %v873
        %v888 = vpack.c.bf16 %v876, %v875
        %v889 = vpack.c.bf16 %v878, %v877
        %v890 = vpack.c.bf16 %v880, %v879
        %v891 = vpack.c.bf16 %v882, %v881
        %v892 = vpack.c.bf16 %v884, %v883
        %v893 = vld [vmem:[%s3 + $0x8] sm:$0xf]
        %v894 = vld [vmem:[%s3 + $0xc] sm:$0xf]
        %v895 = vld [vmem:[%s3 + $0x10] sm:$0xf]
        %v896 = vld [vmem:[%s3 + $0x14] sm:$0xf]
        %v897 = vld [vmem:[%s3 + $0x18] sm:$0xf]
        %v898 = vld [vmem:[%s3 + $0x1c] sm:$0xf]
        %v905 = vunpack.c.l.b16 %v893
        %v906 = vunpack.c.l.b16 %v894
        %v907 = vunpack.c.l.b16 %v895
        %v908 = vunpack.c.l.b16 %v896
        %v909 = vunpack.c.l.b16 %v897
        %v910 = vunpack.c.l.b16 %v898
        %v911 = vpack.c.b16 %v906, %v905
        %v912 = vpack.c.b16 %v908, %v907
        %v913 = vpack.c.b16 %v910, %v909
        %vm917 = vcmask 392192
        %v919 = vsel %vm917, %v885, 0
        %v922 = vsel %vm917, %v886, 0
        %v925 = vsel %vm917, %v887, 0
        %v928 = vsel %vm917, %v888, 0
        %v931 = vsel %vm917, %v889, 0
        %v934 = vsel %vm917, %v890, 0
        %v937 = vsel %vm917, %v891, 0
        %v940 = vsel %vm917, %v892, 0
        %942 = vmatprep.subr.bf16.mxu0 0
        %943 = vmatpush1.bf16.msra.mxu0 0
        %944 = vmatprep.subr.bf16.mxu0 0
        %945 = vmatpush1.bf16.msra.mxu0 0
        %946 = vmatprep.subr.bf16.mxu0 0
        %947 = vmatpush1.bf16.msra.mxu0 0
        %948 = vmatprep.subr.bf16.mxu0 0
        %949 = vmatpush1.bf16.msra.mxu0 0
        %950 = vmatprep.subr.bf16.mxu0 0
        %951 = vmatpush1.bf16.msra.mxu0 0
        %952 = vmatprep.subr.bf16.mxu0 0
        %953 = vmatpush1.bf16.msra.mxu0 %v913
        %954 = vmatprep.subr.bf16.mxu0 0
        %955 = vmatpush1.bf16.msra.mxu0 %v912
        %956 = vmatprep.subr.bf16.mxu0 0
        %957 = vmatpush1.bf16.msra.mxu0 %v911
        %958 = vmatprep.subr.bf16.mxu0 0
        %959 = vmatpush2.bf16.msra.mxu0 0
        %960 = vmatprep.subr.bf16.mxu0 0
        %961 = vmatpush2.bf16.msra.mxu0 0
        %962 = vmatprep.subr.bf16.mxu0 0
        %963 = vmatpush2.bf16.msra.mxu0 0
        %964 = vmatprep.subr.bf16.mxu0 0
        %965 = vmatpush2.bf16.msra.mxu0 0
        %966 = vmatprep.subr.bf16.mxu0 0
        %967 = vmatpush2.bf16.msra.mxu0 0
        %968 = vmatprep.subr.bf16.mxu0 0
        %969 = vmatpush2.bf16.msra.mxu0 0
        %970 = vmatprep.subr.bf16.mxu0 0
        %971 = vmatpush2.bf16.msra.mxu0 0
        %972 = vmatprep.subr.bf16.mxu0 0
        %973 = vmatpush2.bf16.msra.mxu0 0
        %974 = vmatprep.mubr.bf16.mxu0 0
        %975 = vmatmul.mubr.bf16.gmra.mxu0 %v919
        %v976 = vpop.f32.mrf.mxu0
        %v977 = vadd.f32 0.0, %v976
        %v978 = vpop.f32.mrf.mxu0
        %v979 = vpop.f32.mrf.mxu0
        %v980 = vadd.f32 0.0, %v979
        %v981 = vpop.f32.mrf.mxu0
        %982 = vmatprep.mubr.bf16.mxu0 0
        %983 = vmatmul.mubr.bf16.gmra.mxu0 %v922
        %v984 = vpop.f32.mrf.mxu0
        %v985 = vadd.f32 0.0, %v984
        %v986 = vpop.f32.mrf.mxu0
        %v987 = vpop.f32.mrf.mxu0
        %v988 = vadd.f32 0.0, %v987
        %v989 = vpop.f32.mrf.mxu0
        %990 = vmatprep.mubr.bf16.mxu0 0
        %991 = vmatmul.mubr.bf16.gmra.mxu0 %v925
        %v992 = vpop.f32.mrf.mxu0
        %v993 = vadd.f32 0.0, %v992
        %v994 = vpop.f32.mrf.mxu0
        %v995 = vpop.f32.mrf.mxu0
        %v996 = vadd.f32 0.0, %v995
        %v997 = vpop.f32.mrf.mxu0
        %998 = vmatprep.mubr.bf16.mxu0 0
        %999 = vmatmul.mubr.bf16.gmra.mxu0 %v928
        %v1000 = vpop.f32.mrf.mxu0
        %v1001 = vadd.f32 0.0, %v1000
        %v1002 = vpop.f32.mrf.mxu0
        %v1003 = vpop.f32.mrf.mxu0
        %v1004 = vadd.f32 0.0, %v1003
        %v1005 = vpop.f32.mrf.mxu0
        %1006 = vmatprep.mubr.bf16.mxu0 0
        %1007 = vmatmul.mubr.bf16.gmra.mxu0 %v931
        %v1008 = vpop.f32.mrf.mxu0
        %v1009 = vadd.f32 0.0, %v1008
        %v1010 = vpop.f32.mrf.mxu0
        %v1011 = vpop.f32.mrf.mxu0
        %v1012 = vadd.f32 0.0, %v1011
        %v1013 = vpop.f32.mrf.mxu0
        %1014 = vmatprep.mubr.bf16.mxu0 0
        %1015 = vmatmul.mubr.bf16.gmra.mxu0 %v934
        %v1016 = vpop.f32.mrf.mxu0
        %v1017 = vadd.f32 0.0, %v1016
        %v1018 = vpop.f32.mrf.mxu0
        %v1019 = vpop.f32.mrf.mxu0
        %v1020 = vadd.f32 0.0, %v1019
        %v1021 = vpop.f32.mrf.mxu0
        %1022 = vmatprep.mubr.bf16.mxu0 0
        %1023 = vmatmul.mubr.bf16.gmra.mxu0 %v937
        %v1024 = vpop.f32.mrf.mxu0
        %v1025 = vadd.f32 0.0, %v1024
        %v1026 = vpop.f32.mrf.mxu0
        %v1027 = vpop.f32.mrf.mxu0
        %v1028 = vadd.f32 0.0, %v1027
        %v1029 = vpop.f32.mrf.mxu0
        %1030 = vmatprep.mubr.bf16.mxu0 0
        %1031 = vmatmul.mubr.bf16.gmra.mxu0 %v940
        %v1032 = vpop.f32.mrf.mxu0
        %v1033 = vadd.f32 0.0, %v1032
        %v1034 = vpop.f32.mrf.mxu0
        %v1035 = vpop.f32.mrf.mxu0
        %v1036 = vadd.f32 0.0, %v1035
        %v1037 = vpop.f32.mrf.mxu0
        %1038 = vdwg.mxu0
        %v1041 = vunpack.c.l.b16 %v867
        %v1042 = vunpack.c.l.b16 %v868
        %v1043 = vpack.c.b16 %v1042, %v1041
        %v1046 = vsel %vm737, %v859, 0
        %v1049 = vsel %vm737, %v860, 0
        %v1052 = vsel %vm737, %v861, 0
        %v1055 = vsel %vm737, %v862, 0
        %v1058 = vsel %vm737, %v863, 0
        %v1061 = vsel %vm737, %v864, 0
        %v1064 = vsel %vm737, %v865, 0
        %v1067 = vsel %vm737, %v866, 0
        %1069 = vmatprep.subr.bf16.mxu0 0
        %1070 = vmatpush1.bf16.msra.mxu0 0
        %1071 = vmatprep.subr.bf16.mxu0 0
        %1072 = vmatpush1.bf16.msra.mxu0 0
        %1073 = vmatprep.subr.bf16.mxu0 0
        %1074 = vmatpush1.bf16.msra.mxu0 0
        %1075 = vmatprep.subr.bf16.mxu0 0
        %1076 = vmatpush1.bf16.msra.mxu0 0
        %1077 = vmatprep.subr.bf16.mxu0 0
        %1078 = vmatpush1.bf16.msra.mxu0 0
        %1079 = vmatprep.subr.bf16.mxu0 0
        %1080 = vmatpush1.bf16.msra.mxu0 0
        %1081 = vmatprep.subr.bf16.mxu0 0
        %1082 = vmatpush1.bf16.msra.mxu0 0
        %1083 = vmatprep.subr.bf16.mxu0 0
        %1084 = vmatpush1.bf16.msra.mxu0 %v1043
        %1085 = vmatprep.subr.bf16.mxu0 0
        %1086 = vmatpush2.bf16.msra.mxu0 0
        %1087 = vmatprep.subr.bf16.mxu0 0
        %1088 = vmatpush2.bf16.msra.mxu0 0
        %1089 = vmatprep.subr.bf16.mxu0 0
        %1090 = vmatpush2.bf16.msra.mxu0 0
        %1091 = vmatprep.subr.bf16.mxu0 0
        %1092 = vmatpush2.bf16.msra.mxu0 0
        %1093 = vmatprep.subr.bf16.mxu0 0
        %1094 = vmatpush2.bf16.msra.mxu0 0
        %1095 = vmatprep.subr.bf16.mxu0 0
        %1096 = vmatpush2.bf16.msra.mxu0 0
        %1097 = vmatprep.subr.bf16.mxu0 0
        %1098 = vmatpush2.bf16.msra.mxu0 0
        %1099 = vmatprep.subr.bf16.mxu0 0
        %1100 = vmatpush2.bf16.msra.mxu0 0
        %1101 = vmatprep.mubr.bf16.mxu0 0
        %1102 = vmatmul.mubr.bf16.gmra.mxu0 %v1046
        %v1103 = vpop.f32.mrf.mxu0
        %v1104 = vadd.f32 %v977, %v1103
        %v1105 = vpop.f32.mrf.mxu0
        %v1106 = vpop.f32.mrf.mxu0
        %v1107 = vadd.f32 %v980, %v1106
        %v1108 = vpop.f32.mrf.mxu0
        %1109 = vmatprep.mubr.bf16.mxu0 0
        %1110 = vmatmul.mubr.bf16.gmra.mxu0 %v1049
        %v1111 = vpop.f32.mrf.mxu0
        %v1112 = vadd.f32 %v985, %v1111
        %v1113 = vpop.f32.mrf.mxu0
        %v1114 = vpop.f32.mrf.mxu0
        %v1115 = vadd.f32 %v988, %v1114
        %v1116 = vpop.f32.mrf.mxu0
        %1117 = vmatprep.mubr.bf16.mxu0 0
        %1118 = vmatmul.mubr.bf16.gmra.mxu0 %v1052
        %v1119 = vpop.f32.mrf.mxu0
        %v1120 = vadd.f32 %v993, %v1119
        %v1121 = vpop.f32.mrf.mxu0
        %v1122 = vpop.f32.mrf.mxu0
        %v1123 = vadd.f32 %v996, %v1122
        %v1124 = vpop.f32.mrf.mxu0
        %1125 = vmatprep.mubr.bf16.mxu0 0
        %1126 = vmatmul.mubr.bf16.gmra.mxu0 %v1055
        %v1127 = vpop.f32.mrf.mxu0
        %v1128 = vadd.f32 %v1001, %v1127
        %v1129 = vpop.f32.mrf.mxu0
        %v1130 = vpop.f32.mrf.mxu0
        %v1131 = vadd.f32 %v1004, %v1130
        %v1132 = vpop.f32.mrf.mxu0
        %1133 = vmatprep.mubr.bf16.mxu0 0
        %1134 = vmatmul.mubr.bf16.gmra.mxu0 %v1058
        %v1135 = vpop.f32.mrf.mxu0
        %v1136 = vadd.f32 %v1009, %v1135
        %v1137 = vpop.f32.mrf.mxu0
        %v1138 = vpop.f32.mrf.mxu0
        %v1139 = vadd.f32 %v1012, %v1138
        %v1140 = vpop.f32.mrf.mxu0
        %1141 = vmatprep.mubr.bf16.mxu0 0
        %1142 = vmatmul.mubr.bf16.gmra.mxu0 %v1061
        %v1143 = vpop.f32.mrf.mxu0
        %v1144 = vadd.f32 %v1017, %v1143
        %v1145 = vpop.f32.mrf.mxu0
        %v1146 = vpop.f32.mrf.mxu0
        %v1147 = vadd.f32 %v1020, %v1146
        %v1148 = vpop.f32.mrf.mxu0
        %1149 = vmatprep.mubr.bf16.mxu0 0
        %1150 = vmatmul.mubr.bf16.gmra.mxu0 %v1064
        %v1151 = vpop.f32.mrf.mxu0
        %v1152 = vadd.f32 %v1025, %v1151
        %v1153 = vpop.f32.mrf.mxu0
        %v1154 = vpop.f32.mrf.mxu0
        %v1155 = vadd.f32 %v1028, %v1154
        %v1156 = vpop.f32.mrf.mxu0
        %1157 = vmatprep.mubr.bf16.mxu0 0
        %1158 = vmatmul.mubr.bf16.gmra.mxu0 %v1067
        %v1159 = vpop.f32.mrf.mxu0
        %v1160 = vadd.f32 %v1033, %v1159
        %v1161 = vpop.f32.mrf.mxu0
        %v1162 = vpop.f32.mrf.mxu0
        %v1163 = vadd.f32 %v1036, %v1162
        %v1164 = vpop.f32.mrf.mxu0
        %1165 = vdwg.mxu0
        %v1166 = vadd.f32 %v1104, %v1107
        %v1167 = vadd.f32 %v1166, %v1112
        %v1168 = vadd.f32 %v1167, %v1115
        %v1169 = vadd.f32 %v1168, %v1120
        %v1170 = vadd.f32 %v1169, %v1123
        %v1171 = vadd.f32 %v1170, %v1128
        %v1172 = vadd.f32 %v1171, %v1131
        %v1173 = vadd.f32 %v1172, %v1136
        %v1174 = vadd.f32 %v1173, %v1139
        %v1175 = vadd.f32 %v1174, %v1144
        %v1176 = vadd.f32 %v1175, %v1147
        %v1177 = vadd.f32 %v1176, %v1152
        %v1178 = vadd.f32 %v1177, %v1155
        %v1179 = vadd.f32 %v1178, %v1160
        %v1180 = vadd.f32 %v1179, %v1163
        %v1181 = vrot.slane %v1180, 4
        %v1182 = vadd.f32 %v1180, %v1181
        %v1183 = vrot.slane %v1182, 2
        %v1184 = vadd.f32 %v1182, %v1183
        %v1185 = vrot.slane %v1184, 1
        %v1186 = vadd.f32 %v1184, %v1185
        %v1187 = vrcp.pop 128.0
        %v1188 = vmul.f32 %v1186, %v1187
        %v1189 = vsub.f32 %v1104, %v1188
        %v1190 = vsub.f32 %v1107, %v1188
        %v1191 = vsub.f32 %v1112, %v1188
        %v1192 = vsub.f32 %v1115, %v1188
        %v1193 = vsub.f32 %v1120, %v1188
        %v1194 = vsub.f32 %v1123, %v1188
        %v1195 = vsub.f32 %v1128, %v1188
        %v1196 = vsub.f32 %v1131, %v1188
        %v1197 = vsub.f32 %v1136, %v1188
        %v1198 = vsub.f32 %v1139, %v1188
        %v1199 = vsub.f32 %v1144, %v1188
        %v1200 = vsub.f32 %v1147, %v1188
        %v1201 = vsub.f32 %v1152, %v1188
        %v1202 = vsub.f32 %v1155, %v1188
        %v1203 = vsub.f32 %v1160, %v1188
        %v1204 = vsub.f32 %v1163, %v1188
        %v1205 = vmul.f32 %v1189, %v1189
        %v1206 = vmul.f32 %v1190, %v1190
        %v1207 = vmul.f32 %v1191, %v1191
        %v1208 = vmul.f32 %v1192, %v1192
        %v1209 = vmul.f32 %v1193, %v1193
        %v1210 = vmul.f32 %v1194, %v1194
        %v1211 = vmul.f32 %v1195, %v1195
        %v1212 = vmul.f32 %v1196, %v1196
        %v1213 = vmul.f32 %v1197, %v1197
        %v1214 = vmul.f32 %v1198, %v1198
        %v1215 = vmul.f32 %v1199, %v1199
        %v1216 = vmul.f32 %v1200, %v1200
        %v1217 = vmul.f32 %v1201, %v1201
        %v1218 = vmul.f32 %v1202, %v1202
        %v1219 = vmul.f32 %v1203, %v1203
        %v1220 = vmul.f32 %v1204, %v1204
        %v1221 = vadd.f32 %v1205, %v1206
        %v1222 = vadd.f32 %v1221, %v1207
        %v1223 = vadd.f32 %v1222, %v1208
        %v1224 = vadd.f32 %v1223, %v1209
        %v1225 = vadd.f32 %v1224, %v1210
        %v1226 = vadd.f32 %v1225, %v1211
        %v1227 = vadd.f32 %v1226, %v1212
        %v1228 = vadd.f32 %v1227, %v1213
        %v1229 = vadd.f32 %v1228, %v1214
        %v1230 = vadd.f32 %v1229, %v1215
        %v1231 = vadd.f32 %v1230, %v1216
        %v1232 = vadd.f32 %v1231, %v1217
        %v1233 = vadd.f32 %v1232, %v1218
        %v1234 = vadd.f32 %v1233, %v1219
        %v1235 = vadd.f32 %v1234, %v1220
        %v1236 = vrot.slane %v1235, 4
        %v1237 = vadd.f32 %v1235, %v1236
        %v1238 = vrot.slane %v1237, 2
        %v1239 = vadd.f32 %v1237, %v1238
        %v1240 = vrot.slane %v1239, 1
        %v1241 = vadd.f32 %v1239, %v1240
        %v1242 = vmul.f32 %v1241, %v1187
        %v1243 = vld [vmem:[%s4] sm:$0x1]
        %v1244 = vadd.f32 %v1242, 0.8
        %v1245 = vrsqrt.pop %v1244
        %v1246 = vmul.f32 %v1243, %v1245
        %v1248 = vlaneseq
        %v1249 = vshrl.u32 %v1248, 7
        %v1250 = vsub.s32 0, %v1249
        %v1251 = vrot.slane %v1246, %v1250
        %v1253 = vmul.f32 %v1189, %v1251
        %v1254 = vmul.f32 %v1190, %v1251
        %v1255 = vmul.f32 %v1191, %v1251
        %v1256 = vmul.f32 %v1192, %v1251
        %v1257 = vmul.f32 %v1193, %v1251
        %v1258 = vmul.f32 %v1194, %v1251
        %v1259 = vmul.f32 %v1195, %v1251
        %v1260 = vmul.f32 %v1196, %v1251
        %v1261 = vmul.f32 %v1197, %v1251
        %v1262 = vmul.f32 %v1198, %v1251
        %v1263 = vmul.f32 %v1199, %v1251
        %v1264 = vmul.f32 %v1200, %v1251
        %v1265 = vmul.f32 %v1201, %v1251
        %v1266 = vmul.f32 %v1202, %v1251
        %v1267 = vmul.f32 %v1203, %v1251
        %v1268 = vmul.f32 %v1204, %v1251
        %v1269 = vld [vmem:[%s5] sm:$0x1]
        %v1271 = vlaneseq
        %v1272 = vshrl.u32 %v1271, 7
        %v1273 = vsub.s32 0, %v1272
        %v1274 = vrot.slane %v1269, %v1273
        %v1276 = vadd.f32 %v1253, %v1274
        %v1277 = vadd.f32 %v1254, %v1274
        %v1278 = vadd.f32 %v1255, %v1274
        %v1279 = vadd.f32 %v1256, %v1274
        %v1280 = vadd.f32 %v1257, %v1274
        %v1281 = vadd.f32 %v1258, %v1274
        %v1282 = vadd.f32 %v1259, %v1274
        %v1283 = vadd.f32 %v1260, %v1274
        %v1284 = vadd.f32 %v1261, %v1274
        %v1285 = vadd.f32 %v1262, %v1274
        %v1286 = vadd.f32 %v1263, %v1274
        %v1287 = vadd.f32 %v1264, %v1274
        %v1288 = vadd.f32 %v1265, %v1274
        %v1289 = vadd.f32 %v1266, %v1274
        %v1290 = vadd.f32 %v1267, %v1274
        %v1291 = vadd.f32 %v1268, %v1274
        %v1292 = vmul.f32 %v1276, 0.2
        %v1293 = vmul.f32 %v1277, 0.2
        %v1294 = vmul.f32 %v1278, 0.2
        %v1295 = vmul.f32 %v1279, 0.2
        %v1296 = vmul.f32 %v1280, 0.2
        %v1297 = vmul.f32 %v1281, 0.2
        %v1298 = vmul.f32 %v1282, 0.2
        %v1299 = vmul.f32 %v1283, 0.2
        %v1300 = vmul.f32 %v1284, 0.2
        %v1301 = vmul.f32 %v1285, 0.2
        %v1302 = vmul.f32 %v1286, 0.2
        %v1303 = vmul.f32 %v1287, 0.2
        %v1304 = vmul.f32 %v1288, 0.2
        %v1305 = vmul.f32 %v1289, 0.2
        %v1306 = vmul.f32 %v1290, 0.2
        %v1307 = vmul.f32 %v1291, 0.2
        %v1308 = vmax.f32 %v1276, %v1292
        %v1309 = vmax.f32 %v1277, %v1293
        %v1310 = vmax.f32 %v1278, %v1294
        %v1311 = vmax.f32 %v1279, %v1295
        %v1312 = vmax.f32 %v1280, %v1296
        %v1313 = vmax.f32 %v1281, %v1297
        %v1314 = vmax.f32 %v1282, %v1298
        %v1315 = vmax.f32 %v1283, %v1299
        %v1316 = vmax.f32 %v1284, %v1300
        %v1317 = vmax.f32 %v1285, %v1301
        %v1318 = vmax.f32 %v1286, %v1302
        %v1319 = vmax.f32 %v1287, %v1303
        %v1320 = vmax.f32 %v1288, %v1304
        %v1321 = vmax.f32 %v1289, %v1305
        %v1322 = vmax.f32 %v1290, %v1306
        %v1323 = vmax.f32 %v1291, %v1307
        %v1324 = vpack.c.bf16 %v1309, %v1308
        %v1325 = vpack.c.bf16 %v1311, %v1310
        %v1326 = vpack.c.bf16 %v1313, %v1312
        %v1327 = vpack.c.bf16 %v1315, %v1314
        %v1328 = vpack.c.bf16 %v1317, %v1316
        %v1329 = vpack.c.bf16 %v1319, %v1318
        %v1330 = vpack.c.bf16 %v1321, %v1320
        %v1331 = vpack.c.bf16 %v1323, %v1322
        %v1332 = vld [vmem:[%s6] sm:$0xff]
        %v1333 = vld [vmem:[%s6 + $0x8] sm:$0xff]
        %v1334 = vld [vmem:[%s6 + $0x10] sm:$0xff]
        %v1335 = vld [vmem:[%s6 + $0x18] sm:$0xff]
        %v1336 = vld [vmem:[%s6 + $0x20] sm:$0xff]
        %v1337 = vld [vmem:[%s6 + $0x28] sm:$0xff]
        %v1338 = vld [vmem:[%s6 + $0x30] sm:$0xff]
        %v1339 = vld [vmem:[%s6 + $0x38] sm:$0xff]
        %v1340 = vld [vmem:[%s6 + $0x40] sm:$0xff]
        %v1341 = vld [vmem:[%s6 + $0x48] sm:$0xff]
        %v1342 = vld [vmem:[%s6 + $0x50] sm:$0xff]
        %v1343 = vld [vmem:[%s6 + $0x58] sm:$0xff]
        %v1344 = vld [vmem:[%s6 + $0x60] sm:$0xff]
        %v1345 = vld [vmem:[%s6 + $0x68] sm:$0xff]
        %v1346 = vld [vmem:[%s6 + $0x70] sm:$0xff]
        %v1347 = vld [vmem:[%s6 + $0x78] sm:$0xff]
        %v1364 = vunpack.c.l.b16 %v1332
        %v1365 = vunpack.c.h.b16 %v1332
        %v1366 = vunpack.c.l.b16 %v1333
        %v1367 = vunpack.c.h.b16 %v1333
        %v1368 = vunpack.c.l.b16 %v1334
        %v1369 = vunpack.c.h.b16 %v1334
        %v1370 = vunpack.c.l.b16 %v1335
        %v1371 = vunpack.c.h.b16 %v1335
        %v1372 = vunpack.c.l.b16 %v1336
        %v1373 = vunpack.c.h.b16 %v1336
        %v1374 = vunpack.c.l.b16 %v1337
        %v1375 = vunpack.c.h.b16 %v1337
        %v1376 = vunpack.c.l.b16 %v1338
        %v1377 = vunpack.c.h.b16 %v1338
        %v1378 = vunpack.c.l.b16 %v1339
        %v1379 = vunpack.c.h.b16 %v1339
        %v1380 = vunpack.c.l.b16 %v1340
        %v1381 = vunpack.c.h.b16 %v1340
        %v1382 = vunpack.c.l.b16 %v1341
        %v1383 = vunpack.c.h.b16 %v1341
        %v1384 = vunpack.c.l.b16 %v1342
        %v1385 = vunpack.c.h.b16 %v1342
        %v1386 = vunpack.c.l.b16 %v1343
        %v1387 = vunpack.c.h.b16 %v1343
        %v1388 = vunpack.c.l.b16 %v1344
        %v1389 = vunpack.c.h.b16 %v1344
        %v1390 = vunpack.c.l.b16 %v1345
        %v1391 = vunpack.c.h.b16 %v1345
        %v1392 = vunpack.c.l.b16 %v1346
        %v1393 = vunpack.c.h.b16 %v1346
        %v1394 = vunpack.c.l.b16 %v1347
        %v1395 = vunpack.c.h.b16 %v1347
        %v1396 = vpack.c.b16 %v1366, %v1364
        %v1397 = vpack.c.b16 %v1367, %v1365
        %v1398 = vpack.c.b16 %v1370, %v1368
        %v1399 = vpack.c.b16 %v1371, %v1369
        %v1400 = vpack.c.b16 %v1374, %v1372
        %v1401 = vpack.c.b16 %v1375, %v1373
        %v1402 = vpack.c.b16 %v1378, %v1376
        %v1403 = vpack.c.b16 %v1379, %v1377
        %v1404 = vpack.c.b16 %v1382, %v1380
        %v1405 = vpack.c.b16 %v1383, %v1381
        %v1406 = vpack.c.b16 %v1386, %v1384
        %v1407 = vpack.c.b16 %v1387, %v1385
        %v1408 = vpack.c.b16 %v1390, %v1388
        %v1409 = vpack.c.b16 %v1391, %v1389
        %v1410 = vpack.c.b16 %v1394, %v1392
        %v1411 = vpack.c.b16 %v1395, %v1393
        %1428 = vmatprep.subr.bf16.mxu0 %v1411
        %1429 = vmatpush1.bf16.msra.mxu0 %v1410
        %1430 = vmatprep.subr.bf16.mxu0 %v1409
        %1431 = vmatpush1.bf16.msra.mxu0 %v1408
        %1432 = vmatprep.subr.bf16.mxu0 %v1407
        %1433 = vmatpush1.bf16.msra.mxu0 %v1406
        %1434 = vmatprep.subr.bf16.mxu0 %v1405
        %1435 = vmatpush1.bf16.msra.mxu0 %v1404
        %1436 = vmatprep.subr.bf16.mxu0 %v1403
        %1437 = vmatpush1.bf16.msra.mxu0 %v1402
        %1438 = vmatprep.subr.bf16.mxu0 %v1401
        %1439 = vmatpush1.bf16.msra.mxu0 %v1400
        %1440 = vmatprep.subr.bf16.mxu0 %v1399
        %1441 = vmatpush1.bf16.msra.mxu0 %v1398
        %1442 = vmatprep.subr.bf16.mxu0 %v1397
        %1443 = vmatpush1.bf16.msra.mxu0 %v1396
        %1444 = vmatprep.subr.bf16.mxu0 0
        %1445 = vmatpush2.bf16.msra.mxu0 0
        %1446 = vmatprep.subr.bf16.mxu0 0
        %1447 = vmatpush2.bf16.msra.mxu0 0
        %1448 = vmatprep.subr.bf16.mxu0 0
        %1449 = vmatpush2.bf16.msra.mxu0 0
        %1450 = vmatprep.subr.bf16.mxu0 0
        %1451 = vmatpush2.bf16.msra.mxu0 0
        %1452 = vmatprep.subr.bf16.mxu0 0
        %1453 = vmatpush2.bf16.msra.mxu0 0
        %1454 = vmatprep.subr.bf16.mxu0 0
        %1455 = vmatpush2.bf16.msra.mxu0 0
        %1456 = vmatprep.subr.bf16.mxu0 0
        %1457 = vmatpush2.bf16.msra.mxu0 0
        %1458 = vmatprep.subr.bf16.mxu0 0
        %1459 = vmatpush2.bf16.msra.mxu0 0
        %1460 = vmatprep.mubr.bf16.mxu0 0
        %1461 = vmatmul.mubr.bf16.gmra.mxu0 %v1324
        %v1462 = vpop.f32.mrf.mxu0
        %v1463 = vadd.f32 0.0, %v1462
        %v1464 = vpop.f32.mrf.mxu0
        %v1465 = vadd.f32 0.0, %v1464
        %v1466 = vpop.f32.mrf.mxu0
        %v1467 = vadd.f32 0.0, %v1466
        %v1468 = vpop.f32.mrf.mxu0
        %v1469 = vadd.f32 0.0, %v1468
        %1470 = vmatprep.mubr.bf16.mxu0 0
        %1471 = vmatmul.mubr.bf16.gmra.mxu0 %v1325
        %v1472 = vpop.f32.mrf.mxu0
        %v1473 = vadd.f32 0.0, %v1472
        %v1474 = vpop.f32.mrf.mxu0
        %v1475 = vadd.f32 0.0, %v1474
        %v1476 = vpop.f32.mrf.mxu0
        %v1477 = vadd.f32 0.0, %v1476
        %v1478 = vpop.f32.mrf.mxu0
        %v1479 = vadd.f32 0.0, %v1478
        %1480 = vmatprep.mubr.bf16.mxu0 0
        %1481 = vmatmul.mubr.bf16.gmra.mxu0 %v1326
        %v1482 = vpop.f32.mrf.mxu0
        %v1483 = vadd.f32 0.0, %v1482
        %v1484 = vpop.f32.mrf.mxu0
        %v1485 = vadd.f32 0.0, %v1484
        %v1486 = vpop.f32.mrf.mxu0
        %v1487 = vadd.f32 0.0, %v1486
        %v1488 = vpop.f32.mrf.mxu0
        %v1489 = vadd.f32 0.0, %v1488
        %1490 = vmatprep.mubr.bf16.mxu0 0
        %1491 = vmatmul.mubr.bf16.gmra.mxu0 %v1327
        %v1492 = vpop.f32.mrf.mxu0
        %v1493 = vadd.f32 0.0, %v1492
        %v1494 = vpop.f32.mrf.mxu0
        %v1495 = vadd.f32 0.0, %v1494
        %v1496 = vpop.f32.mrf.mxu0
        %v1497 = vadd.f32 0.0, %v1496
        %v1498 = vpop.f32.mrf.mxu0
        %v1499 = vadd.f32 0.0, %v1498
        %1500 = vmatprep.mubr.bf16.mxu0 0
        %1501 = vmatmul.mubr.bf16.gmra.mxu0 %v1328
        %v1502 = vpop.f32.mrf.mxu0
        %v1503 = vadd.f32 0.0, %v1502
        %v1504 = vpop.f32.mrf.mxu0
        %v1505 = vadd.f32 0.0, %v1504
        %v1506 = vpop.f32.mrf.mxu0
        %v1507 = vadd.f32 0.0, %v1506
        %v1508 = vpop.f32.mrf.mxu0
        %v1509 = vadd.f32 0.0, %v1508
        %1510 = vmatprep.mubr.bf16.mxu0 0
        %1511 = vmatmul.mubr.bf16.gmra.mxu0 %v1329
        %v1512 = vpop.f32.mrf.mxu0
        %v1513 = vadd.f32 0.0, %v1512
        %v1514 = vpop.f32.mrf.mxu0
        %v1515 = vadd.f32 0.0, %v1514
        %v1516 = vpop.f32.mrf.mxu0
        %v1517 = vadd.f32 0.0, %v1516
        %v1518 = vpop.f32.mrf.mxu0
        %v1519 = vadd.f32 0.0, %v1518
        %1520 = vmatprep.mubr.bf16.mxu0 0
        %1521 = vmatmul.mubr.bf16.gmra.mxu0 %v1330
        %v1522 = vpop.f32.mrf.mxu0
        %v1523 = vadd.f32 0.0, %v1522
        %v1524 = vpop.f32.mrf.mxu0
        %v1525 = vadd.f32 0.0, %v1524
        %v1526 = vpop.f32.mrf.mxu0
        %v1527 = vadd.f32 0.0, %v1526
        %v1528 = vpop.f32.mrf.mxu0
        %v1529 = vadd.f32 0.0, %v1528
        %1530 = vmatprep.mubr.bf16.mxu0 0
        %1531 = vmatmul.mubr.bf16.gmra.mxu0 %v1331
        %v1532 = vpop.f32.mrf.mxu0
        %v1533 = vadd.f32 0.0, %v1532
        %v1534 = vpop.f32.mrf.mxu0
        %v1535 = vadd.f32 0.0, %v1534
        %v1536 = vpop.f32.mrf.mxu0
        %v1537 = vadd.f32 0.0, %v1536
        %v1538 = vpop.f32.mrf.mxu0
        %v1539 = vadd.f32 0.0, %v1538
        %1540 = vdwg.mxu0
        %v1541 = vadd.f32 %v1463, %v1467
        %v1542 = vadd.f32 %v1541, %v1473
        %v1543 = vadd.f32 %v1542, %v1477
        %v1544 = vadd.f32 %v1543, %v1483
        %v1545 = vadd.f32 %v1544, %v1487
        %v1546 = vadd.f32 %v1545, %v1493
        %v1547 = vadd.f32 %v1546, %v1497
        %v1548 = vadd.f32 %v1547, %v1503
        %v1549 = vadd.f32 %v1548, %v1507
        %v1550 = vadd.f32 %v1549, %v1513
        %v1551 = vadd.f32 %v1550, %v1517
        %v1552 = vadd.f32 %v1551, %v1523
        %v1553 = vadd.f32 %v1552, %v1527
        %v1554 = vadd.f32 %v1553, %v1533
        %v1555 = vadd.f32 %v1554, %v1537
        %v1556 = vrot.slane %v1555, 4
        %v1557 = vadd.f32 %v1555, %v1556
        %v1558 = vrot.slane %v1557, 2
        %v1559 = vadd.f32 %v1557, %v1558
        %v1560 = vrot.slane %v1559, 1
        %v1561 = vadd.f32 %v1559, %v1560
        %v1562 = vadd.f32 %v1465, %v1469
        %v1563 = vadd.f32 %v1562, %v1475
        %v1564 = vadd.f32 %v1563, %v1479
        %v1565 = vadd.f32 %v1564, %v1485
        %v1566 = vadd.f32 %v1565, %v1489
        %v1567 = vadd.f32 %v1566, %v1495
        %v1568 = vadd.f32 %v1567, %v1499
        %v1569 = vadd.f32 %v1568, %v1505
        %v1570 = vadd.f32 %v1569, %v1509
        %v1571 = vadd.f32 %v1570, %v1515
        %v1572 = vadd.f32 %v1571, %v1519
        %v1573 = vadd.f32 %v1572, %v1525
        %v1574 = vadd.f32 %v1573, %v1529
        %v1575 = vadd.f32 %v1574, %v1535
        %v1576 = vadd.f32 %v1575, %v1539
        %v1577 = vrot.slane %v1576, 4
        %v1578 = vadd.f32 %v1576, %v1577
        %v1579 = vrot.slane %v1578, 2
        %v1580 = vadd.f32 %v1578, %v1579
        %v1581 = vrot.slane %v1580, 1
        %v1582 = vadd.f32 %v1580, %v1581
        %v1583 = vmul.f32 %v1561, %v1187
        %v1584 = vmul.f32 %v1582, %v1187
        %v1585 = vsub.f32 %v1463, %v1583
        %v1586 = vsub.f32 %v1465, %v1584
        %v1587 = vsub.f32 %v1467, %v1583
        %v1588 = vsub.f32 %v1469, %v1584
        %v1589 = vsub.f32 %v1473, %v1583
        %v1590 = vsub.f32 %v1475, %v1584
        %v1591 = vsub.f32 %v1477, %v1583
        %v1592 = vsub.f32 %v1479, %v1584
        %v1593 = vsub.f32 %v1483, %v1583
        %v1594 = vsub.f32 %v1485, %v1584
        %v1595 = vsub.f32 %v1487, %v1583
        %v1596 = vsub.f32 %v1489, %v1584
        %v1597 = vsub.f32 %v1493, %v1583
        %v1598 = vsub.f32 %v1495, %v1584
        %v1599 = vsub.f32 %v1497, %v1583
        %v1600 = vsub.f32 %v1499, %v1584
        %v1601 = vsub.f32 %v1503, %v1583
        %v1602 = vsub.f32 %v1505, %v1584
        %v1603 = vsub.f32 %v1507, %v1583
        %v1604 = vsub.f32 %v1509, %v1584
        %v1605 = vsub.f32 %v1513, %v1583
        %v1606 = vsub.f32 %v1515, %v1584
        %v1607 = vsub.f32 %v1517, %v1583
        %v1608 = vsub.f32 %v1519, %v1584
        %v1609 = vsub.f32 %v1523, %v1583
        %v1610 = vsub.f32 %v1525, %v1584
        %v1611 = vsub.f32 %v1527, %v1583
        %v1612 = vsub.f32 %v1529, %v1584
        %v1613 = vsub.f32 %v1533, %v1583
        %v1614 = vsub.f32 %v1535, %v1584
        %v1615 = vsub.f32 %v1537, %v1583
        %v1616 = vsub.f32 %v1539, %v1584
        %v1617 = vmul.f32 %v1585, %v1585
        %v1618 = vmul.f32 %v1586, %v1586
        %v1619 = vmul.f32 %v1587, %v1587
        %v1620 = vmul.f32 %v1588, %v1588
        %v1621 = vmul.f32 %v1589, %v1589
        %v1622 = vmul.f32 %v1590, %v1590
        %v1623 = vmul.f32 %v1591, %v1591
        %v1624 = vmul.f32 %v1592, %v1592
        %v1625 = vmul.f32 %v1593, %v1593
        %v1626 = vmul.f32 %v1594, %v1594
        %v1627 = vmul.f32 %v1595, %v1595
        %v1628 = vmul.f32 %v1596, %v1596
        %v1629 = vmul.f32 %v1597, %v1597
        %v1630 = vmul.f32 %v1598, %v1598
        %v1631 = vmul.f32 %v1599, %v1599
        %v1632 = vmul.f32 %v1600, %v1600
        %v1633 = vmul.f32 %v1601, %v1601
        %v1634 = vmul.f32 %v1602, %v1602
        %v1635 = vmul.f32 %v1603, %v1603
        %v1636 = vmul.f32 %v1604, %v1604
        %v1637 = vmul.f32 %v1605, %v1605
        %v1638 = vmul.f32 %v1606, %v1606
        %v1639 = vmul.f32 %v1607, %v1607
        %v1640 = vmul.f32 %v1608, %v1608
        %v1641 = vmul.f32 %v1609, %v1609
        %v1642 = vmul.f32 %v1610, %v1610
        %v1643 = vmul.f32 %v1611, %v1611
        %v1644 = vmul.f32 %v1612, %v1612
        %v1645 = vmul.f32 %v1613, %v1613
        %v1646 = vmul.f32 %v1614, %v1614
        %v1647 = vmul.f32 %v1615, %v1615
        %v1648 = vmul.f32 %v1616, %v1616
        %v1649 = vadd.f32 %v1617, %v1619
        %v1650 = vadd.f32 %v1649, %v1621
        %v1651 = vadd.f32 %v1650, %v1623
        %v1652 = vadd.f32 %v1651, %v1625
        %v1653 = vadd.f32 %v1652, %v1627
        %v1654 = vadd.f32 %v1653, %v1629
        %v1655 = vadd.f32 %v1654, %v1631
        %v1656 = vadd.f32 %v1655, %v1633
        %v1657 = vadd.f32 %v1656, %v1635
        %v1658 = vadd.f32 %v1657, %v1637
        %v1659 = vadd.f32 %v1658, %v1639
        %v1660 = vadd.f32 %v1659, %v1641
        %v1661 = vadd.f32 %v1660, %v1643
        %v1662 = vadd.f32 %v1661, %v1645
        %v1663 = vadd.f32 %v1662, %v1647
        %v1664 = vrot.slane %v1663, 4
        %v1665 = vadd.f32 %v1663, %v1664
        %v1666 = vrot.slane %v1665, 2
        %v1667 = vadd.f32 %v1665, %v1666
        %v1668 = vrot.slane %v1667, 1
        %v1669 = vadd.f32 %v1667, %v1668
        %v1670 = vadd.f32 %v1618, %v1620
        %v1671 = vadd.f32 %v1670, %v1622
        %v1672 = vadd.f32 %v1671, %v1624
        %v1673 = vadd.f32 %v1672, %v1626
        %v1674 = vadd.f32 %v1673, %v1628
        %v1675 = vadd.f32 %v1674, %v1630
        %v1676 = vadd.f32 %v1675, %v1632
        %v1677 = vadd.f32 %v1676, %v1634
        %v1678 = vadd.f32 %v1677, %v1636
        %v1679 = vadd.f32 %v1678, %v1638
        %v1680 = vadd.f32 %v1679, %v1640
        %v1681 = vadd.f32 %v1680, %v1642
        %v1682 = vadd.f32 %v1681, %v1644
        %v1683 = vadd.f32 %v1682, %v1646
        %v1684 = vadd.f32 %v1683, %v1648
        %v1685 = vrot.slane %v1684, 4
        %v1686 = vadd.f32 %v1684, %v1685
        %v1687 = vrot.slane %v1686, 2
        %v1688 = vadd.f32 %v1686, %v1687
        %v1689 = vrot.slane %v1688, 1
        %v1690 = vadd.f32 %v1688, %v1689
        %v1691 = vmul.f32 %v1669, %v1187
        %v1692 = vmul.f32 %v1690, %v1187
        %v1693 = vld [vmem:[%s7] sm:$0x3]
        %v1694 = vadd.f32 %v1691, 0.8
        %v1695 = vadd.f32 %v1692, 0.8
        %v1696 = vrsqrt.pop %v1694
        %v1697 = vrsqrt.pop %v1695
        %v1700 = vcombine.low %v1696, %v1697
        %v1702 = vunpack.c.l.s4 1966171168
        %v1703 = vunpack.c.0.s8 %v1702
        %v1704 = vlaneseq
        %v1705 = vshrl.u32 %v1704, 7
        %v1706 = vsub.s32 %v1703, %v1705
        %v1707 = vrot.slane %v1700, %v1706
        %v1709 = vunpack.c.l.s4 1966171168
        %v1710 = vunpack.c.0.s8 %v1709
        %v1711 = vlaneseq
        %v1712 = vshrl.u32 %v1711, 7
        %v1713 = vsub.s32 %v1710, %v1712
        %v1714 = vrot.slane %v1707, %v1713
        %v1716 = vmul.f32 %v1693, %v1714
        %v1718 = vlaneseq
        %v1719 = vshrl.u32 %v1718, 7
        %v1720 = vsub.s32 0, %v1719
        %v1721 = vrot.slane %v1716, %v1720
        %v1722 = vlaneseq
        %v1723 = vshrl.u32 %v1722, 7
        %v1724 = vsub.s32 1, %v1723
        %v1725 = vrot.slane %v1716, %v1724
        %v1728 = vmul.f32 %v1585, %v1721
        %v1729 = vmul.f32 %v1586, %v1725
        %v1730 = vmul.f32 %v1587, %v1721
        %v1731 = vmul.f32 %v1588, %v1725
        %v1732 = vmul.f32 %v1589, %v1721
        %v1733 = vmul.f32 %v1590, %v1725
        %v1734 = vmul.f32 %v1591, %v1721
        %v1735 = vmul.f32 %v1592, %v1725
        %v1736 = vmul.f32 %v1593, %v1721
        %v1737 = vmul.f32 %v1594, %v1725
        %v1738 = vmul.f32 %v1595, %v1721
        %v1739 = vmul.f32 %v1596, %v1725
        %v1740 = vmul.f32 %v1597, %v1721
        %v1741 = vmul.f32 %v1598, %v1725
        %v1742 = vmul.f32 %v1599, %v1721
        %v1743 = vmul.f32 %v1600, %v1725
        %v1744 = vmul.f32 %v1601, %v1721
        %v1745 = vmul.f32 %v1602, %v1725
        %v1746 = vmul.f32 %v1603, %v1721
        %v1747 = vmul.f32 %v1604, %v1725
        %v1748 = vmul.f32 %v1605, %v1721
        %v1749 = vmul.f32 %v1606, %v1725
        %v1750 = vmul.f32 %v1607, %v1721
        %v1751 = vmul.f32 %v1608, %v1725
        %v1752 = vmul.f32 %v1609, %v1721
        %v1753 = vmul.f32 %v1610, %v1725
        %v1754 = vmul.f32 %v1611, %v1721
        %v1755 = vmul.f32 %v1612, %v1725
        %v1756 = vmul.f32 %v1613, %v1721
        %v1757 = vmul.f32 %v1614, %v1725
        %v1758 = vmul.f32 %v1615, %v1721
        %v1759 = vmul.f32 %v1616, %v1725
        %v1760 = vld [vmem:[%s8] sm:$0x3]
        %v1762 = vlaneseq
        %v1763 = vshrl.u32 %v1762, 7
        %v1764 = vsub.s32 0, %v1763
        %v1765 = vrot.slane %v1760, %v1764
        %v1766 = vlaneseq
        %v1767 = vshrl.u32 %v1766, 7
        %v1768 = vsub.s32 1, %v1767
        %v1769 = vrot.slane %v1760, %v1768
        %v1772 = vadd.f32 %v1728, %v1765
        %v1773 = vadd.f32 %v1729, %v1769
        %v1774 = vadd.f32 %v1730, %v1765
        %v1775 = vadd.f32 %v1731, %v1769
        %v1776 = vadd.f32 %v1732, %v1765
        %v1777 = vadd.f32 %v1733, %v1769
        %v1778 = vadd.f32 %v1734, %v1765
        %v1779 = vadd.f32 %v1735, %v1769
        %v1780 = vadd.f32 %v1736, %v1765
        %v1781 = vadd.f32 %v1737, %v1769
        %v1782 = vadd.f32 %v1738, %v1765
        %v1783 = vadd.f32 %v1739, %v1769
        %v1784 = vadd.f32 %v1740, %v1765
        %v1785 = vadd.f32 %v1741, %v1769
        %v1786 = vadd.f32 %v1742, %v1765
        %v1787 = vadd.f32 %v1743, %v1769
        %v1788 = vadd.f32 %v1744, %v1765
        %v1789 = vadd.f32 %v1745, %v1769
        %v1790 = vadd.f32 %v1746, %v1765
        %v1791 = vadd.f32 %v1747, %v1769
        %v1792 = vadd.f32 %v1748, %v1765
        %v1793 = vadd.f32 %v1749, %v1769
        %v1794 = vadd.f32 %v1750, %v1765
        %v1795 = vadd.f32 %v1751, %v1769
        %v1796 = vadd.f32 %v1752, %v1765
        %v1797 = vadd.f32 %v1753, %v1769
        %v1798 = vadd.f32 %v1754, %v1765
        %v1799 = vadd.f32 %v1755, %v1769
        %v1800 = vadd.f32 %v1756, %v1765
        %v1801 = vadd.f32 %v1757, %v1769
        %v1802 = vadd.f32 %v1758, %v1765
        %v1803 = vadd.f32 %v1759, %v1769
        %v1804 = vmul.f32 %v1772, 0.2
        %v1805 = vmul.f32 %v1773, 0.2
        %v1806 = vmul.f32 %v1774, 0.2
        %v1807 = vmul.f32 %v1775, 0.2
        %v1808 = vmul.f32 %v1776, 0.2
        %v1809 = vmul.f32 %v1777, 0.2
        %v1810 = vmul.f32 %v1778, 0.2
        %v1811 = vmul.f32 %v1779, 0.2
        %v1812 = vmul.f32 %v1780, 0.2
        %v1813 = vmul.f32 %v1781, 0.2
        %v1814 = vmul.f32 %v1782, 0.2
        %v1815 = vmul.f32 %v1783, 0.2
        %v1816 = vmul.f32 %v1784, 0.2
        %v1817 = vmul.f32 %v1785, 0.2
        %v1818 = vmul.f32 %v1786, 0.2
        %v1819 = vmul.f32 %v1787, 0.2
        %v1820 = vmul.f32 %v1788, 0.2
        %v1821 = vmul.f32 %v1789, 0.2
        %v1822 = vmul.f32 %v1790, 0.2
        %v1823 = vmul.f32 %v1791, 0.2
        %v1824 = vmul.f32 %v1792, 0.2
        %v1825 = vmul.f32 %v1793, 0.2
        %v1826 = vmul.f32 %v1794, 0.2
        %v1827 = vmul.f32 %v1795, 0.2
        %v1828 = vmul.f32 %v1796, 0.2
        %v1829 = vmul.f32 %v1797, 0.2
        %v1830 = vmul.f32 %v1798, 0.2
        %v1831 = vmul.f32 %v1799, 0.2
        %v1832 = vmul.f32 %v1800, 0.2
        %v1833 = vmul.f32 %v1801, 0.2
        %v1834 = vmul.f32 %v1802, 0.2
        %v1835 = vmul.f32 %v1803, 0.2
        %v1836 = vmax.f32 %v1772, %v1804
        %v1837 = vmax.f32 %v1773, %v1805
        %v1838 = vmax.f32 %v1774, %v1806
        %v1839 = vmax.f32 %v1775, %v1807
        %v1840 = vmax.f32 %v1776, %v1808
        %v1841 = vmax.f32 %v1777, %v1809
        %v1842 = vmax.f32 %v1778, %v1810
        %v1843 = vmax.f32 %v1779, %v1811
        %v1844 = vmax.f32 %v1780, %v1812
        %v1845 = vmax.f32 %v1781, %v1813
        %v1846 = vmax.f32 %v1782, %v1814
        %v1847 = vmax.f32 %v1783, %v1815
        %v1848 = vmax.f32 %v1784, %v1816
        %v1849 = vmax.f32 %v1785, %v1817
        %v1850 = vmax.f32 %v1786, %v1818
        %v1851 = vmax.f32 %v1787, %v1819
        %v1852 = vmax.f32 %v1788, %v1820
        %v1853 = vmax.f32 %v1789, %v1821
        %v1854 = vmax.f32 %v1790, %v1822
        %v1855 = vmax.f32 %v1791, %v1823
        %v1856 = vmax.f32 %v1792, %v1824
        %v1857 = vmax.f32 %v1793, %v1825
        %v1858 = vmax.f32 %v1794, %v1826
        %v1859 = vmax.f32 %v1795, %v1827
        %v1860 = vmax.f32 %v1796, %v1828
        %v1861 = vmax.f32 %v1797, %v1829
        %v1862 = vmax.f32 %v1798, %v1830
        %v1863 = vmax.f32 %v1799, %v1831
        %v1864 = vmax.f32 %v1800, %v1832
        %v1865 = vmax.f32 %v1801, %v1833
        %v1866 = vmax.f32 %v1802, %v1834
        %v1867 = vmax.f32 %v1803, %v1835
        %v1868 = vpack.c.bf16 %v1838, %v1836
        %v1869 = vpack.c.bf16 %v1839, %v1837
        %v1870 = vpack.c.bf16 %v1842, %v1840
        %v1871 = vpack.c.bf16 %v1843, %v1841
        %v1872 = vpack.c.bf16 %v1846, %v1844
        %v1873 = vpack.c.bf16 %v1847, %v1845
        %v1874 = vpack.c.bf16 %v1850, %v1848
        %v1875 = vpack.c.bf16 %v1851, %v1849
        %v1876 = vpack.c.bf16 %v1854, %v1852
        %v1877 = vpack.c.bf16 %v1855, %v1853
        %v1878 = vpack.c.bf16 %v1858, %v1856
        %v1879 = vpack.c.bf16 %v1859, %v1857
        %v1880 = vpack.c.bf16 %v1862, %v1860
        %v1881 = vpack.c.bf16 %v1863, %v1861
        %v1882 = vpack.c.bf16 %v1866, %v1864
        %v1883 = vpack.c.bf16 %v1867, %v1865
        %v1884 = vld [vmem:[#allocation2] sm:$0xff]
        %v1885 = vld [vmem:[#allocation2 + $0x8] sm:$0xff]
        %v1886 = vld [vmem:[#allocation2 + $0x10] sm:$0xff]
        %v1887 = vld [vmem:[#allocation2 + $0x18] sm:$0xff]
        %v1888 = vld [vmem:[#allocation2 + $0x20] sm:$0xff]
        %v1889 = vld [vmem:[#allocation2 + $0x28] sm:$0xff]
        %v1890 = vld [vmem:[#allocation2 + $0x30] sm:$0xff]
        %v1891 = vld [vmem:[#allocation2 + $0x38] sm:$0xff]
        %v1892 = vld [vmem:[#allocation2 + $0x40] sm:$0xff]
        %v1893 = vld [vmem:[#allocation2 + $0x48] sm:$0xff]
        %v1894 = vld [vmem:[#allocation2 + $0x50] sm:$0xff]
        %v1895 = vld [vmem:[#allocation2 + $0x58] sm:$0xff]
        %v1896 = vld [vmem:[#allocation2 + $0x60] sm:$0xff]
        %v1897 = vld [vmem:[#allocation2 + $0x68] sm:$0xff]
        %v1898 = vld [vmem:[#allocation2 + $0x70] sm:$0xff]
        %v1899 = vld [vmem:[#allocation2 + $0x78] sm:$0xff]
        %v1900 = vld [vmem:[#allocation2 + $0x80] sm:$0xff]
        %v1901 = vld [vmem:[#allocation2 + $0x88] sm:$0xff]
        %v1902 = vld [vmem:[#allocation2 + $0x90] sm:$0xff]
        %v1903 = vld [vmem:[#allocation2 + $0x98] sm:$0xff]
        %v1904 = vld [vmem:[#allocation2 + $0xa0] sm:$0xff]
        %v1905 = vld [vmem:[#allocation2 + $0xa8] sm:$0xff]
        %v1906 = vld [vmem:[#allocation2 + $0xb0] sm:$0xff]
        %v1907 = vld [vmem:[#allocation2 + $0xb8] sm:$0xff]
        %v1908 = vld [vmem:[#allocation2 + $0xc0] sm:$0xff]
        %v1909 = vld [vmem:[#allocation2 + $0xc8] sm:$0xff]
        %v1910 = vld [vmem:[#allocation2 + $0xd0] sm:$0xff]
        %v1911 = vld [vmem:[#allocation2 + $0xd8] sm:$0xff]
        %v1912 = vld [vmem:[#allocation2 + $0xe0] sm:$0xff]
        %v1913 = vld [vmem:[#allocation2 + $0xe8] sm:$0xff]
        %v1914 = vld [vmem:[#allocation2 + $0xf0] sm:$0xff]
        %v1915 = vld [vmem:[#allocation2 + $0xf8] sm:$0xff]
        %v1916 = vld [vmem:[#allocation2 + $0x100] sm:$0xff]
        %v1917 = vld [vmem:[#allocation2 + $0x108] sm:$0xff]
        %v1918 = vld [vmem:[#allocation2 + $0x110] sm:$0xff]
        %v1919 = vld [vmem:[#allocation2 + $0x118] sm:$0xff]
        %v1920 = vld [vmem:[#allocation2 + $0x120] sm:$0xff]
        %v1921 = vld [vmem:[#allocation2 + $0x128] sm:$0xff]
        %v1922 = vld [vmem:[#allocation2 + $0x130] sm:$0xff]
        %v1923 = vld [vmem:[#allocation2 + $0x138] sm:$0xff]
        %v1924 = vld [vmem:[#allocation2 + $0x140] sm:$0xff]
        %v1925 = vld [vmem:[#allocation2 + $0x148] sm:$0xff]
        %v1926 = vld [vmem:[#allocation2 + $0x150] sm:$0xff]
        %v1927 = vld [vmem:[#allocation2 + $0x158] sm:$0xff]
        %v1928 = vld [vmem:[#allocation2 + $0x160] sm:$0xff]
        %v1929 = vld [vmem:[#allocation2 + $0x168] sm:$0xff]
        %v1930 = vld [vmem:[#allocation2 + $0x170] sm:$0xff]
        %v1931 = vld [vmem:[#allocation2 + $0x178] sm:$0xff]
        %v1932 = vld [vmem:[#allocation2 + $0x180] sm:$0xff]
        %v1933 = vld [vmem:[#allocation2 + $0x188] sm:$0xff]
        %v1934 = vld [vmem:[#allocation2 + $0x190] sm:$0xff]
        %v1935 = vld [vmem:[#allocation2 + $0x198] sm:$0xff]
        %v1936 = vld [vmem:[#allocation2 + $0x1a0] sm:$0xff]
        %v1937 = vld [vmem:[#allocation2 + $0x1a8] sm:$0xff]
        %v1938 = vld [vmem:[#allocation2 + $0x1b0] sm:$0xff]
        %v1939 = vld [vmem:[#allocation2 + $0x1b8] sm:$0xff]
        %v1940 = vld [vmem:[#allocation2 + $0x1c0] sm:$0xff]
        %v1941 = vld [vmem:[#allocation2 + $0x1c8] sm:$0xff]
        %v1942 = vld [vmem:[#allocation2 + $0x1d0] sm:$0xff]
        %v1943 = vld [vmem:[#allocation2 + $0x1d8] sm:$0xff]
        %v1944 = vld [vmem:[#allocation2 + $0x1e0] sm:$0xff]
        %v1945 = vld [vmem:[#allocation2 + $0x1e8] sm:$0xff]
        %v1946 = vld [vmem:[#allocation2 + $0x1f0] sm:$0xff]
        %v1947 = vld [vmem:[#allocation2 + $0x1f8] sm:$0xff]
        %v2012 = vunpack.c.l.b16 %v1884
        %v2013 = vunpack.c.h.b16 %v1884
        %v2014 = vunpack.c.l.b16 %v1885
        %v2015 = vunpack.c.h.b16 %v1885
        %v2016 = vunpack.c.l.b16 %v1886
        %v2017 = vunpack.c.h.b16 %v1886
        %v2018 = vunpack.c.l.b16 %v1887
        %v2019 = vunpack.c.h.b16 %v1887
        %v2020 = vunpack.c.l.b16 %v1888
        %v2021 = vunpack.c.h.b16 %v1888
        %v2022 = vunpack.c.l.b16 %v1889
        %v2023 = vunpack.c.h.b16 %v1889
        %v2024 = vunpack.c.l.b16 %v1890
        %v2025 = vunpack.c.h.b16 %v1890
        %v2026 = vunpack.c.l.b16 %v1891
        %v2027 = vunpack.c.h.b16 %v1891
        %v2028 = vunpack.c.l.b16 %v1892
        %v2029 = vunpack.c.h.b16 %v1892
        %v2030 = vunpack.c.l.b16 %v1893
        %v2031 = vunpack.c.h.b16 %v1893
        %v2032 = vunpack.c.l.b16 %v1894
        %v2033 = vunpack.c.h.b16 %v1894
        %v2034 = vunpack.c.l.b16 %v1895
        %v2035 = vunpack.c.h.b16 %v1895
        %v2036 = vunpack.c.l.b16 %v1896
        %v2037 = vunpack.c.h.b16 %v1896
        %v2038 = vunpack.c.l.b16 %v1897
        %v2039 = vunpack.c.h.b16 %v1897
        %v2040 = vunpack.c.l.b16 %v1898
        %v2041 = vunpack.c.h.b16 %v1898
        %v2042 = vunpack.c.l.b16 %v1899
        %v2043 = vunpack.c.h.b16 %v1899
        %v2044 = vunpack.c.l.b16 %v1900
        %v2045 = vunpack.c.h.b16 %v1900
        %v2046 = vunpack.c.l.b16 %v1901
        %v2047 = vunpack.c.h.b16 %v1901
        %v2048 = vunpack.c.l.b16 %v1902
        %v2049 = vunpack.c.h.b16 %v1902
        %v2050 = vunpack.c.l.b16 %v1903
        %v2051 = vunpack.c.h.b16 %v1903
        %v2052 = vunpack.c.l.b16 %v1904
        %v2053 = vunpack.c.h.b16 %v1904
        %v2054 = vunpack.c.l.b16 %v1905
        %v2055 = vunpack.c.h.b16 %v1905
        %v2056 = vunpack.c.l.b16 %v1906
        %v2057 = vunpack.c.h.b16 %v1906
        %v2058 = vunpack.c.l.b16 %v1907
        %v2059 = vunpack.c.h.b16 %v1907
        %v2060 = vunpack.c.l.b16 %v1908
        %v2061 = vunpack.c.h.b16 %v1908
        %v2062 = vunpack.c.l.b16 %v1909
        %v2063 = vunpack.c.h.b16 %v1909
        %v2064 = vunpack.c.l.b16 %v1910
        %v2065 = vunpack.c.h.b16 %v1910
        %v2066 = vunpack.c.l.b16 %v1911
        %v2067 = vunpack.c.h.b16 %v1911
        %v2068 = vunpack.c.l.b16 %v1912
        %v2069 = vunpack.c.h.b16 %v1912
        %v2070 = vunpack.c.l.b16 %v1913
        %v2071 = vunpack.c.h.b16 %v1913
        %v2072 = vunpack.c.l.b16 %v1914
        %v2073 = vunpack.c.h.b16 %v1914
        %v2074 = vunpack.c.l.b16 %v1915
        %v2075 = vunpack.c.h.b16 %v1915
        %v2076 = vunpack.c.l.b16 %v1916
        %v2077 = vunpack.c.h.b16 %v1916
        %v2078 = vunpack.c.l.b16 %v1917
        %v2079 = vunpack.c.h.b16 %v1917
        %v2080 = vunpack.c.l.b16 %v1918
        %v2081 = vunpack.c.h.b16 %v1918
        %v2082 = vunpack.c.l.b16 %v1919
        %v2083 = vunpack.c.h.b16 %v1919
        %v2084 = vunpack.c.l.b16 %v1920
        %v2085 = vunpack.c.h.b16 %v1920
        %v2086 = vunpack.c.l.b16 %v1921
        %v2087 = vunpack.c.h.b16 %v1921
        %v2088 = vunpack.c.l.b16 %v1922
        %v2089 = vunpack.c.h.b16 %v1922
        %v2090 = vunpack.c.l.b16 %v1923
        %v2091 = vunpack.c.h.b16 %v1923
        %v2092 = vunpack.c.l.b16 %v1924
        %v2093 = vunpack.c.h.b16 %v1924
        %v2094 = vunpack.c.l.b16 %v1925
        %v2095 = vunpack.c.h.b16 %v1925
        %v2096 = vunpack.c.l.b16 %v1926
        %v2097 = vunpack.c.h.b16 %v1926
        %v2098 = vunpack.c.l.b16 %v1927
        %v2099 = vunpack.c.h.b16 %v1927
        %v2100 = vunpack.c.l.b16 %v1928
        %v2101 = vunpack.c.h.b16 %v1928
        %v2102 = vunpack.c.l.b16 %v1929
        %v2103 = vunpack.c.h.b16 %v1929
        %v2104 = vunpack.c.l.b16 %v1930
        %v2105 = vunpack.c.h.b16 %v1930
        %v2106 = vunpack.c.l.b16 %v1931
        %v2107 = vunpack.c.h.b16 %v1931
        %v2108 = vunpack.c.l.b16 %v1932
        %v2109 = vunpack.c.h.b16 %v1932
        %v2110 = vunpack.c.l.b16 %v1933
        %v2111 = vunpack.c.h.b16 %v1933
        %v2112 = vunpack.c.l.b16 %v1934
        %v2113 = vunpack.c.h.b16 %v1934
        %v2114 = vunpack.c.l.b16 %v1935
        %v2115 = vunpack.c.h.b16 %v1935
        %v2116 = vunpack.c.l.b16 %v1936
        %v2117 = vunpack.c.h.b16 %v1936
        %v2118 = vunpack.c.l.b16 %v1937
        %v2119 = vunpack.c.h.b16 %v1937
        %v2120 = vunpack.c.l.b16 %v1938
        %v2121 = vunpack.c.h.b16 %v1938
        %v2122 = vunpack.c.l.b16 %v1939
        %v2123 = vunpack.c.h.b16 %v1939
        %v2124 = vunpack.c.l.b16 %v1940
        %v2125 = vunpack.c.h.b16 %v1940
        %v2126 = vunpack.c.l.b16 %v1941
        %v2127 = vunpack.c.h.b16 %v1941
        %v2128 = vunpack.c.l.b16 %v1942
        %v2129 = vunpack.c.h.b16 %v1942
        %v2130 = vunpack.c.l.b16 %v1943
        %v2131 = vunpack.c.h.b16 %v1943
        %v2132 = vunpack.c.l.b16 %v1944
        %v2133 = vunpack.c.h.b16 %v1944
        %v2134 = vunpack.c.l.b16 %v1945
        %v2135 = vunpack.c.h.b16 %v1945
        %v2136 = vunpack.c.l.b16 %v1946
        %v2137 = vunpack.c.h.b16 %v1946
        %v2138 = vunpack.c.l.b16 %v1947
        %v2139 = vunpack.c.h.b16 %v1947
        %v2140 = vpack.c.b16 %v2016, %v2012
        %v2141 = vpack.c.b16 %v2017, %v2013
        %v2142 = vpack.c.b16 %v2018, %v2014
        %v2143 = vpack.c.b16 %v2019, %v2015
        %v2144 = vpack.c.b16 %v2024, %v2020
        %v2145 = vpack.c.b16 %v2025, %v2021
        %v2146 = vpack.c.b16 %v2026, %v2022
        %v2147 = vpack.c.b16 %v2027, %v2023
        %v2148 = vpack.c.b16 %v2032, %v2028
        %v2149 = vpack.c.b16 %v2033, %v2029
        %v2150 = vpack.c.b16 %v2034, %v2030
        %v2151 = vpack.c.b16 %v2035, %v2031
        %v2152 = vpack.c.b16 %v2040, %v2036
        %v2153 = vpack.c.b16 %v2041, %v2037
        %v2154 = vpack.c.b16 %v2042, %v2038
        %v2155 = vpack.c.b16 %v2043, %v2039
        %v2156 = vpack.c.b16 %v2048, %v2044
        %v2157 = vpack.c.b16 %v2049, %v2045
        %v2158 = vpack.c.b16 %v2050, %v2046
        %v2159 = vpack.c.b16 %v2051, %v2047
        %v2160 = vpack.c.b16 %v2056, %v2052
        %v2161 = vpack.c.b16 %v2057, %v2053
        %v2162 = vpack.c.b16 %v2058, %v2054
        %v2163 = vpack.c.b16 %v2059, %v2055
        %v2164 = vpack.c.b16 %v2064, %v2060
        %v2165 = vpack.c.b16 %v2065, %v2061
        %v2166 = vpack.c.b16 %v2066, %v2062
        %v2167 = vpack.c.b16 %v2067, %v2063
        %v2168 = vpack.c.b16 %v2072, %v2068
        %v2169 = vpack.c.b16 %v2073, %v2069
        %v2170 = vpack.c.b16 %v2074, %v2070
        %v2171 = vpack.c.b16 %v2075, %v2071
        %v2172 = vpack.c.b16 %v2080, %v2076
        %v2173 = vpack.c.b16 %v2081, %v2077
        %v2174 = vpack.c.b16 %v2082, %v2078
        %v2175 = vpack.c.b16 %v2083, %v2079
        %v2176 = vpack.c.b16 %v2088, %v2084
        %v2177 = vpack.c.b16 %v2089, %v2085
        %v2178 = vpack.c.b16 %v2090, %v2086
        %v2179 = vpack.c.b16 %v2091, %v2087
        %v2180 = vpack.c.b16 %v2096, %v2092
        %v2181 = vpack.c.b16 %v2097, %v2093
        %v2182 = vpack.c.b16 %v2098, %v2094
        %v2183 = vpack.c.b16 %v2099, %v2095
        %v2184 = vpack.c.b16 %v2104, %v2100
        %v2185 = vpack.c.b16 %v2105, %v2101
        %v2186 = vpack.c.b16 %v2106, %v2102
        %v2187 = vpack.c.b16 %v2107, %v2103
        %v2188 = vpack.c.b16 %v2112, %v2108
        %v2189 = vpack.c.b16 %v2113, %v2109
        %v2190 = vpack.c.b16 %v2114, %v2110
        %v2191 = vpack.c.b16 %v2115, %v2111
        %v2192 = vpack.c.b16 %v2120, %v2116
        %v2193 = vpack.c.b16 %v2121, %v2117
        %v2194 = vpack.c.b16 %v2122, %v2118
        %v2195 = vpack.c.b16 %v2123, %v2119
        %v2196 = vpack.c.b16 %v2128, %v2124
        %v2197 = vpack.c.b16 %v2129, %v2125
        %v2198 = vpack.c.b16 %v2130, %v2126
        %v2199 = vpack.c.b16 %v2131, %v2127
        %v2200 = vpack.c.b16 %v2136, %v2132
        %v2201 = vpack.c.b16 %v2137, %v2133
        %v2202 = vpack.c.b16 %v2138, %v2134
        %v2203 = vpack.c.b16 %v2139, %v2135
        %2268 = vmatprep.subr.bf16.mxu0 %v2169
        %2269 = vmatpush1.bf16.msra.mxu0 %v2168
        %2270 = vmatprep.subr.bf16.mxu0 %v2165
        %2271 = vmatpush1.bf16.msra.mxu0 %v2164
        %2272 = vmatprep.subr.bf16.mxu0 %v2161
        %2273 = vmatpush1.bf16.msra.mxu0 %v2160
        %2274 = vmatprep.subr.bf16.mxu0 %v2157
        %2275 = vmatpush1.bf16.msra.mxu0 %v2156
        %2276 = vmatprep.subr.bf16.mxu0 %v2153
        %2277 = vmatpush1.bf16.msra.mxu0 %v2152
        %2278 = vmatprep.subr.bf16.mxu0 %v2149
        %2279 = vmatpush1.bf16.msra.mxu0 %v2148
        %2280 = vmatprep.subr.bf16.mxu0 %v2145
        %2281 = vmatpush1.bf16.msra.mxu0 %v2144
        %2282 = vmatprep.subr.bf16.mxu0 %v2141
        %2283 = vmatpush1.bf16.msra.mxu0 %v2140
        %2284 = vmatprep.subr.bf16.mxu0 %v2201
        %2285 = vmatpush2.bf16.msra.mxu0 %v2200
        %2286 = vmatprep.subr.bf16.mxu0 %v2197
        %2287 = vmatpush2.bf16.msra.mxu0 %v2196
        %2288 = vmatprep.subr.bf16.mxu0 %v2193
        %2289 = vmatpush2.bf16.msra.mxu0 %v2192
        %2290 = vmatprep.subr.bf16.mxu0 %v2189
        %2291 = vmatpush2.bf16.msra.mxu0 %v2188
        %2292 = vmatprep.subr.bf16.mxu0 %v2185
        %2293 = vmatpush2.bf16.msra.mxu0 %v2184
        %2294 = vmatprep.subr.bf16.mxu0 %v2181
        %2295 = vmatpush2.bf16.msra.mxu0 %v2180
        %2296 = vmatprep.subr.bf16.mxu0 %v2177
        %2297 = vmatpush2.bf16.msra.mxu0 %v2176
        %2298 = vmatprep.subr.bf16.mxu0 %v2173
        %2299 = vmatpush2.bf16.msra.mxu0 %v2172
        %2300 = vmatprep.mubr.bf16.mxu0 %v1869
        %2301 = vmatmul.mubr.bf16.gmra.mxu0 %v1868
        %v2302 = vpop.f32.mrf.mxu0
        %v2303 = vadd.f32 0.0, %v2302
        %v2304 = vpop.f32.mrf.mxu0
        %v2305 = vadd.f32 0.0, %v2304
        %v2306 = vpop.f32.mrf.mxu0
        %v2307 = vadd.f32 0.0, %v2306
        %v2308 = vpop.f32.mrf.mxu0
        %v2309 = vadd.f32 0.0, %v2308
        %2310 = vmatprep.mubr.bf16.mxu0 %v1871
        %2311 = vmatmul.mubr.bf16.gmra.mxu0 %v1870
        %v2312 = vpop.f32.mrf.mxu0
        %v2313 = vadd.f32 0.0, %v2312
        %v2314 = vpop.f32.mrf.mxu0
        %v2315 = vadd.f32 0.0, %v2314
        %v2316 = vpop.f32.mrf.mxu0
        %v2317 = vadd.f32 0.0, %v2316
        %v2318 = vpop.f32.mrf.mxu0
        %v2319 = vadd.f32 0.0, %v2318
        %2320 = vmatprep.mubr.bf16.mxu0 %v1873
        %2321 = vmatmul.mubr.bf16.gmra.mxu0 %v1872
        %v2322 = vpop.f32.mrf.mxu0
        %v2323 = vadd.f32 0.0, %v2322
        %v2324 = vpop.f32.mrf.mxu0
        %v2325 = vadd.f32 0.0, %v2324
        %v2326 = vpop.f32.mrf.mxu0
        %v2327 = vadd.f32 0.0, %v2326
        %v2328 = vpop.f32.mrf.mxu0
        %v2329 = vadd.f32 0.0, %v2328
        %2330 = vmatprep.mubr.bf16.mxu0 %v1875
        %2331 = vmatmul.mubr.bf16.gmra.mxu0 %v1874
        %v2332 = vpop.f32.mrf.mxu0
        %v2333 = vadd.f32 0.0, %v2332
        %v2334 = vpop.f32.mrf.mxu0
        %v2335 = vadd.f32 0.0, %v2334
        %v2336 = vpop.f32.mrf.mxu0
        %v2337 = vadd.f32 0.0, %v2336
        %v2338 = vpop.f32.mrf.mxu0
        %v2339 = vadd.f32 0.0, %v2338
        %2340 = vmatprep.mubr.bf16.mxu0 %v1877
        %2341 = vmatmul.mubr.bf16.gmra.mxu0 %v1876
        %v2342 = vpop.f32.mrf.mxu0
        %v2343 = vadd.f32 0.0, %v2342
        %v2344 = vpop.f32.mrf.mxu0
        %v2345 = vadd.f32 0.0, %v2344
        %v2346 = vpop.f32.mrf.mxu0
        %v2347 = vadd.f32 0.0, %v2346
        %v2348 = vpop.f32.mrf.mxu0
        %v2349 = vadd.f32 0.0, %v2348
        %2350 = vmatprep.mubr.bf16.mxu0 %v1879
        %2351 = vmatmul.mubr.bf16.gmra.mxu0 %v1878
        %v2352 = vpop.f32.mrf.mxu0
        %v2353 = vadd.f32 0.0, %v2352
        %v2354 = vpop.f32.mrf.mxu0
        %v2355 = vadd.f32 0.0, %v2354
        %v2356 = vpop.f32.mrf.mxu0
        %v2357 = vadd.f32 0.0, %v2356
        %v2358 = vpop.f32.mrf.mxu0
        %v2359 = vadd.f32 0.0, %v2358
        %2360 = vmatprep.mubr.bf16.mxu0 %v1881
        %2361 = vmatmul.mubr.bf16.gmra.mxu0 %v1880
        %v2362 = vpop.f32.mrf.mxu0
        %v2363 = vadd.f32 0.0, %v2362
        %v2364 = vpop.f32.mrf.mxu0
        %v2365 = vadd.f32 0.0, %v2364
        %v2366 = vpop.f32.mrf.mxu0
        %v2367 = vadd.f32 0.0, %v2366
        %v2368 = vpop.f32.mrf.mxu0
        %v2369 = vadd.f32 0.0, %v2368
        %2370 = vmatprep.mubr.bf16.mxu0 %v1883
        %2371 = vmatmul.mubr.bf16.gmra.mxu0 %v1882
        %v2372 = vpop.f32.mrf.mxu0
        %v2373 = vadd.f32 0.0, %v2372
        %v2374 = vpop.f32.mrf.mxu0
        %v2375 = vadd.f32 0.0, %v2374
        %v2376 = vpop.f32.mrf.mxu0
        %v2377 = vadd.f32 0.0, %v2376
        %v2378 = vpop.f32.mrf.mxu0
        %v2379 = vadd.f32 0.0, %v2378
        %2380 = vdwg.mxu0
        %2381 = vmatprep.subr.bf16.mxu0 %v2171
        %2382 = vmatpush1.bf16.msra.mxu0 %v2170
        %2383 = vmatprep.subr.bf16.mxu0 %v2167
        %2384 = vmatpush1.bf16.msra.mxu0 %v2166
        %2385 = vmatprep.subr.bf16.mxu0 %v2163
        %2386 = vmatpush1.bf16.msra.mxu0 %v2162
        %2387 = vmatprep.subr.bf16.mxu0 %v2159
        %2388 = vmatpush1.bf16.msra.mxu0 %v2158
        %2389 = vmatprep.subr.bf16.mxu0 %v2155
        %2390 = vmatpush1.bf16.msra.mxu0 %v2154
        %2391 = vmatprep.subr.bf16.mxu0 %v2151
        %2392 = vmatpush1.bf16.msra.mxu0 %v2150
        %2393 = vmatprep.subr.bf16.mxu0 %v2147
        %2394 = vmatpush1.bf16.msra.mxu0 %v2146
        %2395 = vmatprep.subr.bf16.mxu0 %v2143
        %2396 = vmatpush1.bf16.msra.mxu0 %v2142
        %2397 = vmatprep.subr.bf16.mxu0 %v2203
        %2398 = vmatpush2.bf16.msra.mxu0 %v2202
        %2399 = vmatprep.subr.bf16.mxu0 %v2199
        %2400 = vmatpush2.bf16.msra.mxu0 %v2198
        %2401 = vmatprep.subr.bf16.mxu0 %v2195
        %2402 = vmatpush2.bf16.msra.mxu0 %v2194
        %2403 = vmatprep.subr.bf16.mxu0 %v2191
        %2404 = vmatpush2.bf16.msra.mxu0 %v2190
        %2405 = vmatprep.subr.bf16.mxu0 %v2187
        %2406 = vmatpush2.bf16.msra.mxu0 %v2186
        %2407 = vmatprep.subr.bf16.mxu0 %v2183
        %2408 = vmatpush2.bf16.msra.mxu0 %v2182
        %2409 = vmatprep.subr.bf16.mxu0 %v2179
        %2410 = vmatpush2.bf16.msra.mxu0 %v2178
        %2411 = vmatprep.subr.bf16.mxu0 %v2175
        %2412 = vmatpush2.bf16.msra.mxu0 %v2174
        %2413 = vmatprep.mubr.bf16.mxu0 %v1869
        %2414 = vmatmul.mubr.bf16.gmra.mxu0 %v1868
        %v2415 = vpop.f32.mrf.mxu0
        %v2416 = vadd.f32 0.0, %v2415
        %v2417 = vpop.f32.mrf.mxu0
        %v2418 = vadd.f32 0.0, %v2417
        %v2419 = vpop.f32.mrf.mxu0
        %v2420 = vadd.f32 0.0, %v2419
        %v2421 = vpop.f32.mrf.mxu0
        %v2422 = vadd.f32 0.0, %v2421
        %2423 = vmatprep.mubr.bf16.mxu0 %v1871
        %2424 = vmatmul.mubr.bf16.gmra.mxu0 %v1870
        %v2425 = vpop.f32.mrf.mxu0
        %v2426 = vadd.f32 0.0, %v2425
        %v2427 = vpop.f32.mrf.mxu0
        %v2428 = vadd.f32 0.0, %v2427
        %v2429 = vpop.f32.mrf.mxu0
        %v2430 = vadd.f32 0.0, %v2429
        %v2431 = vpop.f32.mrf.mxu0
        %v2432 = vadd.f32 0.0, %v2431
        %2433 = vmatprep.mubr.bf16.mxu0 %v1873
        %2434 = vmatmul.mubr.bf16.gmra.mxu0 %v1872
        %v2435 = vpop.f32.mrf.mxu0
        %v2436 = vadd.f32 0.0, %v2435
        %v2437 = vpop.f32.mrf.mxu0
        %v2438 = vadd.f32 0.0, %v2437
        %v2439 = vpop.f32.mrf.mxu0
        %v2440 = vadd.f32 0.0, %v2439
        %v2441 = vpop.f32.mrf.mxu0
        %v2442 = vadd.f32 0.0, %v2441
        %2443 = vmatprep.mubr.bf16.mxu0 %v1875
        %2444 = vmatmul.mubr.bf16.gmra.mxu0 %v1874
        %v2445 = vpop.f32.mrf.mxu0
        %v2446 = vadd.f32 0.0, %v2445
        %v2447 = vpop.f32.mrf.mxu0
        %v2448 = vadd.f32 0.0, %v2447
        %v2449 = vpop.f32.mrf.mxu0
        %v2450 = vadd.f32 0.0, %v2449
        %v2451 = vpop.f32.mrf.mxu0
        %v2452 = vadd.f32 0.0, %v2451
        %2453 = vmatprep.mubr.bf16.mxu0 %v1877
        %2454 = vmatmul.mubr.bf16.gmra.mxu0 %v1876
        %v2455 = vpop.f32.mrf.mxu0
        %v2456 = vadd.f32 0.0, %v2455
        %v2457 = vpop.f32.mrf.mxu0
        %v2458 = vadd.f32 0.0, %v2457
        %v2459 = vpop.f32.mrf.mxu0
        %v2460 = vadd.f32 0.0, %v2459
        %v2461 = vpop.f32.mrf.mxu0
        %v2462 = vadd.f32 0.0, %v2461
        %2463 = vmatprep.mubr.bf16.mxu0 %v1879
        %2464 = vmatmul.mubr.bf16.gmra.mxu0 %v1878
        %v2465 = vpop.f32.mrf.mxu0
        %v2466 = vadd.f32 0.0, %v2465
        %v2467 = vpop.f32.mrf.mxu0
        %v2468 = vadd.f32 0.0, %v2467
        %v2469 = vpop.f32.mrf.mxu0
        %v2470 = vadd.f32 0.0, %v2469
        %v2471 = vpop.f32.mrf.mxu0
        %v2472 = vadd.f32 0.0, %v2471
        %2473 = vmatprep.mubr.bf16.mxu0 %v1881
        %2474 = vmatmul.mubr.bf16.gmra.mxu0 %v1880
        %v2475 = vpop.f32.mrf.mxu0
        %v2476 = vadd.f32 0.0, %v2475
        %v2477 = vpop.f32.mrf.mxu0
        %v2478 = vadd.f32 0.0, %v2477
        %v2479 = vpop.f32.mrf.mxu0
        %v2480 = vadd.f32 0.0, %v2479
        %v2481 = vpop.f32.mrf.mxu0
        %v2482 = vadd.f32 0.0, %v2481
        %2483 = vmatprep.mubr.bf16.mxu0 %v1883
        %2484 = vmatmul.mubr.bf16.gmra.mxu0 %v1882
        %v2485 = vpop.f32.mrf.mxu0
        %v2486 = vadd.f32 0.0, %v2485
        %v2487 = vpop.f32.mrf.mxu0
        %v2488 = vadd.f32 0.0, %v2487
        %v2489 = vpop.f32.mrf.mxu0
        %v2490 = vadd.f32 0.0, %v2489
        %v2491 = vpop.f32.mrf.mxu0
        %v2492 = vadd.f32 0.0, %v2491
        %2493 = vdwg.mxu0
        %v2494 = vadd.f32 %v2303, %v2307
        %v2495 = vadd.f32 %v2494, %v2313
        %v2496 = vadd.f32 %v2495, %v2317
        %v2497 = vadd.f32 %v2496, %v2323
        %v2498 = vadd.f32 %v2497, %v2327
        %v2499 = vadd.f32 %v2498, %v2333
        %v2500 = vadd.f32 %v2499, %v2337
        %v2501 = vadd.f32 %v2500, %v2343
        %v2502 = vadd.f32 %v2501, %v2347
        %v2503 = vadd.f32 %v2502, %v2353
        %v2504 = vadd.f32 %v2503, %v2357
        %v2505 = vadd.f32 %v2504, %v2363
        %v2506 = vadd.f32 %v2505, %v2367
        %v2507 = vadd.f32 %v2506, %v2373
        %v2508 = vadd.f32 %v2507, %v2377
        %v2509 = vrot.slane %v2508, 4
        %v2510 = vadd.f32 %v2508, %v2509
        %v2511 = vrot.slane %v2510, 2
        %v2512 = vadd.f32 %v2510, %v2511
        %v2513 = vrot.slane %v2512, 1
        %v2514 = vadd.f32 %v2512, %v2513
        %v2515 = vadd.f32 %v2305, %v2309
        %v2516 = vadd.f32 %v2515, %v2315
        %v2517 = vadd.f32 %v2516, %v2319
        %v2518 = vadd.f32 %v2517, %v2325
        %v2519 = vadd.f32 %v2518, %v2329
        %v2520 = vadd.f32 %v2519, %v2335
        %v2521 = vadd.f32 %v2520, %v2339
        %v2522 = vadd.f32 %v2521, %v2345
        %v2523 = vadd.f32 %v2522, %v2349
        %v2524 = vadd.f32 %v2523, %v2355
        %v2525 = vadd.f32 %v2524, %v2359
        %v2526 = vadd.f32 %v2525, %v2365
        %v2527 = vadd.f32 %v2526, %v2369
        %v2528 = vadd.f32 %v2527, %v2375
        %v2529 = vadd.f32 %v2528, %v2379
        %v2530 = vrot.slane %v2529, 4
        %v2531 = vadd.f32 %v2529, %v2530
        %v2532 = vrot.slane %v2531, 2
        %v2533 = vadd.f32 %v2531, %v2532
        %v2534 = vrot.slane %v2533, 1
        %v2535 = vadd.f32 %v2533, %v2534
        %v2536 = vadd.f32 %v2416, %v2420
        %v2537 = vadd.f32 %v2536, %v2426
        %v2538 = vadd.f32 %v2537, %v2430
        %v2539 = vadd.f32 %v2538, %v2436
        %v2540 = vadd.f32 %v2539, %v2440
        %v2541 = vadd.f32 %v2540, %v2446
        %v2542 = vadd.f32 %v2541, %v2450
        %v2543 = vadd.f32 %v2542, %v2456
        %v2544 = vadd.f32 %v2543, %v2460
        %v2545 = vadd.f32 %v2544, %v2466
        %v2546 = vadd.f32 %v2545, %v2470
        %v2547 = vadd.f32 %v2546, %v2476
        %v2548 = vadd.f32 %v2547, %v2480
        %v2549 = vadd.f32 %v2548, %v2486
        %v2550 = vadd.f32 %v2549, %v2490
        %v2551 = vrot.slane %v2550, 4
        %v2552 = vadd.f32 %v2550, %v2551
        %v2553 = vrot.slane %v2552, 2
        %v2554 = vadd.f32 %v2552, %v2553
        %v2555 = vrot.slane %v2554, 1
        %v2556 = vadd.f32 %v2554, %v2555
        %v2557 = vadd.f32 %v2418, %v2422
        %v2558 = vadd.f32 %v2557, %v2428
        %v2559 = vadd.f32 %v2558, %v2432
        %v2560 = vadd.f32 %v2559, %v2438
        %v2561 = vadd.f32 %v2560, %v2442
        %v2562 = vadd.f32 %v2561, %v2448
        %v2563 = vadd.f32 %v2562, %v2452
        %v2564 = vadd.f32 %v2563, %v2458
        %v2565 = vadd.f32 %v2564, %v2462
        %v2566 = vadd.f32 %v2565, %v2468
        %v2567 = vadd.f32 %v2566, %v2472
        %v2568 = vadd.f32 %v2567, %v2478
        %v2569 = vadd.f32 %v2568, %v2482
        %v2570 = vadd.f32 %v2569, %v2488
        %v2571 = vadd.f32 %v2570, %v2492
        %v2572 = vrot.slane %v2571, 4
        %v2573 = vadd.f32 %v2571, %v2572
        %v2574 = vrot.slane %v2573, 2
        %v2575 = vadd.f32 %v2573, %v2574
        %v2576 = vrot.slane %v2575, 1
        %v2577 = vadd.f32 %v2575, %v2576
        %v2578 = vmul.f32 %v2514, %v1187
        %v2579 = vmul.f32 %v2535, %v1187
        %v2580 = vmul.f32 %v2556, %v1187
        %v2581 = vmul.f32 %v2577, %v1187
        %v2582 = vsub.f32 %v2303, %v2578
        %v2583 = vsub.f32 %v2305, %v2579
        %v2584 = vsub.f32 %v2416, %v2580
        %v2585 = vsub.f32 %v2418, %v2581
        %v2586 = vsub.f32 %v2307, %v2578
        %v2587 = vsub.f32 %v2309, %v2579
        %v2588 = vsub.f32 %v2420, %v2580
        %v2589 = vsub.f32 %v2422, %v2581
        %v2590 = vsub.f32 %v2313, %v2578
        %v2591 = vsub.f32 %v2315, %v2579
        %v2592 = vsub.f32 %v2426, %v2580
        %v2593 = vsub.f32 %v2428, %v2581
        %v2594 = vsub.f32 %v2317, %v2578
        %v2595 = vsub.f32 %v2319, %v2579
        %v2596 = vsub.f32 %v2430, %v2580
        %v2597 = vsub.f32 %v2432, %v2581
        %v2598 = vsub.f32 %v2323, %v2578
        %v2599 = vsub.f32 %v2325, %v2579
        %v2600 = vsub.f32 %v2436, %v2580
        %v2601 = vsub.f32 %v2438, %v2581
        %v2602 = vsub.f32 %v2327, %v2578
        %v2603 = vsub.f32 %v2329, %v2579
        %v2604 = vsub.f32 %v2440, %v2580
        %v2605 = vsub.f32 %v2442, %v2581
        %v2606 = vsub.f32 %v2333, %v2578
        %v2607 = vsub.f32 %v2335, %v2579
        %v2608 = vsub.f32 %v2446, %v2580
        %v2609 = vsub.f32 %v2448, %v2581
        %v2610 = vsub.f32 %v2337, %v2578
        %v2611 = vsub.f32 %v2339, %v2579
        %v2612 = vsub.f32 %v2450, %v2580
        %v2613 = vsub.f32 %v2452, %v2581
        %v2614 = vsub.f32 %v2343, %v2578
        %v2615 = vsub.f32 %v2345, %v2579
        %v2616 = vsub.f32 %v2456, %v2580
        %v2617 = vsub.f32 %v2458, %v2581
        %v2618 = vsub.f32 %v2347, %v2578
        %v2619 = vsub.f32 %v2349, %v2579
        %v2620 = vsub.f32 %v2460, %v2580
        %v2621 = vsub.f32 %v2462, %v2581
        %v2622 = vsub.f32 %v2353, %v2578
        %v2623 = vsub.f32 %v2355, %v2579
        %v2624 = vsub.f32 %v2466, %v2580
        %v2625 = vsub.f32 %v2468, %v2581
        %v2626 = vsub.f32 %v2357, %v2578
        %v2627 = vsub.f32 %v2359, %v2579
        %v2628 = vsub.f32 %v2470, %v2580
        %v2629 = vsub.f32 %v2472, %v2581
        %v2630 = vsub.f32 %v2363, %v2578
        %v2631 = vsub.f32 %v2365, %v2579
        %v2632 = vsub.f32 %v2476, %v2580
        %v2633 = vsub.f32 %v2478, %v2581
        %v2634 = vsub.f32 %v2367, %v2578
        %v2635 = vsub.f32 %v2369, %v2579
        %v2636 = vsub.f32 %v2480, %v2580
        %v2637 = vsub.f32 %v2482, %v2581
        %v2638 = vsub.f32 %v2373, %v2578
        %v2639 = vsub.f32 %v2375, %v2579
        %v2640 = vsub.f32 %v2486, %v2580
        %v2641 = vsub.f32 %v2488, %v2581
        %v2642 = vsub.f32 %v2377, %v2578
        %v2643 = vsub.f32 %v2379, %v2579
        %v2644 = vsub.f32 %v2490, %v2580
        %v2645 = vsub.f32 %v2492, %v2581
        %v2646 = vmul.f32 %v2582, %v2582
        %v2647 = vmul.f32 %v2583, %v2583
        %v2648 = vmul.f32 %v2584, %v2584
        %v2649 = vmul.f32 %v2585, %v2585
        %v2650 = vmul.f32 %v2586, %v2586
        %v2651 = vmul.f32 %v2587, %v2587
        %v2652 = vmul.f32 %v2588, %v2588
        %v2653 = vmul.f32 %v2589, %v2589
        %v2654 = vmul.f32 %v2590, %v2590
        %v2655 = vmul.f32 %v2591, %v2591
        %v2656 = vmul.f32 %v2592, %v2592
        %v2657 = vmul.f32 %v2593, %v2593
        %v2658 = vmul.f32 %v2594, %v2594
        %v2659 = vmul.f32 %v2595, %v2595
        %v2660 = vmul.f32 %v2596, %v2596
        %v2661 = vmul.f32 %v2597, %v2597
        %v2662 = vmul.f32 %v2598, %v2598
        %v2663 = vmul.f32 %v2599, %v2599
        %v2664 = vmul.f32 %v2600, %v2600
        %v2665 = vmul.f32 %v2601, %v2601
        %v2666 = vmul.f32 %v2602, %v2602
        %v2667 = vmul.f32 %v2603, %v2603
        %v2668 = vmul.f32 %v2604, %v2604
        %v2669 = vmul.f32 %v2605, %v2605
        %v2670 = vmul.f32 %v2606, %v2606
        %v2671 = vmul.f32 %v2607, %v2607
        %v2672 = vmul.f32 %v2608, %v2608
        %v2673 = vmul.f32 %v2609, %v2609
        %v2674 = vmul.f32 %v2610, %v2610
        %v2675 = vmul.f32 %v2611, %v2611
        %v2676 = vmul.f32 %v2612, %v2612
        %v2677 = vmul.f32 %v2613, %v2613
        %v2678 = vmul.f32 %v2614, %v2614
        %v2679 = vmul.f32 %v2615, %v2615
        %v2680 = vmul.f32 %v2616, %v2616
        %v2681 = vmul.f32 %v2617, %v2617
        %v2682 = vmul.f32 %v2618, %v2618
        %v2683 = vmul.f32 %v2619, %v2619
        %v2684 = vmul.f32 %v2620, %v2620
        %v2685 = vmul.f32 %v2621, %v2621
        %v2686 = vmul.f32 %v2622, %v2622
        %v2687 = vmul.f32 %v2623, %v2623
        %v2688 = vmul.f32 %v2624, %v2624
        %v2689 = vmul.f32 %v2625, %v2625
        %v2690 = vmul.f32 %v2626, %v2626
        %v2691 = vmul.f32 %v2627, %v2627
        %v2692 = vmul.f32 %v2628, %v2628
        %v2693 = vmul.f32 %v2629, %v2629
        %v2694 = vmul.f32 %v2630, %v2630
        %v2695 = vmul.f32 %v2631, %v2631
        %v2696 = vmul.f32 %v2632, %v2632
        %v2697 = vmul.f32 %v2633, %v2633
        %v2698 = vmul.f32 %v2634, %v2634
        %v2699 = vmul.f32 %v2635, %v2635
        %v2700 = vmul.f32 %v2636, %v2636
        %v2701 = vmul.f32 %v2637, %v2637
        %v2702 = vmul.f32 %v2638, %v2638
        %v2703 = vmul.f32 %v2639, %v2639
        %v2704 = vmul.f32 %v2640, %v2640
        %v2705 = vmul.f32 %v2641, %v2641
        %v2706 = vmul.f32 %v2642, %v2642
        %v2707 = vmul.f32 %v2643, %v2643
        %v2708 = vmul.f32 %v2644, %v2644
        %v2709 = vmul.f32 %v2645, %v2645
        %v2710 = vadd.f32 %v2646, %v2650
        %v2711 = vadd.f32 %v2710, %v2654
        %v2712 = vadd.f32 %v2711, %v2658
        %v2713 = vadd.f32 %v2712, %v2662
        %v2714 = vadd.f32 %v2713, %v2666
        %v2715 = vadd.f32 %v2714, %v2670
        %v2716 = vadd.f32 %v2715, %v2674
        %v2717 = vadd.f32 %v2716, %v2678
        %v2718 = vadd.f32 %v2717, %v2682
        %v2719 = vadd.f32 %v2718, %v2686
        %v2720 = vadd.f32 %v2719, %v2690
        %v2721 = vadd.f32 %v2720, %v2694
        %v2722 = vadd.f32 %v2721, %v2698
        %v2723 = vadd.f32 %v2722, %v2702
        %v2724 = vadd.f32 %v2723, %v2706
        %v2725 = vrot.slane %v2724, 4
        %v2726 = vadd.f32 %v2724, %v2725
        %v2727 = vrot.slane %v2726, 2
        %v2728 = vadd.f32 %v2726, %v2727
        %v2729 = vrot.slane %v2728, 1
        %v2730 = vadd.f32 %v2728, %v2729
        %v2731 = vadd.f32 %v2647, %v2651
        %v2732 = vadd.f32 %v2731, %v2655
        %v2733 = vadd.f32 %v2732, %v2659
        %v2734 = vadd.f32 %v2733, %v2663
        %v2735 = vadd.f32 %v2734, %v2667
        %v2736 = vadd.f32 %v2735, %v2671
        %v2737 = vadd.f32 %v2736, %v2675
        %v2738 = vadd.f32 %v2737, %v2679
        %v2739 = vadd.f32 %v2738, %v2683
        %v2740 = vadd.f32 %v2739, %v2687
        %v2741 = vadd.f32 %v2740, %v2691
        %v2742 = vadd.f32 %v2741, %v2695
        %v2743 = vadd.f32 %v2742, %v2699
        %v2744 = vadd.f32 %v2743, %v2703
        %v2745 = vadd.f32 %v2744, %v2707
        %v2746 = vrot.slane %v2745, 4
        %v2747 = vadd.f32 %v2745, %v2746
        %v2748 = vrot.slane %v2747, 2
        %v2749 = vadd.f32 %v2747, %v2748
        %v2750 = vrot.slane %v2749, 1
        %v2751 = vadd.f32 %v2749, %v2750
        %v2752 = vadd.f32 %v2648, %v2652
        %v2753 = vadd.f32 %v2752, %v2656
        %v2754 = vadd.f32 %v2753, %v2660
        %v2755 = vadd.f32 %v2754, %v2664
        %v2756 = vadd.f32 %v2755, %v2668
        %v2757 = vadd.f32 %v2756, %v2672
        %v2758 = vadd.f32 %v2757, %v2676
        %v2759 = vadd.f32 %v2758, %v2680
        %v2760 = vadd.f32 %v2759, %v2684
        %v2761 = vadd.f32 %v2760, %v2688
        %v2762 = vadd.f32 %v2761, %v2692
        %v2763 = vadd.f32 %v2762, %v2696
        %v2764 = vadd.f32 %v2763, %v2700
        %v2765 = vadd.f32 %v2764, %v2704
        %v2766 = vadd.f32 %v2765, %v2708
        %v2767 = vrot.slane %v2766, 4
        %v2768 = vadd.f32 %v2766, %v2767
        %v2769 = vrot.slane %v2768, 2
        %v2770 = vadd.f32 %v2768, %v2769
        %v2771 = vrot.slane %v2770, 1
        %v2772 = vadd.f32 %v2770, %v2771
        %v2773 = vadd.f32 %v2649, %v2653
        %v2774 = vadd.f32 %v2773, %v2657
        %v2775 = vadd.f32 %v2774, %v2661
        %v2776 = vadd.f32 %v2775, %v2665
        %v2777 = vadd.f32 %v2776, %v2669
        %v2778 = vadd.f32 %v2777, %v2673
        %v2779 = vadd.f32 %v2778, %v2677
        %v2780 = vadd.f32 %v2779, %v2681
        %v2781 = vadd.f32 %v2780, %v2685
        %v2782 = vadd.f32 %v2781, %v2689
        %v2783 = vadd.f32 %v2782, %v2693
        %v2784 = vadd.f32 %v2783, %v2697
        %v2785 = vadd.f32 %v2784, %v2701
        %v2786 = vadd.f32 %v2785, %v2705
        %v2787 = vadd.f32 %v2786, %v2709
        %v2788 = vrot.slane %v2787, 4
        %v2789 = vadd.f32 %v2787, %v2788
        %v2790 = vrot.slane %v2789, 2
        %v2791 = vadd.f32 %v2789, %v2790
        %v2792 = vrot.slane %v2791, 1
        %v2793 = vadd.f32 %v2791, %v2792
        %v2794 = vmul.f32 %v2730, %v1187
        %v2795 = vmul.f32 %v2751, %v1187
        %v2796 = vmul.f32 %v2772, %v1187
        %v2797 = vmul.f32 %v2793, %v1187
        %v2798 = vld [vmem:[%s10] sm:$0xf]
        %v2799 = vadd.f32 %v2794, 0.8
        %v2800 = vadd.f32 %v2795, 0.8
        %v2801 = vadd.f32 %v2796, 0.8
        %v2802 = vadd.f32 %v2797, 0.8
        %v2803 = vrsqrt.pop %v2799
        %v2804 = vrsqrt.pop %v2800
        %v2805 = vrsqrt.pop %v2801
        %v2806 = vrsqrt.pop %v2802
        %v2811 = vcombine.low %v2803, %v2804
        %v2812 = vcombine.low %v2805, %v2806
        %v2814 = vunpack.c.l.s4 1966171168
        %v2815 = vunpack.c.0.s8 %v2814
        %v2816 = vlaneseq
        %v2817 = vshrl.u32 %v2816, 7
        %v2818 = vsub.s32 %v2815, %v2817
        %v2819 = vrot.slane %v2811, %v2818
        %v2821 = vunpack.c.l.s4 1966171168
        %v2822 = vunpack.c.0.s8 %v2821
        %v2823 = vlaneseq
        %v2824 = vshrl.u32 %v2823, 7
        %v2825 = vsub.s32 %v2822, %v2824
        %v2826 = vrot.slane %v2812, %v2825
        %v2827 = vcombine.low %v2819, %v2826
        %v2829 = vunpack.c.l.s4 1966171168
        %v2830 = vunpack.c.0.s8 %v2829
        %v2831 = vlaneseq
        %v2832 = vshrl.u32 %v2831, 7
        %v2833 = vsub.s32 %v2830, %v2832
        %v2834 = vrot.slane %v2827, %v2833
        %v2836 = vmul.f32 %v2798, %v2834
        %v2838 = vlaneseq
        %v2839 = vshrl.u32 %v2838, 7
        %v2840 = vsub.s32 0, %v2839
        %v2841 = vrot.slane %v2836, %v2840
        %v2842 = vlaneseq
        %v2843 = vshrl.u32 %v2842, 7
        %v2844 = vsub.s32 1, %v2843
        %v2845 = vrot.slane %v2836, %v2844
        %v2846 = vlaneseq
        %v2847 = vshrl.u32 %v2846, 7
        %v2848 = vsub.s32 2, %v2847
        %v2849 = vrot.slane %v2836, %v2848
        %v2850 = vlaneseq
        %v2851 = vshrl.u32 %v2850, 7
        %v2852 = vsub.s32 3, %v2851
        %v2853 = vrot.slane %v2836, %v2852
        %v2858 = vmul.f32 %v2582, %v2841
        %v2859 = vmul.f32 %v2583, %v2845
        %v2860 = vmul.f32 %v2584, %v2849
        %v2861 = vmul.f32 %v2585, %v2853
        %v2862 = vmul.f32 %v2586, %v2841
        %v2863 = vmul.f32 %v2587, %v2845
        %v2864 = vmul.f32 %v2588, %v2849
        %v2865 = vmul.f32 %v2589, %v2853
        %v2866 = vmul.f32 %v2590, %v2841
        %v2867 = vmul.f32 %v2591, %v2845
        %v2868 = vmul.f32 %v2592, %v2849
        %v2869 = vmul.f32 %v2593, %v2853
        %v2870 = vmul.f32 %v2594, %v2841
        %v2871 = vmul.f32 %v2595, %v2845
        %v2872 = vmul.f32 %v2596, %v2849
        %v2873 = vmul.f32 %v2597, %v2853
        %v2874 = vmul.f32 %v2598, %v2841
        %v2875 = vmul.f32 %v2599, %v2845
        %v2876 = vmul.f32 %v2600, %v2849
        %v2877 = vmul.f32 %v2601, %v2853
        %v2878 = vmul.f32 %v2602, %v2841
        %v2879 = vmul.f32 %v2603, %v2845
        %v2880 = vmul.f32 %v2604, %v2849
        %v2881 = vmul.f32 %v2605, %v2853
        %v2882 = vmul.f32 %v2606, %v2841
        %v2883 = vmul.f32 %v2607, %v2845
        %v2884 = vmul.f32 %v2608, %v2849
        %v2885 = vmul.f32 %v2609, %v2853
        %v2886 = vmul.f32 %v2610, %v2841
        %v2887 = vmul.f32 %v2611, %v2845
        %v2888 = vmul.f32 %v2612, %v2849
        %v2889 = vmul.f32 %v2613, %v2853
        %v2890 = vmul.f32 %v2614, %v2841
        %v2891 = vmul.f32 %v2615, %v2845
        %v2892 = vmul.f32 %v2616, %v2849
        %v2893 = vmul.f32 %v2617, %v2853
        %v2894 = vmul.f32 %v2618, %v2841
        %v2895 = vmul.f32 %v2619, %v2845
        %v2896 = vmul.f32 %v2620, %v2849
        %v2897 = vmul.f32 %v2621, %v2853
        %v2898 = vmul.f32 %v2622, %v2841
        %v2899 = vmul.f32 %v2623, %v2845
        %v2900 = vmul.f32 %v2624, %v2849
        %v2901 = vmul.f32 %v2625, %v2853
        %v2902 = vmul.f32 %v2626, %v2841
        %v2903 = vmul.f32 %v2627, %v2845
        %v2904 = vmul.f32 %v2628, %v2849
        %v2905 = vmul.f32 %v2629, %v2853
        %v2906 = vmul.f32 %v2630, %v2841
        %v2907 = vmul.f32 %v2631, %v2845
        %v2908 = vmul.f32 %v2632, %v2849
        %v2909 = vmul.f32 %v2633, %v2853
        %v2910 = vmul.f32 %v2634, %v2841
        %v2911 = vmul.f32 %v2635, %v2845
        %v2912 = vmul.f32 %v2636, %v2849
        %v2913 = vmul.f32 %v2637, %v2853
        %v2914 = vmul.f32 %v2638, %v2841
        %v2915 = vmul.f32 %v2639, %v2845
        %v2916 = vmul.f32 %v2640, %v2849
        %v2917 = vmul.f32 %v2641, %v2853
        %v2918 = vmul.f32 %v2642, %v2841
        %v2919 = vmul.f32 %v2643, %v2845
        %v2920 = vmul.f32 %v2644, %v2849
        %v2921 = vmul.f32 %v2645, %v2853
        %v2922 = vld [vmem:[%s11] sm:$0xf]
        %v2924 = vlaneseq
        %v2925 = vshrl.u32 %v2924, 7
        %v2926 = vsub.s32 0, %v2925
        %v2927 = vrot.slane %v2922, %v2926
        %v2928 = vlaneseq
        %v2929 = vshrl.u32 %v2928, 7
        %v2930 = vsub.s32 1, %v2929
        %v2931 = vrot.slane %v2922, %v2930
        %v2932 = vlaneseq
        %v2933 = vshrl.u32 %v2932, 7
        %v2934 = vsub.s32 2, %v2933
        %v2935 = vrot.slane %v2922, %v2934
        %v2936 = vlaneseq
        %v2937 = vshrl.u32 %v2936, 7
        %v2938 = vsub.s32 3, %v2937
        %v2939 = vrot.slane %v2922, %v2938
        %v2944 = vadd.f32 %v2858, %v2927
        %v2945 = vadd.f32 %v2859, %v2931
        %v2946 = vadd.f32 %v2860, %v2935
        %v2947 = vadd.f32 %v2861, %v2939
        %v2948 = vadd.f32 %v2862, %v2927
        %v2949 = vadd.f32 %v2863, %v2931
        %v2950 = vadd.f32 %v2864, %v2935
        %v2951 = vadd.f32 %v2865, %v2939
        %v2952 = vadd.f32 %v2866, %v2927
        %v2953 = vadd.f32 %v2867, %v2931
        %v2954 = vadd.f32 %v2868, %v2935
        %v2955 = vadd.f32 %v2869, %v2939
        %v2956 = vadd.f32 %v2870, %v2927
        %v2957 = vadd.f32 %v2871, %v2931
        %v2958 = vadd.f32 %v2872, %v2935
        %v2959 = vadd.f32 %v2873, %v2939
        %v2960 = vadd.f32 %v2874, %v2927
        %v2961 = vadd.f32 %v2875, %v2931
        %v2962 = vadd.f32 %v2876, %v2935
        %v2963 = vadd.f32 %v2877, %v2939
        %v2964 = vadd.f32 %v2878, %v2927
        %v2965 = vadd.f32 %v2879, %v2931
        %v2966 = vadd.f32 %v2880, %v2935
        %v2967 = vadd.f32 %v2881, %v2939
        %v2968 = vadd.f32 %v2882, %v2927
        %v2969 = vadd.f32 %v2883, %v2931
        %v2970 = vadd.f32 %v2884, %v2935
        %v2971 = vadd.f32 %v2885, %v2939
        %v2972 = vadd.f32 %v2886, %v2927
        %v2973 = vadd.f32 %v2887, %v2931
        %v2974 = vadd.f32 %v2888, %v2935
        %v2975 = vadd.f32 %v2889, %v2939
        %v2976 = vadd.f32 %v2890, %v2927
        %v2977 = vadd.f32 %v2891, %v2931
        %v2978 = vadd.f32 %v2892, %v2935
        %v2979 = vadd.f32 %v2893, %v2939
        %v2980 = vadd.f32 %v2894, %v2927
        %v2981 = vadd.f32 %v2895, %v2931
        %v2982 = vadd.f32 %v2896, %v2935
        %v2983 = vadd.f32 %v2897, %v2939
        %v2984 = vadd.f32 %v2898, %v2927
        %v2985 = vadd.f32 %v2899, %v2931
        %v2986 = vadd.f32 %v2900, %v2935
        %v2987 = vadd.f32 %v2901, %v2939
        %v2988 = vadd.f32 %v2902, %v2927
        %v2989 = vadd.f32 %v2903, %v2931
        %v2990 = vadd.f32 %v2904, %v2935
        %v2991 = vadd.f32 %v2905, %v2939
        %v2992 = vadd.f32 %v2906, %v2927
        %v2993 = vadd.f32 %v2907, %v2931
        %v2994 = vadd.f32 %v2908, %v2935
        %v2995 = vadd.f32 %v2909, %v2939
        %v2996 = vadd.f32 %v2910, %v2927
        %v2997 = vadd.f32 %v2911, %v2931
        %v2998 = vadd.f32 %v2912, %v2935
        %v2999 = vadd.f32 %v2913, %v2939
        %v3000 = vadd.f32 %v2914, %v2927
        %v3001 = vadd.f32 %v2915, %v2931
        %v3002 = vadd.f32 %v2916, %v2935
        %v3003 = vadd.f32 %v2917, %v2939
        %v3004 = vadd.f32 %v2918, %v2927
        %v3005 = vadd.f32 %v2919, %v2931
        %v3006 = vadd.f32 %v2920, %v2935
        %v3007 = vadd.f32 %v2921, %v2939
        %v3008 = vmul.f32 %v2944, 0.2
        %v3009 = vmul.f32 %v2945, 0.2
        %v3010 = vmul.f32 %v2946, 0.2
        %v3011 = vmul.f32 %v2947, 0.2
        %v3012 = vmul.f32 %v2948, 0.2
        %v3013 = vmul.f32 %v2949, 0.2
        %v3014 = vmul.f32 %v2950, 0.2
        %v3015 = vmul.f32 %v2951, 0.2
        %v3016 = vmul.f32 %v2952, 0.2
        %v3017 = vmul.f32 %v2953, 0.2
        %v3018 = vmul.f32 %v2954, 0.2
        %v3019 = vmul.f32 %v2955, 0.2
        %v3020 = vmul.f32 %v2956, 0.2
        %v3021 = vmul.f32 %v2957, 0.2
        %v3022 = vmul.f32 %v2958, 0.2
        %v3023 = vmul.f32 %v2959, 0.2
        %v3024 = vmul.f32 %v2960, 0.2
        %v3025 = vmul.f32 %v2961, 0.2
        %v3026 = vmul.f32 %v2962, 0.2
        %v3027 = vmul.f32 %v2963, 0.2
        %v3028 = vmul.f32 %v2964, 0.2
        %v3029 = vmul.f32 %v2965, 0.2
        %v3030 = vmul.f32 %v2966, 0.2
        %v3031 = vmul.f32 %v2967, 0.2
        %v3032 = vmul.f32 %v2968, 0.2
        %v3033 = vmul.f32 %v2969, 0.2
        %v3034 = vmul.f32 %v2970, 0.2
        %v3035 = vmul.f32 %v2971, 0.2
        %v3036 = vmul.f32 %v2972, 0.2
        %v3037 = vmul.f32 %v2973, 0.2
        %v3038 = vmul.f32 %v2974, 0.2
        %v3039 = vmul.f32 %v2975, 0.2
        %v3040 = vmul.f32 %v2976, 0.2
        %v3041 = vmul.f32 %v2977, 0.2
        %v3042 = vmul.f32 %v2978, 0.2
        %v3043 = vmul.f32 %v2979, 0.2
        %v3044 = vmul.f32 %v2980, 0.2
        %v3045 = vmul.f32 %v2981, 0.2
        %v3046 = vmul.f32 %v2982, 0.2
        %v3047 = vmul.f32 %v2983, 0.2
        %v3048 = vmul.f32 %v2984, 0.2
        %v3049 = vmul.f32 %v2985, 0.2
        %v3050 = vmul.f32 %v2986, 0.2
        %v3051 = vmul.f32 %v2987, 0.2
        %v3052 = vmul.f32 %v2988, 0.2
        %v3053 = vmul.f32 %v2989, 0.2
        %v3054 = vmul.f32 %v2990, 0.2
        %v3055 = vmul.f32 %v2991, 0.2
        %v3056 = vmul.f32 %v2992, 0.2
        %v3057 = vmul.f32 %v2993, 0.2
        %v3058 = vmul.f32 %v2994, 0.2
        %v3059 = vmul.f32 %v2995, 0.2
        %v3060 = vmul.f32 %v2996, 0.2
        %v3061 = vmul.f32 %v2997, 0.2
        %v3062 = vmul.f32 %v2998, 0.2
        %v3063 = vmul.f32 %v2999, 0.2
        %v3064 = vmul.f32 %v3000, 0.2
        %v3065 = vmul.f32 %v3001, 0.2
        %v3066 = vmul.f32 %v3002, 0.2
        %v3067 = vmul.f32 %v3003, 0.2
        %v3068 = vmul.f32 %v3004, 0.2
        %v3069 = vmul.f32 %v3005, 0.2
        %v3070 = vmul.f32 %v3006, 0.2
        %v3071 = vmul.f32 %v3007, 0.2
        %v3072 = vmax.f32 %v2944, %v3008
        %v3073 = vmax.f32 %v2945, %v3009
        %v3074 = vmax.f32 %v2946, %v3010
        %v3075 = vmax.f32 %v2947, %v3011
        %v3076 = vmax.f32 %v2948, %v3012
        %v3077 = vmax.f32 %v2949, %v3013
        %v3078 = vmax.f32 %v2950, %v3014
        %v3079 = vmax.f32 %v2951, %v3015
        %v3080 = vmax.f32 %v2952, %v3016
        %v3081 = vmax.f32 %v2953, %v3017
        %v3082 = vmax.f32 %v2954, %v3018
        %v3083 = vmax.f32 %v2955, %v3019
        %v3084 = vmax.f32 %v2956, %v3020
        %v3085 = vmax.f32 %v2957, %v3021
        %v3086 = vmax.f32 %v2958, %v3022
        %v3087 = vmax.f32 %v2959, %v3023
        %v3088 = vmax.f32 %v2960, %v3024
        %v3089 = vmax.f32 %v2961, %v3025
        %v3090 = vmax.f32 %v2962, %v3026
        %v3091 = vmax.f32 %v2963, %v3027
        %v3092 = vmax.f32 %v2964, %v3028
        %v3093 = vmax.f32 %v2965, %v3029
        %v3094 = vmax.f32 %v2966, %v3030
        %v3095 = vmax.f32 %v2967, %v3031
        %v3096 = vmax.f32 %v2968, %v3032
        %v3097 = vmax.f32 %v2969, %v3033
        %v3098 = vmax.f32 %v2970, %v3034
        %v3099 = vmax.f32 %v2971, %v3035
        %v3100 = vmax.f32 %v2972, %v3036
        %v3101 = vmax.f32 %v2973, %v3037
        %v3102 = vmax.f32 %v2974, %v3038
        %v3103 = vmax.f32 %v2975, %v3039
        %v3104 = vmax.f32 %v2976, %v3040
        %v3105 = vmax.f32 %v2977, %v3041
        %v3106 = vmax.f32 %v2978, %v3042
        %v3107 = vmax.f32 %v2979, %v3043
        %v3108 = vmax.f32 %v2980, %v3044
        %v3109 = vmax.f32 %v2981, %v3045
        %v3110 = vmax.f32 %v2982, %v3046
        %v3111 = vmax.f32 %v2983, %v3047
        %v3112 = vmax.f32 %v2984, %v3048
        %v3113 = vmax.f32 %v2985, %v3049
        %v3114 = vmax.f32 %v2986, %v3050
        %v3115 = vmax.f32 %v2987, %v3051
        %v3116 = vmax.f32 %v2988, %v3052
        %v3117 = vmax.f32 %v2989, %v3053
        %v3118 = vmax.f32 %v2990, %v3054
        %v3119 = vmax.f32 %v2991, %v3055
        %v3120 = vmax.f32 %v2992, %v3056
        %v3121 = vmax.f32 %v2993, %v3057
        %v3122 = vmax.f32 %v2994, %v3058
        %v3123 = vmax.f32 %v2995, %v3059
        %v3124 = vmax.f32 %v2996, %v3060
        %v3125 = vmax.f32 %v2997, %v3061
        %v3126 = vmax.f32 %v2998, %v3062
        %v3127 = vmax.f32 %v2999, %v3063
        %v3128 = vmax.f32 %v3000, %v3064
        %v3129 = vmax.f32 %v3001, %v3065
        %v3130 = vmax.f32 %v3002, %v3066
        %v3131 = vmax.f32 %v3003, %v3067
        %v3132 = vmax.f32 %v3004, %v3068
        %v3133 = vmax.f32 %v3005, %v3069
        %v3134 = vmax.f32 %v3006, %v3070
        %v3135 = vmax.f32 %v3007, %v3071
        %v3136 = vpack.c.bf16 %v3076, %v3072
        %v3137 = vpack.c.bf16 %v3077, %v3073
        %v3138 = vpack.c.bf16 %v3078, %v3074
        %v3139 = vpack.c.bf16 %v3079, %v3075
        %v3140 = vpack.c.bf16 %v3084, %v3080
        %v3141 = vpack.c.bf16 %v3085, %v3081
        %v3142 = vpack.c.bf16 %v3086, %v3082
        %v3143 = vpack.c.bf16 %v3087, %v3083
        %v3144 = vpack.c.bf16 %v3092, %v3088
        %v3145 = vpack.c.bf16 %v3093, %v3089
        %v3146 = vpack.c.bf16 %v3094, %v3090
        %v3147 = vpack.c.bf16 %v3095, %v3091
        %v3148 = vpack.c.bf16 %v3100, %v3096
        %v3149 = vpack.c.bf16 %v3101, %v3097
        %v3150 = vpack.c.bf16 %v3102, %v3098
        %v3151 = vpack.c.bf16 %v3103, %v3099
        %v3152 = vpack.c.bf16 %v3108, %v3104
        %v3153 = vpack.c.bf16 %v3109, %v3105
        %v3154 = vpack.c.bf16 %v3110, %v3106
        %v3155 = vpack.c.bf16 %v3111, %v3107
        %v3156 = vpack.c.bf16 %v3116, %v3112
        %v3157 = vpack.c.bf16 %v3117, %v3113
        %v3158 = vpack.c.bf16 %v3118, %v3114
        %v3159 = vpack.c.bf16 %v3119, %v3115
        %v3160 = vpack.c.bf16 %v3124, %v3120
        %v3161 = vpack.c.bf16 %v3125, %v3121
        %v3162 = vpack.c.bf16 %v3126, %v3122
        %v3163 = vpack.c.bf16 %v3127, %v3123
        %v3164 = vpack.c.bf16 %v3132, %v3128
        %v3165 = vpack.c.bf16 %v3133, %v3129
        %v3166 = vpack.c.bf16 %v3134, %v3130
        %v3167 = vpack.c.bf16 %v3135, %v3131
        %v3168 = vld [vmem:[#allocation4] sm:$0xff]
        %v3169 = vld [vmem:[#allocation4 + $0x8] sm:$0xff]
        %v3170 = vld [vmem:[#allocation4 + $0x10] sm:$0xff]
        %v3171 = vld [vmem:[#allocation4 + $0x18] sm:$0xff]
        %v3172 = vld [vmem:[#allocation4 + $0x20] sm:$0xff]
        %v3173 = vld [vmem:[#allocation4 + $0x28] sm:$0xff]
        %v3174 = vld [vmem:[#allocation4 + $0x30] sm:$0xff]
        %v3175 = vld [vmem:[#allocation4 + $0x38] sm:$0xff]
        %v3176 = vld [vmem:[#allocation4 + $0x40] sm:$0xff]
        %v3177 = vld [vmem:[#allocation4 + $0x48] sm:$0xff]
        %v3178 = vld [vmem:[#allocation4 + $0x50] sm:$0xff]
        %v3179 = vld [vmem:[#allocation4 + $0x58] sm:$0xff]
        %v3180 = vld [vmem:[#allocation4 + $0x60] sm:$0xff]
        %v3181 = vld [vmem:[#allocation4 + $0x68] sm:$0xff]
        %v3182 = vld [vmem:[#allocation4 + $0x70] sm:$0xff]
        %v3183 = vld [vmem:[#allocation4 + $0x78] sm:$0xff]
        %v3184 = vld [vmem:[#allocation4 + $0x80] sm:$0xff]
        %v3185 = vld [vmem:[#allocation4 + $0x88] sm:$0xff]
        %v3186 = vld [vmem:[#allocation4 + $0x90] sm:$0xff]
        %v3187 = vld [vmem:[#allocation4 + $0x98] sm:$0xff]
        %v3188 = vld [vmem:[#allocation4 + $0xa0] sm:$0xff]
        %v3189 = vld [vmem:[#allocation4 + $0xa8] sm:$0xff]
        %v3190 = vld [vmem:[#allocation4 + $0xb0] sm:$0xff]
        %v3191 = vld [vmem:[#allocation4 + $0xb8] sm:$0xff]
        %v3192 = vld [vmem:[#allocation4 + $0xc0] sm:$0xff]
        %v3193 = vld [vmem:[#allocation4 + $0xc8] sm:$0xff]
        %v3194 = vld [vmem:[#allocation4 + $0xd0] sm:$0xff]
        %v3195 = vld [vmem:[#allocation4 + $0xd8] sm:$0xff]
        %v3196 = vld [vmem:[#allocation4 + $0xe0] sm:$0xff]
        %v3197 = vld [vmem:[#allocation4 + $0xe8] sm:$0xff]
        %v3198 = vld [vmem:[#allocation4 + $0xf0] sm:$0xff]
        %v3199 = vld [vmem:[#allocation4 + $0xf8] sm:$0xff]
        %v3200 = vld [vmem:[#allocation4 + $0x100] sm:$0xff]
        %v3201 = vld [vmem:[#allocation4 + $0x108] sm:$0xff]
        %v3202 = vld [vmem:[#allocation4 + $0x110] sm:$0xff]
        %v3203 = vld [vmem:[#allocation4 + $0x118] sm:$0xff]
        %v3204 = vld [vmem:[#allocation4 + $0x120] sm:$0xff]
        %v3205 = vld [vmem:[#allocation4 + $0x128] sm:$0xff]
        %v3206 = vld [vmem:[#allocation4 + $0x130] sm:$0xff]
        %v3207 = vld [vmem:[#allocation4 + $0x138] sm:$0xff]
        %v3208 = vld [vmem:[#allocation4 + $0x140] sm:$0xff]
        %v3209 = vld [vmem:[#allocation4 + $0x148] sm:$0xff]
        %v3210 = vld [vmem:[#allocation4 + $0x150] sm:$0xff]
        %v3211 = vld [vmem:[#allocation4 + $0x158] sm:$0xff]
        %v3212 = vld [vmem:[#allocation4 + $0x160] sm:$0xff]
        %v3213 = vld [vmem:[#allocation4 + $0x168] sm:$0xff]
        %v3214 = vld [vmem:[#allocation4 + $0x170] sm:$0xff]
        %v3215 = vld [vmem:[#allocation4 + $0x178] sm:$0xff]
        %v3216 = vld [vmem:[#allocation4 + $0x180] sm:$0xff]
        %v3217 = vld [vmem:[#allocation4 + $0x188] sm:$0xff]
        %v3218 = vld [vmem:[#allocation4 + $0x190] sm:$0xff]
        %v3219 = vld [vmem:[#allocation4 + $0x198] sm:$0xff]
        %v3220 = vld [vmem:[#allocation4 + $0x1a0] sm:$0xff]
        %v3221 = vld [vmem:[#allocation4 + $0x1a8] sm:$0xff]
        %v3222 = vld [vmem:[#allocation4 + $0x1b0] sm:$0xff]
        %v3223 = vld [vmem:[#allocation4 + $0x1b8] sm:$0xff]
        %v3224 = vld [vmem:[#allocation4 + $0x1c0] sm:$0xff]
        %v3225 = vld [vmem:[#allocation4 + $0x1c8] sm:$0xff]
        %v3226 = vld [vmem:[#allocation4 + $0x1d0] sm:$0xff]
        %v3227 = vld [vmem:[#allocation4 + $0x1d8] sm:$0xff]
        %v3228 = vld [vmem:[#allocation4 + $0x1e0] sm:$0xff]
        %v3229 = vld [vmem:[#allocation4 + $0x1e8] sm:$0xff]
        %v3230 = vld [vmem:[#allocation4 + $0x1f0] sm:$0xff]
        %v3231 = vld [vmem:[#allocation4 + $0x1f8] sm:$0xff]
        %v3232 = vld [vmem:[#allocation4 + $0x200] sm:$0xff]
        %v3233 = vld [vmem:[#allocation4 + $0x208] sm:$0xff]
        %v3234 = vld [vmem:[#allocation4 + $0x210] sm:$0xff]
        %v3235 = vld [vmem:[#allocation4 + $0x218] sm:$0xff]
        %v3236 = vld [vmem:[#allocation4 + $0x220] sm:$0xff]
        %v3237 = vld [vmem:[#allocation4 + $0x228] sm:$0xff]
        %v3238 = vld [vmem:[#allocation4 + $0x230] sm:$0xff]
        %v3239 = vld [vmem:[#allocation4 + $0x238] sm:$0xff]
        %v3240 = vld [vmem:[#allocation4 + $0x240] sm:$0xff]
        %v3241 = vld [vmem:[#allocation4 + $0x248] sm:$0xff]
        %v3242 = vld [vmem:[#allocation4 + $0x250] sm:$0xff]
        %v3243 = vld [vmem:[#allocation4 + $0x258] sm:$0xff]
        %v3244 = vld [vmem:[#allocation4 + $0x260] sm:$0xff]
        %v3245 = vld [vmem:[#allocation4 + $0x268] sm:$0xff]
        %v3246 = vld [vmem:[#allocation4 + $0x270] sm:$0xff]
        %v3247 = vld [vmem:[#allocation4 + $0x278] sm:$0xff]
        %v3248 = vld [vmem:[#allocation4 + $0x280] sm:$0xff]
        %v3249 = vld [vmem:[#allocation4 + $0x288] sm:$0xff]
        %v3250 = vld [vmem:[#allocation4 + $0x290] sm:$0xff]
        %v3251 = vld [vmem:[#allocation4 + $0x298] sm:$0xff]
        %v3252 = vld [vmem:[#allocation4 + $0x2a0] sm:$0xff]
        %v3253 = vld [vmem:[#allocation4 + $0x2a8] sm:$0xff]
        %v3254 = vld [vmem:[#allocation4 + $0x2b0] sm:$0xff]
        %v3255 = vld [vmem:[#allocation4 + $0x2b8] sm:$0xff]
        %v3256 = vld [vmem:[#allocation4 + $0x2c0] sm:$0xff]
        %v3257 = vld [vmem:[#allocation4 + $0x2c8] sm:$0xff]
        %v3258 = vld [vmem:[#allocation4 + $0x2d0] sm:$0xff]
        %v3259 = vld [vmem:[#allocation4 + $0x2d8] sm:$0xff]
        %v3260 = vld [vmem:[#allocation4 + $0x2e0] sm:$0xff]
        %v3261 = vld [vmem:[#allocation4 + $0x2e8] sm:$0xff]
        %v3262 = vld [vmem:[#allocation4 + $0x2f0] sm:$0xff]
        %v3263 = vld [vmem:[#allocation4 + $0x2f8] sm:$0xff]
        %v3264 = vld [vmem:[#allocation4 + $0x300] sm:$0xff]
        %v3265 = vld [vmem:[#allocation4 + $0x308] sm:$0xff]
        %v3266 = vld [vmem:[#allocation4 + $0x310] sm:$0xff]
        %v3267 = vld [vmem:[#allocation4 + $0x318] sm:$0xff]
        %v3268 = vld [vmem:[#allocation4 + $0x320] sm:$0xff]
        %v3269 = vld [vmem:[#allocation4 + $0x328] sm:$0xff]
        %v3270 = vld [vmem:[#allocation4 + $0x330] sm:$0xff]
        %v3271 = vld [vmem:[#allocation4 + $0x338] sm:$0xff]
        %v3272 = vld [vmem:[#allocation4 + $0x340] sm:$0xff]
        %v3273 = vld [vmem:[#allocation4 + $0x348] sm:$0xff]
        %v3274 = vld [vmem:[#allocation4 + $0x350] sm:$0xff]
        %v3275 = vld [vmem:[#allocation4 + $0x358] sm:$0xff]
        %v3276 = vld [vmem:[#allocation4 + $0x360] sm:$0xff]
        %v3277 = vld [vmem:[#allocation4 + $0x368] sm:$0xff]
        %v3278 = vld [vmem:[#allocation4 + $0x370] sm:$0xff]
        %v3279 = vld [vmem:[#allocation4 + $0x378] sm:$0xff]
        %v3280 = vld [vmem:[#allocation4 + $0x380] sm:$0xff]
        %v3281 = vld [vmem:[#allocation4 + $0x388] sm:$0xff]
        %v3282 = vld [vmem:[#allocation4 + $0x390] sm:$0xff]
        %v3283 = vld [vmem:[#allocation4 + $0x398] sm:$0xff]
        %v3284 = vld [vmem:[#allocation4 + $0x3a0] sm:$0xff]
        %v3285 = vld [vmem:[#allocation4 + $0x3a8] sm:$0xff]
        %v3286 = vld [vmem:[#allocation4 + $0x3b0] sm:$0xff]
        %v3287 = vld [vmem:[#allocation4 + $0x3b8] sm:$0xff]
        %v3288 = vld [vmem:[#allocation4 + $0x3c0] sm:$0xff]
        %v3289 = vld [vmem:[#allocation4 + $0x3c8] sm:$0xff]
        %v3290 = vld [vmem:[#allocation4 + $0x3d0] sm:$0xff]
        %v3291 = vld [vmem:[#allocation4 + $0x3d8] sm:$0xff]
        %v3292 = vld [vmem:[#allocation4 + $0x3e0] sm:$0xff]
        %v3293 = vld [vmem:[#allocation4 + $0x3e8] sm:$0xff]
        %v3294 = vld [vmem:[#allocation4 + $0x3f0] sm:$0xff]
        %v3295 = vld [vmem:[#allocation4 + $0x3f8] sm:$0xff]
        %v3296 = vld [vmem:[#allocation4 + $0x400] sm:$0xff]
        %v3297 = vld [vmem:[#allocation4 + $0x408] sm:$0xff]
        %v3298 = vld [vmem:[#allocation4 + $0x410] sm:$0xff]
        %v3299 = vld [vmem:[#allocation4 + $0x418] sm:$0xff]
        %v3300 = vld [vmem:[#allocation4 + $0x420] sm:$0xff]
        %v3301 = vld [vmem:[#allocation4 + $0x428] sm:$0xff]
        %v3302 = vld [vmem:[#allocation4 + $0x430] sm:$0xff]
        %v3303 = vld [vmem:[#allocation4 + $0x438] sm:$0xff]
        %v3304 = vld [vmem:[#allocation4 + $0x440] sm:$0xff]
        %v3305 = vld [vmem:[#allocation4 + $0x448] sm:$0xff]
        %v3306 = vld [vmem:[#allocation4 + $0x450] sm:$0xff]
        %v3307 = vld [vmem:[#allocation4 + $0x458] sm:$0xff]
        %v3308 = vld [vmem:[#allocation4 + $0x460] sm:$0xff]
        %v3309 = vld [vmem:[#allocation4 + $0x468] sm:$0xff]
        %v3310 = vld [vmem:[#allocation4 + $0x470] sm:$0xff]
        %v3311 = vld [vmem:[#allocation4 + $0x478] sm:$0xff]
        %v3312 = vld [vmem:[#allocation4 + $0x480] sm:$0xff]
        %v3313 = vld [vmem:[#allocation4 + $0x488] sm:$0xff]
        %v3314 = vld [vmem:[#allocation4 + $0x490] sm:$0xff]
        %v3315 = vld [vmem:[#allocation4 + $0x498] sm:$0xff]
        %v3316 = vld [vmem:[#allocation4 + $0x4a0] sm:$0xff]
        %v3317 = vld [vmem:[#allocation4 + $0x4a8] sm:$0xff]
        %v3318 = vld [vmem:[#allocation4 + $0x4b0] sm:$0xff]
        %v3319 = vld [vmem:[#allocation4 + $0x4b8] sm:$0xff]
        %v3320 = vld [vmem:[#allocation4 + $0x4c0] sm:$0xff]
        %v3321 = vld [vmem:[#allocation4 + $0x4c8] sm:$0xff]
        %v3322 = vld [vmem:[#allocation4 + $0x4d0] sm:$0xff]
        %v3323 = vld [vmem:[#allocation4 + $0x4d8] sm:$0xff]
        %v3324 = vld [vmem:[#allocation4 + $0x4e0] sm:$0xff]
        %v3325 = vld [vmem:[#allocation4 + $0x4e8] sm:$0xff]
        %v3326 = vld [vmem:[#allocation4 + $0x4f0] sm:$0xff]
        %v3327 = vld [vmem:[#allocation4 + $0x4f8] sm:$0xff]
        %v3328 = vld [vmem:[#allocation4 + $0x500] sm:$0xff]
        %v3329 = vld [vmem:[#allocation4 + $0x508] sm:$0xff]
        %v3330 = vld [vmem:[#allocation4 + $0x510] sm:$0xff]
        %v3331 = vld [vmem:[#allocation4 + $0x518] sm:$0xff]
        %v3332 = vld [vmem:[#allocation4 + $0x520] sm:$0xff]
        %v3333 = vld [vmem:[#allocation4 + $0x528] sm:$0xff]
        %v3334 = vld [vmem:[#allocation4 + $0x530] sm:$0xff]
        %v3335 = vld [vmem:[#allocation4 + $0x538] sm:$0xff]
        %v3336 = vld [vmem:[#allocation4 + $0x540] sm:$0xff]
        %v3337 = vld [vmem:[#allocation4 + $0x548] sm:$0xff]
        %v3338 = vld [vmem:[#allocation4 + $0x550] sm:$0xff]
        %v3339 = vld [vmem:[#allocation4 + $0x558] sm:$0xff]
        %v3340 = vld [vmem:[#allocation4 + $0x560] sm:$0xff]
        %v3341 = vld [vmem:[#allocation4 + $0x568] sm:$0xff]
        %v3342 = vld [vmem:[#allocation4 + $0x570] sm:$0xff]
        %v3343 = vld [vmem:[#allocation4 + $0x578] sm:$0xff]
        %v3344 = vld [vmem:[#allocation4 + $0x580] sm:$0xff]
        %v3345 = vld [vmem:[#allocation4 + $0x588] sm:$0xff]
        %v3346 = vld [vmem:[#allocation4 + $0x590] sm:$0xff]
        %v3347 = vld [vmem:[#allocation4 + $0x598] sm:$0xff]
        %v3348 = vld [vmem:[#allocation4 + $0x5a0] sm:$0xff]
        %v3349 = vld [vmem:[#allocation4 + $0x5a8] sm:$0xff]
        %v3350 = vld [vmem:[#allocation4 + $0x5b0] sm:$0xff]
        %v3351 = vld [vmem:[#allocation4 + $0x5b8] sm:$0xff]
        %v3352 = vld [vmem:[#allocation4 + $0x5c0] sm:$0xff]
        %v3353 = vld [vmem:[#allocation4 + $0x5c8] sm:$0xff]
        %v3354 = vld [vmem:[#allocation4 + $0x5d0] sm:$0xff]
        %v3355 = vld [vmem:[#allocation4 + $0x5d8] sm:$0xff]
        %v3356 = vld [vmem:[#allocation4 + $0x5e0] sm:$0xff]
        %v3357 = vld [vmem:[#allocation4 + $0x5e8] sm:$0xff]
        %v3358 = vld [vmem:[#allocation4 + $0x5f0] sm:$0xff]
        %v3359 = vld [vmem:[#allocation4 + $0x5f8] sm:$0xff]
        %v3360 = vld [vmem:[#allocation4 + $0x600] sm:$0xff]
        %v3361 = vld [vmem:[#allocation4 + $0x608] sm:$0xff]
        %v3362 = vld [vmem:[#allocation4 + $0x610] sm:$0xff]
        %v3363 = vld [vmem:[#allocation4 + $0x618] sm:$0xff]
        %v3364 = vld [vmem:[#allocation4 + $0x620] sm:$0xff]
        %v3365 = vld [vmem:[#allocation4 + $0x628] sm:$0xff]
        %v3366 = vld [vmem:[#allocation4 + $0x630] sm:$0xff]
        %v3367 = vld [vmem:[#allocation4 + $0x638] sm:$0xff]
        %v3368 = vld [vmem:[#allocation4 + $0x640] sm:$0xff]
        %v3369 = vld [vmem:[#allocation4 + $0x648] sm:$0xff]
        %v3370 = vld [vmem:[#allocation4 + $0x650] sm:$0xff]
        %v3371 = vld [vmem:[#allocation4 + $0x658] sm:$0xff]
        %v3372 = vld [vmem:[#allocation4 + $0x660] sm:$0xff]
        %v3373 = vld [vmem:[#allocation4 + $0x668] sm:$0xff]
        %v3374 = vld [vmem:[#allocation4 + $0x670] sm:$0xff]
        %v3375 = vld [vmem:[#allocation4 + $0x678] sm:$0xff]
        %v3376 = vld [vmem:[#allocation4 + $0x680] sm:$0xff]
        %v3377 = vld [vmem:[#allocation4 + $0x688] sm:$0xff]
        %v3378 = vld [vmem:[#allocation4 + $0x690] sm:$0xff]
        %v3379 = vld [vmem:[#allocation4 + $0x698] sm:$0xff]
        %v3380 = vld [vmem:[#allocation4 + $0x6a0] sm:$0xff]
        %v3381 = vld [vmem:[#allocation4 + $0x6a8] sm:$0xff]
        %v3382 = vld [vmem:[#allocation4 + $0x6b0] sm:$0xff]
        %v3383 = vld [vmem:[#allocation4 + $0x6b8] sm:$0xff]
        %v3384 = vld [vmem:[#allocation4 + $0x6c0] sm:$0xff]
        %v3385 = vld [vmem:[#allocation4 + $0x6c8] sm:$0xff]
        %v3386 = vld [vmem:[#allocation4 + $0x6d0] sm:$0xff]
        %v3387 = vld [vmem:[#allocation4 + $0x6d8] sm:$0xff]
        %v3388 = vld [vmem:[#allocation4 + $0x6e0] sm:$0xff]
        %v3389 = vld [vmem:[#allocation4 + $0x6e8] sm:$0xff]
        %v3390 = vld [vmem:[#allocation4 + $0x6f0] sm:$0xff]
        %v3391 = vld [vmem:[#allocation4 + $0x6f8] sm:$0xff]
        %v3392 = vld [vmem:[#allocation4 + $0x700] sm:$0xff]
        %v3393 = vld [vmem:[#allocation4 + $0x708] sm:$0xff]
        %v3394 = vld [vmem:[#allocation4 + $0x710] sm:$0xff]
        %v3395 = vld [vmem:[#allocation4 + $0x718] sm:$0xff]
        %v3396 = vld [vmem:[#allocation4 + $0x720] sm:$0xff]
        %v3397 = vld [vmem:[#allocation4 + $0x728] sm:$0xff]
        %v3398 = vld [vmem:[#allocation4 + $0x730] sm:$0xff]
        %v3399 = vld [vmem:[#allocation4 + $0x738] sm:$0xff]
        %v3400 = vld [vmem:[#allocation4 + $0x740] sm:$0xff]
        %v3401 = vld [vmem:[#allocation4 + $0x748] sm:$0xff]
        %v3402 = vld [vmem:[#allocation4 + $0x750] sm:$0xff]
        %v3403 = vld [vmem:[#allocation4 + $0x758] sm:$0xff]
        %v3404 = vld [vmem:[#allocation4 + $0x760] sm:$0xff]
        %v3405 = vld [vmem:[#allocation4 + $0x768] sm:$0xff]
        %v3406 = vld [vmem:[#allocation4 + $0x770] sm:$0xff]
        %v3407 = vld [vmem:[#allocation4 + $0x778] sm:$0xff]
        %v3408 = vld [vmem:[#allocation4 + $0x780] sm:$0xff]
        %v3409 = vld [vmem:[#allocation4 + $0x788] sm:$0xff]
        %v3410 = vld [vmem:[#allocation4 + $0x790] sm:$0xff]
        %v3411 = vld [vmem:[#allocation4 + $0x798] sm:$0xff]
        %v3412 = vld [vmem:[#allocation4 + $0x7a0] sm:$0xff]
        %v3413 = vld [vmem:[#allocation4 + $0x7a8] sm:$0xff]
        %v3414 = vld [vmem:[#allocation4 + $0x7b0] sm:$0xff]
        %v3415 = vld [vmem:[#allocation4 + $0x7b8] sm:$0xff]
        %v3416 = vld [vmem:[#allocation4 + $0x7c0] sm:$0xff]
        %v3417 = vld [vmem:[#allocation4 + $0x7c8] sm:$0xff]
        %v3418 = vld [vmem:[#allocation4 + $0x7d0] sm:$0xff]
        %v3419 = vld [vmem:[#allocation4 + $0x7d8] sm:$0xff]
        %v3420 = vld [vmem:[#allocation4 + $0x7e0] sm:$0xff]
        %v3421 = vld [vmem:[#allocation4 + $0x7e8] sm:$0xff]
        %v3422 = vld [vmem:[#allocation4 + $0x7f0] sm:$0xff]
        %v3423 = vld [vmem:[#allocation4 + $0x7f8] sm:$0xff]
        %v3680 = vunpack.c.l.b16 %v3168
        %v3681 = vunpack.c.h.b16 %v3168
        %v3682 = vunpack.c.l.b16 %v3169
        %v3683 = vunpack.c.h.b16 %v3169
        %v3684 = vunpack.c.l.b16 %v3170
        %v3685 = vunpack.c.h.b16 %v3170
        %v3686 = vunpack.c.l.b16 %v3171
        %v3687 = vunpack.c.h.b16 %v3171
        %v3688 = vunpack.c.l.b16 %v3172
        %v3689 = vunpack.c.h.b16 %v3172
        %v3690 = vunpack.c.l.b16 %v3173
        %v3691 = vunpack.c.h.b16 %v3173
        %v3692 = vunpack.c.l.b16 %v3174
        %v3693 = vunpack.c.h.b16 %v3174
        %v3694 = vunpack.c.l.b16 %v3175
        %v3695 = vunpack.c.h.b16 %v3175
        %v3696 = vunpack.c.l.b16 %v3176
        %v3697 = vunpack.c.h.b16 %v3176
        %v3698 = vunpack.c.l.b16 %v3177
        %v3699 = vunpack.c.h.b16 %v3177
        %v3700 = vunpack.c.l.b16 %v3178
        %v3701 = vunpack.c.h.b16 %v3178
        %v3702 = vunpack.c.l.b16 %v3179
        %v3703 = vunpack.c.h.b16 %v3179
        %v3704 = vunpack.c.l.b16 %v3180
        %v3705 = vunpack.c.h.b16 %v3180
        %v3706 = vunpack.c.l.b16 %v3181
        %v3707 = vunpack.c.h.b16 %v3181
        %v3708 = vunpack.c.l.b16 %v3182
        %v3709 = vunpack.c.h.b16 %v3182
        %v3710 = vunpack.c.l.b16 %v3183
        %v3711 = vunpack.c.h.b16 %v3183
        %v3712 = vunpack.c.l.b16 %v3184
        %v3713 = vunpack.c.h.b16 %v3184
        %v3714 = vunpack.c.l.b16 %v3185
        %v3715 = vunpack.c.h.b16 %v3185
        %v3716 = vunpack.c.l.b16 %v3186
        %v3717 = vunpack.c.h.b16 %v3186
        %v3718 = vunpack.c.l.b16 %v3187
        %v3719 = vunpack.c.h.b16 %v3187
        %v3720 = vunpack.c.l.b16 %v3188
        %v3721 = vunpack.c.h.b16 %v3188
        %v3722 = vunpack.c.l.b16 %v3189
        %v3723 = vunpack.c.h.b16 %v3189
        %v3724 = vunpack.c.l.b16 %v3190
        %v3725 = vunpack.c.h.b16 %v3190
        %v3726 = vunpack.c.l.b16 %v3191
        %v3727 = vunpack.c.h.b16 %v3191
        %v3728 = vunpack.c.l.b16 %v3192
        %v3729 = vunpack.c.h.b16 %v3192
        %v3730 = vunpack.c.l.b16 %v3193
        %v3731 = vunpack.c.h.b16 %v3193
        %v3732 = vunpack.c.l.b16 %v3194
        %v3733 = vunpack.c.h.b16 %v3194
        %v3734 = vunpack.c.l.b16 %v3195
        %v3735 = vunpack.c.h.b16 %v3195
        %v3736 = vunpack.c.l.b16 %v3196
        %v3737 = vunpack.c.h.b16 %v3196
        %v3738 = vunpack.c.l.b16 %v3197
        %v3739 = vunpack.c.h.b16 %v3197
        %v3740 = vunpack.c.l.b16 %v3198
        %v3741 = vunpack.c.h.b16 %v3198
        %v3742 = vunpack.c.l.b16 %v3199
        %v3743 = vunpack.c.h.b16 %v3199
        %v3744 = vunpack.c.l.b16 %v3200
        %v3745 = vunpack.c.h.b16 %v3200
        %v3746 = vunpack.c.l.b16 %v3201
        %v3747 = vunpack.c.h.b16 %v3201
        %v3748 = vunpack.c.l.b16 %v3202
        %v3749 = vunpack.c.h.b16 %v3202
        %v3750 = vunpack.c.l.b16 %v3203
        %v3751 = vunpack.c.h.b16 %v3203
        %v3752 = vunpack.c.l.b16 %v3204
        %v3753 = vunpack.c.h.b16 %v3204
        %v3754 = vunpack.c.l.b16 %v3205
        %v3755 = vunpack.c.h.b16 %v3205
        %v3756 = vunpack.c.l.b16 %v3206
        %v3757 = vunpack.c.h.b16 %v3206
        %v3758 = vunpack.c.l.b16 %v3207
        %v3759 = vunpack.c.h.b16 %v3207
        %v3760 = vunpack.c.l.b16 %v3208
        %v3761 = vunpack.c.h.b16 %v3208
        %v3762 = vunpack.c.l.b16 %v3209
        %v3763 = vunpack.c.h.b16 %v3209
        %v3764 = vunpack.c.l.b16 %v3210
        %v3765 = vunpack.c.h.b16 %v3210
        %v3766 = vunpack.c.l.b16 %v3211
        %v3767 = vunpack.c.h.b16 %v3211
        %v3768 = vunpack.c.l.b16 %v3212
        %v3769 = vunpack.c.h.b16 %v3212
        %v3770 = vunpack.c.l.b16 %v3213
        %v3771 = vunpack.c.h.b16 %v3213
        %v3772 = vunpack.c.l.b16 %v3214
        %v3773 = vunpack.c.h.b16 %v3214
        %v3774 = vunpack.c.l.b16 %v3215
        %v3775 = vunpack.c.h.b16 %v3215
        %v3776 = vunpack.c.l.b16 %v3216
        %v3777 = vunpack.c.h.b16 %v3216
        %v3778 = vunpack.c.l.b16 %v3217
        %v3779 = vunpack.c.h.b16 %v3217
        %v3780 = vunpack.c.l.b16 %v3218
        %v3781 = vunpack.c.h.b16 %v3218
        %v3782 = vunpack.c.l.b16 %v3219
        %v3783 = vunpack.c.h.b16 %v3219
        %v3784 = vunpack.c.l.b16 %v3220
        %v3785 = vunpack.c.h.b16 %v3220
        %v3786 = vunpack.c.l.b16 %v3221
        %v3787 = vunpack.c.h.b16 %v3221
        %v3788 = vunpack.c.l.b16 %v3222
        %v3789 = vunpack.c.h.b16 %v3222
        %v3790 = vunpack.c.l.b16 %v3223
        %v3791 = vunpack.c.h.b16 %v3223
        %v3792 = vunpack.c.l.b16 %v3224
        %v3793 = vunpack.c.h.b16 %v3224
        %v3794 = vunpack.c.l.b16 %v3225
        %v3795 = vunpack.c.h.b16 %v3225
        %v3796 = vunpack.c.l.b16 %v3226
        %v3797 = vunpack.c.h.b16 %v3226
        %v3798 = vunpack.c.l.b16 %v3227
        %v3799 = vunpack.c.h.b16 %v3227
        %v3800 = vunpack.c.l.b16 %v3228
        %v3801 = vunpack.c.h.b16 %v3228
        %v3802 = vunpack.c.l.b16 %v3229
        %v3803 = vunpack.c.h.b16 %v3229
        %v3804 = vunpack.c.l.b16 %v3230
        %v3805 = vunpack.c.h.b16 %v3230
        %v3806 = vunpack.c.l.b16 %v3231
        %v3807 = vunpack.c.h.b16 %v3231
        %v3808 = vunpack.c.l.b16 %v3232
        %v3809 = vunpack.c.h.b16 %v3232
        %v3810 = vunpack.c.l.b16 %v3233
        %v3811 = vunpack.c.h.b16 %v3233
        %v3812 = vunpack.c.l.b16 %v3234
        %v3813 = vunpack.c.h.b16 %v3234
        %v3814 = vunpack.c.l.b16 %v3235
        %v3815 = vunpack.c.h.b16 %v3235
        %v3816 = vunpack.c.l.b16 %v3236
        %v3817 = vunpack.c.h.b16 %v3236
        %v3818 = vunpack.c.l.b16 %v3237
        %v3819 = vunpack.c.h.b16 %v3237
        %v3820 = vunpack.c.l.b16 %v3238
        %v3821 = vunpack.c.h.b16 %v3238
        %v3822 = vunpack.c.l.b16 %v3239
        %v3823 = vunpack.c.h.b16 %v3239
        %v3824 = vunpack.c.l.b16 %v3240
        %v3825 = vunpack.c.h.b16 %v3240
        %v3826 = vunpack.c.l.b16 %v3241
        %v3827 = vunpack.c.h.b16 %v3241
        %v3828 = vunpack.c.l.b16 %v3242
        %v3829 = vunpack.c.h.b16 %v3242
        %v3830 = vunpack.c.l.b16 %v3243
        %v3831 = vunpack.c.h.b16 %v3243
        %v3832 = vunpack.c.l.b16 %v3244
        %v3833 = vunpack.c.h.b16 %v3244
        %v3834 = vunpack.c.l.b16 %v3245
        %v3835 = vunpack.c.h.b16 %v3245
        %v3836 = vunpack.c.l.b16 %v3246
        %v3837 = vunpack.c.h.b16 %v3246
        %v3838 = vunpack.c.l.b16 %v3247
        %v3839 = vunpack.c.h.b16 %v3247
        %v3840 = vunpack.c.l.b16 %v3248
        %v3841 = vunpack.c.h.b16 %v3248
        %v3842 = vunpack.c.l.b16 %v3249
        %v3843 = vunpack.c.h.b16 %v3249
        %v3844 = vunpack.c.l.b16 %v3250
        %v3845 = vunpack.c.h.b16 %v3250
        %v3846 = vunpack.c.l.b16 %v3251
        %v3847 = vunpack.c.h.b16 %v3251
        %v3848 = vunpack.c.l.b16 %v3252
        %v3849 = vunpack.c.h.b16 %v3252
        %v3850 = vunpack.c.l.b16 %v3253
        %v3851 = vunpack.c.h.b16 %v3253
        %v3852 = vunpack.c.l.b16 %v3254
        %v3853 = vunpack.c.h.b16 %v3254
        %v3854 = vunpack.c.l.b16 %v3255
        %v3855 = vunpack.c.h.b16 %v3255
        %v3856 = vunpack.c.l.b16 %v3256
        %v3857 = vunpack.c.h.b16 %v3256
        %v3858 = vunpack.c.l.b16 %v3257
        %v3859 = vunpack.c.h.b16 %v3257
        %v3860 = vunpack.c.l.b16 %v3258
        %v3861 = vunpack.c.h.b16 %v3258
        %v3862 = vunpack.c.l.b16 %v3259
        %v3863 = vunpack.c.h.b16 %v3259
        %v3864 = vunpack.c.l.b16 %v3260
        %v3865 = vunpack.c.h.b16 %v3260
        %v3866 = vunpack.c.l.b16 %v3261
        %v3867 = vunpack.c.h.b16 %v3261
        %v3868 = vunpack.c.l.b16 %v3262
        %v3869 = vunpack.c.h.b16 %v3262
        %v3870 = vunpack.c.l.b16 %v3263
        %v3871 = vunpack.c.h.b16 %v3263
        %v3872 = vunpack.c.l.b16 %v3264
        %v3873 = vunpack.c.h.b16 %v3264
        %v3874 = vunpack.c.l.b16 %v3265
        %v3875 = vunpack.c.h.b16 %v3265
        %v3876 = vunpack.c.l.b16 %v3266
        %v3877 = vunpack.c.h.b16 %v3266
        %v3878 = vunpack.c.l.b16 %v3267
        %v3879 = vunpack.c.h.b16 %v3267
        %v3880 = vunpack.c.l.b16 %v3268
        %v3881 = vunpack.c.h.b16 %v3268
        %v3882 = vunpack.c.l.b16 %v3269
        %v3883 = vunpack.c.h.b16 %v3269
        %v3884 = vunpack.c.l.b16 %v3270
        %v3885 = vunpack.c.h.b16 %v3270
        %v3886 = vunpack.c.l.b16 %v3271
        %v3887 = vunpack.c.h.b16 %v3271
        %v3888 = vunpack.c.l.b16 %v3272
        %v3889 = vunpack.c.h.b16 %v3272
        %v3890 = vunpack.c.l.b16 %v3273
        %v3891 = vunpack.c.h.b16 %v3273
        %v3892 = vunpack.c.l.b16 %v3274
        %v3893 = vunpack.c.h.b16 %v3274
        %v3894 = vunpack.c.l.b16 %v3275
        %v3895 = vunpack.c.h.b16 %v3275
        %v3896 = vunpack.c.l.b16 %v3276
        %v3897 = vunpack.c.h.b16 %v3276
        %v3898 = vunpack.c.l.b16 %v3277
        %v3899 = vunpack.c.h.b16 %v3277
        %v3900 = vunpack.c.l.b16 %v3278
        %v3901 = vunpack.c.h.b16 %v3278
        %v3902 = vunpack.c.l.b16 %v3279
        %v3903 = vunpack.c.h.b16 %v3279
        %v3904 = vunpack.c.l.b16 %v3280
        %v3905 = vunpack.c.h.b16 %v3280
        %v3906 = vunpack.c.l.b16 %v3281
        %v3907 = vunpack.c.h.b16 %v3281
        %v3908 = vunpack.c.l.b16 %v3282
        %v3909 = vunpack.c.h.b16 %v3282
        %v3910 = vunpack.c.l.b16 %v3283
        %v3911 = vunpack.c.h.b16 %v3283
        %v3912 = vunpack.c.l.b16 %v3284
        %v3913 = vunpack.c.h.b16 %v3284
        %v3914 = vunpack.c.l.b16 %v3285
        %v3915 = vunpack.c.h.b16 %v3285
        %v3916 = vunpack.c.l.b16 %v3286
        %v3917 = vunpack.c.h.b16 %v3286
        %v3918 = vunpack.c.l.b16 %v3287
        %v3919 = vunpack.c.h.b16 %v3287
        %v3920 = vunpack.c.l.b16 %v3288
        %v3921 = vunpack.c.h.b16 %v3288
        %v3922 = vunpack.c.l.b16 %v3289
        %v3923 = vunpack.c.h.b16 %v3289
        %v3924 = vunpack.c.l.b16 %v3290
        %v3925 = vunpack.c.h.b16 %v3290
        %v3926 = vunpack.c.l.b16 %v3291
        %v3927 = vunpack.c.h.b16 %v3291
        %v3928 = vunpack.c.l.b16 %v3292
        %v3929 = vunpack.c.h.b16 %v3292
        %v3930 = vunpack.c.l.b16 %v3293
        %v3931 = vunpack.c.h.b16 %v3293
        %v3932 = vunpack.c.l.b16 %v3294
        %v3933 = vunpack.c.h.b16 %v3294
        %v3934 = vunpack.c.l.b16 %v3295
        %v3935 = vunpack.c.h.b16 %v3295
        %v3936 = vunpack.c.l.b16 %v3296
        %v3937 = vunpack.c.h.b16 %v3296
        %v3938 = vunpack.c.l.b16 %v3297
        %v3939 = vunpack.c.h.b16 %v3297
        %v3940 = vunpack.c.l.b16 %v3298
        %v3941 = vunpack.c.h.b16 %v3298
        %v3942 = vunpack.c.l.b16 %v3299
        %v3943 = vunpack.c.h.b16 %v3299
        %v3944 = vunpack.c.l.b16 %v3300
        %v3945 = vunpack.c.h.b16 %v3300
        %v3946 = vunpack.c.l.b16 %v3301
        %v3947 = vunpack.c.h.b16 %v3301
        %v3948 = vunpack.c.l.b16 %v3302
        %v3949 = vunpack.c.h.b16 %v3302
        %v3950 = vunpack.c.l.b16 %v3303
        %v3951 = vunpack.c.h.b16 %v3303
        %v3952 = vunpack.c.l.b16 %v3304
        %v3953 = vunpack.c.h.b16 %v3304
        %v3954 = vunpack.c.l.b16 %v3305
        %v3955 = vunpack.c.h.b16 %v3305
        %v3956 = vunpack.c.l.b16 %v3306
        %v3957 = vunpack.c.h.b16 %v3306
        %v3958 = vunpack.c.l.b16 %v3307
        %v3959 = vunpack.c.h.b16 %v3307
        %v3960 = vunpack.c.l.b16 %v3308
        %v3961 = vunpack.c.h.b16 %v3308
        %v3962 = vunpack.c.l.b16 %v3309
        %v3963 = vunpack.c.h.b16 %v3309
        %v3964 = vunpack.c.l.b16 %v3310
        %v3965 = vunpack.c.h.b16 %v3310
        %v3966 = vunpack.c.l.b16 %v3311
        %v3967 = vunpack.c.h.b16 %v3311
        %v3968 = vunpack.c.l.b16 %v3312
        %v3969 = vunpack.c.h.b16 %v3312
        %v3970 = vunpack.c.l.b16 %v3313
        %v3971 = vunpack.c.h.b16 %v3313
        %v3972 = vunpack.c.l.b16 %v3314
        %v3973 = vunpack.c.h.b16 %v3314
        %v3974 = vunpack.c.l.b16 %v3315
        %v3975 = vunpack.c.h.b16 %v3315
        %v3976 = vunpack.c.l.b16 %v3316
        %v3977 = vunpack.c.h.b16 %v3316
        %v3978 = vunpack.c.l.b16 %v3317
        %v3979 = vunpack.c.h.b16 %v3317
        %v3980 = vunpack.c.l.b16 %v3318
        %v3981 = vunpack.c.h.b16 %v3318
        %v3982 = vunpack.c.l.b16 %v3319
        %v3983 = vunpack.c.h.b16 %v3319
        %v3984 = vunpack.c.l.b16 %v3320
        %v3985 = vunpack.c.h.b16 %v3320
        %v3986 = vunpack.c.l.b16 %v3321
        %v3987 = vunpack.c.h.b16 %v3321
        %v3988 = vunpack.c.l.b16 %v3322
        %v3989 = vunpack.c.h.b16 %v3322
        %v3990 = vunpack.c.l.b16 %v3323
        %v3991 = vunpack.c.h.b16 %v3323
        %v3992 = vunpack.c.l.b16 %v3324
        %v3993 = vunpack.c.h.b16 %v3324
        %v3994 = vunpack.c.l.b16 %v3325
        %v3995 = vunpack.c.h.b16 %v3325
        %v3996 = vunpack.c.l.b16 %v3326
        %v3997 = vunpack.c.h.b16 %v3326
        %v3998 = vunpack.c.l.b16 %v3327
        %v3999 = vunpack.c.h.b16 %v3327
        %v4000 = vunpack.c.l.b16 %v3328
        %v4001 = vunpack.c.h.b16 %v3328
        %v4002 = vunpack.c.l.b16 %v3329
        %v4003 = vunpack.c.h.b16 %v3329
        %v4004 = vunpack.c.l.b16 %v3330
        %v4005 = vunpack.c.h.b16 %v3330
        %v4006 = vunpack.c.l.b16 %v3331
        %v4007 = vunpack.c.h.b16 %v3331
        %v4008 = vunpack.c.l.b16 %v3332
        %v4009 = vunpack.c.h.b16 %v3332
        %v4010 = vunpack.c.l.b16 %v3333
        %v4011 = vunpack.c.h.b16 %v3333
        %v4012 = vunpack.c.l.b16 %v3334
        %v4013 = vunpack.c.h.b16 %v3334
        %v4014 = vunpack.c.l.b16 %v3335
        %v4015 = vunpack.c.h.b16 %v3335
        %v4016 = vunpack.c.l.b16 %v3336
        %v4017 = vunpack.c.h.b16 %v3336
        %v4018 = vunpack.c.l.b16 %v3337
        %v4019 = vunpack.c.h.b16 %v3337
        %v4020 = vunpack.c.l.b16 %v3338
        %v4021 = vunpack.c.h.b16 %v3338
        %v4022 = vunpack.c.l.b16 %v3339
        %v4023 = vunpack.c.h.b16 %v3339
        %v4024 = vunpack.c.l.b16 %v3340
        %v4025 = vunpack.c.h.b16 %v3340
        %v4026 = vunpack.c.l.b16 %v3341
        %v4027 = vunpack.c.h.b16 %v3341
        %v4028 = vunpack.c.l.b16 %v3342
        %v4029 = vunpack.c.h.b16 %v3342
        %v4030 = vunpack.c.l.b16 %v3343
        %v4031 = vunpack.c.h.b16 %v3343
        %v4032 = vunpack.c.l.b16 %v3344
        %v4033 = vunpack.c.h.b16 %v3344
        %v4034 = vunpack.c.l.b16 %v3345
        %v4035 = vunpack.c.h.b16 %v3345
        %v4036 = vunpack.c.l.b16 %v3346
        %v4037 = vunpack.c.h.b16 %v3346
        %v4038 = vunpack.c.l.b16 %v3347
        %v4039 = vunpack.c.h.b16 %v3347
        %v4040 = vunpack.c.l.b16 %v3348
        %v4041 = vunpack.c.h.b16 %v3348
        %v4042 = vunpack.c.l.b16 %v3349
        %v4043 = vunpack.c.h.b16 %v3349
        %v4044 = vunpack.c.l.b16 %v3350
        %v4045 = vunpack.c.h.b16 %v3350
        %v4046 = vunpack.c.l.b16 %v3351
        %v4047 = vunpack.c.h.b16 %v3351
        %v4048 = vunpack.c.l.b16 %v3352
        %v4049 = vunpack.c.h.b16 %v3352
        %v4050 = vunpack.c.l.b16 %v3353
        %v4051 = vunpack.c.h.b16 %v3353
        %v4052 = vunpack.c.l.b16 %v3354
        %v4053 = vunpack.c.h.b16 %v3354
        %v4054 = vunpack.c.l.b16 %v3355
        %v4055 = vunpack.c.h.b16 %v3355
        %v4056 = vunpack.c.l.b16 %v3356
        %v4057 = vunpack.c.h.b16 %v3356
        %v4058 = vunpack.c.l.b16 %v3357
        %v4059 = vunpack.c.h.b16 %v3357
        %v4060 = vunpack.c.l.b16 %v3358
        %v4061 = vunpack.c.h.b16 %v3358
        %v4062 = vunpack.c.l.b16 %v3359
        %v4063 = vunpack.c.h.b16 %v3359
        %v4064 = vunpack.c.l.b16 %v3360
        %v4065 = vunpack.c.h.b16 %v3360
        %v4066 = vunpack.c.l.b16 %v3361
        %v4067 = vunpack.c.h.b16 %v3361
        %v4068 = vunpack.c.l.b16 %v3362
        %v4069 = vunpack.c.h.b16 %v3362
        %v4070 = vunpack.c.l.b16 %v3363
        %v4071 = vunpack.c.h.b16 %v3363
        %v4072 = vunpack.c.l.b16 %v3364
        %v4073 = vunpack.c.h.b16 %v3364
        %v4074 = vunpack.c.l.b16 %v3365
        %v4075 = vunpack.c.h.b16 %v3365
        %v4076 = vunpack.c.l.b16 %v3366
        %v4077 = vunpack.c.h.b16 %v3366
        %v4078 = vunpack.c.l.b16 %v3367
        %v4079 = vunpack.c.h.b16 %v3367
        %v4080 = vunpack.c.l.b16 %v3368
        %v4081 = vunpack.c.h.b16 %v3368
        %v4082 = vunpack.c.l.b16 %v3369
        %v4083 = vunpack.c.h.b16 %v3369
        %v4084 = vunpack.c.l.b16 %v3370
        %v4085 = vunpack.c.h.b16 %v3370
        %v4086 = vunpack.c.l.b16 %v3371
        %v4087 = vunpack.c.h.b16 %v3371
        %v4088 = vunpack.c.l.b16 %v3372
        %v4089 = vunpack.c.h.b16 %v3372
        %v4090 = vunpack.c.l.b16 %v3373
        %v4091 = vunpack.c.h.b16 %v3373
        %v4092 = vunpack.c.l.b16 %v3374
        %v4093 = vunpack.c.h.b16 %v3374
        %v4094 = vunpack.c.l.b16 %v3375
        %v4095 = vunpack.c.h.b16 %v3375
        %v4096 = vunpack.c.l.b16 %v3376
        %v4097 = vunpack.c.h.b16 %v3376
        %v4098 = vunpack.c.l.b16 %v3377
        %v4099 = vunpack.c.h.b16 %v3377
        %v4100 = vunpack.c.l.b16 %v3378
        %v4101 = vunpack.c.h.b16 %v3378
        %v4102 = vunpack.c.l.b16 %v3379
        %v4103 = vunpack.c.h.b16 %v3379
        %v4104 = vunpack.c.l.b16 %v3380
        %v4105 = vunpack.c.h.b16 %v3380
        %v4106 = vunpack.c.l.b16 %v3381
        %v4107 = vunpack.c.h.b16 %v3381
        %v4108 = vunpack.c.l.b16 %v3382
        %v4109 = vunpack.c.h.b16 %v3382
        %v4110 = vunpack.c.l.b16 %v3383
        %v4111 = vunpack.c.h.b16 %v3383
        %v4112 = vunpack.c.l.b16 %v3384
        %v4113 = vunpack.c.h.b16 %v3384
        %v4114 = vunpack.c.l.b16 %v3385
        %v4115 = vunpack.c.h.b16 %v3385
        %v4116 = vunpack.c.l.b16 %v3386
        %v4117 = vunpack.c.h.b16 %v3386
        %v4118 = vunpack.c.l.b16 %v3387
        %v4119 = vunpack.c.h.b16 %v3387
        %v4120 = vunpack.c.l.b16 %v3388
        %v4121 = vunpack.c.h.b16 %v3388
        %v4122 = vunpack.c.l.b16 %v3389
        %v4123 = vunpack.c.h.b16 %v3389
        %v4124 = vunpack.c.l.b16 %v3390
        %v4125 = vunpack.c.h.b16 %v3390
        %v4126 = vunpack.c.l.b16 %v3391
        %v4127 = vunpack.c.h.b16 %v3391
        %v4128 = vunpack.c.l.b16 %v3392
        %v4129 = vunpack.c.h.b16 %v3392
        %v4130 = vunpack.c.l.b16 %v3393
        %v4131 = vunpack.c.h.b16 %v3393
        %v4132 = vunpack.c.l.b16 %v3394
        %v4133 = vunpack.c.h.b16 %v3394
        %v4134 = vunpack.c.l.b16 %v3395
        %v4135 = vunpack.c.h.b16 %v3395
        %v4136 = vunpack.c.l.b16 %v3396
        %v4137 = vunpack.c.h.b16 %v3396
        %v4138 = vunpack.c.l.b16 %v3397
        %v4139 = vunpack.c.h.b16 %v3397
        %v4140 = vunpack.c.l.b16 %v3398
        %v4141 = vunpack.c.h.b16 %v3398
        %v4142 = vunpack.c.l.b16 %v3399
        %v4143 = vunpack.c.h.b16 %v3399
        %v4144 = vunpack.c.l.b16 %v3400
        %v4145 = vunpack.c.h.b16 %v3400
        %v4146 = vunpack.c.l.b16 %v3401
        %v4147 = vunpack.c.h.b16 %v3401
        %v4148 = vunpack.c.l.b16 %v3402
        %v4149 = vunpack.c.h.b16 %v3402
        %v4150 = vunpack.c.l.b16 %v3403
        %v4151 = vunpack.c.h.b16 %v3403
        %v4152 = vunpack.c.l.b16 %v3404
        %v4153 = vunpack.c.h.b16 %v3404
        %v4154 = vunpack.c.l.b16 %v3405
        %v4155 = vunpack.c.h.b16 %v3405
        %v4156 = vunpack.c.l.b16 %v3406
        %v4157 = vunpack.c.h.b16 %v3406
        %v4158 = vunpack.c.l.b16 %v3407
        %v4159 = vunpack.c.h.b16 %v3407
        %v4160 = vunpack.c.l.b16 %v3408
        %v4161 = vunpack.c.h.b16 %v3408
        %v4162 = vunpack.c.l.b16 %v3409
        %v4163 = vunpack.c.h.b16 %v3409
        %v4164 = vunpack.c.l.b16 %v3410
        %v4165 = vunpack.c.h.b16 %v3410
        %v4166 = vunpack.c.l.b16 %v3411
        %v4167 = vunpack.c.h.b16 %v3411
        %v4168 = vunpack.c.l.b16 %v3412
        %v4169 = vunpack.c.h.b16 %v3412
        %v4170 = vunpack.c.l.b16 %v3413
        %v4171 = vunpack.c.h.b16 %v3413
        %v4172 = vunpack.c.l.b16 %v3414
        %v4173 = vunpack.c.h.b16 %v3414
        %v4174 = vunpack.c.l.b16 %v3415
        %v4175 = vunpack.c.h.b16 %v3415
        %v4176 = vunpack.c.l.b16 %v3416
        %v4177 = vunpack.c.h.b16 %v3416
        %v4178 = vunpack.c.l.b16 %v3417
        %v4179 = vunpack.c.h.b16 %v3417
        %v4180 = vunpack.c.l.b16 %v3418
        %v4181 = vunpack.c.h.b16 %v3418
        %v4182 = vunpack.c.l.b16 %v3419
        %v4183 = vunpack.c.h.b16 %v3419
        %v4184 = vunpack.c.l.b16 %v3420
        %v4185 = vunpack.c.h.b16 %v3420
        %v4186 = vunpack.c.l.b16 %v3421
        %v4187 = vunpack.c.h.b16 %v3421
        %v4188 = vunpack.c.l.b16 %v3422
        %v4189 = vunpack.c.h.b16 %v3422
        %v4190 = vunpack.c.l.b16 %v3423
        %v4191 = vunpack.c.h.b16 %v3423
        %v4192 = vpack.c.b16 %v3688, %v3680
        %v4193 = vpack.c.b16 %v3689, %v3681
        %v4194 = vpack.c.b16 %v3690, %v3682
        %v4195 = vpack.c.b16 %v3691, %v3683
        %v4196 = vpack.c.b16 %v3692, %v3684
        %v4197 = vpack.c.b16 %v3693, %v3685
        %v4198 = vpack.c.b16 %v3694, %v3686
        %v4199 = vpack.c.b16 %v3695, %v3687
        %v4200 = vpack.c.b16 %v3704, %v3696
        %v4201 = vpack.c.b16 %v3705, %v3697
        %v4202 = vpack.c.b16 %v3706, %v3698
        %v4203 = vpack.c.b16 %v3707, %v3699
        %v4204 = vpack.c.b16 %v3708, %v3700
        %v4205 = vpack.c.b16 %v3709, %v3701
        %v4206 = vpack.c.b16 %v3710, %v3702
        %v4207 = vpack.c.b16 %v3711, %v3703
        %v4208 = vpack.c.b16 %v3720, %v3712
        %v4209 = vpack.c.b16 %v3721, %v3713
        %v4210 = vpack.c.b16 %v3722, %v3714
        %v4211 = vpack.c.b16 %v3723, %v3715
        %v4212 = vpack.c.b16 %v3724, %v3716
        %v4213 = vpack.c.b16 %v3725, %v3717
        %v4214 = vpack.c.b16 %v3726, %v3718
        %v4215 = vpack.c.b16 %v3727, %v3719
        %v4216 = vpack.c.b16 %v3736, %v3728
        %v4217 = vpack.c.b16 %v3737, %v3729
        %v4218 = vpack.c.b16 %v3738, %v3730
        %v4219 = vpack.c.b16 %v3739, %v3731
        %v4220 = vpack.c.b16 %v3740, %v3732
        %v4221 = vpack.c.b16 %v3741, %v3733
        %v4222 = vpack.c.b16 %v3742, %v3734
        %v4223 = vpack.c.b16 %v3743, %v3735
        %v4224 = vpack.c.b16 %v3752, %v3744
        %v4225 = vpack.c.b16 %v3753, %v3745
        %v4226 = vpack.c.b16 %v3754, %v3746
        %v4227 = vpack.c.b16 %v3755, %v3747
        %v4228 = vpack.c.b16 %v3756, %v3748
        %v4229 = vpack.c.b16 %v3757, %v3749
        %v4230 = vpack.c.b16 %v3758, %v3750
        %v4231 = vpack.c.b16 %v3759, %v3751
        %v4232 = vpack.c.b16 %v3768, %v3760
        %v4233 = vpack.c.b16 %v3769, %v3761
        %v4234 = vpack.c.b16 %v3770, %v3762
        %v4235 = vpack.c.b16 %v3771, %v3763
        %v4236 = vpack.c.b16 %v3772, %v3764
        %v4237 = vpack.c.b16 %v3773, %v3765
        %v4238 = vpack.c.b16 %v3774, %v3766
        %v4239 = vpack.c.b16 %v3775, %v3767
        %v4240 = vpack.c.b16 %v3784, %v3776
        %v4241 = vpack.c.b16 %v3785, %v3777
        %v4242 = vpack.c.b16 %v3786, %v3778
        %v4243 = vpack.c.b16 %v3787, %v3779
        %v4244 = vpack.c.b16 %v3788, %v3780
        %v4245 = vpack.c.b16 %v3789, %v3781
        %v4246 = vpack.c.b16 %v3790, %v3782
        %v4247 = vpack.c.b16 %v3791, %v3783
        %v4248 = vpack.c.b16 %v3800, %v3792
        %v4249 = vpack.c.b16 %v3801, %v3793
        %v4250 = vpack.c.b16 %v3802, %v3794
        %v4251 = vpack.c.b16 %v3803, %v3795
        %v4252 = vpack.c.b16 %v3804, %v3796
        %v4253 = vpack.c.b16 %v3805, %v3797
        %v4254 = vpack.c.b16 %v3806, %v3798
        %v4255 = vpack.c.b16 %v3807, %v3799
        %v4256 = vpack.c.b16 %v3816, %v3808
        %v4257 = vpack.c.b16 %v3817, %v3809
        %v4258 = vpack.c.b16 %v3818, %v3810
        %v4259 = vpack.c.b16 %v3819, %v3811
        %v4260 = vpack.c.b16 %v3820, %v3812
        %v4261 = vpack.c.b16 %v3821, %v3813
        %v4262 = vpack.c.b16 %v3822, %v3814
        %v4263 = vpack.c.b16 %v3823, %v3815
        %v4264 = vpack.c.b16 %v3832, %v3824
        %v4265 = vpack.c.b16 %v3833, %v3825
        %v4266 = vpack.c.b16 %v3834, %v3826
        %v4267 = vpack.c.b16 %v3835, %v3827
        %v4268 = vpack.c.b16 %v3836, %v3828
        %v4269 = vpack.c.b16 %v3837, %v3829
        %v4270 = vpack.c.b16 %v3838, %v3830
        %v4271 = vpack.c.b16 %v3839, %v3831
        %v4272 = vpack.c.b16 %v3848, %v3840
        %v4273 = vpack.c.b16 %v3849, %v3841
        %v4274 = vpack.c.b16 %v3850, %v3842
        %v4275 = vpack.c.b16 %v3851, %v3843
        %v4276 = vpack.c.b16 %v3852, %v3844
        %v4277 = vpack.c.b16 %v3853, %v3845
        %v4278 = vpack.c.b16 %v3854, %v3846
        %v4279 = vpack.c.b16 %v3855, %v3847
        %v4280 = vpack.c.b16 %v3864, %v3856
        %v4281 = vpack.c.b16 %v3865, %v3857
        %v4282 = vpack.c.b16 %v3866, %v3858
        %v4283 = vpack.c.b16 %v3867, %v3859
        %v4284 = vpack.c.b16 %v3868, %v3860
        %v4285 = vpack.c.b16 %v3869, %v3861
        %v4286 = vpack.c.b16 %v3870, %v3862
        %v4287 = vpack.c.b16 %v3871, %v3863
        %v4288 = vpack.c.b16 %v3880, %v3872
        %v4289 = vpack.c.b16 %v3881, %v3873
        %v4290 = vpack.c.b16 %v3882, %v3874
        %v4291 = vpack.c.b16 %v3883, %v3875
        %v4292 = vpack.c.b16 %v3884, %v3876
        %v4293 = vpack.c.b16 %v3885, %v3877
        %v4294 = vpack.c.b16 %v3886, %v3878
        %v4295 = vpack.c.b16 %v3887, %v3879
        %v4296 = vpack.c.b16 %v3896, %v3888
        %v4297 = vpack.c.b16 %v3897, %v3889
        %v4298 = vpack.c.b16 %v3898, %v3890
        %v4299 = vpack.c.b16 %v3899, %v3891
        %v4300 = vpack.c.b16 %v3900, %v3892
        %v4301 = vpack.c.b16 %v3901, %v3893
        %v4302 = vpack.c.b16 %v3902, %v3894
        %v4303 = vpack.c.b16 %v3903, %v3895
        %v4304 = vpack.c.b16 %v3912, %v3904
        %v4305 = vpack.c.b16 %v3913, %v3905
        %v4306 = vpack.c.b16 %v3914, %v3906
        %v4307 = vpack.c.b16 %v3915, %v3907
        %v4308 = vpack.c.b16 %v3916, %v3908
        %v4309 = vpack.c.b16 %v3917, %v3909
        %v4310 = vpack.c.b16 %v3918, %v3910
        %v4311 = vpack.c.b16 %v3919, %v3911
        %v4312 = vpack.c.b16 %v3928, %v3920
        %v4313 = vpack.c.b16 %v3929, %v3921
        %v4314 = vpack.c.b16 %v3930, %v3922
        %v4315 = vpack.c.b16 %v3931, %v3923
        %v4316 = vpack.c.b16 %v3932, %v3924
        %v4317 = vpack.c.b16 %v3933, %v3925
        %v4318 = vpack.c.b16 %v3934, %v3926
        %v4319 = vpack.c.b16 %v3935, %v3927
        %v4320 = vpack.c.b16 %v3944, %v3936
        %v4321 = vpack.c.b16 %v3945, %v3937
        %v4322 = vpack.c.b16 %v3946, %v3938
        %v4323 = vpack.c.b16 %v3947, %v3939
        %v4324 = vpack.c.b16 %v3948, %v3940
        %v4325 = vpack.c.b16 %v3949, %v3941
        %v4326 = vpack.c.b16 %v3950, %v3942
        %v4327 = vpack.c.b16 %v3951, %v3943
        %v4328 = vpack.c.b16 %v3960, %v3952
        %v4329 = vpack.c.b16 %v3961, %v3953
        %v4330 = vpack.c.b16 %v3962, %v3954
        %v4331 = vpack.c.b16 %v3963, %v3955
        %v4332 = vpack.c.b16 %v3964, %v3956
        %v4333 = vpack.c.b16 %v3965, %v3957
        %v4334 = vpack.c.b16 %v3966, %v3958
        %v4335 = vpack.c.b16 %v3967, %v3959
        %v4336 = vpack.c.b16 %v3976, %v3968
        %v4337 = vpack.c.b16 %v3977, %v3969
        %v4338 = vpack.c.b16 %v3978, %v3970
        %v4339 = vpack.c.b16 %v3979, %v3971
        %v4340 = vpack.c.b16 %v3980, %v3972
        %v4341 = vpack.c.b16 %v3981, %v3973
        %v4342 = vpack.c.b16 %v3982, %v3974
        %v4343 = vpack.c.b16 %v3983, %v3975
        %v4344 = vpack.c.b16 %v3992, %v3984
        %v4345 = vpack.c.b16 %v3993, %v3985
        %v4346 = vpack.c.b16 %v3994, %v3986
        %v4347 = vpack.c.b16 %v3995, %v3987
        %v4348 = vpack.c.b16 %v3996, %v3988
        %v4349 = vpack.c.b16 %v3997, %v3989
        %v4350 = vpack.c.b16 %v3998, %v3990
        %v4351 = vpack.c.b16 %v3999, %v3991
        %v4352 = vpack.c.b16 %v4008, %v4000
        %v4353 = vpack.c.b16 %v4009, %v4001
        %v4354 = vpack.c.b16 %v4010, %v4002
        %v4355 = vpack.c.b16 %v4011, %v4003
        %v4356 = vpack.c.b16 %v4012, %v4004
        %v4357 = vpack.c.b16 %v4013, %v4005
        %v4358 = vpack.c.b16 %v4014, %v4006
        %v4359 = vpack.c.b16 %v4015, %v4007
        %v4360 = vpack.c.b16 %v4024, %v4016
        %v4361 = vpack.c.b16 %v4025, %v4017
        %v4362 = vpack.c.b16 %v4026, %v4018
        %v4363 = vpack.c.b16 %v4027, %v4019
        %v4364 = vpack.c.b16 %v4028, %v4020
        %v4365 = vpack.c.b16 %v4029, %v4021
        %v4366 = vpack.c.b16 %v4030, %v4022
        %v4367 = vpack.c.b16 %v4031, %v4023
        %v4368 = vpack.c.b16 %v4040, %v4032
        %v4369 = vpack.c.b16 %v4041, %v4033
        %v4370 = vpack.c.b16 %v4042, %v4034
        %v4371 = vpack.c.b16 %v4043, %v4035
        %v4372 = vpack.c.b16 %v4044, %v4036
        %v4373 = vpack.c.b16 %v4045, %v4037
        %v4374 = vpack.c.b16 %v4046, %v4038
        %v4375 = vpack.c.b16 %v4047, %v4039
        %v4376 = vpack.c.b16 %v4056, %v4048
        %v4377 = vpack.c.b16 %v4057, %v4049
        %v4378 = vpack.c.b16 %v4058, %v4050
        %v4379 = vpack.c.b16 %v4059, %v4051
        %v4380 = vpack.c.b16 %v4060, %v4052
        %v4381 = vpack.c.b16 %v4061, %v4053
        %v4382 = vpack.c.b16 %v4062, %v4054
        %v4383 = vpack.c.b16 %v4063, %v4055
        %v4384 = vpack.c.b16 %v4072, %v4064
        %v4385 = vpack.c.b16 %v4073, %v4065
        %v4386 = vpack.c.b16 %v4074, %v4066
        %v4387 = vpack.c.b16 %v4075, %v4067
        %v4388 = vpack.c.b16 %v4076, %v4068
        %v4389 = vpack.c.b16 %v4077, %v4069
        %v4390 = vpack.c.b16 %v4078, %v4070
        %v4391 = vpack.c.b16 %v4079, %v4071
        %v4392 = vpack.c.b16 %v4088, %v4080
        %v4393 = vpack.c.b16 %v4089, %v4081
        %v4394 = vpack.c.b16 %v4090, %v4082
        %v4395 = vpack.c.b16 %v4091, %v4083
        %v4396 = vpack.c.b16 %v4092, %v4084
        %v4397 = vpack.c.b16 %v4093, %v4085
        %v4398 = vpack.c.b16 %v4094, %v4086
        %v4399 = vpack.c.b16 %v4095, %v4087
        %v4400 = vpack.c.b16 %v4104, %v4096
        %v4401 = vpack.c.b16 %v4105, %v4097
        %v4402 = vpack.c.b16 %v4106, %v4098
        %v4403 = vpack.c.b16 %v4107, %v4099
        %v4404 = vpack.c.b16 %v4108, %v4100
        %v4405 = vpack.c.b16 %v4109, %v4101
        %v4406 = vpack.c.b16 %v4110, %v4102
        %v4407 = vpack.c.b16 %v4111, %v4103
        %v4408 = vpack.c.b16 %v4120, %v4112
        %v4409 = vpack.c.b16 %v4121, %v4113
        %v4410 = vpack.c.b16 %v4122, %v4114
        %v4411 = vpack.c.b16 %v4123, %v4115
        %v4412 = vpack.c.b16 %v4124, %v4116
        %v4413 = vpack.c.b16 %v4125, %v4117
        %v4414 = vpack.c.b16 %v4126, %v4118
        %v4415 = vpack.c.b16 %v4127, %v4119
        %v4416 = vpack.c.b16 %v4136, %v4128
        %v4417 = vpack.c.b16 %v4137, %v4129
        %v4418 = vpack.c.b16 %v4138, %v4130
        %v4419 = vpack.c.b16 %v4139, %v4131
        %v4420 = vpack.c.b16 %v4140, %v4132
        %v4421 = vpack.c.b16 %v4141, %v4133
        %v4422 = vpack.c.b16 %v4142, %v4134
        %v4423 = vpack.c.b16 %v4143, %v4135
        %v4424 = vpack.c.b16 %v4152, %v4144
        %v4425 = vpack.c.b16 %v4153, %v4145
        %v4426 = vpack.c.b16 %v4154, %v4146
        %v4427 = vpack.c.b16 %v4155, %v4147
        %v4428 = vpack.c.b16 %v4156, %v4148
        %v4429 = vpack.c.b16 %v4157, %v4149
        %v4430 = vpack.c.b16 %v4158, %v4150
        %v4431 = vpack.c.b16 %v4159, %v4151
        %v4432 = vpack.c.b16 %v4168, %v4160
        %v4433 = vpack.c.b16 %v4169, %v4161
        %v4434 = vpack.c.b16 %v4170, %v4162
        %v4435 = vpack.c.b16 %v4171, %v4163
        %v4436 = vpack.c.b16 %v4172, %v4164
        %v4437 = vpack.c.b16 %v4173, %v4165
        %v4438 = vpack.c.b16 %v4174, %v4166
        %v4439 = vpack.c.b16 %v4175, %v4167
        %v4440 = vpack.c.b16 %v4184, %v4176
        %v4441 = vpack.c.b16 %v4185, %v4177
        %v4442 = vpack.c.b16 %v4186, %v4178
        %v4443 = vpack.c.b16 %v4187, %v4179
        %v4444 = vpack.c.b16 %v4188, %v4180
        %v4445 = vpack.c.b16 %v4189, %v4181
        %v4446 = vpack.c.b16 %v4190, %v4182
        %v4447 = vpack.c.b16 %v4191, %v4183
        %4704 = vmatprep.subr.bf16.mxu0 %v4249
        %4705 = vmatpush1.bf16.msra.mxu0 %v4248
        %4706 = vmatprep.subr.bf16.mxu0 %v4241
        %4707 = vmatpush1.bf16.msra.mxu0 %v4240
        %4708 = vmatprep.subr.bf16.mxu0 %v4233
        %4709 = vmatpush1.bf16.msra.mxu0 %v4232
        %4710 = vmatprep.subr.bf16.mxu0 %v4225
        %4711 = vmatpush1.bf16.msra.mxu0 %v4224
        %4712 = vmatprep.subr.bf16.mxu0 %v4217
        %4713 = vmatpush1.bf16.msra.mxu0 %v4216
        %4714 = vmatprep.subr.bf16.mxu0 %v4209
        %4715 = vmatpush1.bf16.msra.mxu0 %v4208
        %4716 = vmatprep.subr.bf16.mxu0 %v4201
        %4717 = vmatpush1.bf16.msra.mxu0 %v4200
        %4718 = vmatprep.subr.bf16.mxu0 %v4193
        %4719 = vmatpush1.bf16.msra.mxu0 %v4192
        %4720 = vmatprep.subr.bf16.mxu0 %v4313
        %4721 = vmatpush2.bf16.msra.mxu0 %v4312
        %4722 = vmatprep.subr.bf16.mxu0 %v4305
        %4723 = vmatpush2.bf16.msra.mxu0 %v4304
        %4724 = vmatprep.subr.bf16.mxu0 %v4297
        %4725 = vmatpush2.bf16.msra.mxu0 %v4296
        %4726 = vmatprep.subr.bf16.mxu0 %v4289
        %4727 = vmatpush2.bf16.msra.mxu0 %v4288
        %4728 = vmatprep.subr.bf16.mxu0 %v4281
        %4729 = vmatpush2.bf16.msra.mxu0 %v4280
        %4730 = vmatprep.subr.bf16.mxu0 %v4273
        %4731 = vmatpush2.bf16.msra.mxu0 %v4272
        %4732 = vmatprep.subr.bf16.mxu0 %v4265
        %4733 = vmatpush2.bf16.msra.mxu0 %v4264
        %4734 = vmatprep.subr.bf16.mxu0 %v4257
        %4735 = vmatpush2.bf16.msra.mxu0 %v4256
        %4736 = vmatprep.mubr.bf16.mxu0 %v3137
        %4737 = vmatmul.mubr.bf16.gmra.mxu0 %v3136
        %v4738 = vpop.f32.mrf.mxu0
        %v4739 = vadd.f32 0.0, %v4738
        %v4740 = vpop.f32.mrf.mxu0
        %v4741 = vadd.f32 0.0, %v4740
        %v4742 = vpop.f32.mrf.mxu0
        %v4743 = vadd.f32 0.0, %v4742
        %v4744 = vpop.f32.mrf.mxu0
        %v4745 = vadd.f32 0.0, %v4744
        %4746 = vmatprep.mubr.bf16.mxu0 %v3141
        %4747 = vmatmul.mubr.bf16.gmra.mxu0 %v3140
        %v4748 = vpop.f32.mrf.mxu0
        %v4749 = vadd.f32 0.0, %v4748
        %v4750 = vpop.f32.mrf.mxu0
        %v4751 = vadd.f32 0.0, %v4750
        %v4752 = vpop.f32.mrf.mxu0
        %v4753 = vadd.f32 0.0, %v4752
        %v4754 = vpop.f32.mrf.mxu0
        %v4755 = vadd.f32 0.0, %v4754
        %4756 = vmatprep.mubr.bf16.mxu0 %v3145
        %4757 = vmatmul.mubr.bf16.gmra.mxu0 %v3144
        %v4758 = vpop.f32.mrf.mxu0
        %v4759 = vadd.f32 0.0, %v4758
        %v4760 = vpop.f32.mrf.mxu0
        %v4761 = vadd.f32 0.0, %v4760
        %v4762 = vpop.f32.mrf.mxu0
        %v4763 = vadd.f32 0.0, %v4762
        %v4764 = vpop.f32.mrf.mxu0
        %v4765 = vadd.f32 0.0, %v4764
        %4766 = vmatprep.mubr.bf16.mxu0 %v3149
        %4767 = vmatmul.mubr.bf16.gmra.mxu0 %v3148
        %v4768 = vpop.f32.mrf.mxu0
        %v4769 = vadd.f32 0.0, %v4768
        %v4770 = vpop.f32.mrf.mxu0
        %v4771 = vadd.f32 0.0, %v4770
        %v4772 = vpop.f32.mrf.mxu0
        %v4773 = vadd.f32 0.0, %v4772
        %v4774 = vpop.f32.mrf.mxu0
        %v4775 = vadd.f32 0.0, %v4774
        %4776 = vmatprep.mubr.bf16.mxu0 %v3153
        %4777 = vmatmul.mubr.bf16.gmra.mxu0 %v3152
        %v4778 = vpop.f32.mrf.mxu0
        %v4779 = vadd.f32 0.0, %v4778
        %v4780 = vpop.f32.mrf.mxu0
        %v4781 = vadd.f32 0.0, %v4780
        %v4782 = vpop.f32.mrf.mxu0
        %v4783 = vadd.f32 0.0, %v4782
        %v4784 = vpop.f32.mrf.mxu0
        %v4785 = vadd.f32 0.0, %v4784
        %4786 = vmatprep.mubr.bf16.mxu0 %v3157
        %4787 = vmatmul.mubr.bf16.gmra.mxu0 %v3156
        %v4788 = vpop.f32.mrf.mxu0
        %v4789 = vadd.f32 0.0, %v4788
        %v4790 = vpop.f32.mrf.mxu0
        %v4791 = vadd.f32 0.0, %v4790
        %v4792 = vpop.f32.mrf.mxu0
        %v4793 = vadd.f32 0.0, %v4792
        %v4794 = vpop.f32.mrf.mxu0
        %v4795 = vadd.f32 0.0, %v4794
        %4796 = vmatprep.mubr.bf16.mxu0 %v3161
        %4797 = vmatmul.mubr.bf16.gmra.mxu0 %v3160
        %v4798 = vpop.f32.mrf.mxu0
        %v4799 = vadd.f32 0.0, %v4798
        %v4800 = vpop.f32.mrf.mxu0
        %v4801 = vadd.f32 0.0, %v4800
        %v4802 = vpop.f32.mrf.mxu0
        %v4803 = vadd.f32 0.0, %v4802
        %v4804 = vpop.f32.mrf.mxu0
        %v4805 = vadd.f32 0.0, %v4804
        %4806 = vmatprep.mubr.bf16.mxu0 %v3165
        %4807 = vmatmul.mubr.bf16.gmra.mxu0 %v3164
        %v4808 = vpop.f32.mrf.mxu0
        %v4809 = vadd.f32 0.0, %v4808
        %v4810 = vpop.f32.mrf.mxu0
        %v4811 = vadd.f32 0.0, %v4810
        %v4812 = vpop.f32.mrf.mxu0
        %v4813 = vadd.f32 0.0, %v4812
        %v4814 = vpop.f32.mrf.mxu0
        %v4815 = vadd.f32 0.0, %v4814
        %4816 = vdwg.mxu0
        %4817 = vmatprep.subr.bf16.mxu0 %v4377
        %4818 = vmatpush1.bf16.msra.mxu0 %v4376
        %4819 = vmatprep.subr.bf16.mxu0 %v4369
        %4820 = vmatpush1.bf16.msra.mxu0 %v4368
        %4821 = vmatprep.subr.bf16.mxu0 %v4361
        %4822 = vmatpush1.bf16.msra.mxu0 %v4360
        %4823 = vmatprep.subr.bf16.mxu0 %v4353
        %4824 = vmatpush1.bf16.msra.mxu0 %v4352
        %4825 = vmatprep.subr.bf16.mxu0 %v4345
        %4826 = vmatpush1.bf16.msra.mxu0 %v4344
        %4827 = vmatprep.subr.bf16.mxu0 %v4337
        %4828 = vmatpush1.bf16.msra.mxu0 %v4336
        %4829 = vmatprep.subr.bf16.mxu0 %v4329
        %4830 = vmatpush1.bf16.msra.mxu0 %v4328
        %4831 = vmatprep.subr.bf16.mxu0 %v4321
        %4832 = vmatpush1.bf16.msra.mxu0 %v4320
        %4833 = vmatprep.subr.bf16.mxu0 %v4441
        %4834 = vmatpush2.bf16.msra.mxu0 %v4440
        %4835 = vmatprep.subr.bf16.mxu0 %v4433
        %4836 = vmatpush2.bf16.msra.mxu0 %v4432
        %4837 = vmatprep.subr.bf16.mxu0 %v4425
        %4838 = vmatpush2.bf16.msra.mxu0 %v4424
        %4839 = vmatprep.subr.bf16.mxu0 %v4417
        %4840 = vmatpush2.bf16.msra.mxu0 %v4416
        %4841 = vmatprep.subr.bf16.mxu0 %v4409
        %4842 = vmatpush2.bf16.msra.mxu0 %v4408
        %4843 = vmatprep.subr.bf16.mxu0 %v4401
        %4844 = vmatpush2.bf16.msra.mxu0 %v4400
        %4845 = vmatprep.subr.bf16.mxu0 %v4393
        %4846 = vmatpush2.bf16.msra.mxu0 %v4392
        %4847 = vmatprep.subr.bf16.mxu0 %v4385
        %4848 = vmatpush2.bf16.msra.mxu0 %v4384
        %4849 = vmatprep.mubr.bf16.mxu0 %v3139
        %4850 = vmatmul.mubr.bf16.gmra.mxu0 %v3138
        %v4851 = vpop.f32.mrf.mxu0
        %v4852 = vadd.f32 %v4739, %v4851
        %v4853 = vpop.f32.mrf.mxu0
        %v4854 = vadd.f32 %v4741, %v4853
        %v4855 = vpop.f32.mrf.mxu0
        %v4856 = vadd.f32 %v4743, %v4855
        %v4857 = vpop.f32.mrf.mxu0
        %v4858 = vadd.f32 %v4745, %v4857
        %4859 = vmatprep.mubr.bf16.mxu0 %v3143
        %4860 = vmatmul.mubr.bf16.gmra.mxu0 %v3142
        %v4861 = vpop.f32.mrf.mxu0
        %v4862 = vadd.f32 %v4749, %v4861
        %v4863 = vpop.f32.mrf.mxu0
        %v4864 = vadd.f32 %v4751, %v4863
        %v4865 = vpop.f32.mrf.mxu0
        %v4866 = vadd.f32 %v4753, %v4865
        %v4867 = vpop.f32.mrf.mxu0
        %v4868 = vadd.f32 %v4755, %v4867
        %4869 = vmatprep.mubr.bf16.mxu0 %v3147
        %4870 = vmatmul.mubr.bf16.gmra.mxu0 %v3146
        %v4871 = vpop.f32.mrf.mxu0
        %v4872 = vadd.f32 %v4759, %v4871
        %v4873 = vpop.f32.mrf.mxu0
        %v4874 = vadd.f32 %v4761, %v4873
        %v4875 = vpop.f32.mrf.mxu0
        %v4876 = vadd.f32 %v4763, %v4875
        %v4877 = vpop.f32.mrf.mxu0
        %v4878 = vadd.f32 %v4765, %v4877
        %4879 = vmatprep.mubr.bf16.mxu0 %v3151
        %4880 = vmatmul.mubr.bf16.gmra.mxu0 %v3150
        %v4881 = vpop.f32.mrf.mxu0
        %v4882 = vadd.f32 %v4769, %v4881
        %v4883 = vpop.f32.mrf.mxu0
        %v4884 = vadd.f32 %v4771, %v4883
        %v4885 = vpop.f32.mrf.mxu0
        %v4886 = vadd.f32 %v4773, %v4885
        %v4887 = vpop.f32.mrf.mxu0
        %v4888 = vadd.f32 %v4775, %v4887
        %4889 = vmatprep.mubr.bf16.mxu0 %v3155
        %4890 = vmatmul.mubr.bf16.gmra.mxu0 %v3154
        %v4891 = vpop.f32.mrf.mxu0
        %v4892 = vadd.f32 %v4779, %v4891
        %v4893 = vpop.f32.mrf.mxu0
        %v4894 = vadd.f32 %v4781, %v4893
        %v4895 = vpop.f32.mrf.mxu0
        %v4896 = vadd.f32 %v4783, %v4895
        %v4897 = vpop.f32.mrf.mxu0
        %v4898 = vadd.f32 %v4785, %v4897
        %4899 = vmatprep.mubr.bf16.mxu0 %v3159
        %4900 = vmatmul.mubr.bf16.gmra.mxu0 %v3158
        %v4901 = vpop.f32.mrf.mxu0
        %v4902 = vadd.f32 %v4789, %v4901
        %v4903 = vpop.f32.mrf.mxu0
        %v4904 = vadd.f32 %v4791, %v4903
        %v4905 = vpop.f32.mrf.mxu0
        %v4906 = vadd.f32 %v4793, %v4905
        %v4907 = vpop.f32.mrf.mxu0
        %v4908 = vadd.f32 %v4795, %v4907
        %4909 = vmatprep.mubr.bf16.mxu0 %v3163
        %4910 = vmatmul.mubr.bf16.gmra.mxu0 %v3162
        %v4911 = vpop.f32.mrf.mxu0
        %v4912 = vadd.f32 %v4799, %v4911
        %v4913 = vpop.f32.mrf.mxu0
        %v4914 = vadd.f32 %v4801, %v4913
        %v4915 = vpop.f32.mrf.mxu0
        %v4916 = vadd.f32 %v4803, %v4915
        %v4917 = vpop.f32.mrf.mxu0
        %v4918 = vadd.f32 %v4805, %v4917
        %4919 = vmatprep.mubr.bf16.mxu0 %v3167
        %4920 = vmatmul.mubr.bf16.gmra.mxu0 %v3166
        %v4921 = vpop.f32.mrf.mxu0
        %v4922 = vadd.f32 %v4809, %v4921
        %v4923 = vpop.f32.mrf.mxu0
        %v4924 = vadd.f32 %v4811, %v4923
        %v4925 = vpop.f32.mrf.mxu0
        %v4926 = vadd.f32 %v4813, %v4925
        %v4927 = vpop.f32.mrf.mxu0
        %v4928 = vadd.f32 %v4815, %v4927
        %4929 = vdwg.mxu0
        %4930 = vmatprep.subr.bf16.mxu0 %v4251
        %4931 = vmatpush1.bf16.msra.mxu0 %v4250
        %4932 = vmatprep.subr.bf16.mxu0 %v4243
        %4933 = vmatpush1.bf16.msra.mxu0 %v4242
        %4934 = vmatprep.subr.bf16.mxu0 %v4235
        %4935 = vmatpush1.bf16.msra.mxu0 %v4234
        %4936 = vmatprep.subr.bf16.mxu0 %v4227
        %4937 = vmatpush1.bf16.msra.mxu0 %v4226
        %4938 = vmatprep.subr.bf16.mxu0 %v4219
        %4939 = vmatpush1.bf16.msra.mxu0 %v4218
        %4940 = vmatprep.subr.bf16.mxu0 %v4211
        %4941 = vmatpush1.bf16.msra.mxu0 %v4210
        %4942 = vmatprep.subr.bf16.mxu0 %v4203
        %4943 = vmatpush1.bf16.msra.mxu0 %v4202
        %4944 = vmatprep.subr.bf16.mxu0 %v4195
        %4945 = vmatpush1.bf16.msra.mxu0 %v4194
        %4946 = vmatprep.subr.bf16.mxu0 %v4315
        %4947 = vmatpush2.bf16.msra.mxu0 %v4314
        %4948 = vmatprep.subr.bf16.mxu0 %v4307
        %4949 = vmatpush2.bf16.msra.mxu0 %v4306
        %4950 = vmatprep.subr.bf16.mxu0 %v4299
        %4951 = vmatpush2.bf16.msra.mxu0 %v4298
        %4952 = vmatprep.subr.bf16.mxu0 %v4291
        %4953 = vmatpush2.bf16.msra.mxu0 %v4290
        %4954 = vmatprep.subr.bf16.mxu0 %v4283
        %4955 = vmatpush2.bf16.msra.mxu0 %v4282
        %4956 = vmatprep.subr.bf16.mxu0 %v4275
        %4957 = vmatpush2.bf16.msra.mxu0 %v4274
        %4958 = vmatprep.subr.bf16.mxu0 %v4267
        %4959 = vmatpush2.bf16.msra.mxu0 %v4266
        %4960 = vmatprep.subr.bf16.mxu0 %v4259
        %4961 = vmatpush2.bf16.msra.mxu0 %v4258
        %4962 = vmatprep.mubr.bf16.mxu0 %v3137
        %4963 = vmatmul.mubr.bf16.gmra.mxu0 %v3136
        %v4964 = vpop.f32.mrf.mxu0
        %v4965 = vadd.f32 0.0, %v4964
        %v4966 = vpop.f32.mrf.mxu0
        %v4967 = vadd.f32 0.0, %v4966
        %v4968 = vpop.f32.mrf.mxu0
        %v4969 = vadd.f32 0.0, %v4968
        %v4970 = vpop.f32.mrf.mxu0
        %v4971 = vadd.f32 0.0, %v4970
        %4972 = vmatprep.mubr.bf16.mxu0 %v3141
        %4973 = vmatmul.mubr.bf16.gmra.mxu0 %v3140
        %v4974 = vpop.f32.mrf.mxu0
        %v4975 = vadd.f32 0.0, %v4974
        %v4976 = vpop.f32.mrf.mxu0
        %v4977 = vadd.f32 0.0, %v4976
        %v4978 = vpop.f32.mrf.mxu0
        %v4979 = vadd.f32 0.0, %v4978
        %v4980 = vpop.f32.mrf.mxu0
        %v4981 = vadd.f32 0.0, %v4980
        %4982 = vmatprep.mubr.bf16.mxu0 %v3145
        %4983 = vmatmul.mubr.bf16.gmra.mxu0 %v3144
        %v4984 = vpop.f32.mrf.mxu0
        %v4985 = vadd.f32 0.0, %v4984
        %v4986 = vpop.f32.mrf.mxu0
        %v4987 = vadd.f32 0.0, %v4986
        %v4988 = vpop.f32.mrf.mxu0
        %v4989 = vadd.f32 0.0, %v4988
        %v4990 = vpop.f32.mrf.mxu0
        %v4991 = vadd.f32 0.0, %v4990
        %4992 = vmatprep.mubr.bf16.mxu0 %v3149
        %4993 = vmatmul.mubr.bf16.gmra.mxu0 %v3148
        %v4994 = vpop.f32.mrf.mxu0
        %v4995 = vadd.f32 0.0, %v4994
        %v4996 = vpop.f32.mrf.mxu0
        %v4997 = vadd.f32 0.0, %v4996
        %v4998 = vpop.f32.mrf.mxu0
        %v4999 = vadd.f32 0.0, %v4998
        %v5000 = vpop.f32.mrf.mxu0
        %v5001 = vadd.f32 0.0, %v5000
        %5002 = vmatprep.mubr.bf16.mxu0 %v3153
        %5003 = vmatmul.mubr.bf16.gmra.mxu0 %v3152
        %v5004 = vpop.f32.mrf.mxu0
        %v5005 = vadd.f32 0.0, %v5004
        %v5006 = vpop.f32.mrf.mxu0
        %v5007 = vadd.f32 0.0, %v5006
        %v5008 = vpop.f32.mrf.mxu0
        %v5009 = vadd.f32 0.0, %v5008
        %v5010 = vpop.f32.mrf.mxu0
        %v5011 = vadd.f32 0.0, %v5010
        %5012 = vmatprep.mubr.bf16.mxu0 %v3157
        %5013 = vmatmul.mubr.bf16.gmra.mxu0 %v3156
        %v5014 = vpop.f32.mrf.mxu0
        %v5015 = vadd.f32 0.0, %v5014
        %v5016 = vpop.f32.mrf.mxu0
        %v5017 = vadd.f32 0.0, %v5016
        %v5018 = vpop.f32.mrf.mxu0
        %v5019 = vadd.f32 0.0, %v5018
        %v5020 = vpop.f32.mrf.mxu0
        %v5021 = vadd.f32 0.0, %v5020
        %5022 = vmatprep.mubr.bf16.mxu0 %v3161
        %5023 = vmatmul.mubr.bf16.gmra.mxu0 %v3160
        %v5024 = vpop.f32.mrf.mxu0
        %v5025 = vadd.f32 0.0, %v5024
        %v5026 = vpop.f32.mrf.mxu0
        %v5027 = vadd.f32 0.0, %v5026
        %v5028 = vpop.f32.mrf.mxu0
        %v5029 = vadd.f32 0.0, %v5028
        %v5030 = vpop.f32.mrf.mxu0
        %v5031 = vadd.f32 0.0, %v5030
        %5032 = vmatprep.mubr.bf16.mxu0 %v3165
        %5033 = vmatmul.mubr.bf16.gmra.mxu0 %v3164
        %v5034 = vpop.f32.mrf.mxu0
        %v5035 = vadd.f32 0.0, %v5034
        %v5036 = vpop.f32.mrf.mxu0
        %v5037 = vadd.f32 0.0, %v5036
        %v5038 = vpop.f32.mrf.mxu0
        %v5039 = vadd.f32 0.0, %v5038
        %v5040 = vpop.f32.mrf.mxu0
        %v5041 = vadd.f32 0.0, %v5040
        %5042 = vdwg.mxu0
        %5043 = vmatprep.subr.bf16.mxu0 %v4379
        %5044 = vmatpush1.bf16.msra.mxu0 %v4378
        %5045 = vmatprep.subr.bf16.mxu0 %v4371
        %5046 = vmatpush1.bf16.msra.mxu0 %v4370
        %5047 = vmatprep.subr.bf16.mxu0 %v4363
        %5048 = vmatpush1.bf16.msra.mxu0 %v4362
        %5049 = vmatprep.subr.bf16.mxu0 %v4355
        %5050 = vmatpush1.bf16.msra.mxu0 %v4354
        %5051 = vmatprep.subr.bf16.mxu0 %v4347
        %5052 = vmatpush1.bf16.msra.mxu0 %v4346
        %5053 = vmatprep.subr.bf16.mxu0 %v4339
        %5054 = vmatpush1.bf16.msra.mxu0 %v4338
        %5055 = vmatprep.subr.bf16.mxu0 %v4331
        %5056 = vmatpush1.bf16.msra.mxu0 %v4330
        %5057 = vmatprep.subr.bf16.mxu0 %v4323
        %5058 = vmatpush1.bf16.msra.mxu0 %v4322
        %5059 = vmatprep.subr.bf16.mxu0 %v4443
        %5060 = vmatpush2.bf16.msra.mxu0 %v4442
        %5061 = vmatprep.subr.bf16.mxu0 %v4435
        %5062 = vmatpush2.bf16.msra.mxu0 %v4434
        %5063 = vmatprep.subr.bf16.mxu0 %v4427
        %5064 = vmatpush2.bf16.msra.mxu0 %v4426
        %5065 = vmatprep.subr.bf16.mxu0 %v4419
        %5066 = vmatpush2.bf16.msra.mxu0 %v4418
        %5067 = vmatprep.subr.bf16.mxu0 %v4411
        %5068 = vmatpush2.bf16.msra.mxu0 %v4410
        %5069 = vmatprep.subr.bf16.mxu0 %v4403
        %5070 = vmatpush2.bf16.msra.mxu0 %v4402
        %5071 = vmatprep.subr.bf16.mxu0 %v4395
        %5072 = vmatpush2.bf16.msra.mxu0 %v4394
        %5073 = vmatprep.subr.bf16.mxu0 %v4387
        %5074 = vmatpush2.bf16.msra.mxu0 %v4386
        %5075 = vmatprep.mubr.bf16.mxu0 %v3139
        %5076 = vmatmul.mubr.bf16.gmra.mxu0 %v3138
        %v5077 = vpop.f32.mrf.mxu0
        %v5078 = vadd.f32 %v4965, %v5077
        %v5079 = vpop.f32.mrf.mxu0
        %v5080 = vadd.f32 %v4967, %v5079
        %v5081 = vpop.f32.mrf.mxu0
        %v5082 = vadd.f32 %v4969, %v5081
        %v5083 = vpop.f32.mrf.mxu0
        %v5084 = vadd.f32 %v4971, %v5083
        %5085 = vmatprep.mubr.bf16.mxu0 %v3143
        %5086 = vmatmul.mubr.bf16.gmra.mxu0 %v3142
        %v5087 = vpop.f32.mrf.mxu0
        %v5088 = vadd.f32 %v4975, %v5087
        %v5089 = vpop.f32.mrf.mxu0
        %v5090 = vadd.f32 %v4977, %v5089
        %v5091 = vpop.f32.mrf.mxu0
        %v5092 = vadd.f32 %v4979, %v5091
        %v5093 = vpop.f32.mrf.mxu0
        %v5094 = vadd.f32 %v4981, %v5093
        %5095 = vmatprep.mubr.bf16.mxu0 %v3147
        %5096 = vmatmul.mubr.bf16.gmra.mxu0 %v3146
        %v5097 = vpop.f32.mrf.mxu0
        %v5098 = vadd.f32 %v4985, %v5097
        %v5099 = vpop.f32.mrf.mxu0
        %v5100 = vadd.f32 %v4987, %v5099
        %v5101 = vpop.f32.mrf.mxu0
        %v5102 = vadd.f32 %v4989, %v5101
        %v5103 = vpop.f32.mrf.mxu0
        %v5104 = vadd.f32 %v4991, %v5103
        %5105 = vmatprep.mubr.bf16.mxu0 %v3151
        %5106 = vmatmul.mubr.bf16.gmra.mxu0 %v3150
        %v5107 = vpop.f32.mrf.mxu0
        %v5108 = vadd.f32 %v4995, %v5107
        %v5109 = vpop.f32.mrf.mxu0
        %v5110 = vadd.f32 %v4997, %v5109
        %v5111 = vpop.f32.mrf.mxu0
        %v5112 = vadd.f32 %v4999, %v5111
        %v5113 = vpop.f32.mrf.mxu0
        %v5114 = vadd.f32 %v5001, %v5113
        %5115 = vmatprep.mubr.bf16.mxu0 %v3155
        %5116 = vmatmul.mubr.bf16.gmra.mxu0 %v3154
        %v5117 = vpop.f32.mrf.mxu0
        %v5118 = vadd.f32 %v5005, %v5117
        %v5119 = vpop.f32.mrf.mxu0
        %v5120 = vadd.f32 %v5007, %v5119
        %v5121 = vpop.f32.mrf.mxu0
        %v5122 = vadd.f32 %v5009, %v5121
        %v5123 = vpop.f32.mrf.mxu0
        %v5124 = vadd.f32 %v5011, %v5123
        %5125 = vmatprep.mubr.bf16.mxu0 %v3159
        %5126 = vmatmul.mubr.bf16.gmra.mxu0 %v3158
        %v5127 = vpop.f32.mrf.mxu0
        %v5128 = vadd.f32 %v5015, %v5127
        %v5129 = vpop.f32.mrf.mxu0
        %v5130 = vadd.f32 %v5017, %v5129
        %v5131 = vpop.f32.mrf.mxu0
        %v5132 = vadd.f32 %v5019, %v5131
        %v5133 = vpop.f32.mrf.mxu0
        %v5134 = vadd.f32 %v5021, %v5133
        %5135 = vmatprep.mubr.bf16.mxu0 %v3163
        %5136 = vmatmul.mubr.bf16.gmra.mxu0 %v3162
        %v5137 = vpop.f32.mrf.mxu0
        %v5138 = vadd.f32 %v5025, %v5137
        %v5139 = vpop.f32.mrf.mxu0
        %v5140 = vadd.f32 %v5027, %v5139
        %v5141 = vpop.f32.mrf.mxu0
        %v5142 = vadd.f32 %v5029, %v5141
        %v5143 = vpop.f32.mrf.mxu0
        %v5144 = vadd.f32 %v5031, %v5143
        %5145 = vmatprep.mubr.bf16.mxu0 %v3167
        %5146 = vmatmul.mubr.bf16.gmra.mxu0 %v3166
        %v5147 = vpop.f32.mrf.mxu0
        %v5148 = vadd.f32 %v5035, %v5147
        %v5149 = vpop.f32.mrf.mxu0
        %v5150 = vadd.f32 %v5037, %v5149
        %v5151 = vpop.f32.mrf.mxu0
        %v5152 = vadd.f32 %v5039, %v5151
        %v5153 = vpop.f32.mrf.mxu0
        %v5154 = vadd.f32 %v5041, %v5153
        %5155 = vdwg.mxu0
        %5156 = vmatprep.subr.bf16.mxu0 %v4253
        %5157 = vmatpush1.bf16.msra.mxu0 %v4252
        %5158 = vmatprep.subr.bf16.mxu0 %v4245
        %5159 = vmatpush1.bf16.msra.mxu0 %v4244
        %5160 = vmatprep.subr.bf16.mxu0 %v4237
        %5161 = vmatpush1.bf16.msra.mxu0 %v4236
        %5162 = vmatprep.subr.bf16.mxu0 %v4229
        %5163 = vmatpush1.bf16.msra.mxu0 %v4228
        %5164 = vmatprep.subr.bf16.mxu0 %v4221
        %5165 = vmatpush1.bf16.msra.mxu0 %v4220
        %5166 = vmatprep.subr.bf16.mxu0 %v4213
        %5167 = vmatpush1.bf16.msra.mxu0 %v4212
        %5168 = vmatprep.subr.bf16.mxu0 %v4205
        %5169 = vmatpush1.bf16.msra.mxu0 %v4204
        %5170 = vmatprep.subr.bf16.mxu0 %v4197
        %5171 = vmatpush1.bf16.msra.mxu0 %v4196
        %5172 = vmatprep.subr.bf16.mxu0 %v4317
        %5173 = vmatpush2.bf16.msra.mxu0 %v4316
        %5174 = vmatprep.subr.bf16.mxu0 %v4309
        %5175 = vmatpush2.bf16.msra.mxu0 %v4308
        %5176 = vmatprep.subr.bf16.mxu0 %v4301
        %5177 = vmatpush2.bf16.msra.mxu0 %v4300
        %5178 = vmatprep.subr.bf16.mxu0 %v4293
        %5179 = vmatpush2.bf16.msra.mxu0 %v4292
        %5180 = vmatprep.subr.bf16.mxu0 %v4285
        %5181 = vmatpush2.bf16.msra.mxu0 %v4284
        %5182 = vmatprep.subr.bf16.mxu0 %v4277
        %5183 = vmatpush2.bf16.msra.mxu0 %v4276
        %5184 = vmatprep.subr.bf16.mxu0 %v4269
        %5185 = vmatpush2.bf16.msra.mxu0 %v4268
        %5186 = vmatprep.subr.bf16.mxu0 %v4261
        %5187 = vmatpush2.bf16.msra.mxu0 %v4260
        %5188 = vmatprep.mubr.bf16.mxu0 %v3137
        %5189 = vmatmul.mubr.bf16.gmra.mxu0 %v3136
        %v5190 = vpop.f32.mrf.mxu0
        %v5191 = vadd.f32 0.0, %v5190
        %v5192 = vpop.f32.mrf.mxu0
        %v5193 = vadd.f32 0.0, %v5192
        %v5194 = vpop.f32.mrf.mxu0
        %v5195 = vadd.f32 0.0, %v5194
        %v5196 = vpop.f32.mrf.mxu0
        %v5197 = vadd.f32 0.0, %v5196
        %5198 = vmatprep.mubr.bf16.mxu0 %v3141
        %5199 = vmatmul.mubr.bf16.gmra.mxu0 %v3140
        %v5200 = vpop.f32.mrf.mxu0
        %v5201 = vadd.f32 0.0, %v5200
        %v5202 = vpop.f32.mrf.mxu0
        %v5203 = vadd.f32 0.0, %v5202
        %v5204 = vpop.f32.mrf.mxu0
        %v5205 = vadd.f32 0.0, %v5204
        %v5206 = vpop.f32.mrf.mxu0
        %v5207 = vadd.f32 0.0, %v5206
        %5208 = vmatprep.mubr.bf16.mxu0 %v3145
        %5209 = vmatmul.mubr.bf16.gmra.mxu0 %v3144
        %v5210 = vpop.f32.mrf.mxu0
        %v5211 = vadd.f32 0.0, %v5210
        %v5212 = vpop.f32.mrf.mxu0
        %v5213 = vadd.f32 0.0, %v5212
        %v5214 = vpop.f32.mrf.mxu0
        %v5215 = vadd.f32 0.0, %v5214
        %v5216 = vpop.f32.mrf.mxu0
        %v5217 = vadd.f32 0.0, %v5216
        %5218 = vmatprep.mubr.bf16.mxu0 %v3149
        %5219 = vmatmul.mubr.bf16.gmra.mxu0 %v3148
        %v5220 = vpop.f32.mrf.mxu0
        %v5221 = vadd.f32 0.0, %v5220
        %v5222 = vpop.f32.mrf.mxu0
        %v5223 = vadd.f32 0.0, %v5222
        %v5224 = vpop.f32.mrf.mxu0
        %v5225 = vadd.f32 0.0, %v5224
        %v5226 = vpop.f32.mrf.mxu0
        %v5227 = vadd.f32 0.0, %v5226
        %5228 = vmatprep.mubr.bf16.mxu0 %v3153
        %5229 = vmatmul.mubr.bf16.gmra.mxu0 %v3152
        %v5230 = vpop.f32.mrf.mxu0
        %v5231 = vadd.f32 0.0, %v5230
        %v5232 = vpop.f32.mrf.mxu0
        %v5233 = vadd.f32 0.0, %v5232
        %v5234 = vpop.f32.mrf.mxu0
        %v5235 = vadd.f32 0.0, %v5234
        %v5236 = vpop.f32.mrf.mxu0
        %v5237 = vadd.f32 0.0, %v5236
        %5238 = vmatprep.mubr.bf16.mxu0 %v3157
        %5239 = vmatmul.mubr.bf16.gmra.mxu0 %v3156
        %v5240 = vpop.f32.mrf.mxu0
        %v5241 = vadd.f32 0.0, %v5240
        %v5242 = vpop.f32.mrf.mxu0
        %v5243 = vadd.f32 0.0, %v5242
        %v5244 = vpop.f32.mrf.mxu0
        %v5245 = vadd.f32 0.0, %v5244
        %v5246 = vpop.f32.mrf.mxu0
        %v5247 = vadd.f32 0.0, %v5246
        %5248 = vmatprep.mubr.bf16.mxu0 %v3161
        %5249 = vmatmul.mubr.bf16.gmra.mxu0 %v3160
        %v5250 = vpop.f32.mrf.mxu0
        %v5251 = vadd.f32 0.0, %v5250
        %v5252 = vpop.f32.mrf.mxu0
        %v5253 = vadd.f32 0.0, %v5252
        %v5254 = vpop.f32.mrf.mxu0
        %v5255 = vadd.f32 0.0, %v5254
        %v5256 = vpop.f32.mrf.mxu0
        %v5257 = vadd.f32 0.0, %v5256
        %5258 = vmatprep.mubr.bf16.mxu0 %v3165
        %5259 = vmatmul.mubr.bf16.gmra.mxu0 %v3164
        %v5260 = vpop.f32.mrf.mxu0
        %v5261 = vadd.f32 0.0, %v5260
        %v5262 = vpop.f32.mrf.mxu0
        %v5263 = vadd.f32 0.0, %v5262
        %v5264 = vpop.f32.mrf.mxu0
        %v5265 = vadd.f32 0.0, %v5264
        %v5266 = vpop.f32.mrf.mxu0
        %v5267 = vadd.f32 0.0, %v5266
        %5268 = vdwg.mxu0
        %5269 = vmatprep.subr.bf16.mxu0 %v4381
        %5270 = vmatpush1.bf16.msra.mxu0 %v4380
        %5271 = vmatprep.subr.bf16.mxu0 %v4373
        %5272 = vmatpush1.bf16.msra.mxu0 %v4372
        %5273 = vmatprep.subr.bf16.mxu0 %v4365
        %5274 = vmatpush1.bf16.msra.mxu0 %v4364
        %5275 = vmatprep.subr.bf16.mxu0 %v4357
        %5276 = vmatpush1.bf16.msra.mxu0 %v4356
        %5277 = vmatprep.subr.bf16.mxu0 %v4349
        %5278 = vmatpush1.bf16.msra.mxu0 %v4348
        %5279 = vmatprep.subr.bf16.mxu0 %v4341
        %5280 = vmatpush1.bf16.msra.mxu0 %v4340
        %5281 = vmatprep.subr.bf16.mxu0 %v4333
        %5282 = vmatpush1.bf16.msra.mxu0 %v4332
        %5283 = vmatprep.subr.bf16.mxu0 %v4325
        %5284 = vmatpush1.bf16.msra.mxu0 %v4324
        %5285 = vmatprep.subr.bf16.mxu0 %v4445
        %5286 = vmatpush2.bf16.msra.mxu0 %v4444
        %5287 = vmatprep.subr.bf16.mxu0 %v4437
        %5288 = vmatpush2.bf16.msra.mxu0 %v4436
        %5289 = vmatprep.subr.bf16.mxu0 %v4429
        %5290 = vmatpush2.bf16.msra.mxu0 %v4428
        %5291 = vmatprep.subr.bf16.mxu0 %v4421
        %5292 = vmatpush2.bf16.msra.mxu0 %v4420
        %5293 = vmatprep.subr.bf16.mxu0 %v4413
        %5294 = vmatpush2.bf16.msra.mxu0 %v4412
        %5295 = vmatprep.subr.bf16.mxu0 %v4405
        %5296 = vmatpush2.bf16.msra.mxu0 %v4404
        %5297 = vmatprep.subr.bf16.mxu0 %v4397
        %5298 = vmatpush2.bf16.msra.mxu0 %v4396
        %5299 = vmatprep.subr.bf16.mxu0 %v4389
        %5300 = vmatpush2.bf16.msra.mxu0 %v4388
        %5301 = vmatprep.mubr.bf16.mxu0 %v3139
        %5302 = vmatmul.mubr.bf16.gmra.mxu0 %v3138
        %v5303 = vpop.f32.mrf.mxu0
        %v5304 = vadd.f32 %v5191, %v5303
        %v5305 = vpop.f32.mrf.mxu0
        %v5306 = vadd.f32 %v5193, %v5305
        %v5307 = vpop.f32.mrf.mxu0
        %v5308 = vadd.f32 %v5195, %v5307
        %v5309 = vpop.f32.mrf.mxu0
        %v5310 = vadd.f32 %v5197, %v5309
        %5311 = vmatprep.mubr.bf16.mxu0 %v3143
        %5312 = vmatmul.mubr.bf16.gmra.mxu0 %v3142
        %v5313 = vpop.f32.mrf.mxu0
        %v5314 = vadd.f32 %v5201, %v5313
        %v5315 = vpop.f32.mrf.mxu0
        %v5316 = vadd.f32 %v5203, %v5315
        %v5317 = vpop.f32.mrf.mxu0
        %v5318 = vadd.f32 %v5205, %v5317
        %v5319 = vpop.f32.mrf.mxu0
        %v5320 = vadd.f32 %v5207, %v5319
        %5321 = vmatprep.mubr.bf16.mxu0 %v3147
        %5322 = vmatmul.mubr.bf16.gmra.mxu0 %v3146
        %v5323 = vpop.f32.mrf.mxu0
        %v5324 = vadd.f32 %v5211, %v5323
        %v5325 = vpop.f32.mrf.mxu0
        %v5326 = vadd.f32 %v5213, %v5325
        %v5327 = vpop.f32.mrf.mxu0
        %v5328 = vadd.f32 %v5215, %v5327
        %v5329 = vpop.f32.mrf.mxu0
        %v5330 = vadd.f32 %v5217, %v5329
        %5331 = vmatprep.mubr.bf16.mxu0 %v3151
        %5332 = vmatmul.mubr.bf16.gmra.mxu0 %v3150
        %v5333 = vpop.f32.mrf.mxu0
        %v5334 = vadd.f32 %v5221, %v5333
        %v5335 = vpop.f32.mrf.mxu0
        %v5336 = vadd.f32 %v5223, %v5335
        %v5337 = vpop.f32.mrf.mxu0
        %v5338 = vadd.f32 %v5225, %v5337
        %v5339 = vpop.f32.mrf.mxu0
        %v5340 = vadd.f32 %v5227, %v5339
        %5341 = vmatprep.mubr.bf16.mxu0 %v3155
        %5342 = vmatmul.mubr.bf16.gmra.mxu0 %v3154
        %v5343 = vpop.f32.mrf.mxu0
        %v5344 = vadd.f32 %v5231, %v5343
        %v5345 = vpop.f32.mrf.mxu0
        %v5346 = vadd.f32 %v5233, %v5345
        %v5347 = vpop.f32.mrf.mxu0
        %v5348 = vadd.f32 %v5235, %v5347
        %v5349 = vpop.f32.mrf.mxu0
        %v5350 = vadd.f32 %v5237, %v5349
        %5351 = vmatprep.mubr.bf16.mxu0 %v3159
        %5352 = vmatmul.mubr.bf16.gmra.mxu0 %v3158
        %v5353 = vpop.f32.mrf.mxu0
        %v5354 = vadd.f32 %v5241, %v5353
        %v5355 = vpop.f32.mrf.mxu0
        %v5356 = vadd.f32 %v5243, %v5355
        %v5357 = vpop.f32.mrf.mxu0
        %v5358 = vadd.f32 %v5245, %v5357
        %v5359 = vpop.f32.mrf.mxu0
        %v5360 = vadd.f32 %v5247, %v5359
        %5361 = vmatprep.mubr.bf16.mxu0 %v3163
        %5362 = vmatmul.mubr.bf16.gmra.mxu0 %v3162
        %v5363 = vpop.f32.mrf.mxu0
        %v5364 = vadd.f32 %v5251, %v5363
        %v5365 = vpop.f32.mrf.mxu0
        %v5366 = vadd.f32 %v5253, %v5365
        %v5367 = vpop.f32.mrf.mxu0
        %v5368 = vadd.f32 %v5255, %v5367
        %v5369 = vpop.f32.mrf.mxu0
        %v5370 = vadd.f32 %v5257, %v5369
        %5371 = vmatprep.mubr.bf16.mxu0 %v3167
        %5372 = vmatmul.mubr.bf16.gmra.mxu0 %v3166
        %v5373 = vpop.f32.mrf.mxu0
        %v5374 = vadd.f32 %v5261, %v5373
        %v5375 = vpop.f32.mrf.mxu0
        %v5376 = vadd.f32 %v5263, %v5375
        %v5377 = vpop.f32.mrf.mxu0
        %v5378 = vadd.f32 %v5265, %v5377
        %v5379 = vpop.f32.mrf.mxu0
        %v5380 = vadd.f32 %v5267, %v5379
        %5381 = vdwg.mxu0
        %5382 = vmatprep.subr.bf16.mxu0 %v4255
        %5383 = vmatpush1.bf16.msra.mxu0 %v4254
        %5384 = vmatprep.subr.bf16.mxu0 %v4247
        %5385 = vmatpush1.bf16.msra.mxu0 %v4246
        %5386 = vmatprep.subr.bf16.mxu0 %v4239
        %5387 = vmatpush1.bf16.msra.mxu0 %v4238
        %5388 = vmatprep.subr.bf16.mxu0 %v4231
        %5389 = vmatpush1.bf16.msra.mxu0 %v4230
        %5390 = vmatprep.subr.bf16.mxu0 %v4223
        %5391 = vmatpush1.bf16.msra.mxu0 %v4222
        %5392 = vmatprep.subr.bf16.mxu0 %v4215
        %5393 = vmatpush1.bf16.msra.mxu0 %v4214
        %5394 = vmatprep.subr.bf16.mxu0 %v4207
        %5395 = vmatpush1.bf16.msra.mxu0 %v4206
        %5396 = vmatprep.subr.bf16.mxu0 %v4199
        %5397 = vmatpush1.bf16.msra.mxu0 %v4198
        %5398 = vmatprep.subr.bf16.mxu0 %v4319
        %5399 = vmatpush2.bf16.msra.mxu0 %v4318
        %5400 = vmatprep.subr.bf16.mxu0 %v4311
        %5401 = vmatpush2.bf16.msra.mxu0 %v4310
        %5402 = vmatprep.subr.bf16.mxu0 %v4303
        %5403 = vmatpush2.bf16.msra.mxu0 %v4302
        %5404 = vmatprep.subr.bf16.mxu0 %v4295
        %5405 = vmatpush2.bf16.msra.mxu0 %v4294
        %5406 = vmatprep.subr.bf16.mxu0 %v4287
        %5407 = vmatpush2.bf16.msra.mxu0 %v4286
        %5408 = vmatprep.subr.bf16.mxu0 %v4279
        %5409 = vmatpush2.bf16.msra.mxu0 %v4278
        %5410 = vmatprep.subr.bf16.mxu0 %v4271
        %5411 = vmatpush2.bf16.msra.mxu0 %v4270
        %5412 = vmatprep.subr.bf16.mxu0 %v4263
        %5413 = vmatpush2.bf16.msra.mxu0 %v4262
        %5414 = vmatprep.mubr.bf16.mxu0 %v3137
        %5415 = vmatmul.mubr.bf16.gmra.mxu0 %v3136
        %v5416 = vpop.f32.mrf.mxu0
        %v5417 = vadd.f32 0.0, %v5416
        %v5418 = vpop.f32.mrf.mxu0
        %v5419 = vadd.f32 0.0, %v5418
        %v5420 = vpop.f32.mrf.mxu0
        %v5421 = vadd.f32 0.0, %v5420
        %v5422 = vpop.f32.mrf.mxu0
        %v5423 = vadd.f32 0.0, %v5422
        %5424 = vmatprep.mubr.bf16.mxu0 %v3141
        %5425 = vmatmul.mubr.bf16.gmra.mxu0 %v3140
        %v5426 = vpop.f32.mrf.mxu0
        %v5427 = vadd.f32 0.0, %v5426
        %v5428 = vpop.f32.mrf.mxu0
        %v5429 = vadd.f32 0.0, %v5428
        %v5430 = vpop.f32.mrf.mxu0
        %v5431 = vadd.f32 0.0, %v5430
        %v5432 = vpop.f32.mrf.mxu0
        %v5433 = vadd.f32 0.0, %v5432
        %5434 = vmatprep.mubr.bf16.mxu0 %v3145
        %5435 = vmatmul.mubr.bf16.gmra.mxu0 %v3144
        %v5436 = vpop.f32.mrf.mxu0
        %v5437 = vadd.f32 0.0, %v5436
        %v5438 = vpop.f32.mrf.mxu0
        %v5439 = vadd.f32 0.0, %v5438
        %v5440 = vpop.f32.mrf.mxu0
        %v5441 = vadd.f32 0.0, %v5440
        %v5442 = vpop.f32.mrf.mxu0
        %v5443 = vadd.f32 0.0, %v5442
        %5444 = vmatprep.mubr.bf16.mxu0 %v3149
        %5445 = vmatmul.mubr.bf16.gmra.mxu0 %v3148
        %v5446 = vpop.f32.mrf.mxu0
        %v5447 = vadd.f32 0.0, %v5446
        %v5448 = vpop.f32.mrf.mxu0
        %v5449 = vadd.f32 0.0, %v5448
        %v5450 = vpop.f32.mrf.mxu0
        %v5451 = vadd.f32 0.0, %v5450
        %v5452 = vpop.f32.mrf.mxu0
        %v5453 = vadd.f32 0.0, %v5452
        %5454 = vmatprep.mubr.bf16.mxu0 %v3153
        %5455 = vmatmul.mubr.bf16.gmra.mxu0 %v3152
        %v5456 = vpop.f32.mrf.mxu0
        %v5457 = vadd.f32 0.0, %v5456
        %v5458 = vpop.f32.mrf.mxu0
        %v5459 = vadd.f32 0.0, %v5458
        %v5460 = vpop.f32.mrf.mxu0
        %v5461 = vadd.f32 0.0, %v5460
        %v5462 = vpop.f32.mrf.mxu0
        %v5463 = vadd.f32 0.0, %v5462
        %5464 = vmatprep.mubr.bf16.mxu0 %v3157
        %5465 = vmatmul.mubr.bf16.gmra.mxu0 %v3156
        %v5466 = vpop.f32.mrf.mxu0
        %v5467 = vadd.f32 0.0, %v5466
        %v5468 = vpop.f32.mrf.mxu0
        %v5469 = vadd.f32 0.0, %v5468
        %v5470 = vpop.f32.mrf.mxu0
        %v5471 = vadd.f32 0.0, %v5470
        %v5472 = vpop.f32.mrf.mxu0
        %v5473 = vadd.f32 0.0, %v5472
        %5474 = vmatprep.mubr.bf16.mxu0 %v3161
        %5475 = vmatmul.mubr.bf16.gmra.mxu0 %v3160
        %v5476 = vpop.f32.mrf.mxu0
        %v5477 = vadd.f32 0.0, %v5476
        %v5478 = vpop.f32.mrf.mxu0
        %v5479 = vadd.f32 0.0, %v5478
        %v5480 = vpop.f32.mrf.mxu0
        %v5481 = vadd.f32 0.0, %v5480
        %v5482 = vpop.f32.mrf.mxu0
        %v5483 = vadd.f32 0.0, %v5482
        %5484 = vmatprep.mubr.bf16.mxu0 %v3165
        %5485 = vmatmul.mubr.bf16.gmra.mxu0 %v3164
        %v5486 = vpop.f32.mrf.mxu0
        %v5487 = vadd.f32 0.0, %v5486
        %v5488 = vpop.f32.mrf.mxu0
        %v5489 = vadd.f32 0.0, %v5488
        %v5490 = vpop.f32.mrf.mxu0
        %v5491 = vadd.f32 0.0, %v5490
        %v5492 = vpop.f32.mrf.mxu0
        %v5493 = vadd.f32 0.0, %v5492
        %5494 = vdwg.mxu0
        %5495 = vmatprep.subr.bf16.mxu0 %v4383
        %5496 = vmatpush1.bf16.msra.mxu0 %v4382
        %5497 = vmatprep.subr.bf16.mxu0 %v4375
        %5498 = vmatpush1.bf16.msra.mxu0 %v4374
        %5499 = vmatprep.subr.bf16.mxu0 %v4367
        %5500 = vmatpush1.bf16.msra.mxu0 %v4366
        %5501 = vmatprep.subr.bf16.mxu0 %v4359
        %5502 = vmatpush1.bf16.msra.mxu0 %v4358
        %5503 = vmatprep.subr.bf16.mxu0 %v4351
        %5504 = vmatpush1.bf16.msra.mxu0 %v4350
        %5505 = vmatprep.subr.bf16.mxu0 %v4343
        %5506 = vmatpush1.bf16.msra.mxu0 %v4342
        %5507 = vmatprep.subr.bf16.mxu0 %v4335
        %5508 = vmatpush1.bf16.msra.mxu0 %v4334
        %5509 = vmatprep.subr.bf16.mxu0 %v4327
        %5510 = vmatpush1.bf16.msra.mxu0 %v4326
        %5511 = vmatprep.subr.bf16.mxu0 %v4447
        %5512 = vmatpush2.bf16.msra.mxu0 %v4446
        %5513 = vmatprep.subr.bf16.mxu0 %v4439
        %5514 = vmatpush2.bf16.msra.mxu0 %v4438
        %5515 = vmatprep.subr.bf16.mxu0 %v4431
        %5516 = vmatpush2.bf16.msra.mxu0 %v4430
        %5517 = vmatprep.subr.bf16.mxu0 %v4423
        %5518 = vmatpush2.bf16.msra.mxu0 %v4422
        %5519 = vmatprep.subr.bf16.mxu0 %v4415
        %5520 = vmatpush2.bf16.msra.mxu0 %v4414
        %5521 = vmatprep.subr.bf16.mxu0 %v4407
        %5522 = vmatpush2.bf16.msra.mxu0 %v4406
        %5523 = vmatprep.subr.bf16.mxu0 %v4399
        %5524 = vmatpush2.bf16.msra.mxu0 %v4398
        %5525 = vmatprep.subr.bf16.mxu0 %v4391
        %5526 = vmatpush2.bf16.msra.mxu0 %v4390
        %5527 = vmatprep.mubr.bf16.mxu0 %v3139
        %5528 = vmatmul.mubr.bf16.gmra.mxu0 %v3138
        %v5529 = vpop.f32.mrf.mxu0
        %v5530 = vadd.f32 %v5417, %v5529
        %v5531 = vpop.f32.mrf.mxu0
        %v5532 = vadd.f32 %v5419, %v5531
        %v5533 = vpop.f32.mrf.mxu0
        %v5534 = vadd.f32 %v5421, %v5533
        %v5535 = vpop.f32.mrf.mxu0
        %v5536 = vadd.f32 %v5423, %v5535
        %5537 = vmatprep.mubr.bf16.mxu0 %v3143
        %5538 = vmatmul.mubr.bf16.gmra.mxu0 %v3142
        %v5539 = vpop.f32.mrf.mxu0
        %v5540 = vadd.f32 %v5427, %v5539
        %v5541 = vpop.f32.mrf.mxu0
        %v5542 = vadd.f32 %v5429, %v5541
        %v5543 = vpop.f32.mrf.mxu0
        %v5544 = vadd.f32 %v5431, %v5543
        %v5545 = vpop.f32.mrf.mxu0
        %v5546 = vadd.f32 %v5433, %v5545
        %5547 = vmatprep.mubr.bf16.mxu0 %v3147
        %5548 = vmatmul.mubr.bf16.gmra.mxu0 %v3146
        %v5549 = vpop.f32.mrf.mxu0
        %v5550 = vadd.f32 %v5437, %v5549
        %v5551 = vpop.f32.mrf.mxu0
        %v5552 = vadd.f32 %v5439, %v5551
        %v5553 = vpop.f32.mrf.mxu0
        %v5554 = vadd.f32 %v5441, %v5553
        %v5555 = vpop.f32.mrf.mxu0
        %v5556 = vadd.f32 %v5443, %v5555
        %5557 = vmatprep.mubr.bf16.mxu0 %v3151
        %5558 = vmatmul.mubr.bf16.gmra.mxu0 %v3150
        %v5559 = vpop.f32.mrf.mxu0
        %v5560 = vadd.f32 %v5447, %v5559
        %v5561 = vpop.f32.mrf.mxu0
        %v5562 = vadd.f32 %v5449, %v5561
        %v5563 = vpop.f32.mrf.mxu0
        %v5564 = vadd.f32 %v5451, %v5563
        %v5565 = vpop.f32.mrf.mxu0
        %v5566 = vadd.f32 %v5453, %v5565
        %5567 = vmatprep.mubr.bf16.mxu0 %v3155
        %5568 = vmatmul.mubr.bf16.gmra.mxu0 %v3154
        %v5569 = vpop.f32.mrf.mxu0
        %v5570 = vadd.f32 %v5457, %v5569
        %v5571 = vpop.f32.mrf.mxu0
        %v5572 = vadd.f32 %v5459, %v5571
        %v5573 = vpop.f32.mrf.mxu0
        %v5574 = vadd.f32 %v5461, %v5573
        %v5575 = vpop.f32.mrf.mxu0
        %v5576 = vadd.f32 %v5463, %v5575
        %5577 = vmatprep.mubr.bf16.mxu0 %v3159
        %5578 = vmatmul.mubr.bf16.gmra.mxu0 %v3158
        %v5579 = vpop.f32.mrf.mxu0
        %v5580 = vadd.f32 %v5467, %v5579
        %v5581 = vpop.f32.mrf.mxu0
        %v5582 = vadd.f32 %v5469, %v5581
        %v5583 = vpop.f32.mrf.mxu0
        %v5584 = vadd.f32 %v5471, %v5583
        %v5585 = vpop.f32.mrf.mxu0
        %v5586 = vadd.f32 %v5473, %v5585
        %5587 = vmatprep.mubr.bf16.mxu0 %v3163
        %5588 = vmatmul.mubr.bf16.gmra.mxu0 %v3162
        %v5589 = vpop.f32.mrf.mxu0
        %v5590 = vadd.f32 %v5477, %v5589
        %v5591 = vpop.f32.mrf.mxu0
        %v5592 = vadd.f32 %v5479, %v5591
        %v5593 = vpop.f32.mrf.mxu0
        %v5594 = vadd.f32 %v5481, %v5593
        %v5595 = vpop.f32.mrf.mxu0
        %v5596 = vadd.f32 %v5483, %v5595
        %5597 = vmatprep.mubr.bf16.mxu0 %v3167
        %5598 = vmatmul.mubr.bf16.gmra.mxu0 %v3166
        %v5599 = vpop.f32.mrf.mxu0
        %v5600 = vadd.f32 %v5487, %v5599
        %v5601 = vpop.f32.mrf.mxu0
        %v5602 = vadd.f32 %v5489, %v5601
        %v5603 = vpop.f32.mrf.mxu0
        %v5604 = vadd.f32 %v5491, %v5603
        %v5605 = vpop.f32.mrf.mxu0
        %v5606 = vadd.f32 %v5493, %v5605
        %5607 = vdwg.mxu0
        %v5608 = vadd.f32 %v4852, %v4856
        %v5609 = vadd.f32 %v5608, %v4862
        %v5610 = vadd.f32 %v5609, %v4866
        %v5611 = vadd.f32 %v5610, %v4872
        %v5612 = vadd.f32 %v5611, %v4876
        %v5613 = vadd.f32 %v5612, %v4882
        %v5614 = vadd.f32 %v5613, %v4886
        %v5615 = vadd.f32 %v5614, %v4892
        %v5616 = vadd.f32 %v5615, %v4896
        %v5617 = vadd.f32 %v5616, %v4902
        %v5618 = vadd.f32 %v5617, %v4906
        %v5619 = vadd.f32 %v5618, %v4912
        %v5620 = vadd.f32 %v5619, %v4916
        %v5621 = vadd.f32 %v5620, %v4922
        %v5622 = vadd.f32 %v5621, %v4926
        %v5623 = vrot.slane %v5622, 4
        %v5624 = vadd.f32 %v5622, %v5623
        %v5625 = vrot.slane %v5624, 2
        %v5626 = vadd.f32 %v5624, %v5625
        %v5627 = vrot.slane %v5626, 1
        %v5628 = vadd.f32 %v5626, %v5627
        %v5629 = vadd.f32 %v4854, %v4858
        %v5630 = vadd.f32 %v5629, %v4864
        %v5631 = vadd.f32 %v5630, %v4868
        %v5632 = vadd.f32 %v5631, %v4874
        %v5633 = vadd.f32 %v5632, %v4878
        %v5634 = vadd.f32 %v5633, %v4884
        %v5635 = vadd.f32 %v5634, %v4888
        %v5636 = vadd.f32 %v5635, %v4894
        %v5637 = vadd.f32 %v5636, %v4898
        %v5638 = vadd.f32 %v5637, %v4904
        %v5639 = vadd.f32 %v5638, %v4908
        %v5640 = vadd.f32 %v5639, %v4914
        %v5641 = vadd.f32 %v5640, %v4918
        %v5642 = vadd.f32 %v5641, %v4924
        %v5643 = vadd.f32 %v5642, %v4928
        %v5644 = vrot.slane %v5643, 4
        %v5645 = vadd.f32 %v5643, %v5644
        %v5646 = vrot.slane %v5645, 2
        %v5647 = vadd.f32 %v5645, %v5646
        %v5648 = vrot.slane %v5647, 1
        %v5649 = vadd.f32 %v5647, %v5648
        %v5650 = vadd.f32 %v5078, %v5082
        %v5651 = vadd.f32 %v5650, %v5088
        %v5652 = vadd.f32 %v5651, %v5092
        %v5653 = vadd.f32 %v5652, %v5098
        %v5654 = vadd.f32 %v5653, %v5102
        %v5655 = vadd.f32 %v5654, %v5108
        %v5656 = vadd.f32 %v5655, %v5112
        %v5657 = vadd.f32 %v5656, %v5118
        %v5658 = vadd.f32 %v5657, %v5122
        %v5659 = vadd.f32 %v5658, %v5128
        %v5660 = vadd.f32 %v5659, %v5132
        %v5661 = vadd.f32 %v5660, %v5138
        %v5662 = vadd.f32 %v5661, %v5142
        %v5663 = vadd.f32 %v5662, %v5148
        %v5664 = vadd.f32 %v5663, %v5152
        %v5665 = vrot.slane %v5664, 4
        %v5666 = vadd.f32 %v5664, %v5665
        %v5667 = vrot.slane %v5666, 2
        %v5668 = vadd.f32 %v5666, %v5667
        %v5669 = vrot.slane %v5668, 1
        %v5670 = vadd.f32 %v5668, %v5669
        %v5671 = vadd.f32 %v5080, %v5084
        %v5672 = vadd.f32 %v5671, %v5090
        %v5673 = vadd.f32 %v5672, %v5094
        %v5674 = vadd.f32 %v5673, %v5100
        %v5675 = vadd.f32 %v5674, %v5104
        %v5676 = vadd.f32 %v5675, %v5110
        %v5677 = vadd.f32 %v5676, %v5114
        %v5678 = vadd.f32 %v5677, %v5120
        %v5679 = vadd.f32 %v5678, %v5124
        %v5680 = vadd.f32 %v5679, %v5130
        %v5681 = vadd.f32 %v5680, %v5134
        %v5682 = vadd.f32 %v5681, %v5140
        %v5683 = vadd.f32 %v5682, %v5144
        %v5684 = vadd.f32 %v5683, %v5150
        %v5685 = vadd.f32 %v5684, %v5154
        %v5686 = vrot.slane %v5685, 4
        %v5687 = vadd.f32 %v5685, %v5686
        %v5688 = vrot.slane %v5687, 2
        %v5689 = vadd.f32 %v5687, %v5688
        %v5690 = vrot.slane %v5689, 1
        %v5691 = vadd.f32 %v5689, %v5690
        %v5692 = vadd.f32 %v5304, %v5308
        %v5693 = vadd.f32 %v5692, %v5314
        %v5694 = vadd.f32 %v5693, %v5318
        %v5695 = vadd.f32 %v5694, %v5324
        %v5696 = vadd.f32 %v5695, %v5328
        %v5697 = vadd.f32 %v5696, %v5334
        %v5698 = vadd.f32 %v5697, %v5338
        %v5699 = vadd.f32 %v5698, %v5344
        %v5700 = vadd.f32 %v5699, %v5348
        %v5701 = vadd.f32 %v5700, %v5354
        %v5702 = vadd.f32 %v5701, %v5358
        %v5703 = vadd.f32 %v5702, %v5364
        %v5704 = vadd.f32 %v5703, %v5368
        %v5705 = vadd.f32 %v5704, %v5374
        %v5706 = vadd.f32 %v5705, %v5378
        %v5707 = vrot.slane %v5706, 4
        %v5708 = vadd.f32 %v5706, %v5707
        %v5709 = vrot.slane %v5708, 2
        %v5710 = vadd.f32 %v5708, %v5709
        %v5711 = vrot.slane %v5710, 1
        %v5712 = vadd.f32 %v5710, %v5711
        %v5713 = vadd.f32 %v5306, %v5310
        %v5714 = vadd.f32 %v5713, %v5316
        %v5715 = vadd.f32 %v5714, %v5320
        %v5716 = vadd.f32 %v5715, %v5326
        %v5717 = vadd.f32 %v5716, %v5330
        %v5718 = vadd.f32 %v5717, %v5336
        %v5719 = vadd.f32 %v5718, %v5340
        %v5720 = vadd.f32 %v5719, %v5346
        %v5721 = vadd.f32 %v5720, %v5350
        %v5722 = vadd.f32 %v5721, %v5356
        %v5723 = vadd.f32 %v5722, %v5360
        %v5724 = vadd.f32 %v5723, %v5366
        %v5725 = vadd.f32 %v5724, %v5370
        %v5726 = vadd.f32 %v5725, %v5376
        %v5727 = vadd.f32 %v5726, %v5380
        %v5728 = vrot.slane %v5727, 4
        %v5729 = vadd.f32 %v5727, %v5728
        %v5730 = vrot.slane %v5729, 2
        %v5731 = vadd.f32 %v5729, %v5730
        %v5732 = vrot.slane %v5731, 1
        %v5733 = vadd.f32 %v5731, %v5732
        %v5734 = vadd.f32 %v5530, %v5534
        %v5735 = vadd.f32 %v5734, %v5540
        %v5736 = vadd.f32 %v5735, %v5544
        %v5737 = vadd.f32 %v5736, %v5550
        %v5738 = vadd.f32 %v5737, %v5554
        %v5739 = vadd.f32 %v5738, %v5560
        %v5740 = vadd.f32 %v5739, %v5564
        %v5741 = vadd.f32 %v5740, %v5570
        %v5742 = vadd.f32 %v5741, %v5574
        %v5743 = vadd.f32 %v5742, %v5580
        %v5744 = vadd.f32 %v5743, %v5584
        %v5745 = vadd.f32 %v5744, %v5590
        %v5746 = vadd.f32 %v5745, %v5594
        %v5747 = vadd.f32 %v5746, %v5600
        %v5748 = vadd.f32 %v5747, %v5604
        %v5749 = vrot.slane %v5748, 4
        %v5750 = vadd.f32 %v5748, %v5749
        %v5751 = vrot.slane %v5750, 2
        %v5752 = vadd.f32 %v5750, %v5751
        %v5753 = vrot.slane %v5752, 1
        %v5754 = vadd.f32 %v5752, %v5753
        %v5755 = vadd.f32 %v5532, %v5536
        %v5756 = vadd.f32 %v5755, %v5542
        %v5757 = vadd.f32 %v5756, %v5546
        %v5758 = vadd.f32 %v5757, %v5552
        %v5759 = vadd.f32 %v5758, %v5556
        %v5760 = vadd.f32 %v5759, %v5562
        %v5761 = vadd.f32 %v5760, %v5566
        %v5762 = vadd.f32 %v5761, %v5572
        %v5763 = vadd.f32 %v5762, %v5576
        %v5764 = vadd.f32 %v5763, %v5582
        %v5765 = vadd.f32 %v5764, %v5586
        %v5766 = vadd.f32 %v5765, %v5592
        %v5767 = vadd.f32 %v5766, %v5596
        %v5768 = vadd.f32 %v5767, %v5602
        %v5769 = vadd.f32 %v5768, %v5606
        %v5770 = vrot.slane %v5769, 4
        %v5771 = vadd.f32 %v5769, %v5770
        %v5772 = vrot.slane %v5771, 2
        %v5773 = vadd.f32 %v5771, %v5772
        %v5774 = vrot.slane %v5773, 1
        %v5775 = vadd.f32 %v5773, %v5774
        %v5776 = vmul.f32 %v5628, %v1187
        %v5777 = vmul.f32 %v5649, %v1187
        %v5778 = vmul.f32 %v5670, %v1187
        %v5779 = vmul.f32 %v5691, %v1187
        %v5780 = vmul.f32 %v5712, %v1187
        %v5781 = vmul.f32 %v5733, %v1187
        %v5782 = vmul.f32 %v5754, %v1187
        %v5783 = vmul.f32 %v5775, %v1187
        %v5784 = vsub.f32 %v4852, %v5776
        %v5785 = vsub.f32 %v4854, %v5777
        %v5786 = vsub.f32 %v5078, %v5778
        %v5787 = vsub.f32 %v5080, %v5779
        %v5788 = vsub.f32 %v5304, %v5780
        %v5789 = vsub.f32 %v5306, %v5781
        %v5790 = vsub.f32 %v5530, %v5782
        %v5791 = vsub.f32 %v5532, %v5783
        %v5792 = vsub.f32 %v4856, %v5776
        %v5793 = vsub.f32 %v4858, %v5777
        %v5794 = vsub.f32 %v5082, %v5778
        %v5795 = vsub.f32 %v5084, %v5779
        %v5796 = vsub.f32 %v5308, %v5780
        %v5797 = vsub.f32 %v5310, %v5781
        %v5798 = vsub.f32 %v5534, %v5782
        %v5799 = vsub.f32 %v5536, %v5783
        %v5800 = vsub.f32 %v4862, %v5776
        %v5801 = vsub.f32 %v4864, %v5777
        %v5802 = vsub.f32 %v5088, %v5778
        %v5803 = vsub.f32 %v5090, %v5779
        %v5804 = vsub.f32 %v5314, %v5780
        %v5805 = vsub.f32 %v5316, %v5781
        %v5806 = vsub.f32 %v5540, %v5782
        %v5807 = vsub.f32 %v5542, %v5783
        %v5808 = vsub.f32 %v4866, %v5776
        %v5809 = vsub.f32 %v4868, %v5777
        %v5810 = vsub.f32 %v5092, %v5778
        %v5811 = vsub.f32 %v5094, %v5779
        %v5812 = vsub.f32 %v5318, %v5780
        %v5813 = vsub.f32 %v5320, %v5781
        %v5814 = vsub.f32 %v5544, %v5782
        %v5815 = vsub.f32 %v5546, %v5783
        %v5816 = vsub.f32 %v4872, %v5776
        %v5817 = vsub.f32 %v4874, %v5777
        %v5818 = vsub.f32 %v5098, %v5778
        %v5819 = vsub.f32 %v5100, %v5779
        %v5820 = vsub.f32 %v5324, %v5780
        %v5821 = vsub.f32 %v5326, %v5781
        %v5822 = vsub.f32 %v5550, %v5782
        %v5823 = vsub.f32 %v5552, %v5783
        %v5824 = vsub.f32 %v4876, %v5776
        %v5825 = vsub.f32 %v4878, %v5777
        %v5826 = vsub.f32 %v5102, %v5778
        %v5827 = vsub.f32 %v5104, %v5779
        %v5828 = vsub.f32 %v5328, %v5780
        %v5829 = vsub.f32 %v5330, %v5781
        %v5830 = vsub.f32 %v5554, %v5782
        %v5831 = vsub.f32 %v5556, %v5783
        %v5832 = vsub.f32 %v4882, %v5776
        %v5833 = vsub.f32 %v4884, %v5777
        %v5834 = vsub.f32 %v5108, %v5778
        %v5835 = vsub.f32 %v5110, %v5779
        %v5836 = vsub.f32 %v5334, %v5780
        %v5837 = vsub.f32 %v5336, %v5781
        %v5838 = vsub.f32 %v5560, %v5782
        %v5839 = vsub.f32 %v5562, %v5783
        %v5840 = vsub.f32 %v4886, %v5776
        %v5841 = vsub.f32 %v4888, %v5777
        %v5842 = vsub.f32 %v5112, %v5778
        %v5843 = vsub.f32 %v5114, %v5779
        %v5844 = vsub.f32 %v5338, %v5780
        %v5845 = vsub.f32 %v5340, %v5781
        %v5846 = vsub.f32 %v5564, %v5782
        %v5847 = vsub.f32 %v5566, %v5783
        %v5848 = vsub.f32 %v4892, %v5776
        %v5849 = vsub.f32 %v4894, %v5777
        %v5850 = vsub.f32 %v5118, %v5778
        %v5851 = vsub.f32 %v5120, %v5779
        %v5852 = vsub.f32 %v5344, %v5780
        %v5853 = vsub.f32 %v5346, %v5781
        %v5854 = vsub.f32 %v5570, %v5782
        %v5855 = vsub.f32 %v5572, %v5783
        %v5856 = vsub.f32 %v4896, %v5776
        %v5857 = vsub.f32 %v4898, %v5777
        %v5858 = vsub.f32 %v5122, %v5778
        %v5859 = vsub.f32 %v5124, %v5779
        %v5860 = vsub.f32 %v5348, %v5780
        %v5861 = vsub.f32 %v5350, %v5781
        %v5862 = vsub.f32 %v5574, %v5782
        %v5863 = vsub.f32 %v5576, %v5783
        %v5864 = vsub.f32 %v4902, %v5776
        %v5865 = vsub.f32 %v4904, %v5777
        %v5866 = vsub.f32 %v5128, %v5778
        %v5867 = vsub.f32 %v5130, %v5779
        %v5868 = vsub.f32 %v5354, %v5780
        %v5869 = vsub.f32 %v5356, %v5781
        %v5870 = vsub.f32 %v5580, %v5782
        %v5871 = vsub.f32 %v5582, %v5783
        %v5872 = vsub.f32 %v4906, %v5776
        %v5873 = vsub.f32 %v4908, %v5777
        %v5874 = vsub.f32 %v5132, %v5778
        %v5875 = vsub.f32 %v5134, %v5779
        %v5876 = vsub.f32 %v5358, %v5780
        %v5877 = vsub.f32 %v5360, %v5781
        %v5878 = vsub.f32 %v5584, %v5782
        %v5879 = vsub.f32 %v5586, %v5783
        %v5880 = vsub.f32 %v4912, %v5776
        %v5881 = vsub.f32 %v4914, %v5777
        %v5882 = vsub.f32 %v5138, %v5778
        %v5883 = vsub.f32 %v5140, %v5779
        %v5884 = vsub.f32 %v5364, %v5780
        %v5885 = vsub.f32 %v5366, %v5781
        %v5886 = vsub.f32 %v5590, %v5782
        %v5887 = vsub.f32 %v5592, %v5783
        %v5888 = vsub.f32 %v4916, %v5776
        %v5889 = vsub.f32 %v4918, %v5777
        %v5890 = vsub.f32 %v5142, %v5778
        %v5891 = vsub.f32 %v5144, %v5779
        %v5892 = vsub.f32 %v5368, %v5780
        %v5893 = vsub.f32 %v5370, %v5781
        %v5894 = vsub.f32 %v5594, %v5782
        %v5895 = vsub.f32 %v5596, %v5783
        %v5896 = vsub.f32 %v4922, %v5776
        %v5897 = vsub.f32 %v4924, %v5777
        %v5898 = vsub.f32 %v5148, %v5778
        %v5899 = vsub.f32 %v5150, %v5779
        %v5900 = vsub.f32 %v5374, %v5780
        %v5901 = vsub.f32 %v5376, %v5781
        %v5902 = vsub.f32 %v5600, %v5782
        %v5903 = vsub.f32 %v5602, %v5783
        %v5904 = vsub.f32 %v4926, %v5776
        %v5905 = vsub.f32 %v4928, %v5777
        %v5906 = vsub.f32 %v5152, %v5778
        %v5907 = vsub.f32 %v5154, %v5779
        %v5908 = vsub.f32 %v5378, %v5780
        %v5909 = vsub.f32 %v5380, %v5781
        %v5910 = vsub.f32 %v5604, %v5782
        %v5911 = vsub.f32 %v5606, %v5783
        %v5912 = vmul.f32 %v5784, %v5784
        %v5913 = vmul.f32 %v5785, %v5785
        %v5914 = vmul.f32 %v5786, %v5786
        %v5915 = vmul.f32 %v5787, %v5787
        %v5916 = vmul.f32 %v5788, %v5788
        %v5917 = vmul.f32 %v5789, %v5789
        %v5918 = vmul.f32 %v5790, %v5790
        %v5919 = vmul.f32 %v5791, %v5791
        %v5920 = vmul.f32 %v5792, %v5792
        %v5921 = vmul.f32 %v5793, %v5793
        %v5922 = vmul.f32 %v5794, %v5794
        %v5923 = vmul.f32 %v5795, %v5795
        %v5924 = vmul.f32 %v5796, %v5796
        %v5925 = vmul.f32 %v5797, %v5797
        %v5926 = vmul.f32 %v5798, %v5798
        %v5927 = vmul.f32 %v5799, %v5799
        %v5928 = vmul.f32 %v5800, %v5800
        %v5929 = vmul.f32 %v5801, %v5801
        %v5930 = vmul.f32 %v5802, %v5802
        %v5931 = vmul.f32 %v5803, %v5803
        %v5932 = vmul.f32 %v5804, %v5804
        %v5933 = vmul.f32 %v5805, %v5805
        %v5934 = vmul.f32 %v5806, %v5806
        %v5935 = vmul.f32 %v5807, %v5807
        %v5936 = vmul.f32 %v5808, %v5808
        %v5937 = vmul.f32 %v5809, %v5809
        %v5938 = vmul.f32 %v5810, %v5810
        %v5939 = vmul.f32 %v5811, %v5811
        %v5940 = vmul.f32 %v5812, %v5812
        %v5941 = vmul.f32 %v5813, %v5813
        %v5942 = vmul.f32 %v5814, %v5814
        %v5943 = vmul.f32 %v5815, %v5815
        %v5944 = vmul.f32 %v5816, %v5816
        %v5945 = vmul.f32 %v5817, %v5817
        %v5946 = vmul.f32 %v5818, %v5818
        %v5947 = vmul.f32 %v5819, %v5819
        %v5948 = vmul.f32 %v5820, %v5820
        %v5949 = vmul.f32 %v5821, %v5821
        %v5950 = vmul.f32 %v5822, %v5822
        %v5951 = vmul.f32 %v5823, %v5823
        %v5952 = vmul.f32 %v5824, %v5824
        %v5953 = vmul.f32 %v5825, %v5825
        %v5954 = vmul.f32 %v5826, %v5826
        %v5955 = vmul.f32 %v5827, %v5827
        %v5956 = vmul.f32 %v5828, %v5828
        %v5957 = vmul.f32 %v5829, %v5829
        %v5958 = vmul.f32 %v5830, %v5830
        %v5959 = vmul.f32 %v5831, %v5831
        %v5960 = vmul.f32 %v5832, %v5832
        %v5961 = vmul.f32 %v5833, %v5833
        %v5962 = vmul.f32 %v5834, %v5834
        %v5963 = vmul.f32 %v5835, %v5835
        %v5964 = vmul.f32 %v5836, %v5836
        %v5965 = vmul.f32 %v5837, %v5837
        %v5966 = vmul.f32 %v5838, %v5838
        %v5967 = vmul.f32 %v5839, %v5839
        %v5968 = vmul.f32 %v5840, %v5840
        %v5969 = vmul.f32 %v5841, %v5841
        %v5970 = vmul.f32 %v5842, %v5842
        %v5971 = vmul.f32 %v5843, %v5843
        %v5972 = vmul.f32 %v5844, %v5844
        %v5973 = vmul.f32 %v5845, %v5845
        %v5974 = vmul.f32 %v5846, %v5846
        %v5975 = vmul.f32 %v5847, %v5847
        %v5976 = vmul.f32 %v5848, %v5848
        %v5977 = vmul.f32 %v5849, %v5849
        %v5978 = vmul.f32 %v5850, %v5850
        %v5979 = vmul.f32 %v5851, %v5851
        %v5980 = vmul.f32 %v5852, %v5852
        %v5981 = vmul.f32 %v5853, %v5853
        %v5982 = vmul.f32 %v5854, %v5854
        %v5983 = vmul.f32 %v5855, %v5855
        %v5984 = vmul.f32 %v5856, %v5856
        %v5985 = vmul.f32 %v5857, %v5857
        %v5986 = vmul.f32 %v5858, %v5858
        %v5987 = vmul.f32 %v5859, %v5859
        %v5988 = vmul.f32 %v5860, %v5860
        %v5989 = vmul.f32 %v5861, %v5861
        %v5990 = vmul.f32 %v5862, %v5862
        %v5991 = vmul.f32 %v5863, %v5863
        %v5992 = vmul.f32 %v5864, %v5864
        %v5993 = vmul.f32 %v5865, %v5865
        %v5994 = vmul.f32 %v5866, %v5866
        %v5995 = vmul.f32 %v5867, %v5867
        %v5996 = vmul.f32 %v5868, %v5868
        %v5997 = vmul.f32 %v5869, %v5869
        %v5998 = vmul.f32 %v5870, %v5870
        %v5999 = vmul.f32 %v5871, %v5871
        %v6000 = vmul.f32 %v5872, %v5872
        %v6001 = vmul.f32 %v5873, %v5873
        %v6002 = vmul.f32 %v5874, %v5874
        %v6003 = vmul.f32 %v5875, %v5875
        %v6004 = vmul.f32 %v5876, %v5876
        %v6005 = vmul.f32 %v5877, %v5877
        %v6006 = vmul.f32 %v5878, %v5878
        %v6007 = vmul.f32 %v5879, %v5879
        %v6008 = vmul.f32 %v5880, %v5880
        %v6009 = vmul.f32 %v5881, %v5881
        %v6010 = vmul.f32 %v5882, %v5882
        %v6011 = vmul.f32 %v5883, %v5883
        %v6012 = vmul.f32 %v5884, %v5884
        %v6013 = vmul.f32 %v5885, %v5885
        %v6014 = vmul.f32 %v5886, %v5886
        %v6015 = vmul.f32 %v5887, %v5887
        %v6016 = vmul.f32 %v5888, %v5888
        %v6017 = vmul.f32 %v5889, %v5889
        %v6018 = vmul.f32 %v5890, %v5890
        %v6019 = vmul.f32 %v5891, %v5891
        %v6020 = vmul.f32 %v5892, %v5892
        %v6021 = vmul.f32 %v5893, %v5893
        %v6022 = vmul.f32 %v5894, %v5894
        %v6023 = vmul.f32 %v5895, %v5895
        %v6024 = vmul.f32 %v5896, %v5896
        %v6025 = vmul.f32 %v5897, %v5897
        %v6026 = vmul.f32 %v5898, %v5898
        %v6027 = vmul.f32 %v5899, %v5899
        %v6028 = vmul.f32 %v5900, %v5900
        %v6029 = vmul.f32 %v5901, %v5901
        %v6030 = vmul.f32 %v5902, %v5902
        %v6031 = vmul.f32 %v5903, %v5903
        %v6032 = vmul.f32 %v5904, %v5904
        %v6033 = vmul.f32 %v5905, %v5905
        %v6034 = vmul.f32 %v5906, %v5906
        %v6035 = vmul.f32 %v5907, %v5907
        %v6036 = vmul.f32 %v5908, %v5908
        %v6037 = vmul.f32 %v5909, %v5909
        %v6038 = vmul.f32 %v5910, %v5910
        %v6039 = vmul.f32 %v5911, %v5911
        %v6040 = vadd.f32 %v5912, %v5920
        %v6041 = vadd.f32 %v6040, %v5928
        %v6042 = vadd.f32 %v6041, %v5936
        %v6043 = vadd.f32 %v6042, %v5944
        %v6044 = vadd.f32 %v6043, %v5952
        %v6045 = vadd.f32 %v6044, %v5960
        %v6046 = vadd.f32 %v6045, %v5968
        %v6047 = vadd.f32 %v6046, %v5976
        %v6048 = vadd.f32 %v6047, %v5984
        %v6049 = vadd.f32 %v6048, %v5992
        %v6050 = vadd.f32 %v6049, %v6000
        %v6051 = vadd.f32 %v6050, %v6008
        %v6052 = vadd.f32 %v6051, %v6016
        %v6053 = vadd.f32 %v6052, %v6024
        %v6054 = vadd.f32 %v6053, %v6032
        %v6055 = vrot.slane %v6054, 4
        %v6056 = vadd.f32 %v6054, %v6055
        %v6057 = vrot.slane %v6056, 2
        %v6058 = vadd.f32 %v6056, %v6057
        %v6059 = vrot.slane %v6058, 1
        %v6060 = vadd.f32 %v6058, %v6059
        %v6061 = vadd.f32 %v5913, %v5921
        %v6062 = vadd.f32 %v6061, %v5929
        %v6063 = vadd.f32 %v6062, %v5937
        %v6064 = vadd.f32 %v6063, %v5945
        %v6065 = vadd.f32 %v6064, %v5953
        %v6066 = vadd.f32 %v6065, %v5961
        %v6067 = vadd.f32 %v6066, %v5969
        %v6068 = vadd.f32 %v6067, %v5977
        %v6069 = vadd.f32 %v6068, %v5985
        %v6070 = vadd.f32 %v6069, %v5993
        %v6071 = vadd.f32 %v6070, %v6001
        %v6072 = vadd.f32 %v6071, %v6009
        %v6073 = vadd.f32 %v6072, %v6017
        %v6074 = vadd.f32 %v6073, %v6025
        %v6075 = vadd.f32 %v6074, %v6033
        %v6076 = vrot.slane %v6075, 4
        %v6077 = vadd.f32 %v6075, %v6076
        %v6078 = vrot.slane %v6077, 2
        %v6079 = vadd.f32 %v6077, %v6078
        %v6080 = vrot.slane %v6079, 1
        %v6081 = vadd.f32 %v6079, %v6080
        %v6082 = vadd.f32 %v5914, %v5922
        %v6083 = vadd.f32 %v6082, %v5930
        %v6084 = vadd.f32 %v6083, %v5938
        %v6085 = vadd.f32 %v6084, %v5946
        %v6086 = vadd.f32 %v6085, %v5954
        %v6087 = vadd.f32 %v6086, %v5962
        %v6088 = vadd.f32 %v6087, %v5970
        %v6089 = vadd.f32 %v6088, %v5978
        %v6090 = vadd.f32 %v6089, %v5986
        %v6091 = vadd.f32 %v6090, %v5994
        %v6092 = vadd.f32 %v6091, %v6002
        %v6093 = vadd.f32 %v6092, %v6010
        %v6094 = vadd.f32 %v6093, %v6018
        %v6095 = vadd.f32 %v6094, %v6026
        %v6096 = vadd.f32 %v6095, %v6034
        %v6097 = vrot.slane %v6096, 4
        %v6098 = vadd.f32 %v6096, %v6097
        %v6099 = vrot.slane %v6098, 2
        %v6100 = vadd.f32 %v6098, %v6099
        %v6101 = vrot.slane %v6100, 1
        %v6102 = vadd.f32 %v6100, %v6101
        %v6103 = vadd.f32 %v5915, %v5923
        %v6104 = vadd.f32 %v6103, %v5931
        %v6105 = vadd.f32 %v6104, %v5939
        %v6106 = vadd.f32 %v6105, %v5947
        %v6107 = vadd.f32 %v6106, %v5955
        %v6108 = vadd.f32 %v6107, %v5963
        %v6109 = vadd.f32 %v6108, %v5971
        %v6110 = vadd.f32 %v6109, %v5979
        %v6111 = vadd.f32 %v6110, %v5987
        %v6112 = vadd.f32 %v6111, %v5995
        %v6113 = vadd.f32 %v6112, %v6003
        %v6114 = vadd.f32 %v6113, %v6011
        %v6115 = vadd.f32 %v6114, %v6019
        %v6116 = vadd.f32 %v6115, %v6027
        %v6117 = vadd.f32 %v6116, %v6035
        %v6118 = vrot.slane %v6117, 4
        %v6119 = vadd.f32 %v6117, %v6118
        %v6120 = vrot.slane %v6119, 2
        %v6121 = vadd.f32 %v6119, %v6120
        %v6122 = vrot.slane %v6121, 1
        %v6123 = vadd.f32 %v6121, %v6122
        %v6124 = vadd.f32 %v5916, %v5924
        %v6125 = vadd.f32 %v6124, %v5932
        %v6126 = vadd.f32 %v6125, %v5940
        %v6127 = vadd.f32 %v6126, %v5948
        %v6128 = vadd.f32 %v6127, %v5956
        %v6129 = vadd.f32 %v6128, %v5964
        %v6130 = vadd.f32 %v6129, %v5972
        %v6131 = vadd.f32 %v6130, %v5980
        %v6132 = vadd.f32 %v6131, %v5988
        %v6133 = vadd.f32 %v6132, %v5996
        %v6134 = vadd.f32 %v6133, %v6004
        %v6135 = vadd.f32 %v6134, %v6012
        %v6136 = vadd.f32 %v6135, %v6020
        %v6137 = vadd.f32 %v6136, %v6028
        %v6138 = vadd.f32 %v6137, %v6036
        %v6139 = vrot.slane %v6138, 4
        %v6140 = vadd.f32 %v6138, %v6139
        %v6141 = vrot.slane %v6140, 2
        %v6142 = vadd.f32 %v6140, %v6141
        %v6143 = vrot.slane %v6142, 1
        %v6144 = vadd.f32 %v6142, %v6143
        %v6145 = vadd.f32 %v5917, %v5925
        %v6146 = vadd.f32 %v6145, %v5933
        %v6147 = vadd.f32 %v6146, %v5941
        %v6148 = vadd.f32 %v6147, %v5949
        %v6149 = vadd.f32 %v6148, %v5957
        %v6150 = vadd.f32 %v6149, %v5965
        %v6151 = vadd.f32 %v6150, %v5973
        %v6152 = vadd.f32 %v6151, %v5981
        %v6153 = vadd.f32 %v6152, %v5989
        %v6154 = vadd.f32 %v6153, %v5997
        %v6155 = vadd.f32 %v6154, %v6005
        %v6156 = vadd.f32 %v6155, %v6013
        %v6157 = vadd.f32 %v6156, %v6021
        %v6158 = vadd.f32 %v6157, %v6029
        %v6159 = vadd.f32 %v6158, %v6037
        %v6160 = vrot.slane %v6159, 4
        %v6161 = vadd.f32 %v6159, %v6160
        %v6162 = vrot.slane %v6161, 2
        %v6163 = vadd.f32 %v6161, %v6162
        %v6164 = vrot.slane %v6163, 1
        %v6165 = vadd.f32 %v6163, %v6164
        %v6166 = vadd.f32 %v5918, %v5926
        %v6167 = vadd.f32 %v6166, %v5934
        %v6168 = vadd.f32 %v6167, %v5942
        %v6169 = vadd.f32 %v6168, %v5950
        %v6170 = vadd.f32 %v6169, %v5958
        %v6171 = vadd.f32 %v6170, %v5966
        %v6172 = vadd.f32 %v6171, %v5974
        %v6173 = vadd.f32 %v6172, %v5982
        %v6174 = vadd.f32 %v6173, %v5990
        %v6175 = vadd.f32 %v6174, %v5998
        %v6176 = vadd.f32 %v6175, %v6006
        %v6177 = vadd.f32 %v6176, %v6014
        %v6178 = vadd.f32 %v6177, %v6022
        %v6179 = vadd.f32 %v6178, %v6030
        %v6180 = vadd.f32 %v6179, %v6038
        %v6181 = vrot.slane %v6180, 4
        %v6182 = vadd.f32 %v6180, %v6181
        %v6183 = vrot.slane %v6182, 2
        %v6184 = vadd.f32 %v6182, %v6183
        %v6185 = vrot.slane %v6184, 1
        %v6186 = vadd.f32 %v6184, %v6185
        %v6187 = vadd.f32 %v5919, %v5927
        %v6188 = vadd.f32 %v6187, %v5935
        %v6189 = vadd.f32 %v6188, %v5943
        %v6190 = vadd.f32 %v6189, %v5951
        %v6191 = vadd.f32 %v6190, %v5959
        %v6192 = vadd.f32 %v6191, %v5967
        %v6193 = vadd.f32 %v6192, %v5975
        %v6194 = vadd.f32 %v6193, %v5983
        %v6195 = vadd.f32 %v6194, %v5991
        %v6196 = vadd.f32 %v6195, %v5999
        %v6197 = vadd.f32 %v6196, %v6007
        %v6198 = vadd.f32 %v6197, %v6015
        %v6199 = vadd.f32 %v6198, %v6023
        %v6200 = vadd.f32 %v6199, %v6031
        %v6201 = vadd.f32 %v6200, %v6039
        %v6202 = vrot.slane %v6201, 4
        %v6203 = vadd.f32 %v6201, %v6202
        %v6204 = vrot.slane %v6203, 2
        %v6205 = vadd.f32 %v6203, %v6204
        %v6206 = vrot.slane %v6205, 1
        %v6207 = vadd.f32 %v6205, %v6206
        %v6208 = vmul.f32 %v6060, %v1187
        %v6209 = vmul.f32 %v6081, %v1187
        %v6210 = vmul.f32 %v6102, %v1187
        %v6211 = vmul.f32 %v6123, %v1187
        %v6212 = vmul.f32 %v6144, %v1187
        %v6213 = vmul.f32 %v6165, %v1187
        %v6214 = vmul.f32 %v6186, %v1187
        %v6215 = vmul.f32 %v6207, %v1187
        %v6216 = vld [vmem:[%s13] sm:$0xff]
        %v6217 = vadd.f32 %v6208, 0.8
        %v6218 = vadd.f32 %v6209, 0.8
        %v6219 = vadd.f32 %v6210, 0.8
        %v6220 = vadd.f32 %v6211, 0.8
        %v6221 = vadd.f32 %v6212, 0.8
        %v6222 = vadd.f32 %v6213, 0.8
        %v6223 = vadd.f32 %v6214, 0.8
        %v6224 = vadd.f32 %v6215, 0.8
        %v6225 = vrsqrt.pop %v6217
        %v6226 = vrsqrt.pop %v6218
        %v6227 = vrsqrt.pop %v6219
        %v6228 = vrsqrt.pop %v6220
        %v6229 = vrsqrt.pop %v6221
        %v6230 = vrsqrt.pop %v6222
        %v6231 = vrsqrt.pop %v6223
        %v6232 = vrsqrt.pop %v6224
        %v6241 = vcombine.low %v6225, %v6226
        %v6242 = vcombine.low %v6227, %v6228
        %v6243 = vcombine.low %v6229, %v6230
        %v6244 = vcombine.low %v6231, %v6232
        %v6246 = vunpack.c.l.s4 1966171168
        %v6247 = vunpack.c.0.s8 %v6246
        %v6248 = vlaneseq
        %v6249 = vshrl.u32 %v6248, 7
        %v6250 = vsub.s32 %v6247, %v6249
        %v6251 = vrot.slane %v6241, %v6250
        %v6253 = vunpack.c.l.s4 1966171168
        %v6254 = vunpack.c.0.s8 %v6253
        %v6255 = vlaneseq
        %v6256 = vshrl.u32 %v6255, 7
        %v6257 = vsub.s32 %v6254, %v6256
        %v6258 = vrot.slane %v6242, %v6257
        %v6260 = vunpack.c.l.s4 1966171168
        %v6261 = vunpack.c.0.s8 %v6260
        %v6262 = vlaneseq
        %v6263 = vshrl.u32 %v6262, 7
        %v6264 = vsub.s32 %v6261, %v6263
        %v6265 = vrot.slane %v6243, %v6264
        %v6267 = vunpack.c.l.s4 1966171168
        %v6268 = vunpack.c.0.s8 %v6267
        %v6269 = vlaneseq
        %v6270 = vshrl.u32 %v6269, 7
        %v6271 = vsub.s32 %v6268, %v6270
        %v6272 = vrot.slane %v6244, %v6271
        %v6273 = vcombine.low %v6251, %v6258
        %v6274 = vcombine.low %v6265, %v6272
        %v6276 = vunpack.c.l.s4 1966171168
        %v6277 = vunpack.c.0.s8 %v6276
        %v6278 = vlaneseq
        %v6279 = vshrl.u32 %v6278, 7
        %v6280 = vsub.s32 %v6277, %v6279
        %v6281 = vrot.slane %v6273, %v6280
        %v6283 = vunpack.c.l.s4 1966171168
        %v6284 = vunpack.c.0.s8 %v6283
        %v6285 = vlaneseq
        %v6286 = vshrl.u32 %v6285, 7
        %v6287 = vsub.s32 %v6284, %v6286
        %v6288 = vrot.slane %v6274, %v6287
        %v6289 = vcombine.low %v6281, %v6288
        %v6291 = vmul.f32 %v6216, %v6289
        %v6293 = vlaneseq
        %v6294 = vshrl.u32 %v6293, 7
        %v6295 = vsub.s32 0, %v6294
        %v6296 = vrot.slane %v6291, %v6295
        %v6297 = vlaneseq
        %v6298 = vshrl.u32 %v6297, 7
        %v6299 = vsub.s32 1, %v6298
        %v6300 = vrot.slane %v6291, %v6299
        %v6301 = vlaneseq
        %v6302 = vshrl.u32 %v6301, 7
        %v6303 = vsub.s32 2, %v6302
        %v6304 = vrot.slane %v6291, %v6303
        %v6305 = vlaneseq
        %v6306 = vshrl.u32 %v6305, 7
        %v6307 = vsub.s32 3, %v6306
        %v6308 = vrot.slane %v6291, %v6307
        %v6309 = vlaneseq
        %v6310 = vshrl.u32 %v6309, 7
        %v6311 = vsub.s32 4, %v6310
        %v6312 = vrot.slane %v6291, %v6311
        %v6313 = vlaneseq
        %v6314 = vshrl.u32 %v6313, 7
        %v6315 = vsub.s32 5, %v6314
        %v6316 = vrot.slane %v6291, %v6315
        %v6317 = vlaneseq
        %v6318 = vshrl.u32 %v6317, 7
        %v6319 = vsub.s32 6, %v6318
        %v6320 = vrot.slane %v6291, %v6319
        %v6321 = vlaneseq
        %v6322 = vshrl.u32 %v6321, 7
        %v6323 = vsub.s32 7, %v6322
        %v6324 = vrot.slane %v6291, %v6323
        %v6333 = vmul.f32 %v5784, %v6296
        %v6334 = vmul.f32 %v5785, %v6300
        %v6335 = vmul.f32 %v5786, %v6304
        %v6336 = vmul.f32 %v5787, %v6308
        %v6337 = vmul.f32 %v5788, %v6312
        %v6338 = vmul.f32 %v5789, %v6316
        %v6339 = vmul.f32 %v5790, %v6320
        %v6340 = vmul.f32 %v5791, %v6324
        %v6341 = vmul.f32 %v5792, %v6296
        %v6342 = vmul.f32 %v5793, %v6300
        %v6343 = vmul.f32 %v5794, %v6304
        %v6344 = vmul.f32 %v5795, %v6308
        %v6345 = vmul.f32 %v5796, %v6312
        %v6346 = vmul.f32 %v5797, %v6316
        %v6347 = vmul.f32 %v5798, %v6320
        %v6348 = vmul.f32 %v5799, %v6324
        %v6349 = vmul.f32 %v5800, %v6296
        %v6350 = vmul.f32 %v5801, %v6300
        %v6351 = vmul.f32 %v5802, %v6304
        %v6352 = vmul.f32 %v5803, %v6308
        %v6353 = vmul.f32 %v5804, %v6312
        %v6354 = vmul.f32 %v5805, %v6316
        %v6355 = vmul.f32 %v5806, %v6320
        %v6356 = vmul.f32 %v5807, %v6324
        %v6357 = vmul.f32 %v5808, %v6296
        %v6358 = vmul.f32 %v5809, %v6300
        %v6359 = vmul.f32 %v5810, %v6304
        %v6360 = vmul.f32 %v5811, %v6308
        %v6361 = vmul.f32 %v5812, %v6312
        %v6362 = vmul.f32 %v5813, %v6316
        %v6363 = vmul.f32 %v5814, %v6320
        %v6364 = vmul.f32 %v5815, %v6324
        %v6365 = vmul.f32 %v5816, %v6296
        %v6366 = vmul.f32 %v5817, %v6300
        %v6367 = vmul.f32 %v5818, %v6304
        %v6368 = vmul.f32 %v5819, %v6308
        %v6369 = vmul.f32 %v5820, %v6312
        %v6370 = vmul.f32 %v5821, %v6316
        %v6371 = vmul.f32 %v5822, %v6320
        %v6372 = vmul.f32 %v5823, %v6324
        %v6373 = vmul.f32 %v5824, %v6296
        %v6374 = vmul.f32 %v5825, %v6300
        %v6375 = vmul.f32 %v5826, %v6304
        %v6376 = vmul.f32 %v5827, %v6308
        %v6377 = vmul.f32 %v5828, %v6312
        %v6378 = vmul.f32 %v5829, %v6316
        %v6379 = vmul.f32 %v5830, %v6320
        %v6380 = vmul.f32 %v5831, %v6324
        %v6381 = vmul.f32 %v5832, %v6296
        %v6382 = vmul.f32 %v5833, %v6300
        %v6383 = vmul.f32 %v5834, %v6304
        %v6384 = vmul.f32 %v5835, %v6308
        %v6385 = vmul.f32 %v5836, %v6312
        %v6386 = vmul.f32 %v5837, %v6316
        %v6387 = vmul.f32 %v5838, %v6320
        %v6388 = vmul.f32 %v5839, %v6324
        %v6389 = vmul.f32 %v5840, %v6296
        %v6390 = vmul.f32 %v5841, %v6300
        %v6391 = vmul.f32 %v5842, %v6304
        %v6392 = vmul.f32 %v5843, %v6308
        %v6393 = vmul.f32 %v5844, %v6312
        %v6394 = vmul.f32 %v5845, %v6316
        %v6395 = vmul.f32 %v5846, %v6320
        %v6396 = vmul.f32 %v5847, %v6324
        %v6397 = vmul.f32 %v5848, %v6296
        %v6398 = vmul.f32 %v5849, %v6300
        %v6399 = vmul.f32 %v5850, %v6304
        %v6400 = vmul.f32 %v5851, %v6308
        %v6401 = vmul.f32 %v5852, %v6312
        %v6402 = vmul.f32 %v5853, %v6316
        %v6403 = vmul.f32 %v5854, %v6320
        %v6404 = vmul.f32 %v5855, %v6324
        %v6405 = vmul.f32 %v5856, %v6296
        %v6406 = vmul.f32 %v5857, %v6300
        %v6407 = vmul.f32 %v5858, %v6304
        %v6408 = vmul.f32 %v5859, %v6308
        %v6409 = vmul.f32 %v5860, %v6312
        %v6410 = vmul.f32 %v5861, %v6316
        %v6411 = vmul.f32 %v5862, %v6320
        %v6412 = vmul.f32 %v5863, %v6324
        %v6413 = vmul.f32 %v5864, %v6296
        %v6414 = vmul.f32 %v5865, %v6300
        %v6415 = vmul.f32 %v5866, %v6304
        %v6416 = vmul.f32 %v5867, %v6308
        %v6417 = vmul.f32 %v5868, %v6312
        %v6418 = vmul.f32 %v5869, %v6316
        %v6419 = vmul.f32 %v5870, %v6320
        %v6420 = vmul.f32 %v5871, %v6324
        %v6421 = vmul.f32 %v5872, %v6296
        %v6422 = vmul.f32 %v5873, %v6300
        %v6423 = vmul.f32 %v5874, %v6304
        %v6424 = vmul.f32 %v5875, %v6308
        %v6425 = vmul.f32 %v5876, %v6312
        %v6426 = vmul.f32 %v5877, %v6316
        %v6427 = vmul.f32 %v5878, %v6320
        %v6428 = vmul.f32 %v5879, %v6324
        %v6429 = vmul.f32 %v5880, %v6296
        %v6430 = vmul.f32 %v5881, %v6300
        %v6431 = vmul.f32 %v5882, %v6304
        %v6432 = vmul.f32 %v5883, %v6308
        %v6433 = vmul.f32 %v5884, %v6312
        %v6434 = vmul.f32 %v5885, %v6316
        %v6435 = vmul.f32 %v5886, %v6320
        %v6436 = vmul.f32 %v5887, %v6324
        %v6437 = vmul.f32 %v5888, %v6296
        %v6438 = vmul.f32 %v5889, %v6300
        %v6439 = vmul.f32 %v5890, %v6304
        %v6440 = vmul.f32 %v5891, %v6308
        %v6441 = vmul.f32 %v5892, %v6312
        %v6442 = vmul.f32 %v5893, %v6316
        %v6443 = vmul.f32 %v5894, %v6320
        %v6444 = vmul.f32 %v5895, %v6324
        %v6445 = vmul.f32 %v5896, %v6296
        %v6446 = vmul.f32 %v5897, %v6300
        %v6447 = vmul.f32 %v5898, %v6304
        %v6448 = vmul.f32 %v5899, %v6308
        %v6449 = vmul.f32 %v5900, %v6312
        %v6450 = vmul.f32 %v5901, %v6316
        %v6451 = vmul.f32 %v5902, %v6320
        %v6452 = vmul.f32 %v5903, %v6324
        %v6453 = vmul.f32 %v5904, %v6296
        %v6454 = vmul.f32 %v5905, %v6300
        %v6455 = vmul.f32 %v5906, %v6304
        %v6456 = vmul.f32 %v5907, %v6308
        %v6457 = vmul.f32 %v5908, %v6312
        %v6458 = vmul.f32 %v5909, %v6316
        %v6459 = vmul.f32 %v5910, %v6320
        %v6460 = vmul.f32 %v5911, %v6324
        %v6461 = vld [vmem:[%s14] sm:$0xff]
        %v6463 = vlaneseq
        %v6464 = vshrl.u32 %v6463, 7
        %v6465 = vsub.s32 0, %v6464
        %v6466 = vrot.slane %v6461, %v6465
        %v6467 = vlaneseq
        %v6468 = vshrl.u32 %v6467, 7
        %v6469 = vsub.s32 1, %v6468
        %v6470 = vrot.slane %v6461, %v6469
        %v6471 = vlaneseq
        %v6472 = vshrl.u32 %v6471, 7
        %v6473 = vsub.s32 2, %v6472
        %v6474 = vrot.slane %v6461, %v6473
        %v6475 = vlaneseq
        %v6476 = vshrl.u32 %v6475, 7
        %v6477 = vsub.s32 3, %v6476
        %v6478 = vrot.slane %v6461, %v6477
        %v6479 = vlaneseq
        %v6480 = vshrl.u32 %v6479, 7
        %v6481 = vsub.s32 4, %v6480
        %v6482 = vrot.slane %v6461, %v6481
        %v6483 = vlaneseq
        %v6484 = vshrl.u32 %v6483, 7
        %v6485 = vsub.s32 5, %v6484
        %v6486 = vrot.slane %v6461, %v6485
        %v6487 = vlaneseq
        %v6488 = vshrl.u32 %v6487, 7
        %v6489 = vsub.s32 6, %v6488
        %v6490 = vrot.slane %v6461, %v6489
        %v6491 = vlaneseq
        %v6492 = vshrl.u32 %v6491, 7
        %v6493 = vsub.s32 7, %v6492
        %v6494 = vrot.slane %v6461, %v6493
        %v6503 = vadd.f32 %v6333, %v6466
        %v6504 = vadd.f32 %v6334, %v6470
        %v6505 = vadd.f32 %v6335, %v6474
        %v6506 = vadd.f32 %v6336, %v6478
        %v6507 = vadd.f32 %v6337, %v6482
        %v6508 = vadd.f32 %v6338, %v6486
        %v6509 = vadd.f32 %v6339, %v6490
        %v6510 = vadd.f32 %v6340, %v6494
        %v6511 = vadd.f32 %v6341, %v6466
        %v6512 = vadd.f32 %v6342, %v6470
        %v6513 = vadd.f32 %v6343, %v6474
        %v6514 = vadd.f32 %v6344, %v6478
        %v6515 = vadd.f32 %v6345, %v6482
        %v6516 = vadd.f32 %v6346, %v6486
        %v6517 = vadd.f32 %v6347, %v6490
        %v6518 = vadd.f32 %v6348, %v6494
        %v6519 = vadd.f32 %v6349, %v6466
        %v6520 = vadd.f32 %v6350, %v6470
        %v6521 = vadd.f32 %v6351, %v6474
        %v6522 = vadd.f32 %v6352, %v6478
        %v6523 = vadd.f32 %v6353, %v6482
        %v6524 = vadd.f32 %v6354, %v6486
        %v6525 = vadd.f32 %v6355, %v6490
        %v6526 = vadd.f32 %v6356, %v6494
        %v6527 = vadd.f32 %v6357, %v6466
        %v6528 = vadd.f32 %v6358, %v6470
        %v6529 = vadd.f32 %v6359, %v6474
        %v6530 = vadd.f32 %v6360, %v6478
        %v6531 = vadd.f32 %v6361, %v6482
        %v6532 = vadd.f32 %v6362, %v6486
        %v6533 = vadd.f32 %v6363, %v6490
        %v6534 = vadd.f32 %v6364, %v6494
        %v6535 = vadd.f32 %v6365, %v6466
        %v6536 = vadd.f32 %v6366, %v6470
        %v6537 = vadd.f32 %v6367, %v6474
        %v6538 = vadd.f32 %v6368, %v6478
        %v6539 = vadd.f32 %v6369, %v6482
        %v6540 = vadd.f32 %v6370, %v6486
        %v6541 = vadd.f32 %v6371, %v6490
        %v6542 = vadd.f32 %v6372, %v6494
        %v6543 = vadd.f32 %v6373, %v6466
        %v6544 = vadd.f32 %v6374, %v6470
        %v6545 = vadd.f32 %v6375, %v6474
        %v6546 = vadd.f32 %v6376, %v6478
        %v6547 = vadd.f32 %v6377, %v6482
        %v6548 = vadd.f32 %v6378, %v6486
        %v6549 = vadd.f32 %v6379, %v6490
        %v6550 = vadd.f32 %v6380, %v6494
        %v6551 = vadd.f32 %v6381, %v6466
        %v6552 = vadd.f32 %v6382, %v6470
        %v6553 = vadd.f32 %v6383, %v6474
        %v6554 = vadd.f32 %v6384, %v6478
        %v6555 = vadd.f32 %v6385, %v6482
        %v6556 = vadd.f32 %v6386, %v6486
        %v6557 = vadd.f32 %v6387, %v6490
        %v6558 = vadd.f32 %v6388, %v6494
        %v6559 = vadd.f32 %v6389, %v6466
        %v6560 = vadd.f32 %v6390, %v6470
        %v6561 = vadd.f32 %v6391, %v6474
        %v6562 = vadd.f32 %v6392, %v6478
        %v6563 = vadd.f32 %v6393, %v6482
        %v6564 = vadd.f32 %v6394, %v6486
        %v6565 = vadd.f32 %v6395, %v6490
        %v6566 = vadd.f32 %v6396, %v6494
        %v6567 = vadd.f32 %v6397, %v6466
        %v6568 = vadd.f32 %v6398, %v6470
        %v6569 = vadd.f32 %v6399, %v6474
        %v6570 = vadd.f32 %v6400, %v6478
        %v6571 = vadd.f32 %v6401, %v6482
        %v6572 = vadd.f32 %v6402, %v6486
        %v6573 = vadd.f32 %v6403, %v6490
        %v6574 = vadd.f32 %v6404, %v6494
        %v6575 = vadd.f32 %v6405, %v6466
        %v6576 = vadd.f32 %v6406, %v6470
        %v6577 = vadd.f32 %v6407, %v6474
        %v6578 = vadd.f32 %v6408, %v6478
        %v6579 = vadd.f32 %v6409, %v6482
        %v6580 = vadd.f32 %v6410, %v6486
        %v6581 = vadd.f32 %v6411, %v6490
        %v6582 = vadd.f32 %v6412, %v6494
        %v6583 = vadd.f32 %v6413, %v6466
        %v6584 = vadd.f32 %v6414, %v6470
        %v6585 = vadd.f32 %v6415, %v6474
        %v6586 = vadd.f32 %v6416, %v6478
        %v6587 = vadd.f32 %v6417, %v6482
        %v6588 = vadd.f32 %v6418, %v6486
        %v6589 = vadd.f32 %v6419, %v6490
        %v6590 = vadd.f32 %v6420, %v6494
        %v6591 = vadd.f32 %v6421, %v6466
        %v6592 = vadd.f32 %v6422, %v6470
        %v6593 = vadd.f32 %v6423, %v6474
        %v6594 = vadd.f32 %v6424, %v6478
        %v6595 = vadd.f32 %v6425, %v6482
        %v6596 = vadd.f32 %v6426, %v6486
        %v6597 = vadd.f32 %v6427, %v6490
        %v6598 = vadd.f32 %v6428, %v6494
        %v6599 = vadd.f32 %v6429, %v6466
        %v6600 = vadd.f32 %v6430, %v6470
        %v6601 = vadd.f32 %v6431, %v6474
        %v6602 = vadd.f32 %v6432, %v6478
        %v6603 = vadd.f32 %v6433, %v6482
        %v6604 = vadd.f32 %v6434, %v6486
        %v6605 = vadd.f32 %v6435, %v6490
        %v6606 = vadd.f32 %v6436, %v6494
        %v6607 = vadd.f32 %v6437, %v6466
        %v6608 = vadd.f32 %v6438, %v6470
        %v6609 = vadd.f32 %v6439, %v6474
        %v6610 = vadd.f32 %v6440, %v6478
        %v6611 = vadd.f32 %v6441, %v6482
        %v6612 = vadd.f32 %v6442, %v6486
        %v6613 = vadd.f32 %v6443, %v6490
        %v6614 = vadd.f32 %v6444, %v6494
        %v6615 = vadd.f32 %v6445, %v6466
        %v6616 = vadd.f32 %v6446, %v6470
        %v6617 = vadd.f32 %v6447, %v6474
        %v6618 = vadd.f32 %v6448, %v6478
        %v6619 = vadd.f32 %v6449, %v6482
        %v6620 = vadd.f32 %v6450, %v6486
        %v6621 = vadd.f32 %v6451, %v6490
        %v6622 = vadd.f32 %v6452, %v6494
        %v6623 = vadd.f32 %v6453, %v6466
        %v6624 = vadd.f32 %v6454, %v6470
        %v6625 = vadd.f32 %v6455, %v6474
        %v6626 = vadd.f32 %v6456, %v6478
        %v6627 = vadd.f32 %v6457, %v6482
        %v6628 = vadd.f32 %v6458, %v6486
        %v6629 = vadd.f32 %v6459, %v6490
        %v6630 = vadd.f32 %v6460, %v6494
        %v6631 = vmul.f32 %v6503, 0.2
        %v6632 = vmul.f32 %v6504, 0.2
        %v6633 = vmul.f32 %v6505, 0.2
        %v6634 = vmul.f32 %v6506, 0.2
        %v6635 = vmul.f32 %v6507, 0.2
        %v6636 = vmul.f32 %v6508, 0.2
        %v6637 = vmul.f32 %v6509, 0.2
        %v6638 = vmul.f32 %v6510, 0.2
        %v6639 = vmul.f32 %v6511, 0.2
        %v6640 = vmul.f32 %v6512, 0.2
        %v6641 = vmul.f32 %v6513, 0.2
        %v6642 = vmul.f32 %v6514, 0.2
        %v6643 = vmul.f32 %v6515, 0.2
        %v6644 = vmul.f32 %v6516, 0.2
        %v6645 = vmul.f32 %v6517, 0.2
        %v6646 = vmul.f32 %v6518, 0.2
        %v6647 = vmul.f32 %v6519, 0.2
        %v6648 = vmul.f32 %v6520, 0.2
        %v6649 = vmul.f32 %v6521, 0.2
        %v6650 = vmul.f32 %v6522, 0.2
        %v6651 = vmul.f32 %v6523, 0.2
        %v6652 = vmul.f32 %v6524, 0.2
        %v6653 = vmul.f32 %v6525, 0.2
        %v6654 = vmul.f32 %v6526, 0.2
        %v6655 = vmul.f32 %v6527, 0.2
        %v6656 = vmul.f32 %v6528, 0.2
        %v6657 = vmul.f32 %v6529, 0.2
        %v6658 = vmul.f32 %v6530, 0.2
        %v6659 = vmul.f32 %v6531, 0.2
        %v6660 = vmul.f32 %v6532, 0.2
        %v6661 = vmul.f32 %v6533, 0.2
        %v6662 = vmul.f32 %v6534, 0.2
        %v6663 = vmul.f32 %v6535, 0.2
        %v6664 = vmul.f32 %v6536, 0.2
        %v6665 = vmul.f32 %v6537, 0.2
        %v6666 = vmul.f32 %v6538, 0.2
        %v6667 = vmul.f32 %v6539, 0.2
        %v6668 = vmul.f32 %v6540, 0.2
        %v6669 = vmul.f32 %v6541, 0.2
        %v6670 = vmul.f32 %v6542, 0.2
        %v6671 = vmul.f32 %v6543, 0.2
        %v6672 = vmul.f32 %v6544, 0.2
        %v6673 = vmul.f32 %v6545, 0.2
        %v6674 = vmul.f32 %v6546, 0.2
        %v6675 = vmul.f32 %v6547, 0.2
        %v6676 = vmul.f32 %v6548, 0.2
        %v6677 = vmul.f32 %v6549, 0.2
        %v6678 = vmul.f32 %v6550, 0.2
        %v6679 = vmul.f32 %v6551, 0.2
        %v6680 = vmul.f32 %v6552, 0.2
        %v6681 = vmul.f32 %v6553, 0.2
        %v6682 = vmul.f32 %v6554, 0.2
        %v6683 = vmul.f32 %v6555, 0.2
        %v6684 = vmul.f32 %v6556, 0.2
        %v6685 = vmul.f32 %v6557, 0.2
        %v6686 = vmul.f32 %v6558, 0.2
        %v6687 = vmul.f32 %v6559, 0.2
        %v6688 = vmul.f32 %v6560, 0.2
        %v6689 = vmul.f32 %v6561, 0.2
        %v6690 = vmul.f32 %v6562, 0.2
        %v6691 = vmul.f32 %v6563, 0.2
        %v6692 = vmul.f32 %v6564, 0.2
        %v6693 = vmul.f32 %v6565, 0.2
        %v6694 = vmul.f32 %v6566, 0.2
        %v6695 = vmul.f32 %v6567, 0.2
        %v6696 = vmul.f32 %v6568, 0.2
        %v6697 = vmul.f32 %v6569, 0.2
        %v6698 = vmul.f32 %v6570, 0.2
        %v6699 = vmul.f32 %v6571, 0.2
        %v6700 = vmul.f32 %v6572, 0.2
        %v6701 = vmul.f32 %v6573, 0.2
        %v6702 = vmul.f32 %v6574, 0.2
        %v6703 = vmul.f32 %v6575, 0.2
        %v6704 = vmul.f32 %v6576, 0.2
        %v6705 = vmul.f32 %v6577, 0.2
        %v6706 = vmul.f32 %v6578, 0.2
        %v6707 = vmul.f32 %v6579, 0.2
        %v6708 = vmul.f32 %v6580, 0.2
        %v6709 = vmul.f32 %v6581, 0.2
        %v6710 = vmul.f32 %v6582, 0.2
        %v6711 = vmul.f32 %v6583, 0.2
        %v6712 = vmul.f32 %v6584, 0.2
        %v6713 = vmul.f32 %v6585, 0.2
        %v6714 = vmul.f32 %v6586, 0.2
        %v6715 = vmul.f32 %v6587, 0.2
        %v6716 = vmul.f32 %v6588, 0.2
        %v6717 = vmul.f32 %v6589, 0.2
        %v6718 = vmul.f32 %v6590, 0.2
        %v6719 = vmul.f32 %v6591, 0.2
        %v6720 = vmul.f32 %v6592, 0.2
        %v6721 = vmul.f32 %v6593, 0.2
        %v6722 = vmul.f32 %v6594, 0.2
        %v6723 = vmul.f32 %v6595, 0.2
        %v6724 = vmul.f32 %v6596, 0.2
        %v6725 = vmul.f32 %v6597, 0.2
        %v6726 = vmul.f32 %v6598, 0.2
        %v6727 = vmul.f32 %v6599, 0.2
        %v6728 = vmul.f32 %v6600, 0.2
        %v6729 = vmul.f32 %v6601, 0.2
        %v6730 = vmul.f32 %v6602, 0.2
        %v6731 = vmul.f32 %v6603, 0.2
        %v6732 = vmul.f32 %v6604, 0.2
        %v6733 = vmul.f32 %v6605, 0.2
        %v6734 = vmul.f32 %v6606, 0.2
        %v6735 = vmul.f32 %v6607, 0.2
        %v6736 = vmul.f32 %v6608, 0.2
        %v6737 = vmul.f32 %v6609, 0.2
        %v6738 = vmul.f32 %v6610, 0.2
        %v6739 = vmul.f32 %v6611, 0.2
        %v6740 = vmul.f32 %v6612, 0.2
        %v6741 = vmul.f32 %v6613, 0.2
        %v6742 = vmul.f32 %v6614, 0.2
        %v6743 = vmul.f32 %v6615, 0.2
        %v6744 = vmul.f32 %v6616, 0.2
        %v6745 = vmul.f32 %v6617, 0.2
        %v6746 = vmul.f32 %v6618, 0.2
        %v6747 = vmul.f32 %v6619, 0.2
        %v6748 = vmul.f32 %v6620, 0.2
        %v6749 = vmul.f32 %v6621, 0.2
        %v6750 = vmul.f32 %v6622, 0.2
        %v6751 = vmul.f32 %v6623, 0.2
        %v6752 = vmul.f32 %v6624, 0.2
        %v6753 = vmul.f32 %v6625, 0.2
        %v6754 = vmul.f32 %v6626, 0.2
        %v6755 = vmul.f32 %v6627, 0.2
        %v6756 = vmul.f32 %v6628, 0.2
        %v6757 = vmul.f32 %v6629, 0.2
        %v6758 = vmul.f32 %v6630, 0.2
        %v6759 = vmax.f32 %v6503, %v6631
        %v6760 = vmax.f32 %v6504, %v6632
        %v6761 = vmax.f32 %v6505, %v6633
        %v6762 = vmax.f32 %v6506, %v6634
        %v6763 = vmax.f32 %v6507, %v6635
        %v6764 = vmax.f32 %v6508, %v6636
        %v6765 = vmax.f32 %v6509, %v6637
        %v6766 = vmax.f32 %v6510, %v6638
        %v6767 = vmax.f32 %v6511, %v6639
        %v6768 = vmax.f32 %v6512, %v6640
        %v6769 = vmax.f32 %v6513, %v6641
        %v6770 = vmax.f32 %v6514, %v6642
        %v6771 = vmax.f32 %v6515, %v6643
        %v6772 = vmax.f32 %v6516, %v6644
        %v6773 = vmax.f32 %v6517, %v6645
        %v6774 = vmax.f32 %v6518, %v6646
        %v6775 = vmax.f32 %v6519, %v6647
        %v6776 = vmax.f32 %v6520, %v6648
        %v6777 = vmax.f32 %v6521, %v6649
        %v6778 = vmax.f32 %v6522, %v6650
        %v6779 = vmax.f32 %v6523, %v6651
        %v6780 = vmax.f32 %v6524, %v6652
        %v6781 = vmax.f32 %v6525, %v6653
        %v6782 = vmax.f32 %v6526, %v6654
        %v6783 = vmax.f32 %v6527, %v6655
        %v6784 = vmax.f32 %v6528, %v6656
        %v6785 = vmax.f32 %v6529, %v6657
        %v6786 = vmax.f32 %v6530, %v6658
        %v6787 = vmax.f32 %v6531, %v6659
        %v6788 = vmax.f32 %v6532, %v6660
        %v6789 = vmax.f32 %v6533, %v6661
        %v6790 = vmax.f32 %v6534, %v6662
        %v6791 = vmax.f32 %v6535, %v6663
        %v6792 = vmax.f32 %v6536, %v6664
        %v6793 = vmax.f32 %v6537, %v6665
        %v6794 = vmax.f32 %v6538, %v6666
        %v6795 = vmax.f32 %v6539, %v6667
        %v6796 = vmax.f32 %v6540, %v6668
        %v6797 = vmax.f32 %v6541, %v6669
        %v6798 = vmax.f32 %v6542, %v6670
        %v6799 = vmax.f32 %v6543, %v6671
        %v6800 = vmax.f32 %v6544, %v6672
        %v6801 = vmax.f32 %v6545, %v6673
        %v6802 = vmax.f32 %v6546, %v6674
        %v6803 = vmax.f32 %v6547, %v6675
        %v6804 = vmax.f32 %v6548, %v6676
        %v6805 = vmax.f32 %v6549, %v6677
        %v6806 = vmax.f32 %v6550, %v6678
        %v6807 = vmax.f32 %v6551, %v6679
        %v6808 = vmax.f32 %v6552, %v6680
        %v6809 = vmax.f32 %v6553, %v6681
        %v6810 = vmax.f32 %v6554, %v6682
        %v6811 = vmax.f32 %v6555, %v6683
        %v6812 = vmax.f32 %v6556, %v6684
        %v6813 = vmax.f32 %v6557, %v6685
        %v6814 = vmax.f32 %v6558, %v6686
        %v6815 = vmax.f32 %v6559, %v6687
        %v6816 = vmax.f32 %v6560, %v6688
        %v6817 = vmax.f32 %v6561, %v6689
        %v6818 = vmax.f32 %v6562, %v6690
        %v6819 = vmax.f32 %v6563, %v6691
        %v6820 = vmax.f32 %v6564, %v6692
        %v6821 = vmax.f32 %v6565, %v6693
        %v6822 = vmax.f32 %v6566, %v6694
        %v6823 = vmax.f32 %v6567, %v6695
        %v6824 = vmax.f32 %v6568, %v6696
        %v6825 = vmax.f32 %v6569, %v6697
        %v6826 = vmax.f32 %v6570, %v6698
        %v6827 = vmax.f32 %v6571, %v6699
        %v6828 = vmax.f32 %v6572, %v6700
        %v6829 = vmax.f32 %v6573, %v6701
        %v6830 = vmax.f32 %v6574, %v6702
        %v6831 = vmax.f32 %v6575, %v6703
        %v6832 = vmax.f32 %v6576, %v6704
        %v6833 = vmax.f32 %v6577, %v6705
        %v6834 = vmax.f32 %v6578, %v6706
        %v6835 = vmax.f32 %v6579, %v6707
        %v6836 = vmax.f32 %v6580, %v6708
        %v6837 = vmax.f32 %v6581, %v6709
        %v6838 = vmax.f32 %v6582, %v6710
        %v6839 = vmax.f32 %v6583, %v6711
        %v6840 = vmax.f32 %v6584, %v6712
        %v6841 = vmax.f32 %v6585, %v6713
        %v6842 = vmax.f32 %v6586, %v6714
        %v6843 = vmax.f32 %v6587, %v6715
        %v6844 = vmax.f32 %v6588, %v6716
        %v6845 = vmax.f32 %v6589, %v6717
        %v6846 = vmax.f32 %v6590, %v6718
        %v6847 = vmax.f32 %v6591, %v6719
        %v6848 = vmax.f32 %v6592, %v6720
        %v6849 = vmax.f32 %v6593, %v6721
        %v6850 = vmax.f32 %v6594, %v6722
        %v6851 = vmax.f32 %v6595, %v6723
        %v6852 = vmax.f32 %v6596, %v6724
        %v6853 = vmax.f32 %v6597, %v6725
        %v6854 = vmax.f32 %v6598, %v6726
        %v6855 = vmax.f32 %v6599, %v6727
        %v6856 = vmax.f32 %v6600, %v6728
        %v6857 = vmax.f32 %v6601, %v6729
        %v6858 = vmax.f32 %v6602, %v6730
        %v6859 = vmax.f32 %v6603, %v6731
        %v6860 = vmax.f32 %v6604, %v6732
        %v6861 = vmax.f32 %v6605, %v6733
        %v6862 = vmax.f32 %v6606, %v6734
        %v6863 = vmax.f32 %v6607, %v6735
        %v6864 = vmax.f32 %v6608, %v6736
        %v6865 = vmax.f32 %v6609, %v6737
        %v6866 = vmax.f32 %v6610, %v6738
        %v6867 = vmax.f32 %v6611, %v6739
        %v6868 = vmax.f32 %v6612, %v6740
        %v6869 = vmax.f32 %v6613, %v6741
        %v6870 = vmax.f32 %v6614, %v6742
        %v6871 = vmax.f32 %v6615, %v6743
        %v6872 = vmax.f32 %v6616, %v6744
        %v6873 = vmax.f32 %v6617, %v6745
        %v6874 = vmax.f32 %v6618, %v6746
        %v6875 = vmax.f32 %v6619, %v6747
        %v6876 = vmax.f32 %v6620, %v6748
        %v6877 = vmax.f32 %v6621, %v6749
        %v6878 = vmax.f32 %v6622, %v6750
        %v6879 = vmax.f32 %v6623, %v6751
        %v6880 = vmax.f32 %v6624, %v6752
        %v6881 = vmax.f32 %v6625, %v6753
        %v6882 = vmax.f32 %v6626, %v6754
        %v6883 = vmax.f32 %v6627, %v6755
        %v6884 = vmax.f32 %v6628, %v6756
        %v6885 = vmax.f32 %v6629, %v6757
        %v6886 = vmax.f32 %v6630, %v6758
        %v6887 = vpack.c.bf16 %v6767, %v6759
        %v6888 = vpack.c.bf16 %v6768, %v6760
        %v6889 = vpack.c.bf16 %v6769, %v6761
        %v6890 = vpack.c.bf16 %v6770, %v6762
        %v6891 = vpack.c.bf16 %v6771, %v6763
        %v6892 = vpack.c.bf16 %v6772, %v6764
        %v6893 = vpack.c.bf16 %v6773, %v6765
        %v6894 = vpack.c.bf16 %v6774, %v6766
        %v6895 = vpack.c.bf16 %v6783, %v6775
        %v6896 = vpack.c.bf16 %v6784, %v6776
        %v6897 = vpack.c.bf16 %v6785, %v6777
        %v6898 = vpack.c.bf16 %v6786, %v6778
        %v6899 = vpack.c.bf16 %v6787, %v6779
        %v6900 = vpack.c.bf16 %v6788, %v6780
        %v6901 = vpack.c.bf16 %v6789, %v6781
        %v6902 = vpack.c.bf16 %v6790, %v6782
        %v6903 = vpack.c.bf16 %v6799, %v6791
        %v6904 = vpack.c.bf16 %v6800, %v6792
        %v6905 = vpack.c.bf16 %v6801, %v6793
        %v6906 = vpack.c.bf16 %v6802, %v6794
        %v6907 = vpack.c.bf16 %v6803, %v6795
        %v6908 = vpack.c.bf16 %v6804, %v6796
        %v6909 = vpack.c.bf16 %v6805, %v6797
        %v6910 = vpack.c.bf16 %v6806, %v6798
        %v6911 = vpack.c.bf16 %v6815, %v6807
        %v6912 = vpack.c.bf16 %v6816, %v6808
        %v6913 = vpack.c.bf16 %v6817, %v6809
        %v6914 = vpack.c.bf16 %v6818, %v6810
        %v6915 = vpack.c.bf16 %v6819, %v6811
        %v6916 = vpack.c.bf16 %v6820, %v6812
        %v6917 = vpack.c.bf16 %v6821, %v6813
        %v6918 = vpack.c.bf16 %v6822, %v6814
        %v6919 = vpack.c.bf16 %v6831, %v6823
        %v6920 = vpack.c.bf16 %v6832, %v6824
        %v6921 = vpack.c.bf16 %v6833, %v6825
        %v6922 = vpack.c.bf16 %v6834, %v6826
        %v6923 = vpack.c.bf16 %v6835, %v6827
        %v6924 = vpack.c.bf16 %v6836, %v6828
        %v6925 = vpack.c.bf16 %v6837, %v6829
        %v6926 = vpack.c.bf16 %v6838, %v6830
        %v6927 = vpack.c.bf16 %v6847, %v6839
        %v6928 = vpack.c.bf16 %v6848, %v6840
        %v6929 = vpack.c.bf16 %v6849, %v6841
        %v6930 = vpack.c.bf16 %v6850, %v6842
        %v6931 = vpack.c.bf16 %v6851, %v6843
        %v6932 = vpack.c.bf16 %v6852, %v6844
        %v6933 = vpack.c.bf16 %v6853, %v6845
        %v6934 = vpack.c.bf16 %v6854, %v6846
        %v6935 = vpack.c.bf16 %v6863, %v6855
        %v6936 = vpack.c.bf16 %v6864, %v6856
        %v6937 = vpack.c.bf16 %v6865, %v6857
        %v6938 = vpack.c.bf16 %v6866, %v6858
        %v6939 = vpack.c.bf16 %v6867, %v6859
        %v6940 = vpack.c.bf16 %v6868, %v6860
        %v6941 = vpack.c.bf16 %v6869, %v6861
        %v6942 = vpack.c.bf16 %v6870, %v6862
        %v6943 = vpack.c.bf16 %v6879, %v6871
        %v6944 = vpack.c.bf16 %v6880, %v6872
        %v6945 = vpack.c.bf16 %v6881, %v6873
        %v6946 = vpack.c.bf16 %v6882, %v6874
        %v6947 = vpack.c.bf16 %v6883, %v6875
        %v6948 = vpack.c.bf16 %v6884, %v6876
        %v6949 = vpack.c.bf16 %v6885, %v6877
        %v6950 = vpack.c.bf16 %v6886, %v6878
        %v6951 = vld [vmem:[%s15] sm:$0xff]
        %v6952 = vld [vmem:[%s15 + $0x8] sm:$0xff]
        %v6953 = vld [vmem:[%s15 + $0x10] sm:$0xff]
        %v6954 = vld [vmem:[%s15 + $0x18] sm:$0xff]
        %v6955 = vld [vmem:[%s15 + $0x20] sm:$0xff]
        %v6956 = vld [vmem:[%s15 + $0x28] sm:$0xff]
        %v6957 = vld [vmem:[%s15 + $0x30] sm:$0xff]
        %v6958 = vld [vmem:[%s15 + $0x38] sm:$0xff]
        %v6959 = vld [vmem:[%s15 + $0x40] sm:$0xff]
        %v6960 = vld [vmem:[%s15 + $0x48] sm:$0xff]
        %v6961 = vld [vmem:[%s15 + $0x50] sm:$0xff]
        %v6962 = vld [vmem:[%s15 + $0x58] sm:$0xff]
        %v6963 = vld [vmem:[%s15 + $0x60] sm:$0xff]
        %v6964 = vld [vmem:[%s15 + $0x68] sm:$0xff]
        %v6965 = vld [vmem:[%s15 + $0x70] sm:$0xff]
        %v6966 = vld [vmem:[%s15 + $0x78] sm:$0xff]
        %v6967 = vld [vmem:[%s15 + $0x80] sm:$0xff]
        %v6968 = vld [vmem:[%s15 + $0x88] sm:$0xff]
        %v6969 = vld [vmem:[%s15 + $0x90] sm:$0xff]
        %v6970 = vld [vmem:[%s15 + $0x98] sm:$0xff]
        %v6971 = vld [vmem:[%s15 + $0xa0] sm:$0xff]
        %v6972 = vld [vmem:[%s15 + $0xa8] sm:$0xff]
        %v6973 = vld [vmem:[%s15 + $0xb0] sm:$0xff]
        %v6974 = vld [vmem:[%s15 + $0xb8] sm:$0xff]
        %v6975 = vld [vmem:[%s15 + $0xc0] sm:$0xff]
        %v6976 = vld [vmem:[%s15 + $0xc8] sm:$0xff]
        %v6977 = vld [vmem:[%s15 + $0xd0] sm:$0xff]
        %v6978 = vld [vmem:[%s15 + $0xd8] sm:$0xff]
        %v6979 = vld [vmem:[%s15 + $0xe0] sm:$0xff]
        %v6980 = vld [vmem:[%s15 + $0xe8] sm:$0xff]
        %v6981 = vld [vmem:[%s15 + $0xf0] sm:$0xff]
        %v6982 = vld [vmem:[%s15 + $0xf8] sm:$0xff]
        %v6983 = vld [vmem:[%s15 + $0x100] sm:$0xff]
        %v6984 = vld [vmem:[%s15 + $0x108] sm:$0xff]
        %v6985 = vld [vmem:[%s15 + $0x110] sm:$0xff]
        %v6986 = vld [vmem:[%s15 + $0x118] sm:$0xff]
        %v6987 = vld [vmem:[%s15 + $0x120] sm:$0xff]
        %v6988 = vld [vmem:[%s15 + $0x128] sm:$0xff]
        %v6989 = vld [vmem:[%s15 + $0x130] sm:$0xff]
        %v6990 = vld [vmem:[%s15 + $0x138] sm:$0xff]
        %v6991 = vld [vmem:[%s15 + $0x140] sm:$0xff]
        %v6992 = vld [vmem:[%s15 + $0x148] sm:$0xff]
        %v6993 = vld [vmem:[%s15 + $0x150] sm:$0xff]
        %v6994 = vld [vmem:[%s15 + $0x158] sm:$0xff]
        %v6995 = vld [vmem:[%s15 + $0x160] sm:$0xff]
        %v6996 = vld [vmem:[%s15 + $0x168] sm:$0xff]
        %v6997 = vld [vmem:[%s15 + $0x170] sm:$0xff]
        %v6998 = vld [vmem:[%s15 + $0x178] sm:$0xff]
        %v6999 = vld [vmem:[%s15 + $0x180] sm:$0xff]
        %v7000 = vld [vmem:[%s15 + $0x188] sm:$0xff]
        %v7001 = vld [vmem:[%s15 + $0x190] sm:$0xff]
        %v7002 = vld [vmem:[%s15 + $0x198] sm:$0xff]
        %v7003 = vld [vmem:[%s15 + $0x1a0] sm:$0xff]
        %v7004 = vld [vmem:[%s15 + $0x1a8] sm:$0xff]
        %v7005 = vld [vmem:[%s15 + $0x1b0] sm:$0xff]
        %v7006 = vld [vmem:[%s15 + $0x1b8] sm:$0xff]
        %v7007 = vld [vmem:[%s15 + $0x1c0] sm:$0xff]
        %v7008 = vld [vmem:[%s15 + $0x1c8] sm:$0xff]
        %v7009 = vld [vmem:[%s15 + $0x1d0] sm:$0xff]
        %v7010 = vld [vmem:[%s15 + $0x1d8] sm:$0xff]
        %v7011 = vld [vmem:[%s15 + $0x1e0] sm:$0xff]
        %v7012 = vld [vmem:[%s15 + $0x1e8] sm:$0xff]
        %v7013 = vld [vmem:[%s15 + $0x1f0] sm:$0xff]
        %v7014 = vld [vmem:[%s15 + $0x1f8] sm:$0xff]
        %v7015 = vld [vmem:[%s15 + $0x200] sm:$0xff]
        %v7016 = vld [vmem:[%s15 + $0x208] sm:$0xff]
        %v7017 = vld [vmem:[%s15 + $0x210] sm:$0xff]
        %v7018 = vld [vmem:[%s15 + $0x218] sm:$0xff]
        %v7019 = vld [vmem:[%s15 + $0x220] sm:$0xff]
        %v7020 = vld [vmem:[%s15 + $0x228] sm:$0xff]
        %v7021 = vld [vmem:[%s15 + $0x230] sm:$0xff]
        %v7022 = vld [vmem:[%s15 + $0x238] sm:$0xff]
        %v7023 = vld [vmem:[%s15 + $0x240] sm:$0xff]
        %v7024 = vld [vmem:[%s15 + $0x248] sm:$0xff]
        %v7025 = vld [vmem:[%s15 + $0x250] sm:$0xff]
        %v7026 = vld [vmem:[%s15 + $0x258] sm:$0xff]
        %v7027 = vld [vmem:[%s15 + $0x260] sm:$0xff]
        %v7028 = vld [vmem:[%s15 + $0x268] sm:$0xff]
        %v7029 = vld [vmem:[%s15 + $0x270] sm:$0xff]
        %v7030 = vld [vmem:[%s15 + $0x278] sm:$0xff]
        %v7031 = vld [vmem:[%s15 + $0x280] sm:$0xff]
        %v7032 = vld [vmem:[%s15 + $0x288] sm:$0xff]
        %v7033 = vld [vmem:[%s15 + $0x290] sm:$0xff]
        %v7034 = vld [vmem:[%s15 + $0x298] sm:$0xff]
        %v7035 = vld [vmem:[%s15 + $0x2a0] sm:$0xff]
        %v7036 = vld [vmem:[%s15 + $0x2a8] sm:$0xff]
        %v7037 = vld [vmem:[%s15 + $0x2b0] sm:$0xff]
        %v7038 = vld [vmem:[%s15 + $0x2b8] sm:$0xff]
        %v7039 = vld [vmem:[%s15 + $0x2c0] sm:$0xff]
        %v7040 = vld [vmem:[%s15 + $0x2c8] sm:$0xff]
        %v7041 = vld [vmem:[%s15 + $0x2d0] sm:$0xff]
        %v7042 = vld [vmem:[%s15 + $0x2d8] sm:$0xff]
        %v7043 = vld [vmem:[%s15 + $0x2e0] sm:$0xff]
        %v7044 = vld [vmem:[%s15 + $0x2e8] sm:$0xff]
        %v7045 = vld [vmem:[%s15 + $0x2f0] sm:$0xff]
        %v7046 = vld [vmem:[%s15 + $0x2f8] sm:$0xff]
        %v7047 = vld [vmem:[%s15 + $0x300] sm:$0xff]
        %v7048 = vld [vmem:[%s15 + $0x308] sm:$0xff]
        %v7049 = vld [vmem:[%s15 + $0x310] sm:$0xff]
        %v7050 = vld [vmem:[%s15 + $0x318] sm:$0xff]
        %v7051 = vld [vmem:[%s15 + $0x320] sm:$0xff]
        %v7052 = vld [vmem:[%s15 + $0x328] sm:$0xff]
        %v7053 = vld [vmem:[%s15 + $0x330] sm:$0xff]
        %v7054 = vld [vmem:[%s15 + $0x338] sm:$0xff]
        %v7055 = vld [vmem:[%s15 + $0x340] sm:$0xff]
        %v7056 = vld [vmem:[%s15 + $0x348] sm:$0xff]
        %v7057 = vld [vmem:[%s15 + $0x350] sm:$0xff]
        %v7058 = vld [vmem:[%s15 + $0x358] sm:$0xff]
        %v7059 = vld [vmem:[%s15 + $0x360] sm:$0xff]
        %v7060 = vld [vmem:[%s15 + $0x368] sm:$0xff]
        %v7061 = vld [vmem:[%s15 + $0x370] sm:$0xff]
        %v7062 = vld [vmem:[%s15 + $0x378] sm:$0xff]
        %v7063 = vld [vmem:[%s15 + $0x380] sm:$0xff]
        %v7064 = vld [vmem:[%s15 + $0x388] sm:$0xff]
        %v7065 = vld [vmem:[%s15 + $0x390] sm:$0xff]
        %v7066 = vld [vmem:[%s15 + $0x398] sm:$0xff]
        %v7067 = vld [vmem:[%s15 + $0x3a0] sm:$0xff]
        %v7068 = vld [vmem:[%s15 + $0x3a8] sm:$0xff]
        %v7069 = vld [vmem:[%s15 + $0x3b0] sm:$0xff]
        %v7070 = vld [vmem:[%s15 + $0x3b8] sm:$0xff]
        %v7071 = vld [vmem:[%s15 + $0x3c0] sm:$0xff]
        %v7072 = vld [vmem:[%s15 + $0x3c8] sm:$0xff]
        %v7073 = vld [vmem:[%s15 + $0x3d0] sm:$0xff]
        %v7074 = vld [vmem:[%s15 + $0x3d8] sm:$0xff]
        %v7075 = vld [vmem:[%s15 + $0x3e0] sm:$0xff]
        %v7076 = vld [vmem:[%s15 + $0x3e8] sm:$0xff]
        %v7077 = vld [vmem:[%s15 + $0x3f0] sm:$0xff]
        %v7078 = vld [vmem:[%s15 + $0x3f8] sm:$0xff]
        %v7079 = vld [vmem:[%s16] sm:$0x3]
        %v7081 = vlaneseq
        %v7082 = vshrl.u32 %v7081, 7
        %v7083 = vsub.s32 0, %v7082
        %v7084 = vrot.slane %v7079, %v7083
        %v7085 = vlaneseq
        %v7086 = vshrl.u32 %v7085, 7
        %v7087 = vsub.s32 1, %v7086
        %v7088 = vrot.slane %v7079, %v7087
        %v7219 = vunpack.c.l.b16 %v6951
        %v7220 = vunpack.c.h.b16 %v6951
        %v7221 = vunpack.c.l.b16 %v6952
        %v7222 = vunpack.c.h.b16 %v6952
        %v7223 = vunpack.c.l.b16 %v6953
        %v7224 = vunpack.c.h.b16 %v6953
        %v7225 = vunpack.c.l.b16 %v6954
        %v7226 = vunpack.c.h.b16 %v6954
        %v7227 = vunpack.c.l.b16 %v6955
        %v7228 = vunpack.c.h.b16 %v6955
        %v7229 = vunpack.c.l.b16 %v6956
        %v7230 = vunpack.c.h.b16 %v6956
        %v7231 = vunpack.c.l.b16 %v6957
        %v7232 = vunpack.c.h.b16 %v6957
        %v7233 = vunpack.c.l.b16 %v6958
        %v7234 = vunpack.c.h.b16 %v6958
        %v7235 = vunpack.c.l.b16 %v6959
        %v7236 = vunpack.c.h.b16 %v6959
        %v7237 = vunpack.c.l.b16 %v6960
        %v7238 = vunpack.c.h.b16 %v6960
        %v7239 = vunpack.c.l.b16 %v6961
        %v7240 = vunpack.c.h.b16 %v6961
        %v7241 = vunpack.c.l.b16 %v6962
        %v7242 = vunpack.c.h.b16 %v6962
        %v7243 = vunpack.c.l.b16 %v6963
        %v7244 = vunpack.c.h.b16 %v6963
        %v7245 = vunpack.c.l.b16 %v6964
        %v7246 = vunpack.c.h.b16 %v6964
        %v7247 = vunpack.c.l.b16 %v6965
        %v7248 = vunpack.c.h.b16 %v6965
        %v7249 = vunpack.c.l.b16 %v6966
        %v7250 = vunpack.c.h.b16 %v6966
        %v7251 = vunpack.c.l.b16 %v6967
        %v7252 = vunpack.c.h.b16 %v6967
        %v7253 = vunpack.c.l.b16 %v6968
        %v7254 = vunpack.c.h.b16 %v6968
        %v7255 = vunpack.c.l.b16 %v6969
        %v7256 = vunpack.c.h.b16 %v6969
        %v7257 = vunpack.c.l.b16 %v6970
        %v7258 = vunpack.c.h.b16 %v6970
        %v7259 = vunpack.c.l.b16 %v6971
        %v7260 = vunpack.c.h.b16 %v6971
        %v7261 = vunpack.c.l.b16 %v6972
        %v7262 = vunpack.c.h.b16 %v6972
        %v7263 = vunpack.c.l.b16 %v6973
        %v7264 = vunpack.c.h.b16 %v6973
        %v7265 = vunpack.c.l.b16 %v6974
        %v7266 = vunpack.c.h.b16 %v6974
        %v7267 = vunpack.c.l.b16 %v6975
        %v7268 = vunpack.c.h.b16 %v6975
        %v7269 = vunpack.c.l.b16 %v6976
        %v7270 = vunpack.c.h.b16 %v6976
        %v7271 = vunpack.c.l.b16 %v6977
        %v7272 = vunpack.c.h.b16 %v6977
        %v7273 = vunpack.c.l.b16 %v6978
        %v7274 = vunpack.c.h.b16 %v6978
        %v7275 = vunpack.c.l.b16 %v6979
        %v7276 = vunpack.c.h.b16 %v6979
        %v7277 = vunpack.c.l.b16 %v6980
        %v7278 = vunpack.c.h.b16 %v6980
        %v7279 = vunpack.c.l.b16 %v6981
        %v7280 = vunpack.c.h.b16 %v6981
        %v7281 = vunpack.c.l.b16 %v6982
        %v7282 = vunpack.c.h.b16 %v6982
        %v7283 = vunpack.c.l.b16 %v6983
        %v7284 = vunpack.c.h.b16 %v6983
        %v7285 = vunpack.c.l.b16 %v6984
        %v7286 = vunpack.c.h.b16 %v6984
        %v7287 = vunpack.c.l.b16 %v6985
        %v7288 = vunpack.c.h.b16 %v6985
        %v7289 = vunpack.c.l.b16 %v6986
        %v7290 = vunpack.c.h.b16 %v6986
        %v7291 = vunpack.c.l.b16 %v6987
        %v7292 = vunpack.c.h.b16 %v6987
        %v7293 = vunpack.c.l.b16 %v6988
        %v7294 = vunpack.c.h.b16 %v6988
        %v7295 = vunpack.c.l.b16 %v6989
        %v7296 = vunpack.c.h.b16 %v6989
        %v7297 = vunpack.c.l.b16 %v6990
        %v7298 = vunpack.c.h.b16 %v6990
        %v7299 = vunpack.c.l.b16 %v6991
        %v7300 = vunpack.c.h.b16 %v6991
        %v7301 = vunpack.c.l.b16 %v6992
        %v7302 = vunpack.c.h.b16 %v6992
        %v7303 = vunpack.c.l.b16 %v6993
        %v7304 = vunpack.c.h.b16 %v6993
        %v7305 = vunpack.c.l.b16 %v6994
        %v7306 = vunpack.c.h.b16 %v6994
        %v7307 = vunpack.c.l.b16 %v6995
        %v7308 = vunpack.c.h.b16 %v6995
        %v7309 = vunpack.c.l.b16 %v6996
        %v7310 = vunpack.c.h.b16 %v6996
        %v7311 = vunpack.c.l.b16 %v6997
        %v7312 = vunpack.c.h.b16 %v6997
        %v7313 = vunpack.c.l.b16 %v6998
        %v7314 = vunpack.c.h.b16 %v6998
        %v7315 = vunpack.c.l.b16 %v6999
        %v7316 = vunpack.c.h.b16 %v6999
        %v7317 = vunpack.c.l.b16 %v7000
        %v7318 = vunpack.c.h.b16 %v7000
        %v7319 = vunpack.c.l.b16 %v7001
        %v7320 = vunpack.c.h.b16 %v7001
        %v7321 = vunpack.c.l.b16 %v7002
        %v7322 = vunpack.c.h.b16 %v7002
        %v7323 = vunpack.c.l.b16 %v7003
        %v7324 = vunpack.c.h.b16 %v7003
        %v7325 = vunpack.c.l.b16 %v7004
        %v7326 = vunpack.c.h.b16 %v7004
        %v7327 = vunpack.c.l.b16 %v7005
        %v7328 = vunpack.c.h.b16 %v7005
        %v7329 = vunpack.c.l.b16 %v7006
        %v7330 = vunpack.c.h.b16 %v7006
        %v7331 = vunpack.c.l.b16 %v7007
        %v7332 = vunpack.c.h.b16 %v7007
        %v7333 = vunpack.c.l.b16 %v7008
        %v7334 = vunpack.c.h.b16 %v7008
        %v7335 = vunpack.c.l.b16 %v7009
        %v7336 = vunpack.c.h.b16 %v7009
        %v7337 = vunpack.c.l.b16 %v7010
        %v7338 = vunpack.c.h.b16 %v7010
        %v7339 = vunpack.c.l.b16 %v7011
        %v7340 = vunpack.c.h.b16 %v7011
        %v7341 = vunpack.c.l.b16 %v7012
        %v7342 = vunpack.c.h.b16 %v7012
        %v7343 = vunpack.c.l.b16 %v7013
        %v7344 = vunpack.c.h.b16 %v7013
        %v7345 = vunpack.c.l.b16 %v7014
        %v7346 = vunpack.c.h.b16 %v7014
        %v7347 = vunpack.c.l.b16 %v7015
        %v7348 = vunpack.c.h.b16 %v7015
        %v7349 = vunpack.c.l.b16 %v7016
        %v7350 = vunpack.c.h.b16 %v7016
        %v7351 = vunpack.c.l.b16 %v7017
        %v7352 = vunpack.c.h.b16 %v7017
        %v7353 = vunpack.c.l.b16 %v7018
        %v7354 = vunpack.c.h.b16 %v7018
        %v7355 = vunpack.c.l.b16 %v7019
        %v7356 = vunpack.c.h.b16 %v7019
        %v7357 = vunpack.c.l.b16 %v7020
        %v7358 = vunpack.c.h.b16 %v7020
        %v7359 = vunpack.c.l.b16 %v7021
        %v7360 = vunpack.c.h.b16 %v7021
        %v7361 = vunpack.c.l.b16 %v7022
        %v7362 = vunpack.c.h.b16 %v7022
        %v7363 = vunpack.c.l.b16 %v7023
        %v7364 = vunpack.c.h.b16 %v7023
        %v7365 = vunpack.c.l.b16 %v7024
        %v7366 = vunpack.c.h.b16 %v7024
        %v7367 = vunpack.c.l.b16 %v7025
        %v7368 = vunpack.c.h.b16 %v7025
        %v7369 = vunpack.c.l.b16 %v7026
        %v7370 = vunpack.c.h.b16 %v7026
        %v7371 = vunpack.c.l.b16 %v7027
        %v7372 = vunpack.c.h.b16 %v7027
        %v7373 = vunpack.c.l.b16 %v7028
        %v7374 = vunpack.c.h.b16 %v7028
        %v7375 = vunpack.c.l.b16 %v7029
        %v7376 = vunpack.c.h.b16 %v7029
        %v7377 = vunpack.c.l.b16 %v7030
        %v7378 = vunpack.c.h.b16 %v7030
        %v7379 = vunpack.c.l.b16 %v7031
        %v7380 = vunpack.c.h.b16 %v7031
        %v7381 = vunpack.c.l.b16 %v7032
        %v7382 = vunpack.c.h.b16 %v7032
        %v7383 = vunpack.c.l.b16 %v7033
        %v7384 = vunpack.c.h.b16 %v7033
        %v7385 = vunpack.c.l.b16 %v7034
        %v7386 = vunpack.c.h.b16 %v7034
        %v7387 = vunpack.c.l.b16 %v7035
        %v7388 = vunpack.c.h.b16 %v7035
        %v7389 = vunpack.c.l.b16 %v7036
        %v7390 = vunpack.c.h.b16 %v7036
        %v7391 = vunpack.c.l.b16 %v7037
        %v7392 = vunpack.c.h.b16 %v7037
        %v7393 = vunpack.c.l.b16 %v7038
        %v7394 = vunpack.c.h.b16 %v7038
        %v7395 = vunpack.c.l.b16 %v7039
        %v7396 = vunpack.c.h.b16 %v7039
        %v7397 = vunpack.c.l.b16 %v7040
        %v7398 = vunpack.c.h.b16 %v7040
        %v7399 = vunpack.c.l.b16 %v7041
        %v7400 = vunpack.c.h.b16 %v7041
        %v7401 = vunpack.c.l.b16 %v7042
        %v7402 = vunpack.c.h.b16 %v7042
        %v7403 = vunpack.c.l.b16 %v7043
        %v7404 = vunpack.c.h.b16 %v7043
        %v7405 = vunpack.c.l.b16 %v7044
        %v7406 = vunpack.c.h.b16 %v7044
        %v7407 = vunpack.c.l.b16 %v7045
        %v7408 = vunpack.c.h.b16 %v7045
        %v7409 = vunpack.c.l.b16 %v7046
        %v7410 = vunpack.c.h.b16 %v7046
        %v7411 = vunpack.c.l.b16 %v7047
        %v7412 = vunpack.c.h.b16 %v7047
        %v7413 = vunpack.c.l.b16 %v7048
        %v7414 = vunpack.c.h.b16 %v7048
        %v7415 = vunpack.c.l.b16 %v7049
        %v7416 = vunpack.c.h.b16 %v7049
        %v7417 = vunpack.c.l.b16 %v7050
        %v7418 = vunpack.c.h.b16 %v7050
        %v7419 = vunpack.c.l.b16 %v7051
        %v7420 = vunpack.c.h.b16 %v7051
        %v7421 = vunpack.c.l.b16 %v7052
        %v7422 = vunpack.c.h.b16 %v7052
        %v7423 = vunpack.c.l.b16 %v7053
        %v7424 = vunpack.c.h.b16 %v7053
        %v7425 = vunpack.c.l.b16 %v7054
        %v7426 = vunpack.c.h.b16 %v7054
        %v7427 = vunpack.c.l.b16 %v7055
        %v7428 = vunpack.c.h.b16 %v7055
        %v7429 = vunpack.c.l.b16 %v7056
        %v7430 = vunpack.c.h.b16 %v7056
        %v7431 = vunpack.c.l.b16 %v7057
        %v7432 = vunpack.c.h.b16 %v7057
        %v7433 = vunpack.c.l.b16 %v7058
        %v7434 = vunpack.c.h.b16 %v7058
        %v7435 = vunpack.c.l.b16 %v7059
        %v7436 = vunpack.c.h.b16 %v7059
        %v7437 = vunpack.c.l.b16 %v7060
        %v7438 = vunpack.c.h.b16 %v7060
        %v7439 = vunpack.c.l.b16 %v7061
        %v7440 = vunpack.c.h.b16 %v7061
        %v7441 = vunpack.c.l.b16 %v7062
        %v7442 = vunpack.c.h.b16 %v7062
        %v7443 = vunpack.c.l.b16 %v7063
        %v7444 = vunpack.c.h.b16 %v7063
        %v7445 = vunpack.c.l.b16 %v7064
        %v7446 = vunpack.c.h.b16 %v7064
        %v7447 = vunpack.c.l.b16 %v7065
        %v7448 = vunpack.c.h.b16 %v7065
        %v7449 = vunpack.c.l.b16 %v7066
        %v7450 = vunpack.c.h.b16 %v7066
        %v7451 = vunpack.c.l.b16 %v7067
        %v7452 = vunpack.c.h.b16 %v7067
        %v7453 = vunpack.c.l.b16 %v7068
        %v7454 = vunpack.c.h.b16 %v7068
        %v7455 = vunpack.c.l.b16 %v7069
        %v7456 = vunpack.c.h.b16 %v7069
        %v7457 = vunpack.c.l.b16 %v7070
        %v7458 = vunpack.c.h.b16 %v7070
        %v7459 = vunpack.c.l.b16 %v7071
        %v7460 = vunpack.c.h.b16 %v7071
        %v7461 = vunpack.c.l.b16 %v7072
        %v7462 = vunpack.c.h.b16 %v7072
        %v7463 = vunpack.c.l.b16 %v7073
        %v7464 = vunpack.c.h.b16 %v7073
        %v7465 = vunpack.c.l.b16 %v7074
        %v7466 = vunpack.c.h.b16 %v7074
        %v7467 = vunpack.c.l.b16 %v7075
        %v7468 = vunpack.c.h.b16 %v7075
        %v7469 = vunpack.c.l.b16 %v7076
        %v7470 = vunpack.c.h.b16 %v7076
        %v7471 = vunpack.c.l.b16 %v7077
        %v7472 = vunpack.c.h.b16 %v7077
        %v7473 = vunpack.c.l.b16 %v7078
        %v7474 = vunpack.c.h.b16 %v7078
        %v7475 = vpack.c.b16 %v7221, %v7219
        %v7476 = vpack.c.b16 %v7222, %v7220
        %v7477 = vpack.c.b16 %v7225, %v7223
        %v7478 = vpack.c.b16 %v7226, %v7224
        %v7479 = vpack.c.b16 %v7229, %v7227
        %v7480 = vpack.c.b16 %v7230, %v7228
        %v7481 = vpack.c.b16 %v7233, %v7231
        %v7482 = vpack.c.b16 %v7234, %v7232
        %v7483 = vpack.c.b16 %v7237, %v7235
        %v7484 = vpack.c.b16 %v7238, %v7236
        %v7485 = vpack.c.b16 %v7241, %v7239
        %v7486 = vpack.c.b16 %v7242, %v7240
        %v7487 = vpack.c.b16 %v7245, %v7243
        %v7488 = vpack.c.b16 %v7246, %v7244
        %v7489 = vpack.c.b16 %v7249, %v7247
        %v7490 = vpack.c.b16 %v7250, %v7248
        %v7491 = vpack.c.b16 %v7253, %v7251
        %v7492 = vpack.c.b16 %v7254, %v7252
        %v7493 = vpack.c.b16 %v7257, %v7255
        %v7494 = vpack.c.b16 %v7258, %v7256
        %v7495 = vpack.c.b16 %v7261, %v7259
        %v7496 = vpack.c.b16 %v7262, %v7260
        %v7497 = vpack.c.b16 %v7265, %v7263
        %v7498 = vpack.c.b16 %v7266, %v7264
        %v7499 = vpack.c.b16 %v7269, %v7267
        %v7500 = vpack.c.b16 %v7270, %v7268
        %v7501 = vpack.c.b16 %v7273, %v7271
        %v7502 = vpack.c.b16 %v7274, %v7272
        %v7503 = vpack.c.b16 %v7277, %v7275
        %v7504 = vpack.c.b16 %v7278, %v7276
        %v7505 = vpack.c.b16 %v7281, %v7279
        %v7506 = vpack.c.b16 %v7282, %v7280
        %v7507 = vpack.c.b16 %v7285, %v7283
        %v7508 = vpack.c.b16 %v7286, %v7284
        %v7509 = vpack.c.b16 %v7289, %v7287
        %v7510 = vpack.c.b16 %v7290, %v7288
        %v7511 = vpack.c.b16 %v7293, %v7291
        %v7512 = vpack.c.b16 %v7294, %v7292
        %v7513 = vpack.c.b16 %v7297, %v7295
        %v7514 = vpack.c.b16 %v7298, %v7296
        %v7515 = vpack.c.b16 %v7301, %v7299
        %v7516 = vpack.c.b16 %v7302, %v7300
        %v7517 = vpack.c.b16 %v7305, %v7303
        %v7518 = vpack.c.b16 %v7306, %v7304
        %v7519 = vpack.c.b16 %v7309, %v7307
        %v7520 = vpack.c.b16 %v7310, %v7308
        %v7521 = vpack.c.b16 %v7313, %v7311
        %v7522 = vpack.c.b16 %v7314, %v7312
        %v7523 = vpack.c.b16 %v7317, %v7315
        %v7524 = vpack.c.b16 %v7318, %v7316
        %v7525 = vpack.c.b16 %v7321, %v7319
        %v7526 = vpack.c.b16 %v7322, %v7320
        %v7527 = vpack.c.b16 %v7325, %v7323
        %v7528 = vpack.c.b16 %v7326, %v7324
        %v7529 = vpack.c.b16 %v7329, %v7327
        %v7530 = vpack.c.b16 %v7330, %v7328
        %v7531 = vpack.c.b16 %v7333, %v7331
        %v7532 = vpack.c.b16 %v7334, %v7332
        %v7533 = vpack.c.b16 %v7337, %v7335
        %v7534 = vpack.c.b16 %v7338, %v7336
        %v7535 = vpack.c.b16 %v7341, %v7339
        %v7536 = vpack.c.b16 %v7342, %v7340
        %v7537 = vpack.c.b16 %v7345, %v7343
        %v7538 = vpack.c.b16 %v7346, %v7344
        %v7539 = vpack.c.b16 %v7349, %v7347
        %v7540 = vpack.c.b16 %v7350, %v7348
        %v7541 = vpack.c.b16 %v7353, %v7351
        %v7542 = vpack.c.b16 %v7354, %v7352
        %v7543 = vpack.c.b16 %v7357, %v7355
        %v7544 = vpack.c.b16 %v7358, %v7356
        %v7545 = vpack.c.b16 %v7361, %v7359
        %v7546 = vpack.c.b16 %v7362, %v7360
        %v7547 = vpack.c.b16 %v7365, %v7363
        %v7548 = vpack.c.b16 %v7366, %v7364
        %v7549 = vpack.c.b16 %v7369, %v7367
        %v7550 = vpack.c.b16 %v7370, %v7368
        %v7551 = vpack.c.b16 %v7373, %v7371
        %v7552 = vpack.c.b16 %v7374, %v7372
        %v7553 = vpack.c.b16 %v7377, %v7375
        %v7554 = vpack.c.b16 %v7378, %v7376
        %v7555 = vpack.c.b16 %v7381, %v7379
        %v7556 = vpack.c.b16 %v7382, %v7380
        %v7557 = vpack.c.b16 %v7385, %v7383
        %v7558 = vpack.c.b16 %v7386, %v7384
        %v7559 = vpack.c.b16 %v7389, %v7387
        %v7560 = vpack.c.b16 %v7390, %v7388
        %v7561 = vpack.c.b16 %v7393, %v7391
        %v7562 = vpack.c.b16 %v7394, %v7392
        %v7563 = vpack.c.b16 %v7397, %v7395
        %v7564 = vpack.c.b16 %v7398, %v7396
        %v7565 = vpack.c.b16 %v7401, %v7399
        %v7566 = vpack.c.b16 %v7402, %v7400
        %v7567 = vpack.c.b16 %v7405, %v7403
        %v7568 = vpack.c.b16 %v7406, %v7404
        %v7569 = vpack.c.b16 %v7409, %v7407
        %v7570 = vpack.c.b16 %v7410, %v7408
        %v7571 = vpack.c.b16 %v7413, %v7411
        %v7572 = vpack.c.b16 %v7414, %v7412
        %v7573 = vpack.c.b16 %v7417, %v7415
        %v7574 = vpack.c.b16 %v7418, %v7416
        %v7575 = vpack.c.b16 %v7421, %v7419
        %v7576 = vpack.c.b16 %v7422, %v7420
        %v7577 = vpack.c.b16 %v7425, %v7423
        %v7578 = vpack.c.b16 %v7426, %v7424
        %v7579 = vpack.c.b16 %v7429, %v7427
        %v7580 = vpack.c.b16 %v7430, %v7428
        %v7581 = vpack.c.b16 %v7433, %v7431
        %v7582 = vpack.c.b16 %v7434, %v7432
        %v7583 = vpack.c.b16 %v7437, %v7435
        %v7584 = vpack.c.b16 %v7438, %v7436
        %v7585 = vpack.c.b16 %v7441, %v7439
        %v7586 = vpack.c.b16 %v7442, %v7440
        %v7587 = vpack.c.b16 %v7445, %v7443
        %v7588 = vpack.c.b16 %v7446, %v7444
        %v7589 = vpack.c.b16 %v7449, %v7447
        %v7590 = vpack.c.b16 %v7450, %v7448
        %v7591 = vpack.c.b16 %v7453, %v7451
        %v7592 = vpack.c.b16 %v7454, %v7452
        %v7593 = vpack.c.b16 %v7457, %v7455
        %v7594 = vpack.c.b16 %v7458, %v7456
        %v7595 = vpack.c.b16 %v7461, %v7459
        %v7596 = vpack.c.b16 %v7462, %v7460
        %v7597 = vpack.c.b16 %v7465, %v7463
        %v7598 = vpack.c.b16 %v7466, %v7464
        %v7599 = vpack.c.b16 %v7469, %v7467
        %v7600 = vpack.c.b16 %v7470, %v7468
        %v7601 = vpack.c.b16 %v7473, %v7471
        %v7602 = vpack.c.b16 %v7474, %v7472
        %7731 = vmatprep.subr.bf16.mxu0 %v7490
        %7732 = vmatpush1.bf16.msra.mxu0 %v7489
        %7733 = vmatprep.subr.bf16.mxu0 %v7488
        %7734 = vmatpush1.bf16.msra.mxu0 %v7487
        %7735 = vmatprep.subr.bf16.mxu0 %v7486
        %7736 = vmatpush1.bf16.msra.mxu0 %v7485
        %7737 = vmatprep.subr.bf16.mxu0 %v7484
        %7738 = vmatpush1.bf16.msra.mxu0 %v7483
        %7739 = vmatprep.subr.bf16.mxu0 %v7482
        %7740 = vmatpush1.bf16.msra.mxu0 %v7481
        %7741 = vmatprep.subr.bf16.mxu0 %v7480
        %7742 = vmatpush1.bf16.msra.mxu0 %v7479
        %7743 = vmatprep.subr.bf16.mxu0 %v7478
        %7744 = vmatpush1.bf16.msra.mxu0 %v7477
        %7745 = vmatprep.subr.bf16.mxu0 %v7476
        %7746 = vmatpush1.bf16.msra.mxu0 %v7475
        %7747 = vmatprep.subr.bf16.mxu0 %v7506
        %7748 = vmatpush2.bf16.msra.mxu0 %v7505
        %7749 = vmatprep.subr.bf16.mxu0 %v7504
        %7750 = vmatpush2.bf16.msra.mxu0 %v7503
        %7751 = vmatprep.subr.bf16.mxu0 %v7502
        %7752 = vmatpush2.bf16.msra.mxu0 %v7501
        %7753 = vmatprep.subr.bf16.mxu0 %v7500
        %7754 = vmatpush2.bf16.msra.mxu0 %v7499
        %7755 = vmatprep.subr.bf16.mxu0 %v7498
        %7756 = vmatpush2.bf16.msra.mxu0 %v7497
        %7757 = vmatprep.subr.bf16.mxu0 %v7496
        %7758 = vmatpush2.bf16.msra.mxu0 %v7495
        %7759 = vmatprep.subr.bf16.mxu0 %v7494
        %7760 = vmatpush2.bf16.msra.mxu0 %v7493
        %7761 = vmatprep.subr.bf16.mxu0 %v7492
        %7762 = vmatpush2.bf16.msra.mxu0 %v7491
        %7763 = vmatprep.mubr.bf16.mxu0 %v6888
        %7764 = vmatmul.mubr.bf16.gmra.mxu0 %v6887
        %v7765 = vpop.f32.mrf.mxu0
        %v7766 = vadd.f32 %v7084, %v7765
        %v7767 = vpop.f32.mrf.mxu0
        %v7768 = vadd.f32 %v7088, %v7767
        %v7769 = vpop.f32.mrf.mxu0
        %v7770 = vadd.f32 %v7084, %v7769
        %v7771 = vpop.f32.mrf.mxu0
        %v7772 = vadd.f32 %v7088, %v7771
        %7773 = vmatprep.mubr.bf16.mxu0 %v6896
        %7774 = vmatmul.mubr.bf16.gmra.mxu0 %v6895
        %v7775 = vpop.f32.mrf.mxu0
        %v7776 = vadd.f32 %v7084, %v7775
        %v7777 = vpop.f32.mrf.mxu0
        %v7778 = vadd.f32 %v7088, %v7777
        %v7779 = vpop.f32.mrf.mxu0
        %v7780 = vadd.f32 %v7084, %v7779
        %v7781 = vpop.f32.mrf.mxu0
        %v7782 = vadd.f32 %v7088, %v7781
        %7783 = vmatprep.mubr.bf16.mxu0 %v6904
        %7784 = vmatmul.mubr.bf16.gmra.mxu0 %v6903
        %v7785 = vpop.f32.mrf.mxu0
        %v7786 = vadd.f32 %v7084, %v7785
        %v7787 = vpop.f32.mrf.mxu0
        %v7788 = vadd.f32 %v7088, %v7787
        %v7789 = vpop.f32.mrf.mxu0
        %v7790 = vadd.f32 %v7084, %v7789
        %v7791 = vpop.f32.mrf.mxu0
        %v7792 = vadd.f32 %v7088, %v7791
        %7793 = vmatprep.mubr.bf16.mxu0 %v6912
        %7794 = vmatmul.mubr.bf16.gmra.mxu0 %v6911
        %v7795 = vpop.f32.mrf.mxu0
        %v7796 = vadd.f32 %v7084, %v7795
        %v7797 = vpop.f32.mrf.mxu0
        %v7798 = vadd.f32 %v7088, %v7797
        %v7799 = vpop.f32.mrf.mxu0
        %v7800 = vadd.f32 %v7084, %v7799
        %v7801 = vpop.f32.mrf.mxu0
        %v7802 = vadd.f32 %v7088, %v7801
        %7803 = vmatprep.mubr.bf16.mxu0 %v6920
        %7804 = vmatmul.mubr.bf16.gmra.mxu0 %v6919
        %v7805 = vpop.f32.mrf.mxu0
        %v7806 = vadd.f32 %v7084, %v7805
        %v7807 = vpop.f32.mrf.mxu0
        %v7808 = vadd.f32 %v7088, %v7807
        %v7809 = vpop.f32.mrf.mxu0
        %v7810 = vadd.f32 %v7084, %v7809
        %v7811 = vpop.f32.mrf.mxu0
        %v7812 = vadd.f32 %v7088, %v7811
        %7813 = vmatprep.mubr.bf16.mxu0 %v6928
        %7814 = vmatmul.mubr.bf16.gmra.mxu0 %v6927
        %v7815 = vpop.f32.mrf.mxu0
        %v7816 = vadd.f32 %v7084, %v7815
        %v7817 = vpop.f32.mrf.mxu0
        %v7818 = vadd.f32 %v7088, %v7817
        %v7819 = vpop.f32.mrf.mxu0
        %v7820 = vadd.f32 %v7084, %v7819
        %v7821 = vpop.f32.mrf.mxu0
        %v7822 = vadd.f32 %v7088, %v7821
        %7823 = vmatprep.mubr.bf16.mxu0 %v6936
        %7824 = vmatmul.mubr.bf16.gmra.mxu0 %v6935
        %v7825 = vpop.f32.mrf.mxu0
        %v7826 = vadd.f32 %v7084, %v7825
        %v7827 = vpop.f32.mrf.mxu0
        %v7828 = vadd.f32 %v7088, %v7827
        %v7829 = vpop.f32.mrf.mxu0
        %v7830 = vadd.f32 %v7084, %v7829
        %v7831 = vpop.f32.mrf.mxu0
        %v7832 = vadd.f32 %v7088, %v7831
        %7833 = vmatprep.mubr.bf16.mxu0 %v6944
        %7834 = vmatmul.mubr.bf16.gmra.mxu0 %v6943
        %v7835 = vpop.f32.mrf.mxu0
        %v7836 = vadd.f32 %v7084, %v7835
        %v7837 = vpop.f32.mrf.mxu0
        %v7838 = vadd.f32 %v7088, %v7837
        %v7839 = vpop.f32.mrf.mxu0
        %v7840 = vadd.f32 %v7084, %v7839
        %v7841 = vpop.f32.mrf.mxu0
        %v7842 = vadd.f32 %v7088, %v7841
        %7843 = vdwg.mxu0
        %7844 = vmatprep.subr.bf16.mxu0 %v7522
        %7845 = vmatpush1.bf16.msra.mxu0 %v7521
        %7846 = vmatprep.subr.bf16.mxu0 %v7520
        %7847 = vmatpush1.bf16.msra.mxu0 %v7519
        %7848 = vmatprep.subr.bf16.mxu0 %v7518
        %7849 = vmatpush1.bf16.msra.mxu0 %v7517
        %7850 = vmatprep.subr.bf16.mxu0 %v7516
        %7851 = vmatpush1.bf16.msra.mxu0 %v7515
        %7852 = vmatprep.subr.bf16.mxu0 %v7514
        %7853 = vmatpush1.bf16.msra.mxu0 %v7513
        %7854 = vmatprep.subr.bf16.mxu0 %v7512
        %7855 = vmatpush1.bf16.msra.mxu0 %v7511
        %7856 = vmatprep.subr.bf16.mxu0 %v7510
        %7857 = vmatpush1.bf16.msra.mxu0 %v7509
        %7858 = vmatprep.subr.bf16.mxu0 %v7508
        %7859 = vmatpush1.bf16.msra.mxu0 %v7507
        %7860 = vmatprep.subr.bf16.mxu0 %v7538
        %7861 = vmatpush2.bf16.msra.mxu0 %v7537
        %7862 = vmatprep.subr.bf16.mxu0 %v7536
        %7863 = vmatpush2.bf16.msra.mxu0 %v7535
        %7864 = vmatprep.subr.bf16.mxu0 %v7534
        %7865 = vmatpush2.bf16.msra.mxu0 %v7533
        %7866 = vmatprep.subr.bf16.mxu0 %v7532
        %7867 = vmatpush2.bf16.msra.mxu0 %v7531
        %7868 = vmatprep.subr.bf16.mxu0 %v7530
        %7869 = vmatpush2.bf16.msra.mxu0 %v7529
        %7870 = vmatprep.subr.bf16.mxu0 %v7528
        %7871 = vmatpush2.bf16.msra.mxu0 %v7527
        %7872 = vmatprep.subr.bf16.mxu0 %v7526
        %7873 = vmatpush2.bf16.msra.mxu0 %v7525
        %7874 = vmatprep.subr.bf16.mxu0 %v7524
        %7875 = vmatpush2.bf16.msra.mxu0 %v7523
        %7876 = vmatprep.mubr.bf16.mxu0 %v6890
        %7877 = vmatmul.mubr.bf16.gmra.mxu0 %v6889
        %v7878 = vpop.f32.mrf.mxu0
        %v7879 = vadd.f32 %v7766, %v7878
        %v7880 = vpop.f32.mrf.mxu0
        %v7881 = vadd.f32 %v7768, %v7880
        %v7882 = vpop.f32.mrf.mxu0
        %v7883 = vadd.f32 %v7770, %v7882
        %v7884 = vpop.f32.mrf.mxu0
        %v7885 = vadd.f32 %v7772, %v7884
        %7886 = vmatprep.mubr.bf16.mxu0 %v6898
        %7887 = vmatmul.mubr.bf16.gmra.mxu0 %v6897
        %v7888 = vpop.f32.mrf.mxu0
        %v7889 = vadd.f32 %v7776, %v7888
        %v7890 = vpop.f32.mrf.mxu0
        %v7891 = vadd.f32 %v7778, %v7890
        %v7892 = vpop.f32.mrf.mxu0
        %v7893 = vadd.f32 %v7780, %v7892
        %v7894 = vpop.f32.mrf.mxu0
        %v7895 = vadd.f32 %v7782, %v7894
        %7896 = vmatprep.mubr.bf16.mxu0 %v6906
        %7897 = vmatmul.mubr.bf16.gmra.mxu0 %v6905
        %v7898 = vpop.f32.mrf.mxu0
        %v7899 = vadd.f32 %v7786, %v7898
        %v7900 = vpop.f32.mrf.mxu0
        %v7901 = vadd.f32 %v7788, %v7900
        %v7902 = vpop.f32.mrf.mxu0
        %v7903 = vadd.f32 %v7790, %v7902
        %v7904 = vpop.f32.mrf.mxu0
        %v7905 = vadd.f32 %v7792, %v7904
        %7906 = vmatprep.mubr.bf16.mxu0 %v6914
        %7907 = vmatmul.mubr.bf16.gmra.mxu0 %v6913
        %v7908 = vpop.f32.mrf.mxu0
        %v7909 = vadd.f32 %v7796, %v7908
        %v7910 = vpop.f32.mrf.mxu0
        %v7911 = vadd.f32 %v7798, %v7910
        %v7912 = vpop.f32.mrf.mxu0
        %v7913 = vadd.f32 %v7800, %v7912
        %v7914 = vpop.f32.mrf.mxu0
        %v7915 = vadd.f32 %v7802, %v7914
        %7916 = vmatprep.mubr.bf16.mxu0 %v6922
        %7917 = vmatmul.mubr.bf16.gmra.mxu0 %v6921
        %v7918 = vpop.f32.mrf.mxu0
        %v7919 = vadd.f32 %v7806, %v7918
        %v7920 = vpop.f32.mrf.mxu0
        %v7921 = vadd.f32 %v7808, %v7920
        %v7922 = vpop.f32.mrf.mxu0
        %v7923 = vadd.f32 %v7810, %v7922
        %v7924 = vpop.f32.mrf.mxu0
        %v7925 = vadd.f32 %v7812, %v7924
        %7926 = vmatprep.mubr.bf16.mxu0 %v6930
        %7927 = vmatmul.mubr.bf16.gmra.mxu0 %v6929
        %v7928 = vpop.f32.mrf.mxu0
        %v7929 = vadd.f32 %v7816, %v7928
        %v7930 = vpop.f32.mrf.mxu0
        %v7931 = vadd.f32 %v7818, %v7930
        %v7932 = vpop.f32.mrf.mxu0
        %v7933 = vadd.f32 %v7820, %v7932
        %v7934 = vpop.f32.mrf.mxu0
        %v7935 = vadd.f32 %v7822, %v7934
        %7936 = vmatprep.mubr.bf16.mxu0 %v6938
        %7937 = vmatmul.mubr.bf16.gmra.mxu0 %v6937
        %v7938 = vpop.f32.mrf.mxu0
        %v7939 = vadd.f32 %v7826, %v7938
        %v7940 = vpop.f32.mrf.mxu0
        %v7941 = vadd.f32 %v7828, %v7940
        %v7942 = vpop.f32.mrf.mxu0
        %v7943 = vadd.f32 %v7830, %v7942
        %v7944 = vpop.f32.mrf.mxu0
        %v7945 = vadd.f32 %v7832, %v7944
        %7946 = vmatprep.mubr.bf16.mxu0 %v6946
        %7947 = vmatmul.mubr.bf16.gmra.mxu0 %v6945
        %v7948 = vpop.f32.mrf.mxu0
        %v7949 = vadd.f32 %v7836, %v7948
        %v7950 = vpop.f32.mrf.mxu0
        %v7951 = vadd.f32 %v7838, %v7950
        %v7952 = vpop.f32.mrf.mxu0
        %v7953 = vadd.f32 %v7840, %v7952
        %v7954 = vpop.f32.mrf.mxu0
        %v7955 = vadd.f32 %v7842, %v7954
        %7956 = vdwg.mxu0
        %7957 = vmatprep.subr.bf16.mxu0 %v7554
        %7958 = vmatpush1.bf16.msra.mxu0 %v7553
        %7959 = vmatprep.subr.bf16.mxu0 %v7552
        %7960 = vmatpush1.bf16.msra.mxu0 %v7551
        %7961 = vmatprep.subr.bf16.mxu0 %v7550
        %7962 = vmatpush1.bf16.msra.mxu0 %v7549
        %7963 = vmatprep.subr.bf16.mxu0 %v7548
        %7964 = vmatpush1.bf16.msra.mxu0 %v7547
        %7965 = vmatprep.subr.bf16.mxu0 %v7546
        %7966 = vmatpush1.bf16.msra.mxu0 %v7545
        %7967 = vmatprep.subr.bf16.mxu0 %v7544
        %7968 = vmatpush1.bf16.msra.mxu0 %v7543
        %7969 = vmatprep.subr.bf16.mxu0 %v7542
        %7970 = vmatpush1.bf16.msra.mxu0 %v7541
        %7971 = vmatprep.subr.bf16.mxu0 %v7540
        %7972 = vmatpush1.bf16.msra.mxu0 %v7539
        %7973 = vmatprep.subr.bf16.mxu0 %v7570
        %7974 = vmatpush2.bf16.msra.mxu0 %v7569
        %7975 = vmatprep.subr.bf16.mxu0 %v7568
        %7976 = vmatpush2.bf16.msra.mxu0 %v7567
        %7977 = vmatprep.subr.bf16.mxu0 %v7566
        %7978 = vmatpush2.bf16.msra.mxu0 %v7565
        %7979 = vmatprep.subr.bf16.mxu0 %v7564
        %7980 = vmatpush2.bf16.msra.mxu0 %v7563
        %7981 = vmatprep.subr.bf16.mxu0 %v7562
        %7982 = vmatpush2.bf16.msra.mxu0 %v7561
        %7983 = vmatprep.subr.bf16.mxu0 %v7560
        %7984 = vmatpush2.bf16.msra.mxu0 %v7559
        %7985 = vmatprep.subr.bf16.mxu0 %v7558
        %7986 = vmatpush2.bf16.msra.mxu0 %v7557
        %7987 = vmatprep.subr.bf16.mxu0 %v7556
        %7988 = vmatpush2.bf16.msra.mxu0 %v7555
        %7989 = vmatprep.mubr.bf16.mxu0 %v6892
        %7990 = vmatmul.mubr.bf16.gmra.mxu0 %v6891
        %v7991 = vpop.f32.mrf.mxu0
        %v7992 = vadd.f32 %v7879, %v7991
        %v7993 = vpop.f32.mrf.mxu0
        %v7994 = vadd.f32 %v7881, %v7993
        %v7995 = vpop.f32.mrf.mxu0
        %v7996 = vadd.f32 %v7883, %v7995
        %v7997 = vpop.f32.mrf.mxu0
        %v7998 = vadd.f32 %v7885, %v7997
        %7999 = vmatprep.mubr.bf16.mxu0 %v6900
        %8000 = vmatmul.mubr.bf16.gmra.mxu0 %v6899
        %v8001 = vpop.f32.mrf.mxu0
        %v8002 = vadd.f32 %v7889, %v8001
        %v8003 = vpop.f32.mrf.mxu0
        %v8004 = vadd.f32 %v7891, %v8003
        %v8005 = vpop.f32.mrf.mxu0
        %v8006 = vadd.f32 %v7893, %v8005
        %v8007 = vpop.f32.mrf.mxu0
        %v8008 = vadd.f32 %v7895, %v8007
        %8009 = vmatprep.mubr.bf16.mxu0 %v6908
        %8010 = vmatmul.mubr.bf16.gmra.mxu0 %v6907
        %v8011 = vpop.f32.mrf.mxu0
        %v8012 = vadd.f32 %v7899, %v8011
        %v8013 = vpop.f32.mrf.mxu0
        %v8014 = vadd.f32 %v7901, %v8013
        %v8015 = vpop.f32.mrf.mxu0
        %v8016 = vadd.f32 %v7903, %v8015
        %v8017 = vpop.f32.mrf.mxu0
        %v8018 = vadd.f32 %v7905, %v8017
        %8019 = vmatprep.mubr.bf16.mxu0 %v6916
        %8020 = vmatmul.mubr.bf16.gmra.mxu0 %v6915
        %v8021 = vpop.f32.mrf.mxu0
        %v8022 = vadd.f32 %v7909, %v8021
        %v8023 = vpop.f32.mrf.mxu0
        %v8024 = vadd.f32 %v7911, %v8023
        %v8025 = vpop.f32.mrf.mxu0
        %v8026 = vadd.f32 %v7913, %v8025
        %v8027 = vpop.f32.mrf.mxu0
        %v8028 = vadd.f32 %v7915, %v8027
        %8029 = vmatprep.mubr.bf16.mxu0 %v6924
        %8030 = vmatmul.mubr.bf16.gmra.mxu0 %v6923
        %v8031 = vpop.f32.mrf.mxu0
        %v8032 = vadd.f32 %v7919, %v8031
        %v8033 = vpop.f32.mrf.mxu0
        %v8034 = vadd.f32 %v7921, %v8033
        %v8035 = vpop.f32.mrf.mxu0
        %v8036 = vadd.f32 %v7923, %v8035
        %v8037 = vpop.f32.mrf.mxu0
        %v8038 = vadd.f32 %v7925, %v8037
        %8039 = vmatprep.mubr.bf16.mxu0 %v6932
        %8040 = vmatmul.mubr.bf16.gmra.mxu0 %v6931
        %v8041 = vpop.f32.mrf.mxu0
        %v8042 = vadd.f32 %v7929, %v8041
        %v8043 = vpop.f32.mrf.mxu0
        %v8044 = vadd.f32 %v7931, %v8043
        %v8045 = vpop.f32.mrf.mxu0
        %v8046 = vadd.f32 %v7933, %v8045
        %v8047 = vpop.f32.mrf.mxu0
        %v8048 = vadd.f32 %v7935, %v8047
        %8049 = vmatprep.mubr.bf16.mxu0 %v6940
        %8050 = vmatmul.mubr.bf16.gmra.mxu0 %v6939
        %v8051 = vpop.f32.mrf.mxu0
        %v8052 = vadd.f32 %v7939, %v8051
        %v8053 = vpop.f32.mrf.mxu0
        %v8054 = vadd.f32 %v7941, %v8053
        %v8055 = vpop.f32.mrf.mxu0
        %v8056 = vadd.f32 %v7943, %v8055
        %v8057 = vpop.f32.mrf.mxu0
        %v8058 = vadd.f32 %v7945, %v8057
        %8059 = vmatprep.mubr.bf16.mxu0 %v6948
        %8060 = vmatmul.mubr.bf16.gmra.mxu0 %v6947
        %v8061 = vpop.f32.mrf.mxu0
        %v8062 = vadd.f32 %v7949, %v8061
        %v8063 = vpop.f32.mrf.mxu0
        %v8064 = vadd.f32 %v7951, %v8063
        %v8065 = vpop.f32.mrf.mxu0
        %v8066 = vadd.f32 %v7953, %v8065
        %v8067 = vpop.f32.mrf.mxu0
        %v8068 = vadd.f32 %v7955, %v8067
        %8069 = vdwg.mxu0
        %8070 = vmatprep.subr.bf16.mxu0 %v7586
        %8071 = vmatpush1.bf16.msra.mxu0 %v7585
        %8072 = vmatprep.subr.bf16.mxu0 %v7584
        %8073 = vmatpush1.bf16.msra.mxu0 %v7583
        %8074 = vmatprep.subr.bf16.mxu0 %v7582
        %8075 = vmatpush1.bf16.msra.mxu0 %v7581
        %8076 = vmatprep.subr.bf16.mxu0 %v7580
        %8077 = vmatpush1.bf16.msra.mxu0 %v7579
        %8078 = vmatprep.subr.bf16.mxu0 %v7578
        %8079 = vmatpush1.bf16.msra.mxu0 %v7577
        %8080 = vmatprep.subr.bf16.mxu0 %v7576
        %8081 = vmatpush1.bf16.msra.mxu0 %v7575
        %8082 = vmatprep.subr.bf16.mxu0 %v7574
        %8083 = vmatpush1.bf16.msra.mxu0 %v7573
        %8084 = vmatprep.subr.bf16.mxu0 %v7572
        %8085 = vmatpush1.bf16.msra.mxu0 %v7571
        %8086 = vmatprep.subr.bf16.mxu0 %v7602
        %8087 = vmatpush2.bf16.msra.mxu0 %v7601
        %8088 = vmatprep.subr.bf16.mxu0 %v7600
        %8089 = vmatpush2.bf16.msra.mxu0 %v7599
        %8090 = vmatprep.subr.bf16.mxu0 %v7598
        %8091 = vmatpush2.bf16.msra.mxu0 %v7597
        %8092 = vmatprep.subr.bf16.mxu0 %v7596
        %8093 = vmatpush2.bf16.msra.mxu0 %v7595
        %8094 = vmatprep.subr.bf16.mxu0 %v7594
        %8095 = vmatpush2.bf16.msra.mxu0 %v7593
        %8096 = vmatprep.subr.bf16.mxu0 %v7592
        %8097 = vmatpush2.bf16.msra.mxu0 %v7591
        %8098 = vmatprep.subr.bf16.mxu0 %v7590
        %8099 = vmatpush2.bf16.msra.mxu0 %v7589
        %8100 = vmatprep.subr.bf16.mxu0 %v7588
        %8101 = vmatpush2.bf16.msra.mxu0 %v7587
        %8102 = vmatprep.mubr.bf16.mxu0 %v6894
        %8103 = vmatmul.mubr.bf16.gmra.mxu0 %v6893
        %v8104 = vpop.f32.mrf.mxu0
        %v8105 = vadd.f32 %v7992, %v8104
        %v8106 = vpop.f32.mrf.mxu0
        %v8107 = vadd.f32 %v7994, %v8106
        %v8108 = vpop.f32.mrf.mxu0
        %v8109 = vadd.f32 %v7996, %v8108
        %v8110 = vpop.f32.mrf.mxu0
        %v8111 = vadd.f32 %v7998, %v8110
        %8112 = vmatprep.mubr.bf16.mxu0 %v6902
        %8113 = vmatmul.mubr.bf16.gmra.mxu0 %v6901
        %v8114 = vpop.f32.mrf.mxu0
        %v8115 = vadd.f32 %v8002, %v8114
        %v8116 = vpop.f32.mrf.mxu0
        %v8117 = vadd.f32 %v8004, %v8116
        %v8118 = vpop.f32.mrf.mxu0
        %v8119 = vadd.f32 %v8006, %v8118
        %v8120 = vpop.f32.mrf.mxu0
        %v8121 = vadd.f32 %v8008, %v8120
        %8122 = vmatprep.mubr.bf16.mxu0 %v6910
        %8123 = vmatmul.mubr.bf16.gmra.mxu0 %v6909
        %v8124 = vpop.f32.mrf.mxu0
        %v8125 = vadd.f32 %v8012, %v8124
        %v8126 = vpop.f32.mrf.mxu0
        %v8127 = vadd.f32 %v8014, %v8126
        %v8128 = vpop.f32.mrf.mxu0
        %v8129 = vadd.f32 %v8016, %v8128
        %v8130 = vpop.f32.mrf.mxu0
        %v8131 = vadd.f32 %v8018, %v8130
        %8132 = vmatprep.mubr.bf16.mxu0 %v6918
        %8133 = vmatmul.mubr.bf16.gmra.mxu0 %v6917
        %v8134 = vpop.f32.mrf.mxu0
        %v8135 = vadd.f32 %v8022, %v8134
        %v8136 = vpop.f32.mrf.mxu0
        %v8137 = vadd.f32 %v8024, %v8136
        %v8138 = vpop.f32.mrf.mxu0
        %v8139 = vadd.f32 %v8026, %v8138
        %v8140 = vpop.f32.mrf.mxu0
        %v8141 = vadd.f32 %v8028, %v8140
        %8142 = vmatprep.mubr.bf16.mxu0 %v6926
        %8143 = vmatmul.mubr.bf16.gmra.mxu0 %v6925
        %v8144 = vpop.f32.mrf.mxu0
        %v8145 = vadd.f32 %v8032, %v8144
        %v8146 = vpop.f32.mrf.mxu0
        %v8147 = vadd.f32 %v8034, %v8146
        %v8148 = vpop.f32.mrf.mxu0
        %v8149 = vadd.f32 %v8036, %v8148
        %v8150 = vpop.f32.mrf.mxu0
        %v8151 = vadd.f32 %v8038, %v8150
        %8152 = vmatprep.mubr.bf16.mxu0 %v6934
        %8153 = vmatmul.mubr.bf16.gmra.mxu0 %v6933
        %v8154 = vpop.f32.mrf.mxu0
        %v8155 = vadd.f32 %v8042, %v8154
        %v8156 = vpop.f32.mrf.mxu0
        %v8157 = vadd.f32 %v8044, %v8156
        %v8158 = vpop.f32.mrf.mxu0
        %v8159 = vadd.f32 %v8046, %v8158
        %v8160 = vpop.f32.mrf.mxu0
        %v8161 = vadd.f32 %v8048, %v8160
        %8162 = vmatprep.mubr.bf16.mxu0 %v6942
        %8163 = vmatmul.mubr.bf16.gmra.mxu0 %v6941
        %v8164 = vpop.f32.mrf.mxu0
        %v8165 = vadd.f32 %v8052, %v8164
        %v8166 = vpop.f32.mrf.mxu0
        %v8167 = vadd.f32 %v8054, %v8166
        %v8168 = vpop.f32.mrf.mxu0
        %v8169 = vadd.f32 %v8056, %v8168
        %v8170 = vpop.f32.mrf.mxu0
        %v8171 = vadd.f32 %v8058, %v8170
        %8172 = vmatprep.mubr.bf16.mxu0 %v6950
        %8173 = vmatmul.mubr.bf16.gmra.mxu0 %v6949
        %v8174 = vpop.f32.mrf.mxu0
        %v8175 = vadd.f32 %v8062, %v8174
        %v8176 = vpop.f32.mrf.mxu0
        %v8177 = vadd.f32 %v8064, %v8176
        %v8178 = vpop.f32.mrf.mxu0
        %v8179 = vadd.f32 %v8066, %v8178
        %v8180 = vpop.f32.mrf.mxu0
        %v8181 = vadd.f32 %v8068, %v8180
        %8182 = vdwg.mxu0
        %v8183 = vtanh.pop %v8105
        %v8184 = vtanh.pop %v8107
        %v8185 = vtanh.pop %v8109
        %v8186 = vtanh.pop %v8111
        %v8187 = vtanh.pop %v8115
        %v8188 = vtanh.pop %v8117
        %v8189 = vtanh.pop %v8119
        %v8190 = vtanh.pop %v8121
        %v8191 = vtanh.pop %v8125
        %v8192 = vtanh.pop %v8127
        %v8193 = vtanh.pop %v8129
        %v8194 = vtanh.pop %v8131
        %v8195 = vtanh.pop %v8135
        %v8196 = vtanh.pop %v8137
        %v8197 = vtanh.pop %v8139
        %v8198 = vtanh.pop %v8141
        %v8199 = vtanh.pop %v8145
        %v8200 = vtanh.pop %v8147
        %v8201 = vtanh.pop %v8149
        %v8202 = vtanh.pop %v8151
        %v8203 = vtanh.pop %v8155
        %v8204 = vtanh.pop %v8157
        %v8205 = vtanh.pop %v8159
        %v8206 = vtanh.pop %v8161
        %v8207 = vtanh.pop %v8165
        %v8208 = vtanh.pop %v8167
        %v8209 = vtanh.pop %v8169
        %v8210 = vtanh.pop %v8171
        %v8211 = vtanh.pop %v8175
        %v8212 = vtanh.pop %v8177
        %v8213 = vtanh.pop %v8179
        %v8214 = vtanh.pop %v8181
        %8215 = vst [vmem:[%s604] sm:$0xff] %v8183
        %8216 = vst [vmem:[%s604 + $0x8] sm:$0xff] %v8184
        %8217 = vst [vmem:[%s604 + $0x10] sm:$0xff] %v8185
        %8218 = vst [vmem:[%s604 + $0x18] sm:$0xff] %v8186
        %8219 = vst [vmem:[%s604 + $0x20] sm:$0xff] %v8187
        %8220 = vst [vmem:[%s604 + $0x28] sm:$0xff] %v8188
        %8221 = vst [vmem:[%s604 + $0x30] sm:$0xff] %v8189
        %8222 = vst [vmem:[%s604 + $0x38] sm:$0xff] %v8190
        %8223 = vst [vmem:[%s604 + $0x40] sm:$0xff] %v8191
        %8224 = vst [vmem:[%s604 + $0x48] sm:$0xff] %v8192
        %8225 = vst [vmem:[%s604 + $0x50] sm:$0xff] %v8193
        %8226 = vst [vmem:[%s604 + $0x58] sm:$0xff] %v8194
        %8227 = vst [vmem:[%s604 + $0x60] sm:$0xff] %v8195
        %8228 = vst [vmem:[%s604 + $0x68] sm:$0xff] %v8196
        %8229 = vst [vmem:[%s604 + $0x70] sm:$0xff] %v8197
        %8230 = vst [vmem:[%s604 + $0x78] sm:$0xff] %v8198
        %8231 = vst [vmem:[%s604 + $0x80] sm:$0xff] %v8199
        %8232 = vst [vmem:[%s604 + $0x88] sm:$0xff] %v8200
        %8233 = vst [vmem:[%s604 + $0x90] sm:$0xff] %v8201
        %8234 = vst [vmem:[%s604 + $0x98] sm:$0xff] %v8202
        %8235 = vst [vmem:[%s604 + $0xa0] sm:$0xff] %v8203
        %8236 = vst [vmem:[%s604 + $0xa8] sm:$0xff] %v8204
        %8237 = vst [vmem:[%s604 + $0xb0] sm:$0xff] %v8205
        %8238 = vst [vmem:[%s604 + $0xb8] sm:$0xff] %v8206
        %8239 = vst [vmem:[%s604 + $0xc0] sm:$0xff] %v8207
        %8240 = vst [vmem:[%s604 + $0xc8] sm:$0xff] %v8208
        %8241 = vst [vmem:[%s604 + $0xd0] sm:$0xff] %v8209
        %8242 = vst [vmem:[%s604 + $0xd8] sm:$0xff] %v8210
        %8243 = vst [vmem:[%s604 + $0xe0] sm:$0xff] %v8211
        %8244 = vst [vmem:[%s604 + $0xe8] sm:$0xff] %v8212
        %8245 = vst [vmem:[%s604 + $0xf0] sm:$0xff] %v8213
        %8246 = vst [vmem:[%s604 + $0xf8] sm:$0xff] %v8214
        %s8247 = smul.u32 16, %s30
        %p8248 = scmp.lt.s32.totalorder %s8247, 63
        %s8249 = scalar_select %p8248, %s8247, 63
        %s8250 = smul.addr %s8249, 2
        %s8251 = smul.addr %s8250, 8
        %s8252 = scalar_lea.vmem %s17, %s8251
        // Predicated region
        $region97: #{generator_forward.1} parent=87 // pred_check
          %p8253 = pneg %p415
        $region98: #{generator_forward.1} parent=87 // pred_check_branch
          %8255 = sbr.rel (%p8253) target = $region100
        $region99: #{generator_forward.1} parent=87 // pred_region
          %s8256 = smul.u32 16, %s30
        $region100: #{generator_forward.1} parent=87 // pred_fallthru
          _
      $region88: #{generator_forward.1} parent=5 // pred_fallthru
        _
      %p8257 = scmp.le.s32.totalorder 2, %s25
      // Predicated region
      $region101: #{generator_forward.1} parent=5 // pred_check
        %p8258 = pneg %p8257
      $region102: #{generator_forward.1} parent=5 // pred_check_branch
        %8260 = sbr.rel (%p8258) target = $region104
      $region103: #{generator_forward.1} parent=5 // pred_region
        %s8261 = ssub.s32 %s25, 2
        // Predicated region
        $region105: #{generator_forward.1} parent=103 // pred_check
          %p8262 = pneg %p421
        $region106: #{generator_forward.1} parent=103 // pred_check_branch
          %8264 = sbr.rel (%p8262) target = $region108
        $region107: #{generator_forward.1} parent=103 // pred_region
          %s8265 = smul.u32 16, %s31
          %p8266 = scmp.lt.s32.totalorder %s8265, 63
          %s8267 = scalar_select %p8266, %s8265, 63
          %s8268 = smul.addr %s8267, 2
          %s8269 = smul.addr %s8268, 8
          %s8270 = scalar_lea.vmem %s17, %s8269
        $region108: #{generator_forward.1} parent=103 // pred_fallthru
          _
      $region104: #{generator_forward.1} parent=5 // pred_fallthru
        _
    $region6: #{generator_forward.1} parent=1 // loop_footer
      %s29 = sadd.s32 1, %s25
    $region7: #{generator_forward.1} parent=1 // loop_footer_branch
      %24 = sbr.rel target = $region3
    $region8: #{generator_forward.1} parent=1 // loop_exit
      _
    %8271 = vsyncpa [#allocation3], 1
    %s8272 = scalar_lea.sflag [#allocation3], 1
    %8273 = vsyncpa %s8272, 1
    %8274 = vsyncpa [#allocation5], 1

</llo_original>
